<compile_context>
chip_gen: v7x
topology: tpu7x:2x2x1
jax: 0.10.0
libtpu: 0.0.40
codegen_flags: <defaults>
</compile_context>

<pallas_src>
import functools

import jax
import jax.numpy as jnp
from jax.experimental import pallas as pl
from jax.experimental.pallas import tpu as pltpu

_KOFFS = ((0, 0), (0, 1), (1, 0), (1, 1))   # (kh, kw), kidx = kh*2 + kw
_BN_EPS = 1e-5


def _qnet_kernel(x_ref, w1_ref, s1_ref, w2_ref, s2_ref, w3_ref, s3_ref,
                 fw1_ref, fb1_ref, fw2_ref, fb2_ref, fw3_ref, fb3_ref,
                 o_ref, p1_ref, p2_ref, p3_ref, a3_ref, *, tb, bs):
    f32 = jnp.float32
    bf16 = jnp.bfloat16
    h1 = bs + 1   # conv1 output spatial
    h2 = bs + 2   # conv2 output spatial
    h3 = bs + 3   # conv3 output spatial

    def conv_mxu(p_ref, w_ref, s_ref, hout):
        # p_ref: zero-padded input [hout+1, hout+1, tb, cin] (f32), already filled.
        cin = p_ref.shape[3]
        cout = w_ref.shape[2]
        acc = None
        for kidx, (kh, kw) in enumerate(_KOFFS):
            win = p_ref[kh:kh + hout, kw:kw + hout, :, :]           # [hout,hout,tb,cin]
            win2d = win.reshape(hout * hout * tb, cin).astype(bf16)  # tile-aligned merge
            part = jnp.dot(win2d, w_ref[kidx], preferred_element_type=f32)
            acc = part if acc is None else acc + part
        y = jnp.maximum(acc + s_ref[...], 0.0)                       # [hout*hout*tb,cout]
        return y.reshape(hout, hout, tb, cout)

    # ---- conv1: 1 -> 32 channels (Cin == 1 -> VPU broadcast multiply, no MXU) ----
    p1_ref[...] = jnp.zeros(p1_ref.shape, p1_ref.dtype)
    p1_ref[1:1 + bs, 1:1 + bs, :, :] = x_ref[...]
    acc = None
    for kidx, (kh, kw) in enumerate(_KOFFS):
        win = p1_ref[kh:kh + h1, kw:kw + h1, :, :]                  # [h1,h1,tb,1]
        wk = w1_ref[kidx:kidx + 1, :].astype(f32).reshape(1, 1, 1, -1)
        part = win * wk                                             # [h1,h1,tb,32]
        acc = part if acc is None else acc + part
    y1 = jnp.maximum(acc + s1_ref[...], 0.0)                        # [h1,h1,tb,32] f32

    # ---- conv2: 32 -> 64 channels (MXU, bf16 x bf16 -> f32) ----
    p2_ref[...] = jnp.zeros(p2_ref.shape, p2_ref.dtype)
    p2_ref[1:1 + h1, 1:1 + h1, :, :] = y1
    y2 = conv_mxu(p2_ref, w2_ref, s2_ref, h2)                       # [h2,h2,tb,64]

    # ---- conv3: 64 -> 128 channels (MXU) ----
    p3_ref[...] = jnp.zeros(p3_ref.shape, p3_ref.dtype)
    p3_ref[1:1 + h2, 1:1 + h2, :, :] = y2
    a3_ref[...] = conv_mxu(p3_ref, w3_ref, s3_ref, h3)              # [h3,h3,tb,128]

    # ---- FC head (weights VMEM resident, intermediates stay in vregs) ----
    # fc1: contraction over (h, w, c); one K=128 matmul per spatial position.
    acc = None
    for ih in range(h3):
        for iw in range(h3):
            part = jnp.dot(a3_ref[ih, iw].astype(bf16), fw1_ref[ih, iw],
                           preferred_element_type=f32)              # [tb, hid1]
            acc = part if acc is None else acc + part
    h = jnp.maximum(acc + fb1_ref[...], 0.0)
    # TODO(synk): Dropout(p=0.2) is identity in inference mode; training-mode dropout
    # (and training-mode BatchNorm batch statistics) are not implemented.
    h = jnp.maximum(jnp.dot(h.astype(bf16), fw2_ref[...],
                            preferred_element_type=f32) + fb2_ref[...], 0.0)
    out = jnp.dot(h.astype(bf16), fw3_ref[...],
                  preferred_element_type=f32) + fb3_ref[...]
    o_ref[...] = out.astype(o_ref.dtype)


@functools.partial(jax.jit, static_argnames=("board_size",))
def _qnetwork_apply(params, x2d, *, board_size):
    bs = board_size
    h3 = bs + 3
    b = x2d.shape[0]

    # Batch tile (multiple of 8 so in-kernel reshapes are tile-aligned).
    tb = 8 if b <= 8 else 32
    bp = ((b + tb - 1) // tb) * tb
    grid = (bp // tb,)

    x4 = x2d.astype(jnp.float32).reshape(b, bs, bs, 1)
    if bp != b:
        x4 = jnp.pad(x4, ((0, bp - b), (0, 0), (0, 0), (0, 0)))
    xt = jnp.transpose(x4, (1, 2, 0, 3))            # [bs, bs, bp, 1] (batch-minor)

    w1, s1 = params["conv1_w"], params["conv1_s"]
    w2, s2 = params["conv2_w"], params["conv2_s"]
    w3, s3 = params["conv3_w"], params["conv3_s"]
    fw1, fb1 = params["fc1_w"], params["fc1_b"]
    fw2, fb2 = params["fc2_w"], params["fc2_b"]
    fw3, fb3 = params["fc3_w"], params["fc3_b"]
    hid1, hid2, odim = fw1.shape[-1], fw2.shape[-1], fw3.shape[-1]

    flops = 2 * bp * (4 * ((bs + 1) ** 2 * 1 * 32
                           + (bs + 2) ** 2 * 32 * 64
                           + (bs + 3) ** 2 * 64 * 128)
                      + h3 * h3 * 128 * hid1 + hid1 * hid2 + hid2 * odim)
    bytes_accessed = int(xt.size * 4 + bp * odim * 4
                         + sum(int(p.size) * p.dtype.itemsize for p in
                               (w1, s1, w2, s2, w3, s3,
                                fw1, fb1, fw2, fb2, fw3, fb3)))

    out = pl.pallas_call(
        functools.partial(_qnet_kernel, tb=tb, bs=bs),
        out_shape=jax.ShapeDtypeStruct((bp, odim), jnp.float32),
        grid=grid,
        in_specs=[
            pl.BlockSpec((bs, bs, tb, 1), lambda i: (0, 0, i, 0)),
            pl.BlockSpec((4, 32), lambda i: (0, 0)),
            pl.BlockSpec((1, 32), lambda i: (0, 0)),
            pl.BlockSpec((4, 32, 64), lambda i: (0, 0, 0)),
            pl.BlockSpec((1, 64), lambda i: (0, 0)),
            pl.BlockSpec((4, 64, 128), lambda i: (0, 0, 0)),
            pl.BlockSpec((1, 128), lambda i: (0, 0)),
            pl.BlockSpec((h3, h3, 128, hid1), lambda i: (0, 0, 0, 0)),
            pl.BlockSpec((1, hid1), lambda i: (0, 0)),
            pl.BlockSpec((hid1, hid2), lambda i: (0, 0)),
            pl.BlockSpec((1, hid2), lambda i: (0, 0)),
            pl.BlockSpec((hid2, odim), lambda i: (0, 0)),
            pl.BlockSpec((1, odim), lambda i: (0, 0)),
        ],
        out_specs=pl.BlockSpec((tb, odim), lambda i: (i, 0)),
        scratch_shapes=[
            pltpu.VMEM((bs + 2, bs + 2, tb, 1), jnp.float32),    # conv1 padded input
            pltpu.VMEM((bs + 3, bs + 3, tb, 32), jnp.float32),   # conv2 padded input
            pltpu.VMEM((bs + 4, bs + 4, tb, 64), jnp.float32),   # conv3 padded input
            pltpu.VMEM((h3, h3, tb, 128), jnp.float32),          # conv3 output (reused 49x by fc1)
        ],
        compiler_params=pltpu.CompilerParams(dimension_semantics=("parallel",)),
        cost_estimate=pl.CostEstimate(flops=flops, transcendentals=0,
                                      bytes_accessed=bytes_accessed),
    )(xt, w1, s1, w2, s2, w3, s3, fw1, fb1, fw2, fb2, fw3, fb3)

    return out[:b]


class QNetworkPallas:
    """QNetwork forward (inference mode) with one fused Pallas TPU kernel."""

    def __init__(self, input_dim, hidden_dim, output_dim, key):
        self.board_size = int(round(input_dim ** 0.5))
        bs = self.board_size
        hf = bs + 3                                   # each conv (k=2, p=1) adds +1
        self.conv_output_size = 128 * hf * hf
        self.output_dim = output_dim

        keys = iter(jax.random.split(key, 32))

        def nrm(shape, s=0.05):
            return jax.random.normal(next(keys), shape, jnp.float32) * s

        params = {}
        # Conv blocks (PyTorch weight layout [Cout, Cin, kh, kw]); fold eval-mode BN:
        #   bn(conv(x)+b) = (x (*) (W*scale)) + shift,  scale = gamma/sqrt(var+eps),
        #   shift = (b - mean)*scale + beta.
        for li, (cin, cout) in enumerate(((1, 32), (32, 64), (64, 128)), start=1):
            w_conv = nrm((cout, cin, 2, 2))
            b_conv = nrm((cout,))
            gamma = 1.0 + nrm((cout,))
            beta = nrm((cout,))
            run_mean = nrm((cout,))
            run_var = 1.0 + jnp.abs(nrm((cout,)))
            inv_std = 1.0 / jnp.sqrt(run_var + _BN_EPS)
            scale = gamma * inv_std
            shift = (b_conv - run_mean) * scale + beta
            wk = jnp.transpose(w_conv, (2, 3, 1, 0)).reshape(4, cin, cout)  # [kidx,ci,co]
            wk = wk * scale[None, None, :]           # BN scale folded into weights
            if cin == 1:
                wk = wk[:, 0, :]                     # conv1: [4, 32]
            params[f"conv{li}_w"] = wk.astype(jnp.bfloat16)
            params[f"conv{li}_s"] = shift.reshape(1, cout).astype(jnp.float32)

        # FC head. fc1 is built in PyTorch's NCHW-flatten row order and permuted once
        # to the NHWC (h, w, c) order produced by the conv kernel.
        h1d, h2d = hidden_dim, hidden_dim // 2
        fc1_nchw = nrm((self.conv_output_size, h1d))
        fc1_nhwc = fc1_nchw.reshape(128, hf, hf, h1d).transpose(1, 2, 0, 3)  # [h,w,c,n]
        params["fc1_w"] = fc1_nhwc.astype(jnp.bfloat16)
        params["fc1_b"] = nrm((h1d,)).reshape(1, h1d).astype(jnp.float32)
        params["fc2_w"] = nrm((h1d, h2d)).astype(jnp.bfloat16)
        params["fc2_b"] = nrm((h2d,)).reshape(1, h2d).astype(jnp.float32)
        params["fc3_w"] = nrm((h2d, output_dim)).astype(jnp.bfloat16)
        params["fc3_b"] = nrm((output_dim,)).reshape(1, output_dim).astype(jnp.float32)
        self.params = params

    def __call__(self, state):
        squeeze = (state.ndim == 1)
        x2d = state.reshape(1, -1) if squeeze else state.reshape(state.shape[0], -1)
        out = _qnetwork_apply(self.params, x2d, board_size=self.board_size)
        return out[0] if squeeze else out


if __name__ == "__main__":
    key = jax.random.PRNGKey(0)
    k_param, k_input = jax.random.split(key)

    input_dim, hidden_dim, output_dim = 16, 32, 4   # 4x4 board
    batch = 2

    net = QNetworkPallas(input_dim, hidden_dim, output_dim, k_param)

    x = jax.random.normal(k_input, (batch, input_dim), jnp.float32)
    out = jax.block_until_ready(net(x))
    assert out.shape == (batch, output_dim)
    assert bool(jnp.all(jnp.isfinite(out)))

    # 1-D (single state) path, mirroring PyTorch's squeeze(0).
    out1 = jax.block_until_ready(net(x[0]))
    assert out1.shape == (output_dim,)

    print("KERNEL_OK")
</pallas_src>

<mosaic_0001>
module attributes {stable_mosaic.version = 11 : i64} {
  func.func @_qnet_kernel(%arg0: i32, %arg1: memref<4x4x8x1xf32, #tpu.memory_space<vmem>>, %arg2: memref<4x32xbf16, #tpu.memory_space<vmem>>, %arg3: memref<1x32xf32, #tpu.memory_space<vmem>>, %arg4: memref<4x32x64xbf16, #tpu.memory_space<vmem>>, %arg5: memref<1x64xf32, #tpu.memory_space<vmem>>, %arg6: memref<4x64x128xbf16, #tpu.memory_space<vmem>>, %arg7: memref<1x128xf32, #tpu.memory_space<vmem>>, %arg8: memref<7x7x128x32xbf16, #tpu.memory_space<vmem>>, %arg9: memref<1x32xf32, #tpu.memory_space<vmem>>, %arg10: memref<32x16xbf16, #tpu.memory_space<vmem>>, %arg11: memref<1x16xf32, #tpu.memory_space<vmem>>, %arg12: memref<16x4xbf16, #tpu.memory_space<vmem>>, %arg13: memref<1x4xf32, #tpu.memory_space<vmem>>, %arg14: memref<8x4xf32, #tpu.memory_space<vmem>>, %arg15: memref<6x6x8x1xf32, #tpu.memory_space<vmem>>, %arg16: memref<7x7x8x32xf32, #tpu.memory_space<vmem>>, %arg17: memref<8x8x8x64xf32, #tpu.memory_space<vmem>>, %arg18: memref<7x7x8x128xf32, #tpu.memory_space<vmem>>) attributes {dimension_semantics = [#tpu.dimension_semantics<parallel>], iteration_bounds = array<i64: 1>, scalar_prefetch = 0 : i64, scratch_operands = 4 : i64, tpu.core_type = #tpu.core_type<tc>, window_params = [{transform_indices = @transform_0, window_bounds = array<i64: 4, 4, 8, 1>}, {pipeline_mode = #tpu.pipeline_mode<synchronous>, transform_indices = @transform_1, window_bounds = array<i64: 4, 32>}, {pipeline_mode = #tpu.pipeline_mode<synchronous>, transform_indices = @transform_2, window_bounds = array<i64: 1, 32>}, {pipeline_mode = #tpu.pipeline_mode<synchronous>, transform_indices = @transform_3, window_bounds = array<i64: 4, 32, 64>}, {pipeline_mode = #tpu.pipeline_mode<synchronous>, transform_indices = @transform_4, window_bounds = array<i64: 1, 64>}, {pipeline_mode = #tpu.pipeline_mode<synchronous>, transform_indices = @transform_5, window_bounds = array<i64: 4, 64, 128>}, {pipeline_mode = #tpu.pipeline_mode<synchronous>, transform_indices = @transform_6, window_bounds = array<i64: 1, 128>}, {pipeline_mode = #tpu.pipeline_mode<synchronous>, transform_indices = @transform_7, window_bounds = array<i64: 7, 7, 128, 32>}, {pipeline_mode = #tpu.pipeline_mode<synchronous>, transform_indices = @transform_8, window_bounds = array<i64: 1, 32>}, {pipeline_mode = #tpu.pipeline_mode<synchronous>, transform_indices = @transform_9, window_bounds = array<i64: 32, 16>}, {pipeline_mode = #tpu.pipeline_mode<synchronous>, transform_indices = @transform_10, window_bounds = array<i64: 1, 16>}, {pipeline_mode = #tpu.pipeline_mode<synchronous>, transform_indices = @transform_11, window_bounds = array<i64: 16, 4>}, {pipeline_mode = #tpu.pipeline_mode<synchronous>, transform_indices = @transform_12, window_bounds = array<i64: 1, 4>}, {transform_indices = @transform_13, window_bounds = array<i64: 8, 4>}]} {
    %cst = arith.constant 0.000000e+00 : f32
    %0 = vector.broadcast %cst : f32 to vector<6x6x8x1xf32>
    %c0 = arith.constant 0 : index
    %c0_0 = arith.constant 0 : index
    %c0_1 = arith.constant 0 : index
    %c0_2 = arith.constant 0 : index
    %1 = vector.load %arg15[%c0, %c0_0, %c0_1, %c0_2] : memref<6x6x8x1xf32, #tpu.memory_space<vmem>>, vector<6x6x8x1xf32>
    tpu.vector_store %arg15[%c0, %c0_0, %c0_1, %c0_2], %0 {strides = array<i32>} : memref<6x6x8x1xf32, #tpu.memory_space<vmem>>, vector<6x6x8x1xf32>,
    %c0_3 = arith.constant 0 : index
    %c0_4 = arith.constant 0 : index
    %c0_5 = arith.constant 0 : index
    %c0_6 = arith.constant 0 : index
    %2 = vector.load %arg1[%c0_3, %c0_4, %c0_5, %c0_6] : memref<4x4x8x1xf32, #tpu.memory_space<vmem>>, vector<4x4x8x1xf32>
    %c1 = arith.constant 1 : index
    %c1_7 = arith.constant 1 : index
    %c0_8 = arith.constant 0 : index
    %c0_9 = arith.constant 0 : index
    %3 = vector.load %arg15[%c1, %c1_7, %c0_8, %c0_9] : memref<6x6x8x1xf32, #tpu.memory_space<vmem>>, vector<4x4x8x1xf32>
    tpu.vector_store %arg15[%c1, %c1_7, %c0_8, %c0_9], %2 {strides = array<i32>} : memref<6x6x8x1xf32, #tpu.memory_space<vmem>>, vector<4x4x8x1xf32>,
    %c0_10 = arith.constant 0 : index
    %c0_11 = arith.constant 0 : index
    %c0_12 = arith.constant 0 : index
    %c0_13 = arith.constant 0 : index
    %4 = vector.load %arg15[%c0_10, %c0_11, %c0_12, %c0_13] : memref<6x6x8x1xf32, #tpu.memory_space<vmem>>, vector<5x5x8x1xf32>
    %c0_14 = arith.constant 0 : index
    %c0_15 = arith.constant 0 : index
    %5 = vector.load %arg2[%c0_14, %c0_15] : memref<4x32xbf16, #tpu.memory_space<vmem>>, vector<1x32xbf16>
    %6 = arith.extf %5 : vector<1x32xbf16> to vector<1x32xf32>
    %7 = vector.shape_cast %6 : vector<1x32xf32> to vector<1x1x1x32xf32>
    %8 = vector.broadcast %4 : vector<5x5x8x1xf32> to vector<5x5x8x32xf32>
    %9 = vector.broadcast %7 : vector<1x1x1x32xf32> to vector<5x5x8x32xf32>
    %10 = arith.mulf %8, %9 : vector<5x5x8x32xf32>
    %c0_16 = arith.constant 0 : index
    %c1_17 = arith.constant 1 : index
    %c0_18 = arith.constant 0 : index
    %c0_19 = arith.constant 0 : index
    %11 = vector.load %arg15[%c0_16, %c1_17, %c0_18, %c0_19] : memref<6x6x8x1xf32, #tpu.memory_space<vmem>>, vector<5x5x8x1xf32>
    %c1_20 = arith.constant 1 : index
    %c0_21 = arith.constant 0 : index
    %12 = vector.load %arg2[%c1_20, %c0_21] : memref<4x32xbf16, #tpu.memory_space<vmem>>, vector<1x32xbf16>
    %13 = arith.extf %12 : vector<1x32xbf16> to vector<1x32xf32>
    %14 = vector.shape_cast %13 : vector<1x32xf32> to vector<1x1x1x32xf32>
    %15 = vector.broadcast %11 : vector<5x5x8x1xf32> to vector<5x5x8x32xf32>
    %16 = vector.broadcast %14 : vector<1x1x1x32xf32> to vector<5x5x8x32xf32>
    %17 = arith.mulf %15, %16 : vector<5x5x8x32xf32>
    %18 = arith.addf %10, %17 : vector<5x5x8x32xf32>
    %c1_22 = arith.constant 1 : index
    %c0_23 = arith.constant 0 : index
    %c0_24 = arith.constant 0 : index
    %c0_25 = arith.constant 0 : index
    %19 = vector.load %arg15[%c1_22, %c0_23, %c0_24, %c0_25] : memref<6x6x8x1xf32, #tpu.memory_space<vmem>>, vector<5x5x8x1xf32>
    %c2 = arith.constant 2 : index
    %c0_26 = arith.constant 0 : index
    %20 = vector.load %arg2[%c2, %c0_26] : memref<4x32xbf16, #tpu.memory_space<vmem>>, vector<1x32xbf16>
    %21 = arith.extf %20 : vector<1x32xbf16> to vector<1x32xf32>
    %22 = vector.shape_cast %21 : vector<1x32xf32> to vector<1x1x1x32xf32>
    %23 = vector.broadcast %19 : vector<5x5x8x1xf32> to vector<5x5x8x32xf32>
    %24 = vector.broadcast %22 : vector<1x1x1x32xf32> to vector<5x5x8x32xf32>
    %25 = arith.mulf %23, %24 : vector<5x5x8x32xf32>
    %26 = arith.addf %18, %25 : vector<5x5x8x32xf32>
    %c1_27 = arith.constant 1 : index
    %c1_28 = arith.constant 1 : index
    %c0_29 = arith.constant 0 : index
    %c0_30 = arith.constant 0 : index
    %27 = vector.load %arg15[%c1_27, %c1_28, %c0_29, %c0_30] : memref<6x6x8x1xf32, #tpu.memory_space<vmem>>, vector<5x5x8x1xf32>
    %c3 = arith.constant 3 : index
    %c0_31 = arith.constant 0 : index
    %28 = vector.load %arg2[%c3, %c0_31] : memref<4x32xbf16, #tpu.memory_space<vmem>>, vector<1x32xbf16>
    %29 = arith.extf %28 : vector<1x32xbf16> to vector<1x32xf32>
    %30 = vector.shape_cast %29 : vector<1x32xf32> to vector<1x1x1x32xf32>
    %31 = vector.broadcast %27 : vector<5x5x8x1xf32> to vector<5x5x8x32xf32>
    %32 = vector.broadcast %30 : vector<1x1x1x32xf32> to vector<5x5x8x32xf32>
    %33 = arith.mulf %31, %32 : vector<5x5x8x32xf32>
    %34 = arith.addf %26, %33 : vector<5x5x8x32xf32>
    %c0_32 = arith.constant 0 : index
    %c0_33 = arith.constant 0 : index
    %35 = vector.load %arg3[%c0_32, %c0_33] : memref<1x32xf32, #tpu.memory_space<vmem>>, vector<1x32xf32>
    %36 = vector.shape_cast %35 : vector<1x32xf32> to vector<1x1x1x32xf32>
    %37 = vector.broadcast %36 : vector<1x1x1x32xf32> to vector<5x5x8x32xf32>
    %38 = arith.addf %34, %37 : vector<5x5x8x32xf32>
    %cst_34 = arith.constant 0.000000e+00 : f32
    %39 = vector.broadcast %cst_34 : f32 to vector<5x5x8x32xf32>
    %40 = arith.maximumf %38, %39 : vector<5x5x8x32xf32>
    %cst_35 = arith.constant 0.000000e+00 : f32
    %41 = vector.broadcast %cst_35 : f32 to vector<7x7x8x32xf32>
    %c0_36 = arith.constant 0 : index
    %c0_37 = arith.constant 0 : index
    %c0_38 = arith.constant 0 : index
    %c0_39 = arith.constant 0 : index
    %42 = vector.load %arg16[%c0_36, %c0_37, %c0_38, %c0_39] : memref<7x7x8x32xf32, #tpu.memory_space<vmem>>, vector<7x7x8x32xf32>
    tpu.vector_store %arg16[%c0_36, %c0_37, %c0_38, %c0_39], %41 {strides = array<i32>} : memref<7x7x8x32xf32, #tpu.memory_space<vmem>>, vector<7x7x8x32xf32>,
    %c1_40 = arith.constant 1 : index
    %c1_41 = arith.constant 1 : index
    %c0_42 = arith.constant 0 : index
    %c0_43 = arith.constant 0 : index
    %43 = vector.load %arg16[%c1_40, %c1_41, %c0_42, %c0_43] : memref<7x7x8x32xf32, #tpu.memory_space<vmem>>, vector<5x5x8x32xf32>
    tpu.vector_store %arg16[%c1_40, %c1_41, %c0_42, %c0_43], %40 {strides = array<i32>} : memref<7x7x8x32xf32, #tpu.memory_space<vmem>>, vector<5x5x8x32xf32>,
    %c0_44 = arith.constant 0 : index
    %c0_45 = arith.constant 0 : index
    %c0_46 = arith.constant 0 : index
    %c0_47 = arith.constant 0 : index
    %44 = vector.load %arg16[%c0_44, %c0_45, %c0_46, %c0_47] : memref<7x7x8x32xf32, #tpu.memory_space<vmem>>, vector<6x6x8x32xf32>
    %45 = vector.shape_cast %44 : vector<6x6x8x32xf32> to vector<288x32xf32>
    %46 = arith.truncf %45 : vector<288x32xf32> to vector<288x32xbf16>
    %c0_48 = arith.constant 0 : index
    %c0_49 = arith.constant 0 : index
    %c0_50 = arith.constant 0 : index
    %47 = vector.load %arg4[%c0_48, %c0_49, %c0_50] : memref<4x32x64xbf16, #tpu.memory_space<vmem>>, vector<1x32x64xbf16>
    %48 = vector.shape_cast %47 : vector<1x32x64xbf16> to vector<32x64xbf16>
    %cst_51 = arith.constant dense<0.000000e+00> : vector<288x64xf32>
    %49 = tpu.matmul %46, %48, %cst_51 {dimension_numbers = #tpu.dot_dimension_numbers<[1], [0], [0], [1], [0, 0, 1, 1], [], []>} : vector<288x32xbf16>, vector<32x64xbf16>, vector<288x64xf32> -> vector<288x64xf32>
    %c0_52 = arith.constant 0 : index
    %c1_53 = arith.constant 1 : index
    %c0_54 = arith.constant 0 : index
    %c0_55 = arith.constant 0 : index
    %50 = vector.load %arg16[%c0_52, %c1_53, %c0_54, %c0_55] : memref<7x7x8x32xf32, #tpu.memory_space<vmem>>, vector<6x6x8x32xf32>
    %51 = vector.shape_cast %50 : vector<6x6x8x32xf32> to vector<288x32xf32>
    %52 = arith.truncf %51 : vector<288x32xf32> to vector<288x32xbf16>
    %c1_56 = arith.constant 1 : index
    %c0_57 = arith.constant 0 : index
    %c0_58 = arith.constant 0 : index
    %53 = vector.load %arg4[%c1_56, %c0_57, %c0_58] : memref<4x32x64xbf16, #tpu.memory_space<vmem>>, vector<1x32x64xbf16>
    %54 = vector.shape_cast %53 : vector<1x32x64xbf16> to vector<32x64xbf16>
    %cst_59 = arith.constant dense<0.000000e+00> : vector<288x64xf32>
    %55 = tpu.matmul %52, %54, %cst_59 {dimension_numbers = #tpu.dot_dimension_numbers<[1], [0], [0], [1], [0, 0, 1, 1], [], []>} : vector<288x32xbf16>, vector<32x64xbf16>, vector<288x64xf32> -> vector<288x64xf32>
    %56 = arith.addf %49, %55 : vector<288x64xf32>
    %c1_60 = arith.constant 1 : index
    %c0_61 = arith.constant 0 : index
    %c0_62 = arith.constant 0 : index
    %c0_63 = arith.constant 0 : index
    %57 = vector.load %arg16[%c1_60, %c0_61, %c0_62, %c0_63] : memref<7x7x8x32xf32, #tpu.memory_space<vmem>>, vector<6x6x8x32xf32>
    %58 = vector.shape_cast %57 : vector<6x6x8x32xf32> to vector<288x32xf32>
    %59 = arith.truncf %58 : vector<288x32xf32> to vector<288x32xbf16>
    %c2_64 = arith.constant 2 : index
    %c0_65 = arith.constant 0 : index
    %c0_66 = arith.constant 0 : index
    %60 = vector.load %arg4[%c2_64, %c0_65, %c0_66] : memref<4x32x64xbf16, #tpu.memory_space<vmem>>, vector<1x32x64xbf16>
    %61 = vector.shape_cast %60 : vector<1x32x64xbf16> to vector<32x64xbf16>
    %cst_67 = arith.constant dense<0.000000e+00> : vector<288x64xf32>
    %62 = tpu.matmul %59, %61, %cst_67 {dimension_numbers = #tpu.dot_dimension_numbers<[1], [0], [0], [1], [0, 0, 1, 1], [], []>} : vector<288x32xbf16>, vector<32x64xbf16>, vector<288x64xf32> -> vector<288x64xf32>
    %63 = arith.addf %56, %62 : vector<288x64xf32>
    %c1_68 = arith.constant 1 : index
    %c1_69 = arith.constant 1 : index
    %c0_70 = arith.constant 0 : index
    %c0_71 = arith.constant 0 : index
    %64 = vector.load %arg16[%c1_68, %c1_69, %c0_70, %c0_71] : memref<7x7x8x32xf32, #tpu.memory_space<vmem>>, vector<6x6x8x32xf32>
    %65 = vector.shape_cast %64 : vector<6x6x8x32xf32> to vector<288x32xf32>
    %66 = arith.truncf %65 : vector<288x32xf32> to vector<288x32xbf16>
    %c3_72 = arith.constant 3 : index
    %c0_73 = arith.constant 0 : index
    %c0_74 = arith.constant 0 : index
    %67 = vector.load %arg4[%c3_72, %c0_73, %c0_74] : memref<4x32x64xbf16, #tpu.memory_space<vmem>>, vector<1x32x64xbf16>
    %68 = vector.shape_cast %67 : vector<1x32x64xbf16> to vector<32x64xbf16>
    %cst_75 = arith.constant dense<0.000000e+00> : vector<288x64xf32>
    %69 = tpu.matmul %66, %68, %cst_75 {dimension_numbers = #tpu.dot_dimension_numbers<[1], [0], [0], [1], [0, 0, 1, 1], [], []>} : vector<288x32xbf16>, vector<32x64xbf16>, vector<288x64xf32> -> vector<288x64xf32>
    %70 = arith.addf %63, %69 : vector<288x64xf32>
    %c0_76 = arith.constant 0 : index
    %c0_77 = arith.constant 0 : index
    %71 = vector.load %arg5[%c0_76, %c0_77] : memref<1x64xf32, #tpu.memory_space<vmem>>, vector<1x64xf32>
    %72 = vector.broadcast %71 : vector<1x64xf32> to vector<288x64xf32>
    %73 = arith.addf %70, %72 : vector<288x64xf32>
    %cst_78 = arith.constant 0.000000e+00 : f32
    %74 = vector.broadcast %cst_78 : f32 to vector<288x64xf32>
    %75 = arith.maximumf %73, %74 : vector<288x64xf32>
    %76 = vector.shape_cast %75 : vector<288x64xf32> to vector<6x6x8x64xf32>
    %cst_79 = arith.constant 0.000000e+00 : f32
    %77 = vector.broadcast %cst_79 : f32 to vector<8x8x8x64xf32>
    %c0_80 = arith.constant 0 : index
    %c0_81 = arith.constant 0 : index
    %c0_82 = arith.constant 0 : index
    %c0_83 = arith.constant 0 : index
    %78 = vector.load %arg17[%c0_80, %c0_81, %c0_82, %c0_83] : memref<8x8x8x64xf32, #tpu.memory_space<vmem>>, vector<8x8x8x64xf32>
    tpu.vector_store %arg17[%c0_80, %c0_81, %c0_82, %c0_83], %77 {strides = array<i32>} : memref<8x8x8x64xf32, #tpu.memory_space<vmem>>, vector<8x8x8x64xf32>,
    %c1_84 = arith.constant 1 : index
    %c1_85 = arith.constant 1 : index
    %c0_86 = arith.constant 0 : index
    %c0_87 = arith.constant 0 : index
    %79 = vector.load %arg17[%c1_84, %c1_85, %c0_86, %c0_87] : memref<8x8x8x64xf32, #tpu.memory_space<vmem>>, vector<6x6x8x64xf32>
    tpu.vector_store %arg17[%c1_84, %c1_85, %c0_86, %c0_87], %76 {strides = array<i32>} : memref<8x8x8x64xf32, #tpu.memory_space<vmem>>, vector<6x6x8x64xf32>,
    %c0_88 = arith.constant 0 : index
    %c0_89 = arith.constant 0 : index
    %c0_90 = arith.constant 0 : index
    %c0_91 = arith.constant 0 : index
    %80 = vector.load %arg17[%c0_88, %c0_89, %c0_90, %c0_91] : memref<8x8x8x64xf32, #tpu.memory_space<vmem>>, vector<7x7x8x64xf32>
    %81 = vector.shape_cast %80 : vector<7x7x8x64xf32> to vector<392x64xf32>
    %82 = arith.truncf %81 : vector<392x64xf32> to vector<392x64xbf16>
    %c0_92 = arith.constant 0 : index
    %c0_93 = arith.constant 0 : index
    %c0_94 = arith.constant 0 : index
    %83 = vector.load %arg6[%c0_92, %c0_93, %c0_94] : memref<4x64x128xbf16, #tpu.memory_space<vmem>>, vector<1x64x128xbf16>
    %84 = vector.shape_cast %83 : vector<1x64x128xbf16> to vector<64x128xbf16>
    %cst_95 = arith.constant dense<0.000000e+00> : vector<392x128xf32>
    %85 = tpu.matmul %82, %84, %cst_95 {dimension_numbers = #tpu.dot_dimension_numbers<[1], [0], [0], [1], [0, 0, 1, 1], [], []>} : vector<392x64xbf16>, vector<64x128xbf16>, vector<392x128xf32> -> vector<392x128xf32>
    %c0_96 = arith.constant 0 : index
    %c1_97 = arith.constant 1 : index
    %c0_98 = arith.constant 0 : index
    %c0_99 = arith.constant 0 : index
    %86 = vector.load %arg17[%c0_96, %c1_97, %c0_98, %c0_99] : memref<8x8x8x64xf32, #tpu.memory_space<vmem>>, vector<7x7x8x64xf32>
    %87 = vector.shape_cast %86 : vector<7x7x8x64xf32> to vector<392x64xf32>
    %88 = arith.truncf %87 : vector<392x64xf32> to vector<392x64xbf16>
    %c1_100 = arith.constant 1 : index
    %c0_101 = arith.constant 0 : index
    %c0_102 = arith.constant 0 : index
    %89 = vector.load %arg6[%c1_100, %c0_101, %c0_102] : memref<4x64x128xbf16, #tpu.memory_space<vmem>>, vector<1x64x128xbf16>
    %90 = vector.shape_cast %89 : vector<1x64x128xbf16> to vector<64x128xbf16>
    %cst_103 = arith.constant dense<0.000000e+00> : vector<392x128xf32>
    %91 = tpu.matmul %88, %90, %cst_103 {dimension_numbers = #tpu.dot_dimension_numbers<[1], [0], [0], [1], [0, 0, 1, 1], [], []>} : vector<392x64xbf16>, vector<64x128xbf16>, vector<392x128xf32> -> vector<392x128xf32>
    %92 = arith.addf %85, %91 : vector<392x128xf32>
    %c1_104 = arith.constant 1 : index
    %c0_105 = arith.constant 0 : index
    %c0_106 = arith.constant 0 : index
    %c0_107 = arith.constant 0 : index
    %93 = vector.load %arg17[%c1_104, %c0_105, %c0_106, %c0_107] : memref<8x8x8x64xf32, #tpu.memory_space<vmem>>, vector<7x7x8x64xf32>
    %94 = vector.shape_cast %93 : vector<7x7x8x64xf32> to vector<392x64xf32>
    %95 = arith.truncf %94 : vector<392x64xf32> to vector<392x64xbf16>
    %c2_108 = arith.constant 2 : index
    %c0_109 = arith.constant 0 : index
    %c0_110 = arith.constant 0 : index
    %96 = vector.load %arg6[%c2_108, %c0_109, %c0_110] : memref<4x64x128xbf16, #tpu.memory_space<vmem>>, vector<1x64x128xbf16>
    %97 = vector.shape_cast %96 : vector<1x64x128xbf16> to vector<64x128xbf16>
    %cst_111 = arith.constant dense<0.000000e+00> : vector<392x128xf32>
    %98 = tpu.matmul %95, %97, %cst_111 {dimension_numbers = #tpu.dot_dimension_numbers<[1], [0], [0], [1], [0, 0, 1, 1], [], []>} : vector<392x64xbf16>, vector<64x128xbf16>, vector<392x128xf32> -> vector<392x128xf32>
    %99 = arith.addf %92, %98 : vector<392x128xf32>
    %c1_112 = arith.constant 1 : index
    %c1_113 = arith.constant 1 : index
    %c0_114 = arith.constant 0 : index
    %c0_115 = arith.constant 0 : index
    %100 = vector.load %arg17[%c1_112, %c1_113, %c0_114, %c0_115] : memref<8x8x8x64xf32, #tpu.memory_space<vmem>>, vector<7x7x8x64xf32>
    %101 = vector.shape_cast %100 : vector<7x7x8x64xf32> to vector<392x64xf32>
    %102 = arith.truncf %101 : vector<392x64xf32> to vector<392x64xbf16>
    %c3_116 = arith.constant 3 : index
    %c0_117 = arith.constant 0 : index
    %c0_118 = arith.constant 0 : index
    %103 = vector.load %arg6[%c3_116, %c0_117, %c0_118] : memref<4x64x128xbf16, #tpu.memory_space<vmem>>, vector<1x64x128xbf16>
    %104 = vector.shape_cast %103 : vector<1x64x128xbf16> to vector<64x128xbf16>
    %cst_119 = arith.constant dense<0.000000e+00> : vector<392x128xf32>
    %105 = tpu.matmul %102, %104, %cst_119 {dimension_numbers = #tpu.dot_dimension_numbers<[1], [0], [0], [1], [0, 0, 1, 1], [], []>} : vector<392x64xbf16>, vector<64x128xbf16>, vector<392x128xf32> -> vector<392x128xf32>
    %106 = arith.addf %99, %105 : vector<392x128xf32>
    %c0_120 = arith.constant 0 : index
    %c0_121 = arith.constant 0 : index
    %107 = vector.load %arg7[%c0_120, %c0_121] : memref<1x128xf32, #tpu.memory_space<vmem>>, vector<1x128xf32>
    %108 = vector.broadcast %107 : vector<1x128xf32> to vector<392x128xf32>
    %109 = arith.addf %106, %108 : vector<392x128xf32>
    %cst_122 = arith.constant 0.000000e+00 : f32
    %110 = vector.broadcast %cst_122 : f32 to vector<392x128xf32>
    %111 = arith.maximumf %109, %110 : vector<392x128xf32>
    %112 = vector.shape_cast %111 : vector<392x128xf32> to vector<7x7x8x128xf32>
    %c0_123 = arith.constant 0 : index
    %c0_124 = arith.constant 0 : index
    %c0_125 = arith.constant 0 : index
    %c0_126 = arith.constant 0 : index
    %113 = vector.load %arg18[%c0_123, %c0_124, %c0_125, %c0_126] : memref<7x7x8x128xf32, #tpu.memory_space<vmem>>, vector<7x7x8x128xf32>
    tpu.vector_store %arg18[%c0_123, %c0_124, %c0_125, %c0_126], %112 {strides = array<i32>} : memref<7x7x8x128xf32, #tpu.memory_space<vmem>>, vector<7x7x8x128xf32>,
    %c0_127 = arith.constant 0 : index
    %c0_128 = arith.constant 0 : index
    %c0_129 = arith.constant 0 : index
    %c0_130 = arith.constant 0 : index
    %114 = vector.load %arg18[%c0_127, %c0_128, %c0_129, %c0_130] : memref<7x7x8x128xf32, #tpu.memory_space<vmem>>, vector<1x1x8x128xf32>
    %115 = vector.shape_cast %114 : vector<1x1x8x128xf32> to vector<8x128xf32>
    %116 = arith.truncf %115 : vector<8x128xf32> to vector<8x128xbf16>
    %c0_131 = arith.constant 0 : index
    %c0_132 = arith.constant 0 : index
    %c0_133 = arith.constant 0 : index
    %c0_134 = arith.constant 0 : index
    %117 = vector.load %arg8[%c0_131, %c0_132, %c0_133, %c0_134] : memref<7x7x128x32xbf16, #tpu.memory_space<vmem>>, vector<1x1x128x32xbf16>
    %118 = vector.shape_cast %117 : vector<1x1x128x32xbf16> to vector<128x32xbf16>
    %cst_135 = arith.constant dense<0.000000e+00> : vector<8x32xf32>
    %119 = tpu.matmul %116, %118, %cst_135 {dimension_numbers = #tpu.dot_dimension_numbers<[1], [0], [0], [1], [0, 0, 1, 1], [], []>} : vector<8x128xbf16>, vector<128x32xbf16>, vector<8x32xf32> -> vector<8x32xf32>
    %c0_136 = arith.constant 0 : index
    %c1_137 = arith.constant 1 : index
    %c0_138 = arith.constant 0 : index
    %c0_139 = arith.constant 0 : index
    %120 = vector.load %arg18[%c0_136, %c1_137, %c0_138, %c0_139] : memref<7x7x8x128xf32, #tpu.memory_space<vmem>>, vector<1x1x8x128xf32>
    %121 = vector.shape_cast %120 : vector<1x1x8x128xf32> to vector<8x128xf32>
    %122 = arith.truncf %121 : vector<8x128xf32> to vector<8x128xbf16>
    %c0_140 = arith.constant 0 : index
    %c1_141 = arith.constant 1 : index
    %c0_142 = arith.constant 0 : index
    %c0_143 = arith.constant 0 : index
    %123 = vector.load %arg8[%c0_140, %c1_141, %c0_142, %c0_143] : memref<7x7x128x32xbf16, #tpu.memory_space<vmem>>, vector<1x1x128x32xbf16>
    %124 = vector.shape_cast %123 : vector<1x1x128x32xbf16> to vector<128x32xbf16>
    %cst_144 = arith.constant dense<0.000000e+00> : vector<8x32xf32>
    %125 = tpu.matmul %122, %124, %cst_144 {dimension_numbers = #tpu.dot_dimension_numbers<[1], [0], [0], [1], [0, 0, 1, 1], [], []>} : vector<8x128xbf16>, vector<128x32xbf16>, vector<8x32xf32> -> vector<8x32xf32>
    %126 = arith.addf %119, %125 : vector<8x32xf32>
    %c0_145 = arith.constant 0 : index
    %c2_146 = arith.constant 2 : index
    %c0_147 = arith.constant 0 : index
    %c0_148 = arith.constant 0 : index
    %127 = vector.load %arg18[%c0_145, %c2_146, %c0_147, %c0_148] : memref<7x7x8x128xf32, #tpu.memory_space<vmem>>, vector<1x1x8x128xf32>
    %128 = vector.shape_cast %127 : vector<1x1x8x128xf32> to vector<8x128xf32>
    %129 = arith.truncf %128 : vector<8x128xf32> to vector<8x128xbf16>
    %c0_149 = arith.constant 0 : index
    %c2_150 = arith.constant 2 : index
    %c0_151 = arith.constant 0 : index
    %c0_152 = arith.constant 0 : index
    %130 = vector.load %arg8[%c0_149, %c2_150, %c0_151, %c0_152] : memref<7x7x128x32xbf16, #tpu.memory_space<vmem>>, vector<1x1x128x32xbf16>
    %131 = vector.shape_cast %130 : vector<1x1x128x32xbf16> to vector<128x32xbf16>
    %cst_153 = arith.constant dense<0.000000e+00> : vector<8x32xf32>
    %132 = tpu.matmul %129, %131, %cst_153 {dimension_numbers = #tpu.dot_dimension_numbers<[1], [0], [0], [1], [0, 0, 1, 1], [], []>} : vector<8x128xbf16>, vector<128x32xbf16>, vector<8x32xf32> -> vector<8x32xf32>
    %133 = arith.addf %126, %132 : vector<8x32xf32>
    %c0_154 = arith.constant 0 : index
    %c3_155 = arith.constant 3 : index
    %c0_156 = arith.constant 0 : index
    %c0_157 = arith.constant 0 : index
    %134 = vector.load %arg18[%c0_154, %c3_155, %c0_156, %c0_157] : memref<7x7x8x128xf32, #tpu.memory_space<vmem>>, vector<1x1x8x128xf32>
    %135 = vector.shape_cast %134 : vector<1x1x8x128xf32> to vector<8x128xf32>
    %136 = arith.truncf %135 : vector<8x128xf32> to vector<8x128xbf16>
    %c0_158 = arith.constant 0 : index
    %c3_159 = arith.constant 3 : index
    %c0_160 = arith.constant 0 : index
    %c0_161 = arith.constant 0 : index
    %137 = vector.load %arg8[%c0_158, %c3_159, %c0_160, %c0_161] : memref<7x7x128x32xbf16, #tpu.memory_space<vmem>>, vector<1x1x128x32xbf16>
    %138 = vector.shape_cast %137 : vector<1x1x128x32xbf16> to vector<128x32xbf16>
    %cst_162 = arith.constant dense<0.000000e+00> : vector<8x32xf32>
    %139 = tpu.matmul %136, %138, %cst_162 {dimension_numbers = #tpu.dot_dimension_numbers<[1], [0], [0], [1], [0, 0, 1, 1], [], []>} : vector<8x128xbf16>, vector<128x32xbf16>, vector<8x32xf32> -> vector<8x32xf32>
    %140 = arith.addf %133, %139 : vector<8x32xf32>
    %c0_163 = arith.constant 0 : index
    %c4 = arith.constant 4 : index
    %c0_164 = arith.constant 0 : index
    %c0_165 = arith.constant 0 : index
    %141 = vector.load %arg18[%c0_163, %c4, %c0_164, %c0_165] : memref<7x7x8x128xf32, #tpu.memory_space<vmem>>, vector<1x1x8x128xf32>
    %142 = vector.shape_cast %141 : vector<1x1x8x128xf32> to vector<8x128xf32>
    %143 = arith.truncf %142 : vector<8x128xf32> to vector<8x128xbf16>
    %c0_166 = arith.constant 0 : index
    %c4_167 = arith.constant 4 : index
    %c0_168 = arith.constant 0 : index
    %c0_169 = arith.constant 0 : index
    %144 = vector.load %arg8[%c0_166, %c4_167, %c0_168, %c0_169] : memref<7x7x128x32xbf16, #tpu.memory_space<vmem>>, vector<1x1x128x32xbf16>
    %145 = vector.shape_cast %144 : vector<1x1x128x32xbf16> to vector<128x32xbf16>
    %cst_170 = arith.constant dense<0.000000e+00> : vector<8x32xf32>
    %146 = tpu.matmul %143, %145, %cst_170 {dimension_numbers = #tpu.dot_dimension_numbers<[1], [0], [0], [1], [0, 0, 1, 1], [], []>} : vector<8x128xbf16>, vector<128x32xbf16>, vector<8x32xf32> -> vector<8x32xf32>
    %147 = arith.addf %140, %146 : vector<8x32xf32>
    %c0_171 = arith.constant 0 : index
    %c5 = arith.constant 5 : index
    %c0_172 = arith.constant 0 : index
    %c0_173 = arith.constant 0 : index
    %148 = vector.load %arg18[%c0_171, %c5, %c0_172, %c0_173] : memref<7x7x8x128xf32, #tpu.memory_space<vmem>>, vector<1x1x8x128xf32>
    %149 = vector.shape_cast %148 : vector<1x1x8x128xf32> to vector<8x128xf32>
    %150 = arith.truncf %149 : vector<8x128xf32> to vector<8x128xbf16>
    %c0_174 = arith.constant 0 : index
    %c5_175 = arith.constant 5 : index
    %c0_176 = arith.constant 0 : index
    %c0_177 = arith.constant 0 : index
    %151 = vector.load %arg8[%c0_174, %c5_175, %c0_176, %c0_177] : memref<7x7x128x32xbf16, #tpu.memory_space<vmem>>, vector<1x1x128x32xbf16>
    %152 = vector.shape_cast %151 : vector<1x1x128x32xbf16> to vector<128x32xbf16>
    %cst_178 = arith.constant dense<0.000000e+00> : vector<8x32xf32>
    %153 = tpu.matmul %150, %152, %cst_178 {dimension_numbers = #tpu.dot_dimension_numbers<[1], [0], [0], [1], [0, 0, 1, 1], [], []>} : vector<8x128xbf16>, vector<128x32xbf16>, vector<8x32xf32> -> vector<8x32xf32>
    %154 = arith.addf %147, %153 : vector<8x32xf32>
    %c0_179 = arith.constant 0 : index
    %c6 = arith.constant 6 : index
    %c0_180 = arith.constant 0 : index
    %c0_181 = arith.constant 0 : index
    %155 = vector.load %arg18[%c0_179, %c6, %c0_180, %c0_181] : memref<7x7x8x128xf32, #tpu.memory_space<vmem>>, vector<1x1x8x128xf32>
    %156 = vector.shape_cast %155 : vector<1x1x8x128xf32> to vector<8x128xf32>
    %157 = arith.truncf %156 : vector<8x128xf32> to vector<8x128xbf16>
    %c0_182 = arith.constant 0 : index
    %c6_183 = arith.constant 6 : index
    %c0_184 = arith.constant 0 : index
    %c0_185 = arith.constant 0 : index
    %158 = vector.load %arg8[%c0_182, %c6_183, %c0_184, %c0_185] : memref<7x7x128x32xbf16, #tpu.memory_space<vmem>>, vector<1x1x128x32xbf16>
    %159 = vector.shape_cast %158 : vector<1x1x128x32xbf16> to vector<128x32xbf16>
    %cst_186 = arith.constant dense<0.000000e+00> : vector<8x32xf32>
    %160 = tpu.matmul %157, %159, %cst_186 {dimension_numbers = #tpu.dot_dimension_numbers<[1], [0], [0], [1], [0, 0, 1, 1], [], []>} : vector<8x128xbf16>, vector<128x32xbf16>, vector<8x32xf32> -> vector<8x32xf32>
    %161 = arith.addf %154, %160 : vector<8x32xf32>
    %c1_187 = arith.constant 1 : index
    %c0_188 = arith.constant 0 : index
    %c0_189 = arith.constant 0 : index
    %c0_190 = arith.constant 0 : index
    %162 = vector.load %arg18[%c1_187, %c0_188, %c0_189, %c0_190] : memref<7x7x8x128xf32, #tpu.memory_space<vmem>>, vector<1x1x8x128xf32>
    %163 = vector.shape_cast %162 : vector<1x1x8x128xf32> to vector<8x128xf32>
    %164 = arith.truncf %163 : vector<8x128xf32> to vector<8x128xbf16>
    %c1_191 = arith.constant 1 : index
    %c0_192 = arith.constant 0 : index
    %c0_193 = arith.constant 0 : index
    %c0_194 = arith.constant 0 : index
    %165 = vector.load %arg8[%c1_191, %c0_192, %c0_193, %c0_194] : memref<7x7x128x32xbf16, #tpu.memory_space<vmem>>, vector<1x1x128x32xbf16>
    %166 = vector.shape_cast %165 : vector<1x1x128x32xbf16> to vector<128x32xbf16>
    %cst_195 = arith.constant dense<0.000000e+00> : vector<8x32xf32>
    %167 = tpu.matmul %164, %166, %cst_195 {dimension_numbers = #tpu.dot_dimension_numbers<[1], [0], [0], [1], [0, 0, 1, 1], [], []>} : vector<8x128xbf16>, vector<128x32xbf16>, vector<8x32xf32> -> vector<8x32xf32>
    %168 = arith.addf %161, %167 : vector<8x32xf32>
    %c1_196 = arith.constant 1 : index
    %c1_197 = arith.constant 1 : index
    %c0_198 = arith.constant 0 : index
    %c0_199 = arith.constant 0 : index
    %169 = vector.load %arg18[%c1_196, %c1_197, %c0_198, %c0_199] : memref<7x7x8x128xf32, #tpu.memory_space<vmem>>, vector<1x1x8x128xf32>
    %170 = vector.shape_cast %169 : vector<1x1x8x128xf32> to vector<8x128xf32>
    %171 = arith.truncf %170 : vector<8x128xf32> to vector<8x128xbf16>
    %c1_200 = arith.constant 1 : index
    %c1_201 = arith.constant 1 : index
    %c0_202 = arith.constant 0 : index
    %c0_203 = arith.constant 0 : index
    %172 = vector.load %arg8[%c1_200, %c1_201, %c0_202, %c0_203] : memref<7x7x128x32xbf16, #tpu.memory_space<vmem>>, vector<1x1x128x32xbf16>
    %173 = vector.shape_cast %172 : vector<1x1x128x32xbf16> to vector<128x32xbf16>
    %cst_204 = arith.constant dense<0.000000e+00> : vector<8x32xf32>
    %174 = tpu.matmul %171, %173, %cst_204 {dimension_numbers = #tpu.dot_dimension_numbers<[1], [0], [0], [1], [0, 0, 1, 1], [], []>} : vector<8x128xbf16>, vector<128x32xbf16>, vector<8x32xf32> -> vector<8x32xf32>
    %175 = arith.addf %168, %174 : vector<8x32xf32>
    %c1_205 = arith.constant 1 : index
    %c2_206 = arith.constant 2 : index
    %c0_207 = arith.constant 0 : index
    %c0_208 = arith.constant 0 : index
    %176 = vector.load %arg18[%c1_205, %c2_206, %c0_207, %c0_208] : memref<7x7x8x128xf32, #tpu.memory_space<vmem>>, vector<1x1x8x128xf32>
    %177 = vector.shape_cast %176 : vector<1x1x8x128xf32> to vector<8x128xf32>
    %178 = arith.truncf %177 : vector<8x128xf32> to vector<8x128xbf16>
    %c1_209 = arith.constant 1 : index
    %c2_210 = arith.constant 2 : index
    %c0_211 = arith.constant 0 : index
    %c0_212 = arith.constant 0 : index
    %179 = vector.load %arg8[%c1_209, %c2_210, %c0_211, %c0_212] : memref<7x7x128x32xbf16, #tpu.memory_space<vmem>>, vector<1x1x128x32xbf16>
    %180 = vector.shape_cast %179 : vector<1x1x128x32xbf16> to vector<128x32xbf16>
    %cst_213 = arith.constant dense<0.000000e+00> : vector<8x32xf32>
    %181 = tpu.matmul %178, %180, %cst_213 {dimension_numbers = #tpu.dot_dimension_numbers<[1], [0], [0], [1], [0, 0, 1, 1], [], []>} : vector<8x128xbf16>, vector<128x32xbf16>, vector<8x32xf32> -> vector<8x32xf32>
    %182 = arith.addf %175, %181 : vector<8x32xf32>
    %c1_214 = arith.constant 1 : index
    %c3_215 = arith.constant 3 : index
    %c0_216 = arith.constant 0 : index
    %c0_217 = arith.constant 0 : index
    %183 = vector.load %arg18[%c1_214, %c3_215, %c0_216, %c0_217] : memref<7x7x8x128xf32, #tpu.memory_space<vmem>>, vector<1x1x8x128xf32>
    %184 = vector.shape_cast %183 : vector<1x1x8x128xf32> to vector<8x128xf32>
    %185 = arith.truncf %184 : vector<8x128xf32> to vector<8x128xbf16>
    %c1_218 = arith.constant 1 : index
    %c3_219 = arith.constant 3 : index
    %c0_220 = arith.constant 0 : index
    %c0_221 = arith.constant 0 : index
    %186 = vector.load %arg8[%c1_218, %c3_219, %c0_220, %c0_221] : memref<7x7x128x32xbf16, #tpu.memory_space<vmem>>, vector<1x1x128x32xbf16>
    %187 = vector.shape_cast %186 : vector<1x1x128x32xbf16> to vector<128x32xbf16>
    %cst_222 = arith.constant dense<0.000000e+00> : vector<8x32xf32>
    %188 = tpu.matmul %185, %187, %cst_222 {dimension_numbers = #tpu.dot_dimension_numbers<[1], [0], [0], [1], [0, 0, 1, 1], [], []>} : vector<8x128xbf16>, vector<128x32xbf16>, vector<8x32xf32> -> vector<8x32xf32>
    %189 = arith.addf %182, %188 : vector<8x32xf32>
    %c1_223 = arith.constant 1 : index
    %c4_224 = arith.constant 4 : index
    %c0_225 = arith.constant 0 : index
    %c0_226 = arith.constant 0 : index
    %190 = vector.load %arg18[%c1_223, %c4_224, %c0_225, %c0_226] : memref<7x7x8x128xf32, #tpu.memory_space<vmem>>, vector<1x1x8x128xf32>
    %191 = vector.shape_cast %190 : vector<1x1x8x128xf32> to vector<8x128xf32>
    %192 = arith.truncf %191 : vector<8x128xf32> to vector<8x128xbf16>
    %c1_227 = arith.constant 1 : index
    %c4_228 = arith.constant 4 : index
    %c0_229 = arith.constant 0 : index
    %c0_230 = arith.constant 0 : index
    %193 = vector.load %arg8[%c1_227, %c4_228, %c0_229, %c0_230] : memref<7x7x128x32xbf16, #tpu.memory_space<vmem>>, vector<1x1x128x32xbf16>
    %194 = vector.shape_cast %193 : vector<1x1x128x32xbf16> to vector<128x32xbf16>
    %cst_231 = arith.constant dense<0.000000e+00> : vector<8x32xf32>
    %195 = tpu.matmul %192, %194, %cst_231 {dimension_numbers = #tpu.dot_dimension_numbers<[1], [0], [0], [1], [0, 0, 1, 1], [], []>} : vector<8x128xbf16>, vector<128x32xbf16>, vector<8x32xf32> -> vector<8x32xf32>
    %196 = arith.addf %189, %195 : vector<8x32xf32>
    %c1_232 = arith.constant 1 : index
    %c5_233 = arith.constant 5 : index
    %c0_234 = arith.constant 0 : index
    %c0_235 = arith.constant 0 : index
    %197 = vector.load %arg18[%c1_232, %c5_233, %c0_234, %c0_235] : memref<7x7x8x128xf32, #tpu.memory_space<vmem>>, vector<1x1x8x128xf32>
    %198 = vector.shape_cast %197 : vector<1x1x8x128xf32> to vector<8x128xf32>
    %199 = arith.truncf %198 : vector<8x128xf32> to vector<8x128xbf16>
    %c1_236 = arith.constant 1 : index
    %c5_237 = arith.constant 5 : index
    %c0_238 = arith.constant 0 : index
    %c0_239 = arith.constant 0 : index
    %200 = vector.load %arg8[%c1_236, %c5_237, %c0_238, %c0_239] : memref<7x7x128x32xbf16, #tpu.memory_space<vmem>>, vector<1x1x128x32xbf16>
    %201 = vector.shape_cast %200 : vector<1x1x128x32xbf16> to vector<128x32xbf16>
    %cst_240 = arith.constant dense<0.000000e+00> : vector<8x32xf32>
    %202 = tpu.matmul %199, %201, %cst_240 {dimension_numbers = #tpu.dot_dimension_numbers<[1], [0], [0], [1], [0, 0, 1, 1], [], []>} : vector<8x128xbf16>, vector<128x32xbf16>, vector<8x32xf32> -> vector<8x32xf32>
    %203 = arith.addf %196, %202 : vector<8x32xf32>
    %c1_241 = arith.constant 1 : index
    %c6_242 = arith.constant 6 : index
    %c0_243 = arith.constant 0 : index
    %c0_244 = arith.constant 0 : index
    %204 = vector.load %arg18[%c1_241, %c6_242, %c0_243, %c0_244] : memref<7x7x8x128xf32, #tpu.memory_space<vmem>>, vector<1x1x8x128xf32>
    %205 = vector.shape_cast %204 : vector<1x1x8x128xf32> to vector<8x128xf32>
    %206 = arith.truncf %205 : vector<8x128xf32> to vector<8x128xbf16>
    %c1_245 = arith.constant 1 : index
    %c6_246 = arith.constant 6 : index
    %c0_247 = arith.constant 0 : index
    %c0_248 = arith.constant 0 : index
    %207 = vector.load %arg8[%c1_245, %c6_246, %c0_247, %c0_248] : memref<7x7x128x32xbf16, #tpu.memory_space<vmem>>, vector<1x1x128x32xbf16>
    %208 = vector.shape_cast %207 : vector<1x1x128x32xbf16> to vector<128x32xbf16>
    %cst_249 = arith.constant dense<0.000000e+00> : vector<8x32xf32>
    %209 = tpu.matmul %206, %208, %cst_249 {dimension_numbers = #tpu.dot_dimension_numbers<[1], [0], [0], [1], [0, 0, 1, 1], [], []>} : vector<8x128xbf16>, vector<128x32xbf16>, vector<8x32xf32> -> vector<8x32xf32>
    %210 = arith.addf %203, %209 : vector<8x32xf32>
    %c2_250 = arith.constant 2 : index
    %c0_251 = arith.constant 0 : index
    %c0_252 = arith.constant 0 : index
    %c0_253 = arith.constant 0 : index
    %211 = vector.load %arg18[%c2_250, %c0_251, %c0_252, %c0_253] : memref<7x7x8x128xf32, #tpu.memory_space<vmem>>, vector<1x1x8x128xf32>
    %212 = vector.shape_cast %211 : vector<1x1x8x128xf32> to vector<8x128xf32>
    %213 = arith.truncf %212 : vector<8x128xf32> to vector<8x128xbf16>
    %c2_254 = arith.constant 2 : index
    %c0_255 = arith.constant 0 : index
    %c0_256 = arith.constant 0 : index
    %c0_257 = arith.constant 0 : index
    %214 = vector.load %arg8[%c2_254, %c0_255, %c0_256, %c0_257] : memref<7x7x128x32xbf16, #tpu.memory_space<vmem>>, vector<1x1x128x32xbf16>
    %215 = vector.shape_cast %214 : vector<1x1x128x32xbf16> to vector<128x32xbf16>
    %cst_258 = arith.constant dense<0.000000e+00> : vector<8x32xf32>
    %216 = tpu.matmul %213, %215, %cst_258 {dimension_numbers = #tpu.dot_dimension_numbers<[1], [0], [0], [1], [0, 0, 1, 1], [], []>} : vector<8x128xbf16>, vector<128x32xbf16>, vector<8x32xf32> -> vector<8x32xf32>
    %217 = arith.addf %210, %216 : vector<8x32xf32>
    %c2_259 = arith.constant 2 : index
    %c1_260 = arith.constant 1 : index
    %c0_261 = arith.constant 0 : index
    %c0_262 = arith.constant 0 : index
    %218 = vector.load %arg18[%c2_259, %c1_260, %c0_261, %c0_262] : memref<7x7x8x128xf32, #tpu.memory_space<vmem>>, vector<1x1x8x128xf32>
    %219 = vector.shape_cast %218 : vector<1x1x8x128xf32> to vector<8x128xf32>
    %220 = arith.truncf %219 : vector<8x128xf32> to vector<8x128xbf16>
    %c2_263 = arith.constant 2 : index
    %c1_264 = arith.constant 1 : index
    %c0_265 = arith.constant 0 : index
    %c0_266 = arith.constant 0 : index
    %221 = vector.load %arg8[%c2_263, %c1_264, %c0_265, %c0_266] : memref<7x7x128x32xbf16, #tpu.memory_space<vmem>>, vector<1x1x128x32xbf16>
    %222 = vector.shape_cast %221 : vector<1x1x128x32xbf16> to vector<128x32xbf16>
    %cst_267 = arith.constant dense<0.000000e+00> : vector<8x32xf32>
    %223 = tpu.matmul %220, %222, %cst_267 {dimension_numbers = #tpu.dot_dimension_numbers<[1], [0], [0], [1], [0, 0, 1, 1], [], []>} : vector<8x128xbf16>, vector<128x32xbf16>, vector<8x32xf32> -> vector<8x32xf32>
    %224 = arith.addf %217, %223 : vector<8x32xf32>
    %c2_268 = arith.constant 2 : index
    %c2_269 = arith.constant 2 : index
    %c0_270 = arith.constant 0 : index
    %c0_271 = arith.constant 0 : index
    %225 = vector.load %arg18[%c2_268, %c2_269, %c0_270, %c0_271] : memref<7x7x8x128xf32, #tpu.memory_space<vmem>>, vector<1x1x8x128xf32>
    %226 = vector.shape_cast %225 : vector<1x1x8x128xf32> to vector<8x128xf32>
    %227 = arith.truncf %226 : vector<8x128xf32> to vector<8x128xbf16>
    %c2_272 = arith.constant 2 : index
    %c2_273 = arith.constant 2 : index
    %c0_274 = arith.constant 0 : index
    %c0_275 = arith.constant 0 : index
    %228 = vector.load %arg8[%c2_272, %c2_273, %c0_274, %c0_275] : memref<7x7x128x32xbf16, #tpu.memory_space<vmem>>, vector<1x1x128x32xbf16>
    %229 = vector.shape_cast %228 : vector<1x1x128x32xbf16> to vector<128x32xbf16>
    %cst_276 = arith.constant dense<0.000000e+00> : vector<8x32xf32>
    %230 = tpu.matmul %227, %229, %cst_276 {dimension_numbers = #tpu.dot_dimension_numbers<[1], [0], [0], [1], [0, 0, 1, 1], [], []>} : vector<8x128xbf16>, vector<128x32xbf16>, vector<8x32xf32> -> vector<8x32xf32>
    %231 = arith.addf %224, %230 : vector<8x32xf32>
    %c2_277 = arith.constant 2 : index
    %c3_278 = arith.constant 3 : index
    %c0_279 = arith.constant 0 : index
    %c0_280 = arith.constant 0 : index
    %232 = vector.load %arg18[%c2_277, %c3_278, %c0_279, %c0_280] : memref<7x7x8x128xf32, #tpu.memory_space<vmem>>, vector<1x1x8x128xf32>
    %233 = vector.shape_cast %232 : vector<1x1x8x128xf32> to vector<8x128xf32>
    %234 = arith.truncf %233 : vector<8x128xf32> to vector<8x128xbf16>
    %c2_281 = arith.constant 2 : index
    %c3_282 = arith.constant 3 : index
    %c0_283 = arith.constant 0 : index
    %c0_284 = arith.constant 0 : index
    %235 = vector.load %arg8[%c2_281, %c3_282, %c0_283, %c0_284] : memref<7x7x128x32xbf16, #tpu.memory_space<vmem>>, vector<1x1x128x32xbf16>
    %236 = vector.shape_cast %235 : vector<1x1x128x32xbf16> to vector<128x32xbf16>
    %cst_285 = arith.constant dense<0.000000e+00> : vector<8x32xf32>
    %237 = tpu.matmul %234, %236, %cst_285 {dimension_numbers = #tpu.dot_dimension_numbers<[1], [0], [0], [1], [0, 0, 1, 1], [], []>} : vector<8x128xbf16>, vector<128x32xbf16>, vector<8x32xf32> -> vector<8x32xf32>
    %238 = arith.addf %231, %237 : vector<8x32xf32>
    %c2_286 = arith.constant 2 : index
    %c4_287 = arith.constant 4 : index
    %c0_288 = arith.constant 0 : index
    %c0_289 = arith.constant 0 : index
    %239 = vector.load %arg18[%c2_286, %c4_287, %c0_288, %c0_289] : memref<7x7x8x128xf32, #tpu.memory_space<vmem>>, vector<1x1x8x128xf32>
    %240 = vector.shape_cast %239 : vector<1x1x8x128xf32> to vector<8x128xf32>
    %241 = arith.truncf %240 : vector<8x128xf32> to vector<8x128xbf16>
    %c2_290 = arith.constant 2 : index
    %c4_291 = arith.constant 4 : index
    %c0_292 = arith.constant 0 : index
    %c0_293 = arith.constant 0 : index
    %242 = vector.load %arg8[%c2_290, %c4_291, %c0_292, %c0_293] : memref<7x7x128x32xbf16, #tpu.memory_space<vmem>>, vector<1x1x128x32xbf16>
    %243 = vector.shape_cast %242 : vector<1x1x128x32xbf16> to vector<128x32xbf16>
    %cst_294 = arith.constant dense<0.000000e+00> : vector<8x32xf32>
    %244 = tpu.matmul %241, %243, %cst_294 {dimension_numbers = #tpu.dot_dimension_numbers<[1], [0], [0], [1], [0, 0, 1, 1], [], []>} : vector<8x128xbf16>, vector<128x32xbf16>, vector<8x32xf32> -> vector<8x32xf32>
    %245 = arith.addf %238, %244 : vector<8x32xf32>
    %c2_295 = arith.constant 2 : index
    %c5_296 = arith.constant 5 : index
    %c0_297 = arith.constant 0 : index
    %c0_298 = arith.constant 0 : index
    %246 = vector.load %arg18[%c2_295, %c5_296, %c0_297, %c0_298] : memref<7x7x8x128xf32, #tpu.memory_space<vmem>>, vector<1x1x8x128xf32>
    %247 = vector.shape_cast %246 : vector<1x1x8x128xf32> to vector<8x128xf32>
    %248 = arith.truncf %247 : vector<8x128xf32> to vector<8x128xbf16>
    %c2_299 = arith.constant 2 : index
    %c5_300 = arith.constant 5 : index
    %c0_301 = arith.constant 0 : index
    %c0_302 = arith.constant 0 : index
    %249 = vector.load %arg8[%c2_299, %c5_300, %c0_301, %c0_302] : memref<7x7x128x32xbf16, #tpu.memory_space<vmem>>, vector<1x1x128x32xbf16>
    %250 = vector.shape_cast %249 : vector<1x1x128x32xbf16> to vector<128x32xbf16>
    %cst_303 = arith.constant dense<0.000000e+00> : vector<8x32xf32>
    %251 = tpu.matmul %248, %250, %cst_303 {dimension_numbers = #tpu.dot_dimension_numbers<[1], [0], [0], [1], [0, 0, 1, 1], [], []>} : vector<8x128xbf16>, vector<128x32xbf16>, vector<8x32xf32> -> vector<8x32xf32>
    %252 = arith.addf %245, %251 : vector<8x32xf32>
    %c2_304 = arith.constant 2 : index
    %c6_305 = arith.constant 6 : index
    %c0_306 = arith.constant 0 : index
    %c0_307 = arith.constant 0 : index
    %253 = vector.load %arg18[%c2_304, %c6_305, %c0_306, %c0_307] : memref<7x7x8x128xf32, #tpu.memory_space<vmem>>, vector<1x1x8x128xf32>
    %254 = vector.shape_cast %253 : vector<1x1x8x128xf32> to vector<8x128xf32>
    %255 = arith.truncf %254 : vector<8x128xf32> to vector<8x128xbf16>
    %c2_308 = arith.constant 2 : index
    %c6_309 = arith.constant 6 : index
    %c0_310 = arith.constant 0 : index
    %c0_311 = arith.constant 0 : index
    %256 = vector.load %arg8[%c2_308, %c6_309, %c0_310, %c0_311] : memref<7x7x128x32xbf16, #tpu.memory_space<vmem>>, vector<1x1x128x32xbf16>
    %257 = vector.shape_cast %256 : vector<1x1x128x32xbf16> to vector<128x32xbf16>
    %cst_312 = arith.constant dense<0.000000e+00> : vector<8x32xf32>
    %258 = tpu.matmul %255, %257, %cst_312 {dimension_numbers = #tpu.dot_dimension_numbers<[1], [0], [0], [1], [0, 0, 1, 1], [], []>} : vector<8x128xbf16>, vector<128x32xbf16>, vector<8x32xf32> -> vector<8x32xf32>
    %259 = arith.addf %252, %258 : vector<8x32xf32>
    %c3_313 = arith.constant 3 : index
    %c0_314 = arith.constant 0 : index
    %c0_315 = arith.constant 0 : index
    %c0_316 = arith.constant 0 : index
    %260 = vector.load %arg18[%c3_313, %c0_314, %c0_315, %c0_316] : memref<7x7x8x128xf32, #tpu.memory_space<vmem>>, vector<1x1x8x128xf32>
    %261 = vector.shape_cast %260 : vector<1x1x8x128xf32> to vector<8x128xf32>
    %262 = arith.truncf %261 : vector<8x128xf32> to vector<8x128xbf16>
    %c3_317 = arith.constant 3 : index
    %c0_318 = arith.constant 0 : index
    %c0_319 = arith.constant 0 : index
    %c0_320 = arith.constant 0 : index
    %263 = vector.load %arg8[%c3_317, %c0_318, %c0_319, %c0_320] : memref<7x7x128x32xbf16, #tpu.memory_space<vmem>>, vector<1x1x128x32xbf16>
    %264 = vector.shape_cast %263 : vector<1x1x128x32xbf16> to vector<128x32xbf16>
    %cst_321 = arith.constant dense<0.000000e+00> : vector<8x32xf32>
    %265 = tpu.matmul %262, %264, %cst_321 {dimension_numbers = #tpu.dot_dimension_numbers<[1], [0], [0], [1], [0, 0, 1, 1], [], []>} : vector<8x128xbf16>, vector<128x32xbf16>, vector<8x32xf32> -> vector<8x32xf32>
    %266 = arith.addf %259, %265 : vector<8x32xf32>
    %c3_322 = arith.constant 3 : index
    %c1_323 = arith.constant 1 : index
    %c0_324 = arith.constant 0 : index
    %c0_325 = arith.constant 0 : index
    %267 = vector.load %arg18[%c3_322, %c1_323, %c0_324, %c0_325] : memref<7x7x8x128xf32, #tpu.memory_space<vmem>>, vector<1x1x8x128xf32>
    %268 = vector.shape_cast %267 : vector<1x1x8x128xf32> to vector<8x128xf32>
    %269 = arith.truncf %268 : vector<8x128xf32> to vector<8x128xbf16>
    %c3_326 = arith.constant 3 : index
    %c1_327 = arith.constant 1 : index
    %c0_328 = arith.constant 0 : index
    %c0_329 = arith.constant 0 : index
    %270 = vector.load %arg8[%c3_326, %c1_327, %c0_328, %c0_329] : memref<7x7x128x32xbf16, #tpu.memory_space<vmem>>, vector<1x1x128x32xbf16>
    %271 = vector.shape_cast %270 : vector<1x1x128x32xbf16> to vector<128x32xbf16>
    %cst_330 = arith.constant dense<0.000000e+00> : vector<8x32xf32>
    %272 = tpu.matmul %269, %271, %cst_330 {dimension_numbers = #tpu.dot_dimension_numbers<[1], [0], [0], [1], [0, 0, 1, 1], [], []>} : vector<8x128xbf16>, vector<128x32xbf16>, vector<8x32xf32> -> vector<8x32xf32>
    %273 = arith.addf %266, %272 : vector<8x32xf32>
    %c3_331 = arith.constant 3 : index
    %c2_332 = arith.constant 2 : index
    %c0_333 = arith.constant 0 : index
    %c0_334 = arith.constant 0 : index
    %274 = vector.load %arg18[%c3_331, %c2_332, %c0_333, %c0_334] : memref<7x7x8x128xf32, #tpu.memory_space<vmem>>, vector<1x1x8x128xf32>
    %275 = vector.shape_cast %274 : vector<1x1x8x128xf32> to vector<8x128xf32>
    %276 = arith.truncf %275 : vector<8x128xf32> to vector<8x128xbf16>
    %c3_335 = arith.constant 3 : index
    %c2_336 = arith.constant 2 : index
    %c0_337 = arith.constant 0 : index
    %c0_338 = arith.constant 0 : index
    %277 = vector.load %arg8[%c3_335, %c2_336, %c0_337, %c0_338] : memref<7x7x128x32xbf16, #tpu.memory_space<vmem>>, vector<1x1x128x32xbf16>
    %278 = vector.shape_cast %277 : vector<1x1x128x32xbf16> to vector<128x32xbf16>
    %cst_339 = arith.constant dense<0.000000e+00> : vector<8x32xf32>
    %279 = tpu.matmul %276, %278, %cst_339 {dimension_numbers = #tpu.dot_dimension_numbers<[1], [0], [0], [1], [0, 0, 1, 1], [], []>} : vector<8x128xbf16>, vector<128x32xbf16>, vector<8x32xf32> -> vector<8x32xf32>
    %280 = arith.addf %273, %279 : vector<8x32xf32>
    %c3_340 = arith.constant 3 : index
    %c3_341 = arith.constant 3 : index
    %c0_342 = arith.constant 0 : index
    %c0_343 = arith.constant 0 : index
    %281 = vector.load %arg18[%c3_340, %c3_341, %c0_342, %c0_343] : memref<7x7x8x128xf32, #tpu.memory_space<vmem>>, vector<1x1x8x128xf32>
    %282 = vector.shape_cast %281 : vector<1x1x8x128xf32> to vector<8x128xf32>
    %283 = arith.truncf %282 : vector<8x128xf32> to vector<8x128xbf16>
    %c3_344 = arith.constant 3 : index
    %c3_345 = arith.constant 3 : index
    %c0_346 = arith.constant 0 : index
    %c0_347 = arith.constant 0 : index
    %284 = vector.load %arg8[%c3_344, %c3_345, %c0_346, %c0_347] : memref<7x7x128x32xbf16, #tpu.memory_space<vmem>>, vector<1x1x128x32xbf16>
    %285 = vector.shape_cast %284 : vector<1x1x128x32xbf16> to vector<128x32xbf16>
    %cst_348 = arith.constant dense<0.000000e+00> : vector<8x32xf32>
    %286 = tpu.matmul %283, %285, %cst_348 {dimension_numbers = #tpu.dot_dimension_numbers<[1], [0], [0], [1], [0, 0, 1, 1], [], []>} : vector<8x128xbf16>, vector<128x32xbf16>, vector<8x32xf32> -> vector<8x32xf32>
    %287 = arith.addf %280, %286 : vector<8x32xf32>
    %c3_349 = arith.constant 3 : index
    %c4_350 = arith.constant 4 : index
    %c0_351 = arith.constant 0 : index
    %c0_352 = arith.constant 0 : index
    %288 = vector.load %arg18[%c3_349, %c4_350, %c0_351, %c0_352] : memref<7x7x8x128xf32, #tpu.memory_space<vmem>>, vector<1x1x8x128xf32>
    %289 = vector.shape_cast %288 : vector<1x1x8x128xf32> to vector<8x128xf32>
    %290 = arith.truncf %289 : vector<8x128xf32> to vector<8x128xbf16>
    %c3_353 = arith.constant 3 : index
    %c4_354 = arith.constant 4 : index
    %c0_355 = arith.constant 0 : index
    %c0_356 = arith.constant 0 : index
    %291 = vector.load %arg8[%c3_353, %c4_354, %c0_355, %c0_356] : memref<7x7x128x32xbf16, #tpu.memory_space<vmem>>, vector<1x1x128x32xbf16>
    %292 = vector.shape_cast %291 : vector<1x1x128x32xbf16> to vector<128x32xbf16>
    %cst_357 = arith.constant dense<0.000000e+00> : vector<8x32xf32>
    %293 = tpu.matmul %290, %292, %cst_357 {dimension_numbers = #tpu.dot_dimension_numbers<[1], [0], [0], [1], [0, 0, 1, 1], [], []>} : vector<8x128xbf16>, vector<128x32xbf16>, vector<8x32xf32> -> vector<8x32xf32>
    %294 = arith.addf %287, %293 : vector<8x32xf32>
    %c3_358 = arith.constant 3 : index
    %c5_359 = arith.constant 5 : index
    %c0_360 = arith.constant 0 : index
    %c0_361 = arith.constant 0 : index
    %295 = vector.load %arg18[%c3_358, %c5_359, %c0_360, %c0_361] : memref<7x7x8x128xf32, #tpu.memory_space<vmem>>, vector<1x1x8x128xf32>
    %296 = vector.shape_cast %295 : vector<1x1x8x128xf32> to vector<8x128xf32>
    %297 = arith.truncf %296 : vector<8x128xf32> to vector<8x128xbf16>
    %c3_362 = arith.constant 3 : index
    %c5_363 = arith.constant 5 : index
    %c0_364 = arith.constant 0 : index
    %c0_365 = arith.constant 0 : index
    %298 = vector.load %arg8[%c3_362, %c5_363, %c0_364, %c0_365] : memref<7x7x128x32xbf16, #tpu.memory_space<vmem>>, vector<1x1x128x32xbf16>
    %299 = vector.shape_cast %298 : vector<1x1x128x32xbf16> to vector<128x32xbf16>
    %cst_366 = arith.constant dense<0.000000e+00> : vector<8x32xf32>
    %300 = tpu.matmul %297, %299, %cst_366 {dimension_numbers = #tpu.dot_dimension_numbers<[1], [0], [0], [1], [0, 0, 1, 1], [], []>} : vector<8x128xbf16>, vector<128x32xbf16>, vector<8x32xf32> -> vector<8x32xf32>
    %301 = arith.addf %294, %300 : vector<8x32xf32>
    %c3_367 = arith.constant 3 : index
    %c6_368 = arith.constant 6 : index
    %c0_369 = arith.constant 0 : index
    %c0_370 = arith.constant 0 : index
    %302 = vector.load %arg18[%c3_367, %c6_368, %c0_369, %c0_370] : memref<7x7x8x128xf32, #tpu.memory_space<vmem>>, vector<1x1x8x128xf32>
    %303 = vector.shape_cast %302 : vector<1x1x8x128xf32> to vector<8x128xf32>
    %304 = arith.truncf %303 : vector<8x128xf32> to vector<8x128xbf16>
    %c3_371 = arith.constant 3 : index
    %c6_372 = arith.constant 6 : index
    %c0_373 = arith.constant 0 : index
    %c0_374 = arith.constant 0 : index
    %305 = vector.load %arg8[%c3_371, %c6_372, %c0_373, %c0_374] : memref<7x7x128x32xbf16, #tpu.memory_space<vmem>>, vector<1x1x128x32xbf16>
    %306 = vector.shape_cast %305 : vector<1x1x128x32xbf16> to vector<128x32xbf16>
    %cst_375 = arith.constant dense<0.000000e+00> : vector<8x32xf32>
    %307 = tpu.matmul %304, %306, %cst_375 {dimension_numbers = #tpu.dot_dimension_numbers<[1], [0], [0], [1], [0, 0, 1, 1], [], []>} : vector<8x128xbf16>, vector<128x32xbf16>, vector<8x32xf32> -> vector<8x32xf32>
    %308 = arith.addf %301, %307 : vector<8x32xf32>
    %c4_376 = arith.constant 4 : index
    %c0_377 = arith.constant 0 : index
    %c0_378 = arith.constant 0 : index
    %c0_379 = arith.constant 0 : index
    %309 = vector.load %arg18[%c4_376, %c0_377, %c0_378, %c0_379] : memref<7x7x8x128xf32, #tpu.memory_space<vmem>>, vector<1x1x8x128xf32>
    %310 = vector.shape_cast %309 : vector<1x1x8x128xf32> to vector<8x128xf32>
    %311 = arith.truncf %310 : vector<8x128xf32> to vector<8x128xbf16>
    %c4_380 = arith.constant 4 : index
    %c0_381 = arith.constant 0 : index
    %c0_382 = arith.constant 0 : index
    %c0_383 = arith.constant 0 : index
    %312 = vector.load %arg8[%c4_380, %c0_381, %c0_382, %c0_383] : memref<7x7x128x32xbf16, #tpu.memory_space<vmem>>, vector<1x1x128x32xbf16>
    %313 = vector.shape_cast %312 : vector<1x1x128x32xbf16> to vector<128x32xbf16>
    %cst_384 = arith.constant dense<0.000000e+00> : vector<8x32xf32>
    %314 = tpu.matmul %311, %313, %cst_384 {dimension_numbers = #tpu.dot_dimension_numbers<[1], [0], [0], [1], [0, 0, 1, 1], [], []>} : vector<8x128xbf16>, vector<128x32xbf16>, vector<8x32xf32> -> vector<8x32xf32>
    %315 = arith.addf %308, %314 : vector<8x32xf32>
    %c4_385 = arith.constant 4 : index
    %c1_386 = arith.constant 1 : index
    %c0_387 = arith.constant 0 : index
    %c0_388 = arith.constant 0 : index
    %316 = vector.load %arg18[%c4_385, %c1_386, %c0_387, %c0_388] : memref<7x7x8x128xf32, #tpu.memory_space<vmem>>, vector<1x1x8x128xf32>
    %317 = vector.shape_cast %316 : vector<1x1x8x128xf32> to vector<8x128xf32>
    %318 = arith.truncf %317 : vector<8x128xf32> to vector<8x128xbf16>
    %c4_389 = arith.constant 4 : index
    %c1_390 = arith.constant 1 : index
    %c0_391 = arith.constant 0 : index
    %c0_392 = arith.constant 0 : index
    %319 = vector.load %arg8[%c4_389, %c1_390, %c0_391, %c0_392] : memref<7x7x128x32xbf16, #tpu.memory_space<vmem>>, vector<1x1x128x32xbf16>
    %320 = vector.shape_cast %319 : vector<1x1x128x32xbf16> to vector<128x32xbf16>
    %cst_393 = arith.constant dense<0.000000e+00> : vector<8x32xf32>
    %321 = tpu.matmul %318, %320, %cst_393 {dimension_numbers = #tpu.dot_dimension_numbers<[1], [0], [0], [1], [0, 0, 1, 1], [], []>} : vector<8x128xbf16>, vector<128x32xbf16>, vector<8x32xf32> -> vector<8x32xf32>
    %322 = arith.addf %315, %321 : vector<8x32xf32>
    %c4_394 = arith.constant 4 : index
    %c2_395 = arith.constant 2 : index
    %c0_396 = arith.constant 0 : index
    %c0_397 = arith.constant 0 : index
    %323 = vector.load %arg18[%c4_394, %c2_395, %c0_396, %c0_397] : memref<7x7x8x128xf32, #tpu.memory_space<vmem>>, vector<1x1x8x128xf32>
    %324 = vector.shape_cast %323 : vector<1x1x8x128xf32> to vector<8x128xf32>
    %325 = arith.truncf %324 : vector<8x128xf32> to vector<8x128xbf16>
    %c4_398 = arith.constant 4 : index
    %c2_399 = arith.constant 2 : index
    %c0_400 = arith.constant 0 : index
    %c0_401 = arith.constant 0 : index
    %326 = vector.load %arg8[%c4_398, %c2_399, %c0_400, %c0_401] : memref<7x7x128x32xbf16, #tpu.memory_space<vmem>>, vector<1x1x128x32xbf16>
    %327 = vector.shape_cast %326 : vector<1x1x128x32xbf16> to vector<128x32xbf16>
    %cst_402 = arith.constant dense<0.000000e+00> : vector<8x32xf32>
    %328 = tpu.matmul %325, %327, %cst_402 {dimension_numbers = #tpu.dot_dimension_numbers<[1], [0], [0], [1], [0, 0, 1, 1], [], []>} : vector<8x128xbf16>, vector<128x32xbf16>, vector<8x32xf32> -> vector<8x32xf32>
    %329 = arith.addf %322, %328 : vector<8x32xf32>
    %c4_403 = arith.constant 4 : index
    %c3_404 = arith.constant 3 : index
    %c0_405 = arith.constant 0 : index
    %c0_406 = arith.constant 0 : index
    %330 = vector.load %arg18[%c4_403, %c3_404, %c0_405, %c0_406] : memref<7x7x8x128xf32, #tpu.memory_space<vmem>>, vector<1x1x8x128xf32>
    %331 = vector.shape_cast %330 : vector<1x1x8x128xf32> to vector<8x128xf32>
    %332 = arith.truncf %331 : vector<8x128xf32> to vector<8x128xbf16>
    %c4_407 = arith.constant 4 : index
    %c3_408 = arith.constant 3 : index
    %c0_409 = arith.constant 0 : index
    %c0_410 = arith.constant 0 : index
    %333 = vector.load %arg8[%c4_407, %c3_408, %c0_409, %c0_410] : memref<7x7x128x32xbf16, #tpu.memory_space<vmem>>, vector<1x1x128x32xbf16>
    %334 = vector.shape_cast %333 : vector<1x1x128x32xbf16> to vector<128x32xbf16>
    %cst_411 = arith.constant dense<0.000000e+00> : vector<8x32xf32>
    %335 = tpu.matmul %332, %334, %cst_411 {dimension_numbers = #tpu.dot_dimension_numbers<[1], [0], [0], [1], [0, 0, 1, 1], [], []>} : vector<8x128xbf16>, vector<128x32xbf16>, vector<8x32xf32> -> vector<8x32xf32>
    %336 = arith.addf %329, %335 : vector<8x32xf32>
    %c4_412 = arith.constant 4 : index
    %c4_413 = arith.constant 4 : index
    %c0_414 = arith.constant 0 : index
    %c0_415 = arith.constant 0 : index
    %337 = vector.load %arg18[%c4_412, %c4_413, %c0_414, %c0_415] : memref<7x7x8x128xf32, #tpu.memory_space<vmem>>, vector<1x1x8x128xf32>
    %338 = vector.shape_cast %337 : vector<1x1x8x128xf32> to vector<8x128xf32>
    %339 = arith.truncf %338 : vector<8x128xf32> to vector<8x128xbf16>
    %c4_416 = arith.constant 4 : index
    %c4_417 = arith.constant 4 : index
    %c0_418 = arith.constant 0 : index
    %c0_419 = arith.constant 0 : index
    %340 = vector.load %arg8[%c4_416, %c4_417, %c0_418, %c0_419] : memref<7x7x128x32xbf16, #tpu.memory_space<vmem>>, vector<1x1x128x32xbf16>
    %341 = vector.shape_cast %340 : vector<1x1x128x32xbf16> to vector<128x32xbf16>
    %cst_420 = arith.constant dense<0.000000e+00> : vector<8x32xf32>
    %342 = tpu.matmul %339, %341, %cst_420 {dimension_numbers = #tpu.dot_dimension_numbers<[1], [0], [0], [1], [0, 0, 1, 1], [], []>} : vector<8x128xbf16>, vector<128x32xbf16>, vector<8x32xf32> -> vector<8x32xf32>
    %343 = arith.addf %336, %342 : vector<8x32xf32>
    %c4_421 = arith.constant 4 : index
    %c5_422 = arith.constant 5 : index
    %c0_423 = arith.constant 0 : index
    %c0_424 = arith.constant 0 : index
    %344 = vector.load %arg18[%c4_421, %c5_422, %c0_423, %c0_424] : memref<7x7x8x128xf32, #tpu.memory_space<vmem>>, vector<1x1x8x128xf32>
    %345 = vector.shape_cast %344 : vector<1x1x8x128xf32> to vector<8x128xf32>
    %346 = arith.truncf %345 : vector<8x128xf32> to vector<8x128xbf16>
    %c4_425 = arith.constant 4 : index
    %c5_426 = arith.constant 5 : index
    %c0_427 = arith.constant 0 : index
    %c0_428 = arith.constant 0 : index
    %347 = vector.load %arg8[%c4_425, %c5_426, %c0_427, %c0_428] : memref<7x7x128x32xbf16, #tpu.memory_space<vmem>>, vector<1x1x128x32xbf16>
    %348 = vector.shape_cast %347 : vector<1x1x128x32xbf16> to vector<128x32xbf16>
    %cst_429 = arith.constant dense<0.000000e+00> : vector<8x32xf32>
    %349 = tpu.matmul %346, %348, %cst_429 {dimension_numbers = #tpu.dot_dimension_numbers<[1], [0], [0], [1], [0, 0, 1, 1], [], []>} : vector<8x128xbf16>, vector<128x32xbf16>, vector<8x32xf32> -> vector<8x32xf32>
    %350 = arith.addf %343, %349 : vector<8x32xf32>
    %c4_430 = arith.constant 4 : index
    %c6_431 = arith.constant 6 : index
    %c0_432 = arith.constant 0 : index
    %c0_433 = arith.constant 0 : index
    %351 = vector.load %arg18[%c4_430, %c6_431, %c0_432, %c0_433] : memref<7x7x8x128xf32, #tpu.memory_space<vmem>>, vector<1x1x8x128xf32>
    %352 = vector.shape_cast %351 : vector<1x1x8x128xf32> to vector<8x128xf32>
    %353 = arith.truncf %352 : vector<8x128xf32> to vector<8x128xbf16>
    %c4_434 = arith.constant 4 : index
    %c6_435 = arith.constant 6 : index
    %c0_436 = arith.constant 0 : index
    %c0_437 = arith.constant 0 : index
    %354 = vector.load %arg8[%c4_434, %c6_435, %c0_436, %c0_437] : memref<7x7x128x32xbf16, #tpu.memory_space<vmem>>, vector<1x1x128x32xbf16>
    %355 = vector.shape_cast %354 : vector<1x1x128x32xbf16> to vector<128x32xbf16>
    %cst_438 = arith.constant dense<0.000000e+00> : vector<8x32xf32>
    %356 = tpu.matmul %353, %355, %cst_438 {dimension_numbers = #tpu.dot_dimension_numbers<[1], [0], [0], [1], [0, 0, 1, 1], [], []>} : vector<8x128xbf16>, vector<128x32xbf16>, vector<8x32xf32> -> vector<8x32xf32>
    %357 = arith.addf %350, %356 : vector<8x32xf32>
    %c5_439 = arith.constant 5 : index
    %c0_440 = arith.constant 0 : index
    %c0_441 = arith.constant 0 : index
    %c0_442 = arith.constant 0 : index
    %358 = vector.load %arg18[%c5_439, %c0_440, %c0_441, %c0_442] : memref<7x7x8x128xf32, #tpu.memory_space<vmem>>, vector<1x1x8x128xf32>
    %359 = vector.shape_cast %358 : vector<1x1x8x128xf32> to vector<8x128xf32>
    %360 = arith.truncf %359 : vector<8x128xf32> to vector<8x128xbf16>
    %c5_443 = arith.constant 5 : index
    %c0_444 = arith.constant 0 : index
    %c0_445 = arith.constant 0 : index
    %c0_446 = arith.constant 0 : index
    %361 = vector.load %arg8[%c5_443, %c0_444, %c0_445, %c0_446] : memref<7x7x128x32xbf16, #tpu.memory_space<vmem>>, vector<1x1x128x32xbf16>
    %362 = vector.shape_cast %361 : vector<1x1x128x32xbf16> to vector<128x32xbf16>
    %cst_447 = arith.constant dense<0.000000e+00> : vector<8x32xf32>
    %363 = tpu.matmul %360, %362, %cst_447 {dimension_numbers = #tpu.dot_dimension_numbers<[1], [0], [0], [1], [0, 0, 1, 1], [], []>} : vector<8x128xbf16>, vector<128x32xbf16>, vector<8x32xf32> -> vector<8x32xf32>
    %364 = arith.addf %357, %363 : vector<8x32xf32>
    %c5_448 = arith.constant 5 : index
    %c1_449 = arith.constant 1 : index
    %c0_450 = arith.constant 0 : index
    %c0_451 = arith.constant 0 : index
    %365 = vector.load %arg18[%c5_448, %c1_449, %c0_450, %c0_451] : memref<7x7x8x128xf32, #tpu.memory_space<vmem>>, vector<1x1x8x128xf32>
    %366 = vector.shape_cast %365 : vector<1x1x8x128xf32> to vector<8x128xf32>
    %367 = arith.truncf %366 : vector<8x128xf32> to vector<8x128xbf16>
    %c5_452 = arith.constant 5 : index
    %c1_453 = arith.constant 1 : index
    %c0_454 = arith.constant 0 : index
    %c0_455 = arith.constant 0 : index
    %368 = vector.load %arg8[%c5_452, %c1_453, %c0_454, %c0_455] : memref<7x7x128x32xbf16, #tpu.memory_space<vmem>>, vector<1x1x128x32xbf16>
    %369 = vector.shape_cast %368 : vector<1x1x128x32xbf16> to vector<128x32xbf16>
    %cst_456 = arith.constant dense<0.000000e+00> : vector<8x32xf32>
    %370 = tpu.matmul %367, %369, %cst_456 {dimension_numbers = #tpu.dot_dimension_numbers<[1], [0], [0], [1], [0, 0, 1, 1], [], []>} : vector<8x128xbf16>, vector<128x32xbf16>, vector<8x32xf32> -> vector<8x32xf32>
    %371 = arith.addf %364, %370 : vector<8x32xf32>
    %c5_457 = arith.constant 5 : index
    %c2_458 = arith.constant 2 : index
    %c0_459 = arith.constant 0 : index
    %c0_460 = arith.constant 0 : index
    %372 = vector.load %arg18[%c5_457, %c2_458, %c0_459, %c0_460] : memref<7x7x8x128xf32, #tpu.memory_space<vmem>>, vector<1x1x8x128xf32>
    %373 = vector.shape_cast %372 : vector<1x1x8x128xf32> to vector<8x128xf32>
    %374 = arith.truncf %373 : vector<8x128xf32> to vector<8x128xbf16>
    %c5_461 = arith.constant 5 : index
    %c2_462 = arith.constant 2 : index
    %c0_463 = arith.constant 0 : index
    %c0_464 = arith.constant 0 : index
    %375 = vector.load %arg8[%c5_461, %c2_462, %c0_463, %c0_464] : memref<7x7x128x32xbf16, #tpu.memory_space<vmem>>, vector<1x1x128x32xbf16>
    %376 = vector.shape_cast %375 : vector<1x1x128x32xbf16> to vector<128x32xbf16>
    %cst_465 = arith.constant dense<0.000000e+00> : vector<8x32xf32>
    %377 = tpu.matmul %374, %376, %cst_465 {dimension_numbers = #tpu.dot_dimension_numbers<[1], [0], [0], [1], [0, 0, 1, 1], [], []>} : vector<8x128xbf16>, vector<128x32xbf16>, vector<8x32xf32> -> vector<8x32xf32>
    %378 = arith.addf %371, %377 : vector<8x32xf32>
    %c5_466 = arith.constant 5 : index
    %c3_467 = arith.constant 3 : index
    %c0_468 = arith.constant 0 : index
    %c0_469 = arith.constant 0 : index
    %379 = vector.load %arg18[%c5_466, %c3_467, %c0_468, %c0_469] : memref<7x7x8x128xf32, #tpu.memory_space<vmem>>, vector<1x1x8x128xf32>
    %380 = vector.shape_cast %379 : vector<1x1x8x128xf32> to vector<8x128xf32>
    %381 = arith.truncf %380 : vector<8x128xf32> to vector<8x128xbf16>
    %c5_470 = arith.constant 5 : index
    %c3_471 = arith.constant 3 : index
    %c0_472 = arith.constant 0 : index
    %c0_473 = arith.constant 0 : index
    %382 = vector.load %arg8[%c5_470, %c3_471, %c0_472, %c0_473] : memref<7x7x128x32xbf16, #tpu.memory_space<vmem>>, vector<1x1x128x32xbf16>
    %383 = vector.shape_cast %382 : vector<1x1x128x32xbf16> to vector<128x32xbf16>
    %cst_474 = arith.constant dense<0.000000e+00> : vector<8x32xf32>
    %384 = tpu.matmul %381, %383, %cst_474 {dimension_numbers = #tpu.dot_dimension_numbers<[1], [0], [0], [1], [0, 0, 1, 1], [], []>} : vector<8x128xbf16>, vector<128x32xbf16>, vector<8x32xf32> -> vector<8x32xf32>
    %385 = arith.addf %378, %384 : vector<8x32xf32>
    %c5_475 = arith.constant 5 : index
    %c4_476 = arith.constant 4 : index
    %c0_477 = arith.constant 0 : index
    %c0_478 = arith.constant 0 : index
    %386 = vector.load %arg18[%c5_475, %c4_476, %c0_477, %c0_478] : memref<7x7x8x128xf32, #tpu.memory_space<vmem>>, vector<1x1x8x128xf32>
    %387 = vector.shape_cast %386 : vector<1x1x8x128xf32> to vector<8x128xf32>
    %388 = arith.truncf %387 : vector<8x128xf32> to vector<8x128xbf16>
    %c5_479 = arith.constant 5 : index
    %c4_480 = arith.constant 4 : index
    %c0_481 = arith.constant 0 : index
    %c0_482 = arith.constant 0 : index
    %389 = vector.load %arg8[%c5_479, %c4_480, %c0_481, %c0_482] : memref<7x7x128x32xbf16, #tpu.memory_space<vmem>>, vector<1x1x128x32xbf16>
    %390 = vector.shape_cast %389 : vector<1x1x128x32xbf16> to vector<128x32xbf16>
    %cst_483 = arith.constant dense<0.000000e+00> : vector<8x32xf32>
    %391 = tpu.matmul %388, %390, %cst_483 {dimension_numbers = #tpu.dot_dimension_numbers<[1], [0], [0], [1], [0, 0, 1, 1], [], []>} : vector<8x128xbf16>, vector<128x32xbf16>, vector<8x32xf32> -> vector<8x32xf32>
    %392 = arith.addf %385, %391 : vector<8x32xf32>
    %c5_484 = arith.constant 5 : index
    %c5_485 = arith.constant 5 : index
    %c0_486 = arith.constant 0 : index
    %c0_487 = arith.constant 0 : index
    %393 = vector.load %arg18[%c5_484, %c5_485, %c0_486, %c0_487] : memref<7x7x8x128xf32, #tpu.memory_space<vmem>>, vector<1x1x8x128xf32>
    %394 = vector.shape_cast %393 : vector<1x1x8x128xf32> to vector<8x128xf32>
    %395 = arith.truncf %394 : vector<8x128xf32> to vector<8x128xbf16>
    %c5_488 = arith.constant 5 : index
    %c5_489 = arith.constant 5 : index
    %c0_490 = arith.constant 0 : index
    %c0_491 = arith.constant 0 : index
    %396 = vector.load %arg8[%c5_488, %c5_489, %c0_490, %c0_491] : memref<7x7x128x32xbf16, #tpu.memory_space<vmem>>, vector<1x1x128x32xbf16>
    %397 = vector.shape_cast %396 : vector<1x1x128x32xbf16> to vector<128x32xbf16>
    %cst_492 = arith.constant dense<0.000000e+00> : vector<8x32xf32>
    %398 = tpu.matmul %395, %397, %cst_492 {dimension_numbers = #tpu.dot_dimension_numbers<[1], [0], [0], [1], [0, 0, 1, 1], [], []>} : vector<8x128xbf16>, vector<128x32xbf16>, vector<8x32xf32> -> vector<8x32xf32>
    %399 = arith.addf %392, %398 : vector<8x32xf32>
    %c5_493 = arith.constant 5 : index
    %c6_494 = arith.constant 6 : index
    %c0_495 = arith.constant 0 : index
    %c0_496 = arith.constant 0 : index
    %400 = vector.load %arg18[%c5_493, %c6_494, %c0_495, %c0_496] : memref<7x7x8x128xf32, #tpu.memory_space<vmem>>, vector<1x1x8x128xf32>
    %401 = vector.shape_cast %400 : vector<1x1x8x128xf32> to vector<8x128xf32>
    %402 = arith.truncf %401 : vector<8x128xf32> to vector<8x128xbf16>
    %c5_497 = arith.constant 5 : index
    %c6_498 = arith.constant 6 : index
    %c0_499 = arith.constant 0 : index
    %c0_500 = arith.constant 0 : index
    %403 = vector.load %arg8[%c5_497, %c6_498, %c0_499, %c0_500] : memref<7x7x128x32xbf16, #tpu.memory_space<vmem>>, vector<1x1x128x32xbf16>
    %404 = vector.shape_cast %403 : vector<1x1x128x32xbf16> to vector<128x32xbf16>
    %cst_501 = arith.constant dense<0.000000e+00> : vector<8x32xf32>
    %405 = tpu.matmul %402, %404, %cst_501 {dimension_numbers = #tpu.dot_dimension_numbers<[1], [0], [0], [1], [0, 0, 1, 1], [], []>} : vector<8x128xbf16>, vector<128x32xbf16>, vector<8x32xf32> -> vector<8x32xf32>
    %406 = arith.addf %399, %405 : vector<8x32xf32>
    %c6_502 = arith.constant 6 : index
    %c0_503 = arith.constant 0 : index
    %c0_504 = arith.constant 0 : index
    %c0_505 = arith.constant 0 : index
    %407 = vector.load %arg18[%c6_502, %c0_503, %c0_504, %c0_505] : memref<7x7x8x128xf32, #tpu.memory_space<vmem>>, vector<1x1x8x128xf32>
    %408 = vector.shape_cast %407 : vector<1x1x8x128xf32> to vector<8x128xf32>
    %409 = arith.truncf %408 : vector<8x128xf32> to vector<8x128xbf16>
    %c6_506 = arith.constant 6 : index
    %c0_507 = arith.constant 0 : index
    %c0_508 = arith.constant 0 : index
    %c0_509 = arith.constant 0 : index
    %410 = vector.load %arg8[%c6_506, %c0_507, %c0_508, %c0_509] : memref<7x7x128x32xbf16, #tpu.memory_space<vmem>>, vector<1x1x128x32xbf16>
    %411 = vector.shape_cast %410 : vector<1x1x128x32xbf16> to vector<128x32xbf16>
    %cst_510 = arith.constant dense<0.000000e+00> : vector<8x32xf32>
    %412 = tpu.matmul %409, %411, %cst_510 {dimension_numbers = #tpu.dot_dimension_numbers<[1], [0], [0], [1], [0, 0, 1, 1], [], []>} : vector<8x128xbf16>, vector<128x32xbf16>, vector<8x32xf32> -> vector<8x32xf32>
    %413 = arith.addf %406, %412 : vector<8x32xf32>
    %c6_511 = arith.constant 6 : index
    %c1_512 = arith.constant 1 : index
    %c0_513 = arith.constant 0 : index
    %c0_514 = arith.constant 0 : index
    %414 = vector.load %arg18[%c6_511, %c1_512, %c0_513, %c0_514] : memref<7x7x8x128xf32, #tpu.memory_space<vmem>>, vector<1x1x8x128xf32>
    %415 = vector.shape_cast %414 : vector<1x1x8x128xf32> to vector<8x128xf32>
    %416 = arith.truncf %415 : vector<8x128xf32> to vector<8x128xbf16>
    %c6_515 = arith.constant 6 : index
    %c1_516 = arith.constant 1 : index
    %c0_517 = arith.constant 0 : index
    %c0_518 = arith.constant 0 : index
    %417 = vector.load %arg8[%c6_515, %c1_516, %c0_517, %c0_518] : memref<7x7x128x32xbf16, #tpu.memory_space<vmem>>, vector<1x1x128x32xbf16>
    %418 = vector.shape_cast %417 : vector<1x1x128x32xbf16> to vector<128x32xbf16>
    %cst_519 = arith.constant dense<0.000000e+00> : vector<8x32xf32>
    %419 = tpu.matmul %416, %418, %cst_519 {dimension_numbers = #tpu.dot_dimension_numbers<[1], [0], [0], [1], [0, 0, 1, 1], [], []>} : vector<8x128xbf16>, vector<128x32xbf16>, vector<8x32xf32> -> vector<8x32xf32>
    %420 = arith.addf %413, %419 : vector<8x32xf32>
    %c6_520 = arith.constant 6 : index
    %c2_521 = arith.constant 2 : index
    %c0_522 = arith.constant 0 : index
    %c0_523 = arith.constant 0 : index
    %421 = vector.load %arg18[%c6_520, %c2_521, %c0_522, %c0_523] : memref<7x7x8x128xf32, #tpu.memory_space<vmem>>, vector<1x1x8x128xf32>
    %422 = vector.shape_cast %421 : vector<1x1x8x128xf32> to vector<8x128xf32>
    %423 = arith.truncf %422 : vector<8x128xf32> to vector<8x128xbf16>
    %c6_524 = arith.constant 6 : index
    %c2_525 = arith.constant 2 : index
    %c0_526 = arith.constant 0 : index
    %c0_527 = arith.constant 0 : index
    %424 = vector.load %arg8[%c6_524, %c2_525, %c0_526, %c0_527] : memref<7x7x128x32xbf16, #tpu.memory_space<vmem>>, vector<1x1x128x32xbf16>
    %425 = vector.shape_cast %424 : vector<1x1x128x32xbf16> to vector<128x32xbf16>
    %cst_528 = arith.constant dense<0.000000e+00> : vector<8x32xf32>
    %426 = tpu.matmul %423, %425, %cst_528 {dimension_numbers = #tpu.dot_dimension_numbers<[1], [0], [0], [1], [0, 0, 1, 1], [], []>} : vector<8x128xbf16>, vector<128x32xbf16>, vector<8x32xf32> -> vector<8x32xf32>
    %427 = arith.addf %420, %426 : vector<8x32xf32>
    %c6_529 = arith.constant 6 : index
    %c3_530 = arith.constant 3 : index
    %c0_531 = arith.constant 0 : index
    %c0_532 = arith.constant 0 : index
    %428 = vector.load %arg18[%c6_529, %c3_530, %c0_531, %c0_532] : memref<7x7x8x128xf32, #tpu.memory_space<vmem>>, vector<1x1x8x128xf32>
    %429 = vector.shape_cast %428 : vector<1x1x8x128xf32> to vector<8x128xf32>
    %430 = arith.truncf %429 : vector<8x128xf32> to vector<8x128xbf16>
    %c6_533 = arith.constant 6 : index
    %c3_534 = arith.constant 3 : index
    %c0_535 = arith.constant 0 : index
    %c0_536 = arith.constant 0 : index
    %431 = vector.load %arg8[%c6_533, %c3_534, %c0_535, %c0_536] : memref<7x7x128x32xbf16, #tpu.memory_space<vmem>>, vector<1x1x128x32xbf16>
    %432 = vector.shape_cast %431 : vector<1x1x128x32xbf16> to vector<128x32xbf16>
    %cst_537 = arith.constant dense<0.000000e+00> : vector<8x32xf32>
    %433 = tpu.matmul %430, %432, %cst_537 {dimension_numbers = #tpu.dot_dimension_numbers<[1], [0], [0], [1], [0, 0, 1, 1], [], []>} : vector<8x128xbf16>, vector<128x32xbf16>, vector<8x32xf32> -> vector<8x32xf32>
    %434 = arith.addf %427, %433 : vector<8x32xf32>
    %c6_538 = arith.constant 6 : index
    %c4_539 = arith.constant 4 : index
    %c0_540 = arith.constant 0 : index
    %c0_541 = arith.constant 0 : index
    %435 = vector.load %arg18[%c6_538, %c4_539, %c0_540, %c0_541] : memref<7x7x8x128xf32, #tpu.memory_space<vmem>>, vector<1x1x8x128xf32>
    %436 = vector.shape_cast %435 : vector<1x1x8x128xf32> to vector<8x128xf32>
    %437 = arith.truncf %436 : vector<8x128xf32> to vector<8x128xbf16>
    %c6_542 = arith.constant 6 : index
    %c4_543 = arith.constant 4 : index
    %c0_544 = arith.constant 0 : index
    %c0_545 = arith.constant 0 : index
    %438 = vector.load %arg8[%c6_542, %c4_543, %c0_544, %c0_545] : memref<7x7x128x32xbf16, #tpu.memory_space<vmem>>, vector<1x1x128x32xbf16>
    %439 = vector.shape_cast %438 : vector<1x1x128x32xbf16> to vector<128x32xbf16>
    %cst_546 = arith.constant dense<0.000000e+00> : vector<8x32xf32>
    %440 = tpu.matmul %437, %439, %cst_546 {dimension_numbers = #tpu.dot_dimension_numbers<[1], [0], [0], [1], [0, 0, 1, 1], [], []>} : vector<8x128xbf16>, vector<128x32xbf16>, vector<8x32xf32> -> vector<8x32xf32>
    %441 = arith.addf %434, %440 : vector<8x32xf32>
    %c6_547 = arith.constant 6 : index
    %c5_548 = arith.constant 5 : index
    %c0_549 = arith.constant 0 : index
    %c0_550 = arith.constant 0 : index
    %442 = vector.load %arg18[%c6_547, %c5_548, %c0_549, %c0_550] : memref<7x7x8x128xf32, #tpu.memory_space<vmem>>, vector<1x1x8x128xf32>
    %443 = vector.shape_cast %442 : vector<1x1x8x128xf32> to vector<8x128xf32>
    %444 = arith.truncf %443 : vector<8x128xf32> to vector<8x128xbf16>
    %c6_551 = arith.constant 6 : index
    %c5_552 = arith.constant 5 : index
    %c0_553 = arith.constant 0 : index
    %c0_554 = arith.constant 0 : index
    %445 = vector.load %arg8[%c6_551, %c5_552, %c0_553, %c0_554] : memref<7x7x128x32xbf16, #tpu.memory_space<vmem>>, vector<1x1x128x32xbf16>
    %446 = vector.shape_cast %445 : vector<1x1x128x32xbf16> to vector<128x32xbf16>
    %cst_555 = arith.constant dense<0.000000e+00> : vector<8x32xf32>
    %447 = tpu.matmul %444, %446, %cst_555 {dimension_numbers = #tpu.dot_dimension_numbers<[1], [0], [0], [1], [0, 0, 1, 1], [], []>} : vector<8x128xbf16>, vector<128x32xbf16>, vector<8x32xf32> -> vector<8x32xf32>
    %448 = arith.addf %441, %447 : vector<8x32xf32>
    %c6_556 = arith.constant 6 : index
    %c6_557 = arith.constant 6 : index
    %c0_558 = arith.constant 0 : index
    %c0_559 = arith.constant 0 : index
    %449 = vector.load %arg18[%c6_556, %c6_557, %c0_558, %c0_559] : memref<7x7x8x128xf32, #tpu.memory_space<vmem>>, vector<1x1x8x128xf32>
    %450 = vector.shape_cast %449 : vector<1x1x8x128xf32> to vector<8x128xf32>
    %451 = arith.truncf %450 : vector<8x128xf32> to vector<8x128xbf16>
    %c6_560 = arith.constant 6 : index
    %c6_561 = arith.constant 6 : index
    %c0_562 = arith.constant 0 : index
    %c0_563 = arith.constant 0 : index
    %452 = vector.load %arg8[%c6_560, %c6_561, %c0_562, %c0_563] : memref<7x7x128x32xbf16, #tpu.memory_space<vmem>>, vector<1x1x128x32xbf16>
    %453 = vector.shape_cast %452 : vector<1x1x128x32xbf16> to vector<128x32xbf16>
    %cst_564 = arith.constant dense<0.000000e+00> : vector<8x32xf32>
    %454 = tpu.matmul %451, %453, %cst_564 {dimension_numbers = #tpu.dot_dimension_numbers<[1], [0], [0], [1], [0, 0, 1, 1], [], []>} : vector<8x128xbf16>, vector<128x32xbf16>, vector<8x32xf32> -> vector<8x32xf32>
    %455 = arith.addf %448, %454 : vector<8x32xf32>
    %c0_565 = arith.constant 0 : index
    %c0_566 = arith.constant 0 : index
    %456 = vector.load %arg9[%c0_565, %c0_566] : memref<1x32xf32, #tpu.memory_space<vmem>>, vector<1x32xf32>
    %457 = vector.broadcast %456 : vector<1x32xf32> to vector<8x32xf32>
    %458 = arith.addf %455, %457 : vector<8x32xf32>
    %cst_567 = arith.constant 0.000000e+00 : f32
    %459 = vector.broadcast %cst_567 : f32 to vector<8x32xf32>
    %460 = arith.maximumf %458, %459 : vector<8x32xf32>
    %461 = arith.truncf %460 : vector<8x32xf32> to vector<8x32xbf16>
    %c0_568 = arith.constant 0 : index
    %c0_569 = arith.constant 0 : index
    %462 = vector.load %arg10[%c0_568, %c0_569] : memref<32x16xbf16, #tpu.memory_space<vmem>>, vector<32x16xbf16>
    %cst_570 = arith.constant dense<0.000000e+00> : vector<8x16xf32>
    %463 = tpu.matmul %461, %462, %cst_570 {dimension_numbers = #tpu.dot_dimension_numbers<[1], [0], [0], [1], [0, 0, 1, 1], [], []>} : vector<8x32xbf16>, vector<32x16xbf16>, vector<8x16xf32> -> vector<8x16xf32>
    %c0_571 = arith.constant 0 : index
    %c0_572 = arith.constant 0 : index
    %464 = vector.load %arg11[%c0_571, %c0_572] : memref<1x16xf32, #tpu.memory_space<vmem>>, vector<1x16xf32>
    %465 = vector.broadcast %464 : vector<1x16xf32> to vector<8x16xf32>
    %466 = arith.addf %463, %465 : vector<8x16xf32>
    %cst_573 = arith.constant 0.000000e+00 : f32
    %467 = vector.broadcast %cst_573 : f32 to vector<8x16xf32>
    %468 = arith.maximumf %466, %467 : vector<8x16xf32>
    %469 = arith.truncf %468 : vector<8x16xf32> to vector<8x16xbf16>
    %c0_574 = arith.constant 0 : index
    %c0_575 = arith.constant 0 : index
    %470 = vector.load %arg12[%c0_574, %c0_575] : memref<16x4xbf16, #tpu.memory_space<vmem>>, vector<16x4xbf16>
    %cst_576 = arith.constant dense<0.000000e+00> : vector<8x4xf32>
    %471 = tpu.matmul %469, %470, %cst_576 {dimension_numbers = #tpu.dot_dimension_numbers<[1], [0], [0], [1], [0, 0, 1, 1], [], []>} : vector<8x16xbf16>, vector<16x4xbf16>, vector<8x4xf32> -> vector<8x4xf32>
    %c0_577 = arith.constant 0 : index
    %c0_578 = arith.constant 0 : index
    %472 = vector.load %arg13[%c0_577, %c0_578] : memref<1x4xf32, #tpu.memory_space<vmem>>, vector<1x4xf32>
    %473 = vector.broadcast %472 : vector<1x4xf32> to vector<8x4xf32>
    %474 = arith.addf %471, %473 : vector<8x4xf32>
    %c0_579 = arith.constant 0 : index
    %c0_580 = arith.constant 0 : index
    %475 = vector.load %arg14[%c0_579, %c0_580] : memref<8x4xf32, #tpu.memory_space<vmem>>, vector<8x4xf32>
    tpu.vector_store %arg14[%c0_579, %c0_580], %474 {strides = array<i32>} : memref<8x4xf32, #tpu.memory_space<vmem>>, vector<8x4xf32>,
    return
  }
  func.func @transform_0(%arg0: i32) -> (i32, i32, i32, i32) {
    %c0_i32 = arith.constant 0 : i32
    %c0_i32_0 = arith.constant 0 : i32
    %c0_i32_1 = arith.constant 0 : i32
    %c0_i32_2 = arith.constant 0 : i32
    return %c0_i32, %c0_i32_0, %arg0, %c0_i32_1 : i32, i32, i32, i32
  }
  func.func @transform_1(%arg0: i32) -> (i32, i32) {
    %c0_i32 = arith.constant 0 : i32
    %c0_i32_0 = arith.constant 0 : i32
    %c0_i32_1 = arith.constant 0 : i32
    return %c0_i32, %c0_i32_0 : i32, i32
  }
  func.func @transform_2(%arg0: i32) -> (i32, i32) {
    %c0_i32 = arith.constant 0 : i32
    %c0_i32_0 = arith.constant 0 : i32
    %c0_i32_1 = arith.constant 0 : i32
    return %c0_i32, %c0_i32_0 : i32, i32
  }
  func.func @transform_3(%arg0: i32) -> (i32, i32, i32) {
    %c0_i32 = arith.constant 0 : i32
    %c0_i32_0 = arith.constant 0 : i32
    %c0_i32_1 = arith.constant 0 : i32
    %c0_i32_2 = arith.constant 0 : i32
    return %c0_i32, %c0_i32_0, %c0_i32_1 : i32, i32, i32
  }
  func.func @transform_4(%arg0: i32) -> (i32, i32) {
    %c0_i32 = arith.constant 0 : i32
    %c0_i32_0 = arith.constant 0 : i32
    %c0_i32_1 = arith.constant 0 : i32
    return %c0_i32, %c0_i32_0 : i32, i32
  }
  func.func @transform_5(%arg0: i32) -> (i32, i32, i32) {
    %c0_i32 = arith.constant 0 : i32
    %c0_i32_0 = arith.constant 0 : i32
    %c0_i32_1 = arith.constant 0 : i32
    %c0_i32_2 = arith.constant 0 : i32
    return %c0_i32, %c0_i32_0, %c0_i32_1 : i32, i32, i32
  }
  func.func @transform_6(%arg0: i32) -> (i32, i32) {
    %c0_i32 = arith.constant 0 : i32
    %c0_i32_0 = arith.constant 0 : i32
    %c0_i32_1 = arith.constant 0 : i32
    return %c0_i32, %c0_i32_0 : i32, i32
  }
  func.func @transform_7(%arg0: i32) -> (i32, i32, i32, i32) {
    %c0_i32 = arith.constant 0 : i32
    %c0_i32_0 = arith.constant 0 : i32
    %c0_i32_1 = arith.constant 0 : i32
    %c0_i32_2 = arith.constant 0 : i32
    %c0_i32_3 = arith.constant 0 : i32
    return %c0_i32, %c0_i32_0, %c0_i32_1, %c0_i32_2 : i32, i32, i32, i32
  }
  func.func @transform_8(%arg0: i32) -> (i32, i32) {
    %c0_i32 = arith.constant 0 : i32
    %c0_i32_0 = arith.constant 0 : i32
    %c0_i32_1 = arith.constant 0 : i32
    return %c0_i32, %c0_i32_0 : i32, i32
  }
  func.func @transform_9(%arg0: i32) -> (i32, i32) {
    %c0_i32 = arith.constant 0 : i32
    %c0_i32_0 = arith.constant 0 : i32
    %c0_i32_1 = arith.constant 0 : i32
    return %c0_i32, %c0_i32_0 : i32, i32
  }
  func.func @transform_10(%arg0: i32) -> (i32, i32) {
    %c0_i32 = arith.constant 0 : i32
    %c0_i32_0 = arith.constant 0 : i32
    %c0_i32_1 = arith.constant 0 : i32
    return %c0_i32, %c0_i32_0 : i32, i32
  }
  func.func @transform_11(%arg0: i32) -> (i32, i32) {
    %c0_i32 = arith.constant 0 : i32
    %c0_i32_0 = arith.constant 0 : i32
    %c0_i32_1 = arith.constant 0 : i32
    return %c0_i32, %c0_i32_0 : i32, i32
  }
  func.func @transform_12(%arg0: i32) -> (i32, i32) {
    %c0_i32 = arith.constant 0 : i32
    %c0_i32_0 = arith.constant 0 : i32
    %c0_i32_1 = arith.constant 0 : i32
    return %c0_i32, %c0_i32_0 : i32, i32
  }
  func.func @transform_13(%arg0: i32) -> (i32, i32) {
    %c0_i32 = arith.constant 0 : i32
    %c0_i32_0 = arith.constant 0 : i32
    return %arg0, %c0_i32 : i32, i32
  }
}

</mosaic_0001>

<llo_original>
// kernel: _qnetwork_apply.1
$region0: #{_qnetwork_apply.1}
  #allocation0 [shape = 'u32[]', space=smem, size = 0x4, offset = 0x4, fixed_abs, tag = 'smem constant byte address 0x4 - core index']
  #allocation1 [shape = 'u32[144,128]{1,0:T(1,128)}', space=vmem, size = 0x12000, scoped, tag = 'internal scratch']
  #allocation2 [shape = 'f32[6,6,8,1]{3,2,1,0:T(8,128)}', space=vmem, size = 0x24000, scoped, tag = 'scratch operand']
  #allocation3 [shape = 'f32[7,7,8,32]{3,2,1,0:T(8,128)}', space=vmem, size = 0x31000, scoped, tag = 'scratch operand']
  #allocation4 [shape = 'f32[8,8,8,64]{3,2,1,0:T(8,128)}', space=vmem, size = 0x40000, scoped, tag = 'scratch operand']
  #allocation5 [shape = 'f32[7,7,8,128]{3,2,1,0:T(8,128)}', space=vmem, size = 0x31000, scoped, tag = 'scratch operand']
  %s0 = inlined_call_operand.vmem [shape: f32[4,4,8,1], index: 0, kind: input, shape index: {}]
  %s1 = inlined_call_operand.vmem [shape: bf16[4,32], index: 1, kind: input, shape index: {}]
  %s2 = inlined_call_operand.vmem [shape: f32[1,32], index: 2, kind: input, shape index: {}]
  %s3 = inlined_call_operand.vmem [shape: bf16[4,32,64], index: 3, kind: input, shape index: {}]
  %s4 = inlined_call_operand.vmem [shape: f32[1,64], index: 4, kind: input, shape index: {}]
  %s5 = inlined_call_operand.vmem [shape: bf16[4,64,128], index: 5, kind: input, shape index: {}]
  %s6 = inlined_call_operand.vmem [shape: f32[1,128], index: 6, kind: input, shape index: {}]
  %s7 = inlined_call_operand.vmem [shape: bf16[7,7,128,32], index: 7, kind: input, shape index: {}]
  %s8 = inlined_call_operand.vmem [shape: f32[1,32], index: 8, kind: input, shape index: {}]
  %s9 = inlined_call_operand.vmem [shape: bf16[32,16], index: 9, kind: input, shape index: {}]
  %s10 = inlined_call_operand.vmem [shape: f32[1,16], index: 10, kind: input, shape index: {}]
  %s11 = inlined_call_operand.vmem [shape: bf16[16,4], index: 11, kind: input, shape index: {}]
  %s12 = inlined_call_operand.vmem [shape: f32[1,4], index: 12, kind: input, shape index: {}]
  %s13 = inlined_call_operand.vmem [shape: f32[8,4], index: 13, kind: output, shape index: {}]
  %s14 = sld [smem:[#allocation0]]
  $region62: #{_qnetwork_apply.1} parent=0
    _
  %s16 = ssub.s32 1, %s14
  %s17 = scalar_select 0, %s16, %s14
  // Predicated region
  $region2: #{_qnetwork_apply.1} parent=0 // pred_check
    _
  $region3: #{_qnetwork_apply.1} parent=0 // pred_check_branch
    %19 = sbr.rel (0) target = $region5
  $region4: #{_qnetwork_apply.1} parent=0 // pred_region
    _
  $region5: #{_qnetwork_apply.1} parent=0 // pred_fallthru
    _
  // Predicated region
  $region6: #{_qnetwork_apply.1} parent=0 // pred_check
    _
  $region7: #{_qnetwork_apply.1} parent=0 // pred_check_branch
    %21 = sbr.rel (0) target = $region9
  $region8: #{_qnetwork_apply.1} parent=0 // pred_region
    _
  $region9: #{_qnetwork_apply.1} parent=0 // pred_fallthru
    _
  // Predicated region
  $region10: #{_qnetwork_apply.1} parent=0 // pred_check
    _
  $region11: #{_qnetwork_apply.1} parent=0 // pred_check_branch
    %23 = sbr.rel (0) target = $region13
  $region12: #{_qnetwork_apply.1} parent=0 // pred_region
    _
  $region13: #{_qnetwork_apply.1} parent=0 // pred_fallthru
    _
  // Predicated region
  $region14: #{_qnetwork_apply.1} parent=0 // pred_check
    _
  $region15: #{_qnetwork_apply.1} parent=0 // pred_check_branch
    %25 = sbr.rel (0) target = $region17
  $region16: #{_qnetwork_apply.1} parent=0 // pred_region
    _
  $region17: #{_qnetwork_apply.1} parent=0 // pred_fallthru
    _
  // Predicated region
  $region18: #{_qnetwork_apply.1} parent=0 // pred_check
    _
  $region19: #{_qnetwork_apply.1} parent=0 // pred_check_branch
    %27 = sbr.rel (0) target = $region21
  $region20: #{_qnetwork_apply.1} parent=0 // pred_region
    _
  $region21: #{_qnetwork_apply.1} parent=0 // pred_fallthru
    _
  // Predicated region
  $region22: #{_qnetwork_apply.1} parent=0 // pred_check
    _
  $region23: #{_qnetwork_apply.1} parent=0 // pred_check_branch
    %29 = sbr.rel (0) target = $region25
  $region24: #{_qnetwork_apply.1} parent=0 // pred_region
    _
  $region25: #{_qnetwork_apply.1} parent=0 // pred_fallthru
    _
  // Predicated region
  $region26: #{_qnetwork_apply.1} parent=0 // pred_check
    _
  $region27: #{_qnetwork_apply.1} parent=0 // pred_check_branch
    %31 = sbr.rel (0) target = $region29
  $region28: #{_qnetwork_apply.1} parent=0 // pred_region
    _
  $region29: #{_qnetwork_apply.1} parent=0 // pred_fallthru
    _
  // Predicated region
  $region30: #{_qnetwork_apply.1} parent=0 // pred_check
    _
  $region31: #{_qnetwork_apply.1} parent=0 // pred_check_branch
    %33 = sbr.rel (0) target = $region33
  $region32: #{_qnetwork_apply.1} parent=0 // pred_region
    _
  $region33: #{_qnetwork_apply.1} parent=0 // pred_fallthru
    _
  // Predicated region
  $region34: #{_qnetwork_apply.1} parent=0 // pred_check
    _
  $region35: #{_qnetwork_apply.1} parent=0 // pred_check_branch
    %35 = sbr.rel (0) target = $region37
  $region36: #{_qnetwork_apply.1} parent=0 // pred_region
    _
  $region37: #{_qnetwork_apply.1} parent=0 // pred_fallthru
    _
  // Predicated region
  $region38: #{_qnetwork_apply.1} parent=0 // pred_check
    _
  $region39: #{_qnetwork_apply.1} parent=0 // pred_check_branch
    %37 = sbr.rel (0) target = $region41
  $region40: #{_qnetwork_apply.1} parent=0 // pred_region
    _
  $region41: #{_qnetwork_apply.1} parent=0 // pred_fallthru
    _
  // Predicated region
  $region42: #{_qnetwork_apply.1} parent=0 // pred_check
    _
  $region43: #{_qnetwork_apply.1} parent=0 // pred_check_branch
    %39 = sbr.rel (0) target = $region45
  $region44: #{_qnetwork_apply.1} parent=0 // pred_region
    _
  $region45: #{_qnetwork_apply.1} parent=0 // pred_fallthru
    _
  // Predicated region
  $region46: #{_qnetwork_apply.1} parent=0 // pred_check
    _
  $region47: #{_qnetwork_apply.1} parent=0 // pred_check_branch
    %41 = sbr.rel (0) target = $region49
  $region48: #{_qnetwork_apply.1} parent=0 // pred_region
    _
  $region49: #{_qnetwork_apply.1} parent=0 // pred_fallthru
    _
  // Predicated region
  $region50: #{_qnetwork_apply.1} parent=0 // pred_check
    _
  $region51: #{_qnetwork_apply.1} parent=0 // pred_check_branch
    %43 = sbr.rel (0) target = $region53
  $region52: #{_qnetwork_apply.1} parent=0 // pred_region
    _
  $region53: #{_qnetwork_apply.1} parent=0 // pred_fallthru
    _
  %vm45 = vcmask 7168
  %46 = vst.msk [vmem:[#allocation2] sm:$0xff] %vm45, 0.0
  %47 = vst.msk [vmem:[#allocation2 + $0x8] sm:$0xff] %vm45, 0.0
  %48 = vst.msk [vmem:[#allocation2 + $0x10] sm:$0xff] %vm45, 0.0
  %49 = vst.msk [vmem:[#allocation2 + $0x18] sm:$0xff] %vm45, 0.0
  %50 = vst.msk [vmem:[#allocation2 + $0x20] sm:$0xff] %vm45, 0.0
  %51 = vst.msk [vmem:[#allocation2 + $0x28] sm:$0xff] %vm45, 0.0
  %52 = vst.msk [vmem:[#allocation2 + $0x30] sm:$0xff] %vm45, 0.0
  %53 = vst.msk [vmem:[#allocation2 + $0x38] sm:$0xff] %vm45, 0.0
  %54 = vst.msk [vmem:[#allocation2 + $0x40] sm:$0xff] %vm45, 0.0
  %55 = vst.msk [vmem:[#allocation2 + $0x48] sm:$0xff] %vm45, 0.0
  %56 = vst.msk [vmem:[#allocation2 + $0x50] sm:$0xff] %vm45, 0.0
  %57 = vst.msk [vmem:[#allocation2 + $0x58] sm:$0xff] %vm45, 0.0
  %58 = vst.msk [vmem:[#allocation2 + $0x60] sm:$0xff] %vm45, 0.0
  %59 = vst.msk [vmem:[#allocation2 + $0x68] sm:$0xff] %vm45, 0.0
  %60 = vst.msk [vmem:[#allocation2 + $0x70] sm:$0xff] %vm45, 0.0
  %61 = vst.msk [vmem:[#allocation2 + $0x78] sm:$0xff] %vm45, 0.0
  %62 = vst.msk [vmem:[#allocation2 + $0x80] sm:$0xff] %vm45, 0.0
  %63 = vst.msk [vmem:[#allocation2 + $0x88] sm:$0xff] %vm45, 0.0
  %64 = vst.msk [vmem:[#allocation2 + $0x90] sm:$0xff] %vm45, 0.0
  %65 = vst.msk [vmem:[#allocation2 + $0x98] sm:$0xff] %vm45, 0.0
  %66 = vst.msk [vmem:[#allocation2 + $0xa0] sm:$0xff] %vm45, 0.0
  %67 = vst.msk [vmem:[#allocation2 + $0xa8] sm:$0xff] %vm45, 0.0
  %68 = vst.msk [vmem:[#allocation2 + $0xb0] sm:$0xff] %vm45, 0.0
  %69 = vst.msk [vmem:[#allocation2 + $0xb8] sm:$0xff] %vm45, 0.0
  %70 = vst.msk [vmem:[#allocation2 + $0xc0] sm:$0xff] %vm45, 0.0
  %71 = vst.msk [vmem:[#allocation2 + $0xc8] sm:$0xff] %vm45, 0.0
  %72 = vst.msk [vmem:[#allocation2 + $0xd0] sm:$0xff] %vm45, 0.0
  %73 = vst.msk [vmem:[#allocation2 + $0xd8] sm:$0xff] %vm45, 0.0
  %74 = vst.msk [vmem:[#allocation2 + $0xe0] sm:$0xff] %vm45, 0.0
  %75 = vst.msk [vmem:[#allocation2 + $0xe8] sm:$0xff] %vm45, 0.0
  %76 = vst.msk [vmem:[#allocation2 + $0xf0] sm:$0xff] %vm45, 0.0
  %77 = vst.msk [vmem:[#allocation2 + $0xf8] sm:$0xff] %vm45, 0.0
  %78 = vst.msk [vmem:[#allocation2 + $0x100] sm:$0xff] %vm45, 0.0
  %79 = vst.msk [vmem:[#allocation2 + $0x108] sm:$0xff] %vm45, 0.0
  %80 = vst.msk [vmem:[#allocation2 + $0x110] sm:$0xff] %vm45, 0.0
  %81 = vst.msk [vmem:[#allocation2 + $0x118] sm:$0xff] %vm45, 0.0
  %v82 = vld [vmem:[%s0] sm:$0xff]
  %v83 = vld [vmem:[%s0 + $0x8] sm:$0xff]
  %v84 = vld [vmem:[%s0 + $0x10] sm:$0xff]
  %v85 = vld [vmem:[%s0 + $0x18] sm:$0xff]
  %v86 = vld [vmem:[%s0 + $0x20] sm:$0xff]
  %v87 = vld [vmem:[%s0 + $0x28] sm:$0xff]
  %v88 = vld [vmem:[%s0 + $0x30] sm:$0xff]
  %v89 = vld [vmem:[%s0 + $0x38] sm:$0xff]
  %v90 = vld [vmem:[%s0 + $0x40] sm:$0xff]
  %v91 = vld [vmem:[%s0 + $0x48] sm:$0xff]
  %v92 = vld [vmem:[%s0 + $0x50] sm:$0xff]
  %v93 = vld [vmem:[%s0 + $0x58] sm:$0xff]
  %v94 = vld [vmem:[%s0 + $0x60] sm:$0xff]
  %v95 = vld [vmem:[%s0 + $0x68] sm:$0xff]
  %v96 = vld [vmem:[%s0 + $0x70] sm:$0xff]
  %v97 = vld [vmem:[%s0 + $0x78] sm:$0xff]
  %s98 = scalar_lea.vmem [#allocation2], 56
  %99 = vst.msk [vmem:[%s98] sm:$0xff] %vm45, %v82
  %100 = vst.msk [vmem:[%s98 + $0x8] sm:$0xff] %vm45, %v83
  %101 = vst.msk [vmem:[%s98 + $0x10] sm:$0xff] %vm45, %v84
  %102 = vst.msk [vmem:[%s98 + $0x18] sm:$0xff] %vm45, %v85
  %103 = vst.msk [vmem:[%s98 + $0x30] sm:$0xff] %vm45, %v86
  %104 = vst.msk [vmem:[%s98 + $0x38] sm:$0xff] %vm45, %v87
  %105 = vst.msk [vmem:[%s98 + $0x40] sm:$0xff] %vm45, %v88
  %106 = vst.msk [vmem:[%s98 + $0x48] sm:$0xff] %vm45, %v89
  %107 = vst.msk [vmem:[%s98 + $0x60] sm:$0xff] %vm45, %v90
  %108 = vst.msk [vmem:[%s98 + $0x68] sm:$0xff] %vm45, %v91
  %109 = vst.msk [vmem:[%s98 + $0x70] sm:$0xff] %vm45, %v92
  %110 = vst.msk [vmem:[%s98 + $0x78] sm:$0xff] %vm45, %v93
  %111 = vst.msk [vmem:[%s98 + $0x90] sm:$0xff] %vm45, %v94
  %112 = vst.msk [vmem:[%s98 + $0x98] sm:$0xff] %vm45, %v95
  %113 = vst.msk [vmem:[%s98 + $0xa0] sm:$0xff] %vm45, %v96
  %114 = vst.msk [vmem:[%s98 + $0xa8] sm:$0xff] %vm45, %v97
  %v115 = vld [vmem:[#allocation2] sm:$0xff]
  %v116 = vld [vmem:[#allocation2 + $0x8] sm:$0xff]
  %v117 = vld [vmem:[#allocation2 + $0x10] sm:$0xff]
  %v118 = vld [vmem:[#allocation2 + $0x18] sm:$0xff]
  %v119 = vld [vmem:[#allocation2 + $0x20] sm:$0xff]
  %v120 = vld [vmem:[#allocation2 + $0x30] sm:$0xff]
  %v121 = vld [vmem:[#allocation2 + $0x38] sm:$0xff]
  %v122 = vld [vmem:[#allocation2 + $0x40] sm:$0xff]
  %v123 = vld [vmem:[#allocation2 + $0x48] sm:$0xff]
  %v124 = vld [vmem:[#allocation2 + $0x50] sm:$0xff]
  %v125 = vld [vmem:[#allocation2 + $0x60] sm:$0xff]
  %v126 = vld [vmem:[#allocation2 + $0x68] sm:$0xff]
  %v127 = vld [vmem:[#allocation2 + $0x70] sm:$0xff]
  %v128 = vld [vmem:[#allocation2 + $0x78] sm:$0xff]
  %v129 = vld [vmem:[#allocation2 + $0x80] sm:$0xff]
  %v130 = vld [vmem:[#allocation2 + $0x90] sm:$0xff]
  %v131 = vld [vmem:[#allocation2 + $0x98] sm:$0xff]
  %v132 = vld [vmem:[#allocation2 + $0xa0] sm:$0xff]
  %v133 = vld [vmem:[#allocation2 + $0xa8] sm:$0xff]
  %v134 = vld [vmem:[#allocation2 + $0xb0] sm:$0xff]
  %v135 = vld [vmem:[#allocation2 + $0xc0] sm:$0xff]
  %v136 = vld [vmem:[#allocation2 + $0xc8] sm:$0xff]
  %v137 = vld [vmem:[#allocation2 + $0xd0] sm:$0xff]
  %v138 = vld [vmem:[#allocation2 + $0xd8] sm:$0xff]
  %v139 = vld [vmem:[#allocation2 + $0xe0] sm:$0xff]
  %v140 = vld [vmem:[%s1] sm:$0x1]
  %v141 = vunpack.c.l.bf16 %v140
  %143 = vset.pattern.permute.xlu0 0
  %144 = vperm.xlu0 %143, %v115
  %v145 = vpop.permute.xlu0 %144
  %148 = vset.pattern.permute.xlu0 0
  %149 = vperm.xlu0 %148, %v116
  %v150 = vpop.permute.xlu0 %149
  %153 = vset.pattern.permute.xlu0 0
  %154 = vperm.xlu0 %153, %v117
  %v155 = vpop.permute.xlu0 %154
  %158 = vset.pattern.permute.xlu0 0
  %159 = vperm.xlu0 %158, %v118
  %v160 = vpop.permute.xlu0 %159
  %163 = vset.pattern.permute.xlu0 0
  %164 = vperm.xlu0 %163, %v119
  %v165 = vpop.permute.xlu0 %164
  %168 = vset.pattern.permute.xlu0 0
  %169 = vperm.xlu0 %168, %v120
  %v170 = vpop.permute.xlu0 %169
  %173 = vset.pattern.permute.xlu0 0
  %174 = vperm.xlu0 %173, %v121
  %v175 = vpop.permute.xlu0 %174
  %178 = vset.pattern.permute.xlu0 0
  %179 = vperm.xlu0 %178, %v122
  %v180 = vpop.permute.xlu0 %179
  %183 = vset.pattern.permute.xlu0 0
  %184 = vperm.xlu0 %183, %v123
  %v185 = vpop.permute.xlu0 %184
  %188 = vset.pattern.permute.xlu0 0
  %189 = vperm.xlu0 %188, %v124
  %v190 = vpop.permute.xlu0 %189
  %193 = vset.pattern.permute.xlu0 0
  %194 = vperm.xlu0 %193, %v125
  %v195 = vpop.permute.xlu0 %194
  %198 = vset.pattern.permute.xlu0 0
  %199 = vperm.xlu0 %198, %v126
  %v200 = vpop.permute.xlu0 %199
  %203 = vset.pattern.permute.xlu0 0
  %204 = vperm.xlu0 %203, %v127
  %v205 = vpop.permute.xlu0 %204
  %208 = vset.pattern.permute.xlu0 0
  %209 = vperm.xlu0 %208, %v128
  %v210 = vpop.permute.xlu0 %209
  %213 = vset.pattern.permute.xlu0 0
  %214 = vperm.xlu0 %213, %v129
  %v215 = vpop.permute.xlu0 %214
  %218 = vset.pattern.permute.xlu0 0
  %219 = vperm.xlu0 %218, %v130
  %v220 = vpop.permute.xlu0 %219
  %223 = vset.pattern.permute.xlu0 0
  %224 = vperm.xlu0 %223, %v131
  %v225 = vpop.permute.xlu0 %224
  %228 = vset.pattern.permute.xlu0 0
  %229 = vperm.xlu0 %228, %v132
  %v230 = vpop.permute.xlu0 %229
  %233 = vset.pattern.permute.xlu0 0
  %234 = vperm.xlu0 %233, %v133
  %v235 = vpop.permute.xlu0 %234
  %238 = vset.pattern.permute.xlu0 0
  %239 = vperm.xlu0 %238, %v134
  %v240 = vpop.permute.xlu0 %239
  %243 = vset.pattern.permute.xlu0 0
  %244 = vperm.xlu0 %243, %v135
  %v245 = vpop.permute.xlu0 %244
  %248 = vset.pattern.permute.xlu0 0
  %249 = vperm.xlu0 %248, %v136
  %v250 = vpop.permute.xlu0 %249
  %253 = vset.pattern.permute.xlu0 0
  %254 = vperm.xlu0 %253, %v137
  %v255 = vpop.permute.xlu0 %254
  %258 = vset.pattern.permute.xlu0 0
  %259 = vperm.xlu0 %258, %v138
  %v260 = vpop.permute.xlu0 %259
  %263 = vset.pattern.permute.xlu0 0
  %264 = vperm.xlu0 %263, %v139
  %v265 = vpop.permute.xlu0 %264
  %v267 = vlaneseq
  %v268 = vshrl.u32 %v267, 7
  %v269 = vsub.s32 0, %v268
  %v270 = vrot.slane %v141, %v269
  %v271 = vmul.f32 %v145, %v270
  %v272 = vmul.f32 %v150, %v270
  %v273 = vmul.f32 %v155, %v270
  %v274 = vmul.f32 %v160, %v270
  %v275 = vmul.f32 %v165, %v270
  %v276 = vmul.f32 %v170, %v270
  %v277 = vmul.f32 %v175, %v270
  %v278 = vmul.f32 %v180, %v270
  %v279 = vmul.f32 %v185, %v270
  %v280 = vmul.f32 %v190, %v270
  %v281 = vmul.f32 %v195, %v270
  %v282 = vmul.f32 %v200, %v270
  %v283 = vmul.f32 %v205, %v270
  %v284 = vmul.f32 %v210, %v270
  %v285 = vmul.f32 %v215, %v270
  %v286 = vmul.f32 %v220, %v270
  %v287 = vmul.f32 %v225, %v270
  %v288 = vmul.f32 %v230, %v270
  %v289 = vmul.f32 %v235, %v270
  %v290 = vmul.f32 %v240, %v270
  %v291 = vmul.f32 %v245, %v270
  %v292 = vmul.f32 %v250, %v270
  %v293 = vmul.f32 %v255, %v270
  %v294 = vmul.f32 %v260, %v270
  %v295 = vmul.f32 %v265, %v270
  %s296 = scalar_lea.vmem [#allocation2], 8
  %v297 = vld [vmem:[%s296] sm:$0xff]
  %v298 = vld [vmem:[%s296 + $0x8] sm:$0xff]
  %v299 = vld [vmem:[%s296 + $0x10] sm:$0xff]
  %v300 = vld [vmem:[%s296 + $0x18] sm:$0xff]
  %v301 = vld [vmem:[%s296 + $0x20] sm:$0xff]
  %v302 = vld [vmem:[%s296 + $0x30] sm:$0xff]
  %v303 = vld [vmem:[%s296 + $0x38] sm:$0xff]
  %v304 = vld [vmem:[%s296 + $0x40] sm:$0xff]
  %v305 = vld [vmem:[%s296 + $0x48] sm:$0xff]
  %v306 = vld [vmem:[%s296 + $0x50] sm:$0xff]
  %v307 = vld [vmem:[%s296 + $0x60] sm:$0xff]
  %v308 = vld [vmem:[%s296 + $0x68] sm:$0xff]
  %v309 = vld [vmem:[%s296 + $0x70] sm:$0xff]
  %v310 = vld [vmem:[%s296 + $0x78] sm:$0xff]
  %v311 = vld [vmem:[%s296 + $0x80] sm:$0xff]
  %v312 = vld [vmem:[%s296 + $0x90] sm:$0xff]
  %v313 = vld [vmem:[%s296 + $0x98] sm:$0xff]
  %v314 = vld [vmem:[%s296 + $0xa0] sm:$0xff]
  %v315 = vld [vmem:[%s296 + $0xa8] sm:$0xff]
  %v316 = vld [vmem:[%s296 + $0xb0] sm:$0xff]
  %v317 = vld [vmem:[%s296 + $0xc0] sm:$0xff]
  %v318 = vld [vmem:[%s296 + $0xc8] sm:$0xff]
  %v319 = vld [vmem:[%s296 + $0xd0] sm:$0xff]
  %v320 = vld [vmem:[%s296 + $0xd8] sm:$0xff]
  %v321 = vld [vmem:[%s296 + $0xe0] sm:$0xff]
  %323 = vset.pattern.permute.xlu0 0
  %324 = vperm.xlu0 %323, %v297
  %v325 = vpop.permute.xlu0 %324
  %328 = vset.pattern.permute.xlu0 0
  %329 = vperm.xlu0 %328, %v298
  %v330 = vpop.permute.xlu0 %329
  %333 = vset.pattern.permute.xlu0 0
  %334 = vperm.xlu0 %333, %v299
  %v335 = vpop.permute.xlu0 %334
  %338 = vset.pattern.permute.xlu0 0
  %339 = vperm.xlu0 %338, %v300
  %v340 = vpop.permute.xlu0 %339
  %343 = vset.pattern.permute.xlu0 0
  %344 = vperm.xlu0 %343, %v301
  %v345 = vpop.permute.xlu0 %344
  %348 = vset.pattern.permute.xlu0 0
  %349 = vperm.xlu0 %348, %v302
  %v350 = vpop.permute.xlu0 %349
  %353 = vset.pattern.permute.xlu0 0
  %354 = vperm.xlu0 %353, %v303
  %v355 = vpop.permute.xlu0 %354
  %358 = vset.pattern.permute.xlu0 0
  %359 = vperm.xlu0 %358, %v304
  %v360 = vpop.permute.xlu0 %359
  %363 = vset.pattern.permute.xlu0 0
  %364 = vperm.xlu0 %363, %v305
  %v365 = vpop.permute.xlu0 %364
  %368 = vset.pattern.permute.xlu0 0
  %369 = vperm.xlu0 %368, %v306
  %v370 = vpop.permute.xlu0 %369
  %373 = vset.pattern.permute.xlu0 0
  %374 = vperm.xlu0 %373, %v307
  %v375 = vpop.permute.xlu0 %374
  %378 = vset.pattern.permute.xlu0 0
  %379 = vperm.xlu0 %378, %v308
  %v380 = vpop.permute.xlu0 %379
  %383 = vset.pattern.permute.xlu0 0
  %384 = vperm.xlu0 %383, %v309
  %v385 = vpop.permute.xlu0 %384
  %388 = vset.pattern.permute.xlu0 0
  %389 = vperm.xlu0 %388, %v310
  %v390 = vpop.permute.xlu0 %389
  %393 = vset.pattern.permute.xlu0 0
  %394 = vperm.xlu0 %393, %v311
  %v395 = vpop.permute.xlu0 %394
  %398 = vset.pattern.permute.xlu0 0
  %399 = vperm.xlu0 %398, %v312
  %v400 = vpop.permute.xlu0 %399
  %403 = vset.pattern.permute.xlu0 0
  %404 = vperm.xlu0 %403, %v313
  %v405 = vpop.permute.xlu0 %404
  %408 = vset.pattern.permute.xlu0 0
  %409 = vperm.xlu0 %408, %v314
  %v410 = vpop.permute.xlu0 %409
  %413 = vset.pattern.permute.xlu0 0
  %414 = vperm.xlu0 %413, %v315
  %v415 = vpop.permute.xlu0 %414
  %418 = vset.pattern.permute.xlu0 0
  %419 = vperm.xlu0 %418, %v316
  %v420 = vpop.permute.xlu0 %419
  %423 = vset.pattern.permute.xlu0 0
  %424 = vperm.xlu0 %423, %v317
  %v425 = vpop.permute.xlu0 %424
  %428 = vset.pattern.permute.xlu0 0
  %429 = vperm.xlu0 %428, %v318
  %v430 = vpop.permute.xlu0 %429
  %433 = vset.pattern.permute.xlu0 0
  %434 = vperm.xlu0 %433, %v319
  %v435 = vpop.permute.xlu0 %434
  %438 = vset.pattern.permute.xlu0 0
  %439 = vperm.xlu0 %438, %v320
  %v440 = vpop.permute.xlu0 %439
  %443 = vset.pattern.permute.xlu0 0
  %444 = vperm.xlu0 %443, %v321
  %v445 = vpop.permute.xlu0 %444
  %v447 = vlaneseq
  %v448 = vshrl.u32 %v447, 7
  %v449 = vsub.s32 1, %v448
  %v450 = vrot.slane %v141, %v449
  %v451 = vmul.f32 %v325, %v450
  %v452 = vmul.f32 %v330, %v450
  %v453 = vmul.f32 %v335, %v450
  %v454 = vmul.f32 %v340, %v450
  %v455 = vmul.f32 %v345, %v450
  %v456 = vmul.f32 %v350, %v450
  %v457 = vmul.f32 %v355, %v450
  %v458 = vmul.f32 %v360, %v450
  %v459 = vmul.f32 %v365, %v450
  %v460 = vmul.f32 %v370, %v450
  %v461 = vmul.f32 %v375, %v450
  %v462 = vmul.f32 %v380, %v450
  %v463 = vmul.f32 %v385, %v450
  %v464 = vmul.f32 %v390, %v450
  %v465 = vmul.f32 %v395, %v450
  %v466 = vmul.f32 %v400, %v450
  %v467 = vmul.f32 %v405, %v450
  %v468 = vmul.f32 %v410, %v450
  %v469 = vmul.f32 %v415, %v450
  %v470 = vmul.f32 %v420, %v450
  %v471 = vmul.f32 %v425, %v450
  %v472 = vmul.f32 %v430, %v450
  %v473 = vmul.f32 %v435, %v450
  %v474 = vmul.f32 %v440, %v450
  %v475 = vmul.f32 %v445, %v450
  %v476 = vadd.f32 %v271, %v451
  %v477 = vadd.f32 %v272, %v452
  %v478 = vadd.f32 %v273, %v453
  %v479 = vadd.f32 %v274, %v454
  %v480 = vadd.f32 %v275, %v455
  %v481 = vadd.f32 %v276, %v456
  %v482 = vadd.f32 %v277, %v457
  %v483 = vadd.f32 %v278, %v458
  %v484 = vadd.f32 %v279, %v459
  %v485 = vadd.f32 %v280, %v460
  %v486 = vadd.f32 %v281, %v461
  %v487 = vadd.f32 %v282, %v462
  %v488 = vadd.f32 %v283, %v463
  %v489 = vadd.f32 %v284, %v464
  %v490 = vadd.f32 %v285, %v465
  %v491 = vadd.f32 %v286, %v466
  %v492 = vadd.f32 %v287, %v467
  %v493 = vadd.f32 %v288, %v468
  %v494 = vadd.f32 %v289, %v469
  %v495 = vadd.f32 %v290, %v470
  %v496 = vadd.f32 %v291, %v471
  %v497 = vadd.f32 %v292, %v472
  %v498 = vadd.f32 %v293, %v473
  %v499 = vadd.f32 %v294, %v474
  %v500 = vadd.f32 %v295, %v475
  %s501 = scalar_lea.vmem [#allocation2], 48
  %v502 = vld [vmem:[%s501] sm:$0xff]
  %v503 = vld [vmem:[%s501 + $0x8] sm:$0xff]
  %v504 = vld [vmem:[%s501 + $0x10] sm:$0xff]
  %v505 = vld [vmem:[%s501 + $0x18] sm:$0xff]
  %v506 = vld [vmem:[%s501 + $0x20] sm:$0xff]
  %v507 = vld [vmem:[%s501 + $0x30] sm:$0xff]
  %v508 = vld [vmem:[%s501 + $0x38] sm:$0xff]
  %v509 = vld [vmem:[%s501 + $0x40] sm:$0xff]
  %v510 = vld [vmem:[%s501 + $0x48] sm:$0xff]
  %v511 = vld [vmem:[%s501 + $0x50] sm:$0xff]
  %v512 = vld [vmem:[%s501 + $0x60] sm:$0xff]
  %v513 = vld [vmem:[%s501 + $0x68] sm:$0xff]
  %v514 = vld [vmem:[%s501 + $0x70] sm:$0xff]
  %v515 = vld [vmem:[%s501 + $0x78] sm:$0xff]
  %v516 = vld [vmem:[%s501 + $0x80] sm:$0xff]
  %v517 = vld [vmem:[%s501 + $0x90] sm:$0xff]
  %v518 = vld [vmem:[%s501 + $0x98] sm:$0xff]
  %v519 = vld [vmem:[%s501 + $0xa0] sm:$0xff]
  %v520 = vld [vmem:[%s501 + $0xa8] sm:$0xff]
  %v521 = vld [vmem:[%s501 + $0xb0] sm:$0xff]
  %v522 = vld [vmem:[%s501 + $0xc0] sm:$0xff]
  %v523 = vld [vmem:[%s501 + $0xc8] sm:$0xff]
  %v524 = vld [vmem:[%s501 + $0xd0] sm:$0xff]
  %v525 = vld [vmem:[%s501 + $0xd8] sm:$0xff]
  %v526 = vld [vmem:[%s501 + $0xe0] sm:$0xff]
  %v527 = vld [vmem:[%s1] sm:$0x2]
  %v528 = vunpack.c.l.bf16 %v527
  %530 = vset.pattern.permute.xlu0 0
  %531 = vperm.xlu0 %530, %v502
  %v532 = vpop.permute.xlu0 %531
  %535 = vset.pattern.permute.xlu0 0
  %536 = vperm.xlu0 %535, %v503
  %v537 = vpop.permute.xlu0 %536
  %540 = vset.pattern.permute.xlu0 0
  %541 = vperm.xlu0 %540, %v504
  %v542 = vpop.permute.xlu0 %541
  %545 = vset.pattern.permute.xlu0 0
  %546 = vperm.xlu0 %545, %v505
  %v547 = vpop.permute.xlu0 %546
  %550 = vset.pattern.permute.xlu0 0
  %551 = vperm.xlu0 %550, %v506
  %v552 = vpop.permute.xlu0 %551
  %555 = vset.pattern.permute.xlu0 0
  %556 = vperm.xlu0 %555, %v507
  %v557 = vpop.permute.xlu0 %556
  %560 = vset.pattern.permute.xlu0 0
  %561 = vperm.xlu0 %560, %v508
  %v562 = vpop.permute.xlu0 %561
  %565 = vset.pattern.permute.xlu0 0
  %566 = vperm.xlu0 %565, %v509
  %v567 = vpop.permute.xlu0 %566
  %570 = vset.pattern.permute.xlu0 0
  %571 = vperm.xlu0 %570, %v510
  %v572 = vpop.permute.xlu0 %571
  %575 = vset.pattern.permute.xlu0 0
  %576 = vperm.xlu0 %575, %v511
  %v577 = vpop.permute.xlu0 %576
  %580 = vset.pattern.permute.xlu0 0
  %581 = vperm.xlu0 %580, %v512
  %v582 = vpop.permute.xlu0 %581
  %585 = vset.pattern.permute.xlu0 0
  %586 = vperm.xlu0 %585, %v513
  %v587 = vpop.permute.xlu0 %586
  %590 = vset.pattern.permute.xlu0 0
  %591 = vperm.xlu0 %590, %v514
  %v592 = vpop.permute.xlu0 %591
  %595 = vset.pattern.permute.xlu0 0
  %596 = vperm.xlu0 %595, %v515
  %v597 = vpop.permute.xlu0 %596
  %600 = vset.pattern.permute.xlu0 0
  %601 = vperm.xlu0 %600, %v516
  %v602 = vpop.permute.xlu0 %601
  %605 = vset.pattern.permute.xlu0 0
  %606 = vperm.xlu0 %605, %v517
  %v607 = vpop.permute.xlu0 %606
  %610 = vset.pattern.permute.xlu0 0
  %611 = vperm.xlu0 %610, %v518
  %v612 = vpop.permute.xlu0 %611
  %615 = vset.pattern.permute.xlu0 0
  %616 = vperm.xlu0 %615, %v519
  %v617 = vpop.permute.xlu0 %616
  %620 = vset.pattern.permute.xlu0 0
  %621 = vperm.xlu0 %620, %v520
  %v622 = vpop.permute.xlu0 %621
  %625 = vset.pattern.permute.xlu0 0
  %626 = vperm.xlu0 %625, %v521
  %v627 = vpop.permute.xlu0 %626
  %630 = vset.pattern.permute.xlu0 0
  %631 = vperm.xlu0 %630, %v522
  %v632 = vpop.permute.xlu0 %631
  %635 = vset.pattern.permute.xlu0 0
  %636 = vperm.xlu0 %635, %v523
  %v637 = vpop.permute.xlu0 %636
  %640 = vset.pattern.permute.xlu0 0
  %641 = vperm.xlu0 %640, %v524
  %v642 = vpop.permute.xlu0 %641
  %645 = vset.pattern.permute.xlu0 0
  %646 = vperm.xlu0 %645, %v525
  %v647 = vpop.permute.xlu0 %646
  %650 = vset.pattern.permute.xlu0 0
  %651 = vperm.xlu0 %650, %v526
  %v652 = vpop.permute.xlu0 %651
  %v654 = vlaneseq
  %v655 = vshrl.u32 %v654, 7
  %v656 = vsub.s32 2, %v655
  %v657 = vrot.slane %v528, %v656
  %v658 = vmul.f32 %v532, %v657
  %v659 = vmul.f32 %v537, %v657
  %v660 = vmul.f32 %v542, %v657
  %v661 = vmul.f32 %v547, %v657
  %v662 = vmul.f32 %v552, %v657
  %v663 = vmul.f32 %v557, %v657
  %v664 = vmul.f32 %v562, %v657
  %v665 = vmul.f32 %v567, %v657
  %v666 = vmul.f32 %v572, %v657
  %v667 = vmul.f32 %v577, %v657
  %v668 = vmul.f32 %v582, %v657
  %v669 = vmul.f32 %v587, %v657
  %v670 = vmul.f32 %v592, %v657
  %v671 = vmul.f32 %v597, %v657
  %v672 = vmul.f32 %v602, %v657
  %v673 = vmul.f32 %v607, %v657
  %v674 = vmul.f32 %v612, %v657
  %v675 = vmul.f32 %v617, %v657
  %v676 = vmul.f32 %v622, %v657
  %v677 = vmul.f32 %v627, %v657
  %v678 = vmul.f32 %v632, %v657
  %v679 = vmul.f32 %v637, %v657
  %v680 = vmul.f32 %v642, %v657
  %v681 = vmul.f32 %v647, %v657
  %v682 = vmul.f32 %v652, %v657
  %v683 = vadd.f32 %v476, %v658
  %v684 = vadd.f32 %v477, %v659
  %v685 = vadd.f32 %v478, %v660
  %v686 = vadd.f32 %v479, %v661
  %v687 = vadd.f32 %v480, %v662
  %v688 = vadd.f32 %v481, %v663
  %v689 = vadd.f32 %v482, %v664
  %v690 = vadd.f32 %v483, %v665
  %v691 = vadd.f32 %v484, %v666
  %v692 = vadd.f32 %v485, %v667
  %v693 = vadd.f32 %v486, %v668
  %v694 = vadd.f32 %v487, %v669
  %v695 = vadd.f32 %v488, %v670
  %v696 = vadd.f32 %v489, %v671
  %v697 = vadd.f32 %v490, %v672
  %v698 = vadd.f32 %v491, %v673
  %v699 = vadd.f32 %v492, %v674
  %v700 = vadd.f32 %v493, %v675
  %v701 = vadd.f32 %v494, %v676
  %v702 = vadd.f32 %v495, %v677
  %v703 = vadd.f32 %v496, %v678
  %v704 = vadd.f32 %v497, %v679
  %v705 = vadd.f32 %v498, %v680
  %v706 = vadd.f32 %v499, %v681
  %v707 = vadd.f32 %v500, %v682
  %v708 = vld [vmem:[%s98] sm:$0xff]
  %v709 = vld [vmem:[%s98 + $0x8] sm:$0xff]
  %v710 = vld [vmem:[%s98 + $0x10] sm:$0xff]
  %v711 = vld [vmem:[%s98 + $0x18] sm:$0xff]
  %v712 = vld [vmem:[%s98 + $0x20] sm:$0xff]
  %v713 = vld [vmem:[%s98 + $0x30] sm:$0xff]
  %v714 = vld [vmem:[%s98 + $0x38] sm:$0xff]
  %v715 = vld [vmem:[%s98 + $0x40] sm:$0xff]
  %v716 = vld [vmem:[%s98 + $0x48] sm:$0xff]
  %v717 = vld [vmem:[%s98 + $0x50] sm:$0xff]
  %v718 = vld [vmem:[%s98 + $0x60] sm:$0xff]
  %v719 = vld [vmem:[%s98 + $0x68] sm:$0xff]
  %v720 = vld [vmem:[%s98 + $0x70] sm:$0xff]
  %v721 = vld [vmem:[%s98 + $0x78] sm:$0xff]
  %v722 = vld [vmem:[%s98 + $0x80] sm:$0xff]
  %v723 = vld [vmem:[%s98 + $0x90] sm:$0xff]
  %v724 = vld [vmem:[%s98 + $0x98] sm:$0xff]
  %v725 = vld [vmem:[%s98 + $0xa0] sm:$0xff]
  %v726 = vld [vmem:[%s98 + $0xa8] sm:$0xff]
  %v727 = vld [vmem:[%s98 + $0xb0] sm:$0xff]
  %v728 = vld [vmem:[%s98 + $0xc0] sm:$0xff]
  %v729 = vld [vmem:[%s98 + $0xc8] sm:$0xff]
  %v730 = vld [vmem:[%s98 + $0xd0] sm:$0xff]
  %v731 = vld [vmem:[%s98 + $0xd8] sm:$0xff]
  %v732 = vld [vmem:[%s98 + $0xe0] sm:$0xff]
  %734 = vset.pattern.permute.xlu0 0
  %735 = vperm.xlu0 %734, %v708
  %v736 = vpop.permute.xlu0 %735
  %739 = vset.pattern.permute.xlu0 0
  %740 = vperm.xlu0 %739, %v709
  %v741 = vpop.permute.xlu0 %740
  %744 = vset.pattern.permute.xlu0 0
  %745 = vperm.xlu0 %744, %v710
  %v746 = vpop.permute.xlu0 %745
  %749 = vset.pattern.permute.xlu0 0
  %750 = vperm.xlu0 %749, %v711
  %v751 = vpop.permute.xlu0 %750
  %754 = vset.pattern.permute.xlu0 0
  %755 = vperm.xlu0 %754, %v712
  %v756 = vpop.permute.xlu0 %755
  %759 = vset.pattern.permute.xlu0 0
  %760 = vperm.xlu0 %759, %v713
  %v761 = vpop.permute.xlu0 %760
  %764 = vset.pattern.permute.xlu0 0
  %765 = vperm.xlu0 %764, %v714
  %v766 = vpop.permute.xlu0 %765
  %769 = vset.pattern.permute.xlu0 0
  %770 = vperm.xlu0 %769, %v715
  %v771 = vpop.permute.xlu0 %770
  %774 = vset.pattern.permute.xlu0 0
  %775 = vperm.xlu0 %774, %v716
  %v776 = vpop.permute.xlu0 %775
  %779 = vset.pattern.permute.xlu0 0
  %780 = vperm.xlu0 %779, %v717
  %v781 = vpop.permute.xlu0 %780
  %784 = vset.pattern.permute.xlu0 0
  %785 = vperm.xlu0 %784, %v718
  %v786 = vpop.permute.xlu0 %785
  %789 = vset.pattern.permute.xlu0 0
  %790 = vperm.xlu0 %789, %v719
  %v791 = vpop.permute.xlu0 %790
  %794 = vset.pattern.permute.xlu0 0
  %795 = vperm.xlu0 %794, %v720
  %v796 = vpop.permute.xlu0 %795
  %799 = vset.pattern.permute.xlu0 0
  %800 = vperm.xlu0 %799, %v721
  %v801 = vpop.permute.xlu0 %800
  %804 = vset.pattern.permute.xlu0 0
  %805 = vperm.xlu0 %804, %v722
  %v806 = vpop.permute.xlu0 %805
  %809 = vset.pattern.permute.xlu0 0
  %810 = vperm.xlu0 %809, %v723
  %v811 = vpop.permute.xlu0 %810
  %814 = vset.pattern.permute.xlu0 0
  %815 = vperm.xlu0 %814, %v724
  %v816 = vpop.permute.xlu0 %815
  %819 = vset.pattern.permute.xlu0 0
  %820 = vperm.xlu0 %819, %v725
  %v821 = vpop.permute.xlu0 %820
  %824 = vset.pattern.permute.xlu0 0
  %825 = vperm.xlu0 %824, %v726
  %v826 = vpop.permute.xlu0 %825
  %829 = vset.pattern.permute.xlu0 0
  %830 = vperm.xlu0 %829, %v727
  %v831 = vpop.permute.xlu0 %830
  %834 = vset.pattern.permute.xlu0 0
  %835 = vperm.xlu0 %834, %v728
  %v836 = vpop.permute.xlu0 %835
  %839 = vset.pattern.permute.xlu0 0
  %840 = vperm.xlu0 %839, %v729
  %v841 = vpop.permute.xlu0 %840
  %844 = vset.pattern.permute.xlu0 0
  %845 = vperm.xlu0 %844, %v730
  %v846 = vpop.permute.xlu0 %845
  %849 = vset.pattern.permute.xlu0 0
  %850 = vperm.xlu0 %849, %v731
  %v851 = vpop.permute.xlu0 %850
  %854 = vset.pattern.permute.xlu0 0
  %855 = vperm.xlu0 %854, %v732
  %v856 = vpop.permute.xlu0 %855
  %v858 = vlaneseq
  %v859 = vshrl.u32 %v858, 7
  %v860 = vsub.s32 3, %v859
  %v861 = vrot.slane %v528, %v860
  %v862 = vmul.f32 %v736, %v861
  %v863 = vmul.f32 %v741, %v861
  %v864 = vmul.f32 %v746, %v861
  %v865 = vmul.f32 %v751, %v861
  %v866 = vmul.f32 %v756, %v861
  %v867 = vmul.f32 %v761, %v861
  %v868 = vmul.f32 %v766, %v861
  %v869 = vmul.f32 %v771, %v861
  %v870 = vmul.f32 %v776, %v861
  %v871 = vmul.f32 %v781, %v861
  %v872 = vmul.f32 %v786, %v861
  %v873 = vmul.f32 %v791, %v861
  %v874 = vmul.f32 %v796, %v861
  %v875 = vmul.f32 %v801, %v861
  %v876 = vmul.f32 %v806, %v861
  %v877 = vmul.f32 %v811, %v861
  %v878 = vmul.f32 %v816, %v861
  %v879 = vmul.f32 %v821, %v861
  %v880 = vmul.f32 %v826, %v861
  %v881 = vmul.f32 %v831, %v861
  %v882 = vmul.f32 %v836, %v861
  %v883 = vmul.f32 %v841, %v861
  %v884 = vmul.f32 %v846, %v861
  %v885 = vmul.f32 %v851, %v861
  %v886 = vmul.f32 %v856, %v861
  %v887 = vadd.f32 %v683, %v862
  %v888 = vadd.f32 %v684, %v863
  %v889 = vadd.f32 %v685, %v864
  %v890 = vadd.f32 %v686, %v865
  %v891 = vadd.f32 %v687, %v866
  %v892 = vadd.f32 %v688, %v867
  %v893 = vadd.f32 %v689, %v868
  %v894 = vadd.f32 %v690, %v869
  %v895 = vadd.f32 %v691, %v870
  %v896 = vadd.f32 %v692, %v871
  %v897 = vadd.f32 %v693, %v872
  %v898 = vadd.f32 %v694, %v873
  %v899 = vadd.f32 %v695, %v874
  %v900 = vadd.f32 %v696, %v875
  %v901 = vadd.f32 %v697, %v876
  %v902 = vadd.f32 %v698, %v877
  %v903 = vadd.f32 %v699, %v878
  %v904 = vadd.f32 %v700, %v879
  %v905 = vadd.f32 %v701, %v880
  %v906 = vadd.f32 %v702, %v881
  %v907 = vadd.f32 %v703, %v882
  %v908 = vadd.f32 %v704, %v883
  %v909 = vadd.f32 %v705, %v884
  %v910 = vadd.f32 %v706, %v885
  %v911 = vadd.f32 %v707, %v886
  %v912 = vld [vmem:[%s2] sm:$0x1]
  %v914 = vlaneseq
  %v915 = vshrl.u32 %v914, 7
  %v916 = vsub.s32 0, %v915
  %v917 = vrot.slane %v912, %v916
  %v919 = vadd.f32 %v887, %v917
  %v920 = vadd.f32 %v888, %v917
  %v921 = vadd.f32 %v889, %v917
  %v922 = vadd.f32 %v890, %v917
  %v923 = vadd.f32 %v891, %v917
  %v924 = vadd.f32 %v892, %v917
  %v925 = vadd.f32 %v893, %v917
  %v926 = vadd.f32 %v894, %v917
  %v927 = vadd.f32 %v895, %v917
  %v928 = vadd.f32 %v896, %v917
  %v929 = vadd.f32 %v897, %v917
  %v930 = vadd.f32 %v898, %v917
  %v931 = vadd.f32 %v899, %v917
  %v932 = vadd.f32 %v900, %v917
  %v933 = vadd.f32 %v901, %v917
  %v934 = vadd.f32 %v902, %v917
  %v935 = vadd.f32 %v903, %v917
  %v936 = vadd.f32 %v904, %v917
  %v937 = vadd.f32 %v905, %v917
  %v938 = vadd.f32 %v906, %v917
  %v939 = vadd.f32 %v907, %v917
  %v940 = vadd.f32 %v908, %v917
  %v941 = vadd.f32 %v909, %v917
  %v942 = vadd.f32 %v910, %v917
  %v943 = vadd.f32 %v911, %v917
  %v944 = vmax.f32 %v919, 0.0
  %v945 = vmax.f32 %v920, 0.0
  %v946 = vmax.f32 %v921, 0.0
  %v947 = vmax.f32 %v922, 0.0
  %v948 = vmax.f32 %v923, 0.0
  %v949 = vmax.f32 %v924, 0.0
  %v950 = vmax.f32 %v925, 0.0
  %v951 = vmax.f32 %v926, 0.0
  %v952 = vmax.f32 %v927, 0.0
  %v953 = vmax.f32 %v928, 0.0
  %v954 = vmax.f32 %v929, 0.0
  %v955 = vmax.f32 %v930, 0.0
  %v956 = vmax.f32 %v931, 0.0
  %v957 = vmax.f32 %v932, 0.0
  %v958 = vmax.f32 %v933, 0.0
  %v959 = vmax.f32 %v934, 0.0
  %v960 = vmax.f32 %v935, 0.0
  %v961 = vmax.f32 %v936, 0.0
  %v962 = vmax.f32 %v937, 0.0
  %v963 = vmax.f32 %v938, 0.0
  %v964 = vmax.f32 %v939, 0.0
  %v965 = vmax.f32 %v940, 0.0
  %v966 = vmax.f32 %v941, 0.0
  %v967 = vmax.f32 %v942, 0.0
  %v968 = vmax.f32 %v943, 0.0
  %vm969 = vcmask 261120
  %970 = vst.msk [vmem:[#allocation3] sm:$0xff] %vm969, 0.0
  %971 = vst.msk [vmem:[#allocation3 + $0x8] sm:$0xff] %vm969, 0.0
  %972 = vst.msk [vmem:[#allocation3 + $0x10] sm:$0xff] %vm969, 0.0
  %973 = vst.msk [vmem:[#allocation3 + $0x18] sm:$0xff] %vm969, 0.0
  %974 = vst.msk [vmem:[#allocation3 + $0x20] sm:$0xff] %vm969, 0.0
  %975 = vst.msk [vmem:[#allocation3 + $0x28] sm:$0xff] %vm969, 0.0
  %976 = vst.msk [vmem:[#allocation3 + $0x30] sm:$0xff] %vm969, 0.0
  %977 = vst.msk [vmem:[#allocation3 + $0x38] sm:$0xff] %vm969, 0.0
  %978 = vst.msk [vmem:[#allocation3 + $0x40] sm:$0xff] %vm969, 0.0
  %979 = vst.msk [vmem:[#allocation3 + $0x48] sm:$0xff] %vm969, 0.0
  %980 = vst.msk [vmem:[#allocation3 + $0x50] sm:$0xff] %vm969, 0.0
  %981 = vst.msk [vmem:[#allocation3 + $0x58] sm:$0xff] %vm969, 0.0
  %982 = vst.msk [vmem:[#allocation3 + $0x60] sm:$0xff] %vm969, 0.0
  %983 = vst.msk [vmem:[#allocation3 + $0x68] sm:$0xff] %vm969, 0.0
  %984 = vst.msk [vmem:[#allocation3 + $0x70] sm:$0xff] %vm969, 0.0
  %985 = vst.msk [vmem:[#allocation3 + $0x78] sm:$0xff] %vm969, 0.0
  %986 = vst.msk [vmem:[#allocation3 + $0x80] sm:$0xff] %vm969, 0.0
  %987 = vst.msk [vmem:[#allocation3 + $0x88] sm:$0xff] %vm969, 0.0
  %988 = vst.msk [vmem:[#allocation3 + $0x90] sm:$0xff] %vm969, 0.0
  %989 = vst.msk [vmem:[#allocation3 + $0x98] sm:$0xff] %vm969, 0.0
  %990 = vst.msk [vmem:[#allocation3 + $0xa0] sm:$0xff] %vm969, 0.0
  %991 = vst.msk [vmem:[#allocation3 + $0xa8] sm:$0xff] %vm969, 0.0
  %992 = vst.msk [vmem:[#allocation3 + $0xb0] sm:$0xff] %vm969, 0.0
  %993 = vst.msk [vmem:[#allocation3 + $0xb8] sm:$0xff] %vm969, 0.0
  %994 = vst.msk [vmem:[#allocation3 + $0xc0] sm:$0xff] %vm969, 0.0
  %995 = vst.msk [vmem:[#allocation3 + $0xc8] sm:$0xff] %vm969, 0.0
  %996 = vst.msk [vmem:[#allocation3 + $0xd0] sm:$0xff] %vm969, 0.0
  %997 = vst.msk [vmem:[#allocation3 + $0xd8] sm:$0xff] %vm969, 0.0
  %998 = vst.msk [vmem:[#allocation3 + $0xe0] sm:$0xff] %vm969, 0.0
  %999 = vst.msk [vmem:[#allocation3 + $0xe8] sm:$0xff] %vm969, 0.0
  %1000 = vst.msk [vmem:[#allocation3 + $0xf0] sm:$0xff] %vm969, 0.0
  %1001 = vst.msk [vmem:[#allocation3 + $0xf8] sm:$0xff] %vm969, 0.0
  %1002 = vst.msk [vmem:[#allocation3 + $0x100] sm:$0xff] %vm969, 0.0
  %1003 = vst.msk [vmem:[#allocation3 + $0x108] sm:$0xff] %vm969, 0.0
  %1004 = vst.msk [vmem:[#allocation3 + $0x110] sm:$0xff] %vm969, 0.0
  %1005 = vst.msk [vmem:[#allocation3 + $0x118] sm:$0xff] %vm969, 0.0
  %1006 = vst.msk [vmem:[#allocation3 + $0x120] sm:$0xff] %vm969, 0.0
  %1007 = vst.msk [vmem:[#allocation3 + $0x128] sm:$0xff] %vm969, 0.0
  %1008 = vst.msk [vmem:[#allocation3 + $0x130] sm:$0xff] %vm969, 0.0
  %1009 = vst.msk [vmem:[#allocation3 + $0x138] sm:$0xff] %vm969, 0.0
  %1010 = vst.msk [vmem:[#allocation3 + $0x140] sm:$0xff] %vm969, 0.0
  %1011 = vst.msk [vmem:[#allocation3 + $0x148] sm:$0xff] %vm969, 0.0
  %1012 = vst.msk [vmem:[#allocation3 + $0x150] sm:$0xff] %vm969, 0.0
  %1013 = vst.msk [vmem:[#allocation3 + $0x158] sm:$0xff] %vm969, 0.0
  %1014 = vst.msk [vmem:[#allocation3 + $0x160] sm:$0xff] %vm969, 0.0
  %1015 = vst.msk [vmem:[#allocation3 + $0x168] sm:$0xff] %vm969, 0.0
  %1016 = vst.msk [vmem:[#allocation3 + $0x170] sm:$0xff] %vm969, 0.0
  %1017 = vst.msk [vmem:[#allocation3 + $0x178] sm:$0xff] %vm969, 0.0
  %1018 = vst.msk [vmem:[#allocation3 + $0x180] sm:$0xff] %vm969, 0.0
  %s1019 = scalar_lea.vmem [#allocation3], 64
  %1020 = vst.msk [vmem:[%s1019] sm:$0xff] %vm969, %v944
  %1021 = vst.msk [vmem:[%s1019 + $0x8] sm:$0xff] %vm969, %v945
  %1022 = vst.msk [vmem:[%s1019 + $0x10] sm:$0xff] %vm969, %v946
  %1023 = vst.msk [vmem:[%s1019 + $0x18] sm:$0xff] %vm969, %v947
  %1024 = vst.msk [vmem:[%s1019 + $0x20] sm:$0xff] %vm969, %v948
  %1025 = vst.msk [vmem:[%s1019 + $0x38] sm:$0xff] %vm969, %v949
  %1026 = vst.msk [vmem:[%s1019 + $0x40] sm:$0xff] %vm969, %v950
  %1027 = vst.msk [vmem:[%s1019 + $0x48] sm:$0xff] %vm969, %v951
  %1028 = vst.msk [vmem:[%s1019 + $0x50] sm:$0xff] %vm969, %v952
  %1029 = vst.msk [vmem:[%s1019 + $0x58] sm:$0xff] %vm969, %v953
  %1030 = vst.msk [vmem:[%s1019 + $0x70] sm:$0xff] %vm969, %v954
  %1031 = vst.msk [vmem:[%s1019 + $0x78] sm:$0xff] %vm969, %v955
  %1032 = vst.msk [vmem:[%s1019 + $0x80] sm:$0xff] %vm969, %v956
  %1033 = vst.msk [vmem:[%s1019 + $0x88] sm:$0xff] %vm969, %v957
  %1034 = vst.msk [vmem:[%s1019 + $0x90] sm:$0xff] %vm969, %v958
  %1035 = vst.msk [vmem:[%s1019 + $0xa8] sm:$0xff] %vm969, %v959
  %1036 = vst.msk [vmem:[%s1019 + $0xb0] sm:$0xff] %vm969, %v960
  %1037 = vst.msk [vmem:[%s1019 + $0xb8] sm:$0xff] %vm969, %v961
  %1038 = vst.msk [vmem:[%s1019 + $0xc0] sm:$0xff] %vm969, %v962
  %1039 = vst.msk [vmem:[%s1019 + $0xc8] sm:$0xff] %vm969, %v963
  %1040 = vst.msk [vmem:[%s1019 + $0xe0] sm:$0xff] %vm969, %v964
  %1041 = vst.msk [vmem:[%s1019 + $0xe8] sm:$0xff] %vm969, %v965
  %1042 = vst.msk [vmem:[%s1019 + $0xf0] sm:$0xff] %vm969, %v966
  %1043 = vst.msk [vmem:[%s1019 + $0xf8] sm:$0xff] %vm969, %v967
  %1044 = vst.msk [vmem:[%s1019 + $0x100] sm:$0xff] %vm969, %v968
  %v1045 = vld [vmem:[#allocation3] sm:$0xff]
  %v1046 = vld [vmem:[#allocation3 + $0x8] sm:$0xff]
  %v1047 = vld [vmem:[#allocation3 + $0x10] sm:$0xff]
  %v1048 = vld [vmem:[#allocation3 + $0x18] sm:$0xff]
  %v1049 = vld [vmem:[#allocation3 + $0x20] sm:$0xff]
  %v1050 = vld [vmem:[#allocation3 + $0x28] sm:$0xff]
  %v1051 = vld [vmem:[#allocation3 + $0x38] sm:$0xff]
  %v1052 = vld [vmem:[#allocation3 + $0x40] sm:$0xff]
  %v1053 = vld [vmem:[#allocation3 + $0x48] sm:$0xff]
  %v1054 = vld [vmem:[#allocation3 + $0x50] sm:$0xff]
  %v1055 = vld [vmem:[#allocation3 + $0x58] sm:$0xff]
  %v1056 = vld [vmem:[#allocation3 + $0x60] sm:$0xff]
  %v1057 = vld [vmem:[#allocation3 + $0x70] sm:$0xff]
  %v1058 = vld [vmem:[#allocation3 + $0x78] sm:$0xff]
  %v1059 = vld [vmem:[#allocation3 + $0x80] sm:$0xff]
  %v1060 = vld [vmem:[#allocation3 + $0x88] sm:$0xff]
  %v1061 = vld [vmem:[#allocation3 + $0x90] sm:$0xff]
  %v1062 = vld [vmem:[#allocation3 + $0x98] sm:$0xff]
  %v1063 = vld [vmem:[#allocation3 + $0xa8] sm:$0xff]
  %v1064 = vld [vmem:[#allocation3 + $0xb0] sm:$0xff]
  %v1065 = vld [vmem:[#allocation3 + $0xb8] sm:$0xff]
  %v1066 = vld [vmem:[#allocation3 + $0xc0] sm:$0xff]
  %v1067 = vld [vmem:[#allocation3 + $0xc8] sm:$0xff]
  %v1068 = vld [vmem:[#allocation3 + $0xd0] sm:$0xff]
  %v1069 = vld [vmem:[#allocation3 + $0xe0] sm:$0xff]
  %v1070 = vld [vmem:[#allocation3 + $0xe8] sm:$0xff]
  %v1071 = vld [vmem:[#allocation3 + $0xf0] sm:$0xff]
  %v1072 = vld [vmem:[#allocation3 + $0xf8] sm:$0xff]
  %v1073 = vld [vmem:[#allocation3 + $0x100] sm:$0xff]
  %v1074 = vld [vmem:[#allocation3 + $0x108] sm:$0xff]
  %v1075 = vld [vmem:[#allocation3 + $0x118] sm:$0xff]
  %v1076 = vld [vmem:[#allocation3 + $0x120] sm:$0xff]
  %v1077 = vld [vmem:[#allocation3 + $0x128] sm:$0xff]
  %v1078 = vld [vmem:[#allocation3 + $0x130] sm:$0xff]
  %v1079 = vld [vmem:[#allocation3 + $0x138] sm:$0xff]
  %v1080 = vld [vmem:[#allocation3 + $0x140] sm:$0xff]
  %v1081 = vpack.c.bf16 %v1046, %v1045
  %v1082 = vpack.c.bf16 %v1048, %v1047
  %v1083 = vpack.c.bf16 %v1050, %v1049
  %v1084 = vpack.c.bf16 %v1052, %v1051
  %v1085 = vpack.c.bf16 %v1054, %v1053
  %v1086 = vpack.c.bf16 %v1056, %v1055
  %v1087 = vpack.c.bf16 %v1058, %v1057
  %v1088 = vpack.c.bf16 %v1060, %v1059
  %v1089 = vpack.c.bf16 %v1062, %v1061
  %v1090 = vpack.c.bf16 %v1064, %v1063
  %v1091 = vpack.c.bf16 %v1066, %v1065
  %v1092 = vpack.c.bf16 %v1068, %v1067
  %v1093 = vpack.c.bf16 %v1070, %v1069
  %v1094 = vpack.c.bf16 %v1072, %v1071
  %v1095 = vpack.c.bf16 %v1074, %v1073
  %v1096 = vpack.c.bf16 %v1076, %v1075
  %v1097 = vpack.c.bf16 %v1078, %v1077
  %v1098 = vpack.c.bf16 %v1080, %v1079
  %v1099 = vld [vmem:[%s3] sm:$0xf]
  %v1100 = vld [vmem:[%s3 + $0x4] sm:$0xf]
  %v1101 = vld [vmem:[%s3 + $0x8] sm:$0xf]
  %v1102 = vld [vmem:[%s3 + $0xc] sm:$0xf]
  %s1103 = scalar_lea.vmem [#allocation3], 8
  %v1104 = vld [vmem:[%s1103] sm:$0xff]
  %v1105 = vld [vmem:[%s1103 + $0x8] sm:$0xff]
  %v1106 = vld [vmem:[%s1103 + $0x10] sm:$0xff]
  %v1107 = vld [vmem:[%s1103 + $0x18] sm:$0xff]
  %v1108 = vld [vmem:[%s1103 + $0x20] sm:$0xff]
  %v1109 = vld [vmem:[%s1103 + $0x28] sm:$0xff]
  %v1110 = vld [vmem:[%s1103 + $0x38] sm:$0xff]
  %v1111 = vld [vmem:[%s1103 + $0x40] sm:$0xff]
  %v1112 = vld [vmem:[%s1103 + $0x48] sm:$0xff]
  %v1113 = vld [vmem:[%s1103 + $0x50] sm:$0xff]
  %v1114 = vld [vmem:[%s1103 + $0x58] sm:$0xff]
  %v1115 = vld [vmem:[%s1103 + $0x60] sm:$0xff]
  %v1116 = vld [vmem:[%s1103 + $0x70] sm:$0xff]
  %v1117 = vld [vmem:[%s1103 + $0x78] sm:$0xff]
  %v1118 = vld [vmem:[%s1103 + $0x80] sm:$0xff]
  %v1119 = vld [vmem:[%s1103 + $0x88] sm:$0xff]
  %v1120 = vld [vmem:[%s1103 + $0x90] sm:$0xff]
  %v1121 = vld [vmem:[%s1103 + $0x98] sm:$0xff]
  %v1122 = vld [vmem:[%s1103 + $0xa8] sm:$0xff]
  %v1123 = vld [vmem:[%s1103 + $0xb0] sm:$0xff]
  %v1124 = vld [vmem:[%s1103 + $0xb8] sm:$0xff]
  %v1125 = vld [vmem:[%s1103 + $0xc0] sm:$0xff]
  %v1126 = vld [vmem:[%s1103 + $0xc8] sm:$0xff]
  %v1127 = vld [vmem:[%s1103 + $0xd0] sm:$0xff]
  %v1128 = vld [vmem:[%s1103 + $0xe0] sm:$0xff]
  %v1129 = vld [vmem:[%s1103 + $0xe8] sm:$0xff]
  %v1130 = vld [vmem:[%s1103 + $0xf0] sm:$0xff]
  %v1131 = vld [vmem:[%s1103 + $0xf8] sm:$0xff]
  %v1132 = vld [vmem:[%s1103 + $0x100] sm:$0xff]
  %v1133 = vld [vmem:[%s1103 + $0x108] sm:$0xff]
  %v1134 = vld [vmem:[%s1103 + $0x118] sm:$0xff]
  %v1135 = vld [vmem:[%s1103 + $0x120] sm:$0xff]
  %v1136 = vld [vmem:[%s1103 + $0x128] sm:$0xff]
  %v1137 = vld [vmem:[%s1103 + $0x130] sm:$0xff]
  %v1138 = vld [vmem:[%s1103 + $0x138] sm:$0xff]
  %v1139 = vld [vmem:[%s1103 + $0x140] sm:$0xff]
  %v1140 = vpack.c.bf16 %v1105, %v1104
  %v1141 = vpack.c.bf16 %v1107, %v1106
  %v1142 = vpack.c.bf16 %v1109, %v1108
  %v1143 = vpack.c.bf16 %v1111, %v1110
  %v1144 = vpack.c.bf16 %v1113, %v1112
  %v1145 = vpack.c.bf16 %v1115, %v1114
  %v1146 = vpack.c.bf16 %v1117, %v1116
  %v1147 = vpack.c.bf16 %v1119, %v1118
  %v1148 = vpack.c.bf16 %v1121, %v1120
  %v1149 = vpack.c.bf16 %v1123, %v1122
  %v1150 = vpack.c.bf16 %v1125, %v1124
  %v1151 = vpack.c.bf16 %v1127, %v1126
  %v1152 = vpack.c.bf16 %v1129, %v1128
  %v1153 = vpack.c.bf16 %v1131, %v1130
  %v1154 = vpack.c.bf16 %v1133, %v1132
  %v1155 = vpack.c.bf16 %v1135, %v1134
  %v1156 = vpack.c.bf16 %v1137, %v1136
  %v1157 = vpack.c.bf16 %v1139, %v1138
  %s1158 = scalar_lea.vmem %s3, 16
  %v1159 = vld [vmem:[%s1158] sm:$0xf]
  %v1160 = vld [vmem:[%s1158 + $0x4] sm:$0xf]
  %v1161 = vld [vmem:[%s1158 + $0x8] sm:$0xf]
  %v1162 = vld [vmem:[%s1158 + $0xc] sm:$0xf]
  %v1167 = vunpack.c.l.b16 %v1159
  %v1168 = vunpack.c.l.b16 %v1160
  %v1169 = vunpack.c.l.b16 %v1161
  %v1170 = vunpack.c.l.b16 %v1162
  %v1171 = vpack.c.b16 %v1168, %v1167
  %v1172 = vpack.c.b16 %v1170, %v1169
  %v1176 = vsel %vm969, %v1140, 0
  %v1179 = vsel %vm969, %v1141, 0
  %v1182 = vsel %vm969, %v1142, 0
  %v1185 = vsel %vm969, %v1143, 0
  %v1188 = vsel %vm969, %v1144, 0
  %v1191 = vsel %vm969, %v1145, 0
  %v1194 = vsel %vm969, %v1146, 0
  %v1197 = vsel %vm969, %v1147, 0
  %v1200 = vsel %vm969, %v1148, 0
  %v1203 = vsel %vm969, %v1149, 0
  %v1206 = vsel %vm969, %v1150, 0
  %v1209 = vsel %vm969, %v1151, 0
  %v1212 = vsel %vm969, %v1152, 0
  %v1215 = vsel %vm969, %v1153, 0
  %v1218 = vsel %vm969, %v1154, 0
  %v1221 = vsel %vm969, %v1155, 0
  %v1224 = vsel %vm969, %v1156, 0
  %v1227 = vsel %vm969, %v1157, 0
  %1229 = vmatprep.subr.bf16.mxu0 0
  %1230 = vmatpush1.bf16.msra.mxu0 %v1171
  %1231 = vmatprep.subr.bf16.mxu0 0
  %1232 = vmatpush1.bf16.msra.mxu0 %v1172
  %1233 = vmatprep.subr.bf16.mxu0 0
  %1234 = vmatpush1.bf16.msra.mxu0 0
  %1235 = vmatprep.subr.bf16.mxu0 0
  %1236 = vmatpush1.bf16.msra.mxu0 0
  %1237 = vmatprep.subr.bf16.mxu0 0
  %1238 = vmatpush1.bf16.msra.mxu0 0
  %1239 = vmatprep.subr.bf16.mxu0 0
  %1240 = vmatpush1.bf16.msra.mxu0 0
  %1241 = vmatprep.subr.bf16.mxu0 0
  %1242 = vmatpush1.bf16.msra.mxu0 0
  %1243 = vmatprep.subr.bf16.mxu0 0
  %1244 = vmatpush1.bf16.msra.mxu0 0
  %1245 = vmatprep.subr.bf16.mxu0 0
  %1246 = vmatpush1.bf16.msra.mxu0 0
  %1247 = vmatprep.subr.bf16.mxu0 0
  %1248 = vmatpush1.bf16.msra.mxu0 0
  %1249 = vmatprep.subr.bf16.mxu0 0
  %1250 = vmatpush1.bf16.msra.mxu0 0
  %1251 = vmatprep.subr.bf16.mxu0 0
  %1252 = vmatpush1.bf16.msra.mxu0 0
  %1253 = vmatprep.subr.bf16.mxu0 0
  %1254 = vmatpush1.bf16.msra.mxu0 0
  %1255 = vmatprep.subr.bf16.mxu0 0
  %1256 = vmatpush1.bf16.msra.mxu0 0
  %1257 = vmatprep.subr.bf16.mxu0 0
  %1258 = vmatpush1.bf16.msra.mxu0 0
  %1259 = vmatprep.subr.bf16.mxu0 0
  %1260 = vmatpush1.bf16.msra.mxu0 0
  %1261 = vmatprep.mubr.bf16.mxu0 0
  %1262 = vmatmul.mubr.bf16.gmra.mrb[0].mxu0 %v1176
  %v1263 = vpop.f32.mrb[0].mxu0
  %v1264 = vadd.f32 0.0, %v1263
  %v1265 = vpop.f32.mrb[0].mxu0
  %v1266 = vpop.f32.mrb[0].mxu0
  %v1267 = vadd.f32 0.0, %v1266
  %v1268 = vpop.f32.mrb[0].mxu0
  %1269 = vmatprep.mubr.bf16.mxu0 0
  %1270 = vmatmul.mubr.bf16.gmra.mrb[0].mxu0 %v1179
  %v1271 = vpop.f32.mrb[0].mxu0
  %v1272 = vadd.f32 0.0, %v1271
  %v1273 = vpop.f32.mrb[0].mxu0
  %v1274 = vpop.f32.mrb[0].mxu0
  %v1275 = vadd.f32 0.0, %v1274
  %v1276 = vpop.f32.mrb[0].mxu0
  %1277 = vmatprep.mubr.bf16.mxu0 0
  %1278 = vmatmul.mubr.bf16.gmra.mrb[0].mxu0 %v1182
  %v1279 = vpop.f32.mrb[0].mxu0
  %v1280 = vadd.f32 0.0, %v1279
  %v1281 = vpop.f32.mrb[0].mxu0
  %v1282 = vpop.f32.mrb[0].mxu0
  %v1283 = vadd.f32 0.0, %v1282
  %v1284 = vpop.f32.mrb[0].mxu0
  %1285 = vmatprep.mubr.bf16.mxu0 0
  %1286 = vmatmul.mubr.bf16.gmra.mrb[0].mxu0 %v1185
  %v1287 = vpop.f32.mrb[0].mxu0
  %v1288 = vadd.f32 0.0, %v1287
  %v1289 = vpop.f32.mrb[0].mxu0
  %v1290 = vpop.f32.mrb[0].mxu0
  %v1291 = vadd.f32 0.0, %v1290
  %v1292 = vpop.f32.mrb[0].mxu0
  %1293 = vmatprep.mubr.bf16.mxu0 0
  %1294 = vmatmul.mubr.bf16.gmra.mrb[0].mxu0 %v1188
  %v1295 = vpop.f32.mrb[0].mxu0
  %v1296 = vadd.f32 0.0, %v1295
  %v1297 = vpop.f32.mrb[0].mxu0
  %v1298 = vpop.f32.mrb[0].mxu0
  %v1299 = vadd.f32 0.0, %v1298
  %v1300 = vpop.f32.mrb[0].mxu0
  %1301 = vmatprep.mubr.bf16.mxu0 0
  %1302 = vmatmul.mubr.bf16.gmra.mrb[0].mxu0 %v1191
  %v1303 = vpop.f32.mrb[0].mxu0
  %v1304 = vadd.f32 0.0, %v1303
  %v1305 = vpop.f32.mrb[0].mxu0
  %v1306 = vpop.f32.mrb[0].mxu0
  %v1307 = vadd.f32 0.0, %v1306
  %v1308 = vpop.f32.mrb[0].mxu0
  %1309 = vmatprep.mubr.bf16.mxu0 0
  %1310 = vmatmul.mubr.bf16.gmra.mrb[0].mxu0 %v1194
  %v1311 = vpop.f32.mrb[0].mxu0
  %v1312 = vadd.f32 0.0, %v1311
  %v1313 = vpop.f32.mrb[0].mxu0
  %v1314 = vpop.f32.mrb[0].mxu0
  %v1315 = vadd.f32 0.0, %v1314
  %v1316 = vpop.f32.mrb[0].mxu0
  %1317 = vmatprep.mubr.bf16.mxu0 0
  %1318 = vmatmul.mubr.bf16.gmra.mrb[0].mxu0 %v1197
  %v1319 = vpop.f32.mrb[0].mxu0
  %v1320 = vadd.f32 0.0, %v1319
  %v1321 = vpop.f32.mrb[0].mxu0
  %v1322 = vpop.f32.mrb[0].mxu0
  %v1323 = vadd.f32 0.0, %v1322
  %v1324 = vpop.f32.mrb[0].mxu0
  %1325 = vmatprep.mubr.bf16.mxu0 0
  %1326 = vmatmul.mubr.bf16.gmra.mrb[0].mxu0 %v1200
  %v1327 = vpop.f32.mrb[0].mxu0
  %v1328 = vadd.f32 0.0, %v1327
  %v1329 = vpop.f32.mrb[0].mxu0
  %v1330 = vpop.f32.mrb[0].mxu0
  %v1331 = vadd.f32 0.0, %v1330
  %v1332 = vpop.f32.mrb[0].mxu0
  %1333 = vmatprep.mubr.bf16.mxu0 0
  %1334 = vmatmul.mubr.bf16.gmra.mrb[0].mxu0 %v1203
  %v1335 = vpop.f32.mrb[0].mxu0
  %v1336 = vadd.f32 0.0, %v1335
  %v1337 = vpop.f32.mrb[0].mxu0
  %v1338 = vpop.f32.mrb[0].mxu0
  %v1339 = vadd.f32 0.0, %v1338
  %v1340 = vpop.f32.mrb[0].mxu0
  %1341 = vmatprep.mubr.bf16.mxu0 0
  %1342 = vmatmul.mubr.bf16.gmra.mrb[0].mxu0 %v1206
  %v1343 = vpop.f32.mrb[0].mxu0
  %v1344 = vadd.f32 0.0, %v1343
  %v1345 = vpop.f32.mrb[0].mxu0
  %v1346 = vpop.f32.mrb[0].mxu0
  %v1347 = vadd.f32 0.0, %v1346
  %v1348 = vpop.f32.mrb[0].mxu0
  %1349 = vmatprep.mubr.bf16.mxu0 0
  %1350 = vmatmul.mubr.bf16.gmra.mrb[0].mxu0 %v1209
  %v1351 = vpop.f32.mrb[0].mxu0
  %v1352 = vadd.f32 0.0, %v1351
  %v1353 = vpop.f32.mrb[0].mxu0
  %v1354 = vpop.f32.mrb[0].mxu0
  %v1355 = vadd.f32 0.0, %v1354
  %v1356 = vpop.f32.mrb[0].mxu0
  %1357 = vmatprep.mubr.bf16.mxu0 0
  %1358 = vmatmul.mubr.bf16.gmra.mrb[0].mxu0 %v1212
  %v1359 = vpop.f32.mrb[0].mxu0
  %v1360 = vadd.f32 0.0, %v1359
  %v1361 = vpop.f32.mrb[0].mxu0
  %v1362 = vpop.f32.mrb[0].mxu0
  %v1363 = vadd.f32 0.0, %v1362
  %v1364 = vpop.f32.mrb[0].mxu0
  %1365 = vmatprep.mubr.bf16.mxu0 0
  %1366 = vmatmul.mubr.bf16.gmra.mrb[0].mxu0 %v1215
  %v1367 = vpop.f32.mrb[0].mxu0
  %v1368 = vadd.f32 0.0, %v1367
  %v1369 = vpop.f32.mrb[0].mxu0
  %v1370 = vpop.f32.mrb[0].mxu0
  %v1371 = vadd.f32 0.0, %v1370
  %v1372 = vpop.f32.mrb[0].mxu0
  %1373 = vmatprep.mubr.bf16.mxu0 0
  %1374 = vmatmul.mubr.bf16.gmra.mrb[0].mxu0 %v1218
  %v1375 = vpop.f32.mrb[0].mxu0
  %v1376 = vadd.f32 0.0, %v1375
  %v1377 = vpop.f32.mrb[0].mxu0
  %v1378 = vpop.f32.mrb[0].mxu0
  %v1379 = vadd.f32 0.0, %v1378
  %v1380 = vpop.f32.mrb[0].mxu0
  %1381 = vmatprep.mubr.bf16.mxu0 0
  %1382 = vmatmul.mubr.bf16.gmra.mrb[0].mxu0 %v1221
  %v1383 = vpop.f32.mrb[0].mxu0
  %v1384 = vadd.f32 0.0, %v1383
  %v1385 = vpop.f32.mrb[0].mxu0
  %v1386 = vpop.f32.mrb[0].mxu0
  %v1387 = vadd.f32 0.0, %v1386
  %v1388 = vpop.f32.mrb[0].mxu0
  %1389 = vmatprep.mubr.bf16.mxu0 0
  %1390 = vmatmul.mubr.bf16.gmra.mrb[0].mxu0 %v1224
  %v1391 = vpop.f32.mrb[0].mxu0
  %v1392 = vadd.f32 0.0, %v1391
  %v1393 = vpop.f32.mrb[0].mxu0
  %v1394 = vpop.f32.mrb[0].mxu0
  %v1395 = vadd.f32 0.0, %v1394
  %v1396 = vpop.f32.mrb[0].mxu0
  %1397 = vmatprep.mubr.bf16.mxu0 0
  %1398 = vmatmul.mubr.bf16.gmra.mrb[0].mxu0 %v1227
  %v1399 = vpop.f32.mrb[0].mxu0
  %v1400 = vadd.f32 0.0, %v1399
  %v1401 = vpop.f32.mrb[0].mxu0
  %v1402 = vpop.f32.mrb[0].mxu0
  %v1403 = vadd.f32 0.0, %v1402
  %v1404 = vpop.f32.mrb[0].mxu0
  %1405 = vdwg.mxu0
  %v1410 = vunpack.c.l.b16 %v1099
  %v1411 = vunpack.c.l.b16 %v1100
  %v1412 = vunpack.c.l.b16 %v1101
  %v1413 = vunpack.c.l.b16 %v1102
  %v1414 = vpack.c.b16 %v1411, %v1410
  %v1415 = vpack.c.b16 %v1413, %v1412
  %v1419 = vsel %vm969, %v1081, 0
  %v1422 = vsel %vm969, %v1082, 0
  %v1425 = vsel %vm969, %v1083, 0
  %v1428 = vsel %vm969, %v1084, 0
  %v1431 = vsel %vm969, %v1085, 0
  %v1434 = vsel %vm969, %v1086, 0
  %v1437 = vsel %vm969, %v1087, 0
  %v1440 = vsel %vm969, %v1088, 0
  %v1443 = vsel %vm969, %v1089, 0
  %v1446 = vsel %vm969, %v1090, 0
  %v1449 = vsel %vm969, %v1091, 0
  %v1452 = vsel %vm969, %v1092, 0
  %v1455 = vsel %vm969, %v1093, 0
  %v1458 = vsel %vm969, %v1094, 0
  %v1461 = vsel %vm969, %v1095, 0
  %v1464 = vsel %vm969, %v1096, 0
  %v1467 = vsel %vm969, %v1097, 0
  %v1470 = vsel %vm969, %v1098, 0
  %1472 = vmatprep.subr.bf16.mxu0 0
  %1473 = vmatpush1.bf16.msra.mxu0 %v1414
  %1474 = vmatprep.subr.bf16.mxu0 0
  %1475 = vmatpush1.bf16.msra.mxu0 %v1415
  %1476 = vmatprep.subr.bf16.mxu0 0
  %1477 = vmatpush1.bf16.msra.mxu0 0
  %1478 = vmatprep.subr.bf16.mxu0 0
  %1479 = vmatpush1.bf16.msra.mxu0 0
  %1480 = vmatprep.subr.bf16.mxu0 0
  %1481 = vmatpush1.bf16.msra.mxu0 0
  %1482 = vmatprep.subr.bf16.mxu0 0
  %1483 = vmatpush1.bf16.msra.mxu0 0
  %1484 = vmatprep.subr.bf16.mxu0 0
  %1485 = vmatpush1.bf16.msra.mxu0 0
  %1486 = vmatprep.subr.bf16.mxu0 0
  %1487 = vmatpush1.bf16.msra.mxu0 0
  %1488 = vmatprep.subr.bf16.mxu0 0
  %1489 = vmatpush1.bf16.msra.mxu0 0
  %1490 = vmatprep.subr.bf16.mxu0 0
  %1491 = vmatpush1.bf16.msra.mxu0 0
  %1492 = vmatprep.subr.bf16.mxu0 0
  %1493 = vmatpush1.bf16.msra.mxu0 0
  %1494 = vmatprep.subr.bf16.mxu0 0
  %1495 = vmatpush1.bf16.msra.mxu0 0
  %1496 = vmatprep.subr.bf16.mxu0 0
  %1497 = vmatpush1.bf16.msra.mxu0 0
  %1498 = vmatprep.subr.bf16.mxu0 0
  %1499 = vmatpush1.bf16.msra.mxu0 0
  %1500 = vmatprep.subr.bf16.mxu0 0
  %1501 = vmatpush1.bf16.msra.mxu0 0
  %1502 = vmatprep.subr.bf16.mxu0 0
  %1503 = vmatpush1.bf16.msra.mxu0 0
  %1504 = vmatprep.mubr.bf16.mxu0 0
  %1505 = vmatmul.mubr.bf16.gmra.mrb[0].mxu0 %v1419
  %v1506 = vpop.f32.mrb[0].mxu0
  %v1507 = vadd.f32 %v1264, %v1506
  %v1508 = vpop.f32.mrb[0].mxu0
  %v1509 = vpop.f32.mrb[0].mxu0
  %v1510 = vadd.f32 %v1267, %v1509
  %v1511 = vpop.f32.mrb[0].mxu0
  %1512 = vmatprep.mubr.bf16.mxu0 0
  %1513 = vmatmul.mubr.bf16.gmra.mrb[0].mxu0 %v1422
  %v1514 = vpop.f32.mrb[0].mxu0
  %v1515 = vadd.f32 %v1272, %v1514
  %v1516 = vpop.f32.mrb[0].mxu0
  %v1517 = vpop.f32.mrb[0].mxu0
  %v1518 = vadd.f32 %v1275, %v1517
  %v1519 = vpop.f32.mrb[0].mxu0
  %1520 = vmatprep.mubr.bf16.mxu0 0
  %1521 = vmatmul.mubr.bf16.gmra.mrb[0].mxu0 %v1425
  %v1522 = vpop.f32.mrb[0].mxu0
  %v1523 = vadd.f32 %v1280, %v1522
  %v1524 = vpop.f32.mrb[0].mxu0
  %v1525 = vpop.f32.mrb[0].mxu0
  %v1526 = vadd.f32 %v1283, %v1525
  %v1527 = vpop.f32.mrb[0].mxu0
  %1528 = vmatprep.mubr.bf16.mxu0 0
  %1529 = vmatmul.mubr.bf16.gmra.mrb[0].mxu0 %v1428
  %v1530 = vpop.f32.mrb[0].mxu0
  %v1531 = vadd.f32 %v1288, %v1530
  %v1532 = vpop.f32.mrb[0].mxu0
  %v1533 = vpop.f32.mrb[0].mxu0
  %v1534 = vadd.f32 %v1291, %v1533
  %v1535 = vpop.f32.mrb[0].mxu0
  %1536 = vmatprep.mubr.bf16.mxu0 0
  %1537 = vmatmul.mubr.bf16.gmra.mrb[0].mxu0 %v1431
  %v1538 = vpop.f32.mrb[0].mxu0
  %v1539 = vadd.f32 %v1296, %v1538
  %v1540 = vpop.f32.mrb[0].mxu0
  %v1541 = vpop.f32.mrb[0].mxu0
  %v1542 = vadd.f32 %v1299, %v1541
  %v1543 = vpop.f32.mrb[0].mxu0
  %1544 = vmatprep.mubr.bf16.mxu0 0
  %1545 = vmatmul.mubr.bf16.gmra.mrb[0].mxu0 %v1434
  %v1546 = vpop.f32.mrb[0].mxu0
  %v1547 = vadd.f32 %v1304, %v1546
  %v1548 = vpop.f32.mrb[0].mxu0
  %v1549 = vpop.f32.mrb[0].mxu0
  %v1550 = vadd.f32 %v1307, %v1549
  %v1551 = vpop.f32.mrb[0].mxu0
  %1552 = vmatprep.mubr.bf16.mxu0 0
  %1553 = vmatmul.mubr.bf16.gmra.mrb[0].mxu0 %v1437
  %v1554 = vpop.f32.mrb[0].mxu0
  %v1555 = vadd.f32 %v1312, %v1554
  %v1556 = vpop.f32.mrb[0].mxu0
  %v1557 = vpop.f32.mrb[0].mxu0
  %v1558 = vadd.f32 %v1315, %v1557
  %v1559 = vpop.f32.mrb[0].mxu0
  %1560 = vmatprep.mubr.bf16.mxu0 0
  %1561 = vmatmul.mubr.bf16.gmra.mrb[0].mxu0 %v1440
  %v1562 = vpop.f32.mrb[0].mxu0
  %v1563 = vadd.f32 %v1320, %v1562
  %v1564 = vpop.f32.mrb[0].mxu0
  %v1565 = vpop.f32.mrb[0].mxu0
  %v1566 = vadd.f32 %v1323, %v1565
  %v1567 = vpop.f32.mrb[0].mxu0
  %1568 = vmatprep.mubr.bf16.mxu0 0
  %1569 = vmatmul.mubr.bf16.gmra.mrb[0].mxu0 %v1443
  %v1570 = vpop.f32.mrb[0].mxu0
  %v1571 = vadd.f32 %v1328, %v1570
  %v1572 = vpop.f32.mrb[0].mxu0
  %v1573 = vpop.f32.mrb[0].mxu0
  %v1574 = vadd.f32 %v1331, %v1573
  %v1575 = vpop.f32.mrb[0].mxu0
  %1576 = vmatprep.mubr.bf16.mxu0 0
  %1577 = vmatmul.mubr.bf16.gmra.mrb[0].mxu0 %v1446
  %v1578 = vpop.f32.mrb[0].mxu0
  %v1579 = vadd.f32 %v1336, %v1578
  %v1580 = vpop.f32.mrb[0].mxu0
  %v1581 = vpop.f32.mrb[0].mxu0
  %v1582 = vadd.f32 %v1339, %v1581
  %v1583 = vpop.f32.mrb[0].mxu0
  %1584 = vmatprep.mubr.bf16.mxu0 0
  %1585 = vmatmul.mubr.bf16.gmra.mrb[0].mxu0 %v1449
  %v1586 = vpop.f32.mrb[0].mxu0
  %v1587 = vadd.f32 %v1344, %v1586
  %v1588 = vpop.f32.mrb[0].mxu0
  %v1589 = vpop.f32.mrb[0].mxu0
  %v1590 = vadd.f32 %v1347, %v1589
  %v1591 = vpop.f32.mrb[0].mxu0
  %1592 = vmatprep.mubr.bf16.mxu0 0
  %1593 = vmatmul.mubr.bf16.gmra.mrb[0].mxu0 %v1452
  %v1594 = vpop.f32.mrb[0].mxu0
  %v1595 = vadd.f32 %v1352, %v1594
  %v1596 = vpop.f32.mrb[0].mxu0
  %v1597 = vpop.f32.mrb[0].mxu0
  %v1598 = vadd.f32 %v1355, %v1597
  %v1599 = vpop.f32.mrb[0].mxu0
  %1600 = vmatprep.mubr.bf16.mxu0 0
  %1601 = vmatmul.mubr.bf16.gmra.mrb[0].mxu0 %v1455
  %v1602 = vpop.f32.mrb[0].mxu0
  %v1603 = vadd.f32 %v1360, %v1602
  %v1604 = vpop.f32.mrb[0].mxu0
  %v1605 = vpop.f32.mrb[0].mxu0
  %v1606 = vadd.f32 %v1363, %v1605
  %v1607 = vpop.f32.mrb[0].mxu0
  %1608 = vmatprep.mubr.bf16.mxu0 0
  %1609 = vmatmul.mubr.bf16.gmra.mrb[0].mxu0 %v1458
  %v1610 = vpop.f32.mrb[0].mxu0
  %v1611 = vadd.f32 %v1368, %v1610
  %v1612 = vpop.f32.mrb[0].mxu0
  %v1613 = vpop.f32.mrb[0].mxu0
  %v1614 = vadd.f32 %v1371, %v1613
  %v1615 = vpop.f32.mrb[0].mxu0
  %1616 = vmatprep.mubr.bf16.mxu0 0
  %1617 = vmatmul.mubr.bf16.gmra.mrb[0].mxu0 %v1461
  %v1618 = vpop.f32.mrb[0].mxu0
  %v1619 = vadd.f32 %v1376, %v1618
  %v1620 = vpop.f32.mrb[0].mxu0
  %v1621 = vpop.f32.mrb[0].mxu0
  %v1622 = vadd.f32 %v1379, %v1621
  %v1623 = vpop.f32.mrb[0].mxu0
  %1624 = vmatprep.mubr.bf16.mxu0 0
  %1625 = vmatmul.mubr.bf16.gmra.mrb[0].mxu0 %v1464
  %v1626 = vpop.f32.mrb[0].mxu0
  %v1627 = vadd.f32 %v1384, %v1626
  %v1628 = vpop.f32.mrb[0].mxu0
  %v1629 = vpop.f32.mrb[0].mxu0
  %v1630 = vadd.f32 %v1387, %v1629
  %v1631 = vpop.f32.mrb[0].mxu0
  %1632 = vmatprep.mubr.bf16.mxu0 0
  %1633 = vmatmul.mubr.bf16.gmra.mrb[0].mxu0 %v1467
  %v1634 = vpop.f32.mrb[0].mxu0
  %v1635 = vadd.f32 %v1392, %v1634
  %v1636 = vpop.f32.mrb[0].mxu0
  %v1637 = vpop.f32.mrb[0].mxu0
  %v1638 = vadd.f32 %v1395, %v1637
  %v1639 = vpop.f32.mrb[0].mxu0
  %1640 = vmatprep.mubr.bf16.mxu0 0
  %1641 = vmatmul.mubr.bf16.gmra.mrb[0].mxu0 %v1470
  %v1642 = vpop.f32.mrb[0].mxu0
  %v1643 = vadd.f32 %v1400, %v1642
  %v1644 = vpop.f32.mrb[0].mxu0
  %v1645 = vpop.f32.mrb[0].mxu0
  %v1646 = vadd.f32 %v1403, %v1645
  %v1647 = vpop.f32.mrb[0].mxu0
  %1648 = vdwg.mxu0
  %s1649 = scalar_lea.vmem [#allocation3], 56
  %v1650 = vld [vmem:[%s1649] sm:$0xff]
  %v1651 = vld [vmem:[%s1649 + $0x8] sm:$0xff]
  %v1652 = vld [vmem:[%s1649 + $0x10] sm:$0xff]
  %v1653 = vld [vmem:[%s1649 + $0x18] sm:$0xff]
  %v1654 = vld [vmem:[%s1649 + $0x20] sm:$0xff]
  %v1655 = vld [vmem:[%s1649 + $0x28] sm:$0xff]
  %v1656 = vld [vmem:[%s1649 + $0x38] sm:$0xff]
  %v1657 = vld [vmem:[%s1649 + $0x40] sm:$0xff]
  %v1658 = vld [vmem:[%s1649 + $0x48] sm:$0xff]
  %v1659 = vld [vmem:[%s1649 + $0x50] sm:$0xff]
  %v1660 = vld [vmem:[%s1649 + $0x58] sm:$0xff]
  %v1661 = vld [vmem:[%s1649 + $0x60] sm:$0xff]
  %v1662 = vld [vmem:[%s1649 + $0x70] sm:$0xff]
  %v1663 = vld [vmem:[%s1649 + $0x78] sm:$0xff]
  %v1664 = vld [vmem:[%s1649 + $0x80] sm:$0xff]
  %v1665 = vld [vmem:[%s1649 + $0x88] sm:$0xff]
  %v1666 = vld [vmem:[%s1649 + $0x90] sm:$0xff]
  %v1667 = vld [vmem:[%s1649 + $0x98] sm:$0xff]
  %v1668 = vld [vmem:[%s1649 + $0xa8] sm:$0xff]
  %v1669 = vld [vmem:[%s1649 + $0xb0] sm:$0xff]
  %v1670 = vld [vmem:[%s1649 + $0xb8] sm:$0xff]
  %v1671 = vld [vmem:[%s1649 + $0xc0] sm:$0xff]
  %v1672 = vld [vmem:[%s1649 + $0xc8] sm:$0xff]
  %v1673 = vld [vmem:[%s1649 + $0xd0] sm:$0xff]
  %v1674 = vld [vmem:[%s1649 + $0xe0] sm:$0xff]
  %v1675 = vld [vmem:[%s1649 + $0xe8] sm:$0xff]
  %v1676 = vld [vmem:[%s1649 + $0xf0] sm:$0xff]
  %v1677 = vld [vmem:[%s1649 + $0xf8] sm:$0xff]
  %v1678 = vld [vmem:[%s1649 + $0x100] sm:$0xff]
  %v1679 = vld [vmem:[%s1649 + $0x108] sm:$0xff]
  %v1680 = vld [vmem:[%s1649 + $0x118] sm:$0xff]
  %v1681 = vld [vmem:[%s1649 + $0x120] sm:$0xff]
  %v1682 = vld [vmem:[%s1649 + $0x128] sm:$0xff]
  %v1683 = vld [vmem:[%s1649 + $0x130] sm:$0xff]
  %v1684 = vld [vmem:[%s1649 + $0x138] sm:$0xff]
  %v1685 = vld [vmem:[%s1649 + $0x140] sm:$0xff]
  %v1686 = vpack.c.bf16 %v1651, %v1650
  %v1687 = vpack.c.bf16 %v1653, %v1652
  %v1688 = vpack.c.bf16 %v1655, %v1654
  %v1689 = vpack.c.bf16 %v1657, %v1656
  %v1690 = vpack.c.bf16 %v1659, %v1658
  %v1691 = vpack.c.bf16 %v1661, %v1660
  %v1692 = vpack.c.bf16 %v1663, %v1662
  %v1693 = vpack.c.bf16 %v1665, %v1664
  %v1694 = vpack.c.bf16 %v1667, %v1666
  %v1695 = vpack.c.bf16 %v1669, %v1668
  %v1696 = vpack.c.bf16 %v1671, %v1670
  %v1697 = vpack.c.bf16 %v1673, %v1672
  %v1698 = vpack.c.bf16 %v1675, %v1674
  %v1699 = vpack.c.bf16 %v1677, %v1676
  %v1700 = vpack.c.bf16 %v1679, %v1678
  %v1701 = vpack.c.bf16 %v1681, %v1680
  %v1702 = vpack.c.bf16 %v1683, %v1682
  %v1703 = vpack.c.bf16 %v1685, %v1684
  %s1704 = scalar_lea.vmem %s3, 32
  %v1705 = vld [vmem:[%s1704] sm:$0xf]
  %v1706 = vld [vmem:[%s1704 + $0x4] sm:$0xf]
  %v1707 = vld [vmem:[%s1704 + $0x8] sm:$0xf]
  %v1708 = vld [vmem:[%s1704 + $0xc] sm:$0xf]
  %v1713 = vunpack.c.l.b16 %v1705
  %v1714 = vunpack.c.l.b16 %v1706
  %v1715 = vunpack.c.l.b16 %v1707
  %v1716 = vunpack.c.l.b16 %v1708
  %v1717 = vpack.c.b16 %v1714, %v1713
  %v1718 = vpack.c.b16 %v1716, %v1715
  %v1722 = vsel %vm969, %v1686, 0
  %v1725 = vsel %vm969, %v1687, 0
  %v1728 = vsel %vm969, %v1688, 0
  %v1731 = vsel %vm969, %v1689, 0
  %v1734 = vsel %vm969, %v1690, 0
  %v1737 = vsel %vm969, %v1691, 0
  %v1740 = vsel %vm969, %v1692, 0
  %v1743 = vsel %vm969, %v1693, 0
  %v1746 = vsel %vm969, %v1694, 0
  %v1749 = vsel %vm969, %v1695, 0
  %v1752 = vsel %vm969, %v1696, 0
  %v1755 = vsel %vm969, %v1697, 0
  %v1758 = vsel %vm969, %v1698, 0
  %v1761 = vsel %vm969, %v1699, 0
  %v1764 = vsel %vm969, %v1700, 0
  %v1767 = vsel %vm969, %v1701, 0
  %v1770 = vsel %vm969, %v1702, 0
  %v1773 = vsel %vm969, %v1703, 0
  %1775 = vmatprep.subr.bf16.mxu0 0
  %1776 = vmatpush1.bf16.msra.mxu0 %v1717
  %1777 = vmatprep.subr.bf16.mxu0 0
  %1778 = vmatpush1.bf16.msra.mxu0 %v1718
  %1779 = vmatprep.subr.bf16.mxu0 0
  %1780 = vmatpush1.bf16.msra.mxu0 0
  %1781 = vmatprep.subr.bf16.mxu0 0
  %1782 = vmatpush1.bf16.msra.mxu0 0
  %1783 = vmatprep.subr.bf16.mxu0 0
  %1784 = vmatpush1.bf16.msra.mxu0 0
  %1785 = vmatprep.subr.bf16.mxu0 0
  %1786 = vmatpush1.bf16.msra.mxu0 0
  %1787 = vmatprep.subr.bf16.mxu0 0
  %1788 = vmatpush1.bf16.msra.mxu0 0
  %1789 = vmatprep.subr.bf16.mxu0 0
  %1790 = vmatpush1.bf16.msra.mxu0 0
  %1791 = vmatprep.subr.bf16.mxu0 0
  %1792 = vmatpush1.bf16.msra.mxu0 0
  %1793 = vmatprep.subr.bf16.mxu0 0
  %1794 = vmatpush1.bf16.msra.mxu0 0
  %1795 = vmatprep.subr.bf16.mxu0 0
  %1796 = vmatpush1.bf16.msra.mxu0 0
  %1797 = vmatprep.subr.bf16.mxu0 0
  %1798 = vmatpush1.bf16.msra.mxu0 0
  %1799 = vmatprep.subr.bf16.mxu0 0
  %1800 = vmatpush1.bf16.msra.mxu0 0
  %1801 = vmatprep.subr.bf16.mxu0 0
  %1802 = vmatpush1.bf16.msra.mxu0 0
  %1803 = vmatprep.subr.bf16.mxu0 0
  %1804 = vmatpush1.bf16.msra.mxu0 0
  %1805 = vmatprep.subr.bf16.mxu0 0
  %1806 = vmatpush1.bf16.msra.mxu0 0
  %1807 = vmatprep.mubr.bf16.mxu0 0
  %1808 = vmatmul.mubr.bf16.gmra.mrb[0].mxu0 %v1722
  %v1809 = vpop.f32.mrb[0].mxu0
  %v1810 = vadd.f32 0.0, %v1809
  %v1811 = vpop.f32.mrb[0].mxu0
  %v1812 = vpop.f32.mrb[0].mxu0
  %v1813 = vadd.f32 0.0, %v1812
  %v1814 = vpop.f32.mrb[0].mxu0
  %1815 = vmatprep.mubr.bf16.mxu0 0
  %1816 = vmatmul.mubr.bf16.gmra.mrb[0].mxu0 %v1725
  %v1817 = vpop.f32.mrb[0].mxu0
  %v1818 = vadd.f32 0.0, %v1817
  %v1819 = vpop.f32.mrb[0].mxu0
  %v1820 = vpop.f32.mrb[0].mxu0
  %v1821 = vadd.f32 0.0, %v1820
  %v1822 = vpop.f32.mrb[0].mxu0
  %1823 = vmatprep.mubr.bf16.mxu0 0
  %1824 = vmatmul.mubr.bf16.gmra.mrb[0].mxu0 %v1728
  %v1825 = vpop.f32.mrb[0].mxu0
  %v1826 = vadd.f32 0.0, %v1825
  %v1827 = vpop.f32.mrb[0].mxu0
  %v1828 = vpop.f32.mrb[0].mxu0
  %v1829 = vadd.f32 0.0, %v1828
  %v1830 = vpop.f32.mrb[0].mxu0
  %1831 = vmatprep.mubr.bf16.mxu0 0
  %1832 = vmatmul.mubr.bf16.gmra.mrb[0].mxu0 %v1731
  %v1833 = vpop.f32.mrb[0].mxu0
  %v1834 = vadd.f32 0.0, %v1833
  %v1835 = vpop.f32.mrb[0].mxu0
  %v1836 = vpop.f32.mrb[0].mxu0
  %v1837 = vadd.f32 0.0, %v1836
  %v1838 = vpop.f32.mrb[0].mxu0
  %1839 = vmatprep.mubr.bf16.mxu0 0
  %1840 = vmatmul.mubr.bf16.gmra.mrb[0].mxu0 %v1734
  %v1841 = vpop.f32.mrb[0].mxu0
  %v1842 = vadd.f32 0.0, %v1841
  %v1843 = vpop.f32.mrb[0].mxu0
  %v1844 = vpop.f32.mrb[0].mxu0
  %v1845 = vadd.f32 0.0, %v1844
  %v1846 = vpop.f32.mrb[0].mxu0
  %1847 = vmatprep.mubr.bf16.mxu0 0
  %1848 = vmatmul.mubr.bf16.gmra.mrb[0].mxu0 %v1737
  %v1849 = vpop.f32.mrb[0].mxu0
  %v1850 = vadd.f32 0.0, %v1849
  %v1851 = vpop.f32.mrb[0].mxu0
  %v1852 = vpop.f32.mrb[0].mxu0
  %v1853 = vadd.f32 0.0, %v1852
  %v1854 = vpop.f32.mrb[0].mxu0
  %1855 = vmatprep.mubr.bf16.mxu0 0
  %1856 = vmatmul.mubr.bf16.gmra.mrb[0].mxu0 %v1740
  %v1857 = vpop.f32.mrb[0].mxu0
  %v1858 = vadd.f32 0.0, %v1857
  %v1859 = vpop.f32.mrb[0].mxu0
  %v1860 = vpop.f32.mrb[0].mxu0
  %v1861 = vadd.f32 0.0, %v1860
  %v1862 = vpop.f32.mrb[0].mxu0
  %1863 = vmatprep.mubr.bf16.mxu0 0
  %1864 = vmatmul.mubr.bf16.gmra.mrb[0].mxu0 %v1743
  %v1865 = vpop.f32.mrb[0].mxu0
  %v1866 = vadd.f32 0.0, %v1865
  %v1867 = vpop.f32.mrb[0].mxu0
  %v1868 = vpop.f32.mrb[0].mxu0
  %v1869 = vadd.f32 0.0, %v1868
  %v1870 = vpop.f32.mrb[0].mxu0
  %1871 = vmatprep.mubr.bf16.mxu0 0
  %1872 = vmatmul.mubr.bf16.gmra.mrb[0].mxu0 %v1746
  %v1873 = vpop.f32.mrb[0].mxu0
  %v1874 = vadd.f32 0.0, %v1873
  %v1875 = vpop.f32.mrb[0].mxu0
  %v1876 = vpop.f32.mrb[0].mxu0
  %v1877 = vadd.f32 0.0, %v1876
  %v1878 = vpop.f32.mrb[0].mxu0
  %1879 = vmatprep.mubr.bf16.mxu0 0
  %1880 = vmatmul.mubr.bf16.gmra.mrb[0].mxu0 %v1749
  %v1881 = vpop.f32.mrb[0].mxu0
  %v1882 = vadd.f32 0.0, %v1881
  %v1883 = vpop.f32.mrb[0].mxu0
  %v1884 = vpop.f32.mrb[0].mxu0
  %v1885 = vadd.f32 0.0, %v1884
  %v1886 = vpop.f32.mrb[0].mxu0
  %1887 = vmatprep.mubr.bf16.mxu0 0
  %1888 = vmatmul.mubr.bf16.gmra.mrb[0].mxu0 %v1752
  %v1889 = vpop.f32.mrb[0].mxu0
  %v1890 = vadd.f32 0.0, %v1889
  %v1891 = vpop.f32.mrb[0].mxu0
  %v1892 = vpop.f32.mrb[0].mxu0
  %v1893 = vadd.f32 0.0, %v1892
  %v1894 = vpop.f32.mrb[0].mxu0
  %1895 = vmatprep.mubr.bf16.mxu0 0
  %1896 = vmatmul.mubr.bf16.gmra.mrb[0].mxu0 %v1755
  %v1897 = vpop.f32.mrb[0].mxu0
  %v1898 = vadd.f32 0.0, %v1897
  %v1899 = vpop.f32.mrb[0].mxu0
  %v1900 = vpop.f32.mrb[0].mxu0
  %v1901 = vadd.f32 0.0, %v1900
  %v1902 = vpop.f32.mrb[0].mxu0
  %1903 = vmatprep.mubr.bf16.mxu0 0
  %1904 = vmatmul.mubr.bf16.gmra.mrb[0].mxu0 %v1758
  %v1905 = vpop.f32.mrb[0].mxu0
  %v1906 = vadd.f32 0.0, %v1905
  %v1907 = vpop.f32.mrb[0].mxu0
  %v1908 = vpop.f32.mrb[0].mxu0
  %v1909 = vadd.f32 0.0, %v1908
  %v1910 = vpop.f32.mrb[0].mxu0
  %1911 = vmatprep.mubr.bf16.mxu0 0
  %1912 = vmatmul.mubr.bf16.gmra.mrb[0].mxu0 %v1761
  %v1913 = vpop.f32.mrb[0].mxu0
  %v1914 = vadd.f32 0.0, %v1913
  %v1915 = vpop.f32.mrb[0].mxu0
  %v1916 = vpop.f32.mrb[0].mxu0
  %v1917 = vadd.f32 0.0, %v1916
  %v1918 = vpop.f32.mrb[0].mxu0
  %1919 = vmatprep.mubr.bf16.mxu0 0
  %1920 = vmatmul.mubr.bf16.gmra.mrb[0].mxu0 %v1764
  %v1921 = vpop.f32.mrb[0].mxu0
  %v1922 = vadd.f32 0.0, %v1921
  %v1923 = vpop.f32.mrb[0].mxu0
  %v1924 = vpop.f32.mrb[0].mxu0
  %v1925 = vadd.f32 0.0, %v1924
  %v1926 = vpop.f32.mrb[0].mxu0
  %1927 = vmatprep.mubr.bf16.mxu0 0
  %1928 = vmatmul.mubr.bf16.gmra.mrb[0].mxu0 %v1767
  %v1929 = vpop.f32.mrb[0].mxu0
  %v1930 = vadd.f32 0.0, %v1929
  %v1931 = vpop.f32.mrb[0].mxu0
  %v1932 = vpop.f32.mrb[0].mxu0
  %v1933 = vadd.f32 0.0, %v1932
  %v1934 = vpop.f32.mrb[0].mxu0
  %1935 = vmatprep.mubr.bf16.mxu0 0
  %1936 = vmatmul.mubr.bf16.gmra.mrb[0].mxu0 %v1770
  %v1937 = vpop.f32.mrb[0].mxu0
  %v1938 = vadd.f32 0.0, %v1937
  %v1939 = vpop.f32.mrb[0].mxu0
  %v1940 = vpop.f32.mrb[0].mxu0
  %v1941 = vadd.f32 0.0, %v1940
  %v1942 = vpop.f32.mrb[0].mxu0
  %1943 = vmatprep.mubr.bf16.mxu0 0
  %1944 = vmatmul.mubr.bf16.gmra.mrb[0].mxu0 %v1773
  %v1945 = vpop.f32.mrb[0].mxu0
  %v1946 = vadd.f32 0.0, %v1945
  %v1947 = vpop.f32.mrb[0].mxu0
  %v1948 = vpop.f32.mrb[0].mxu0
  %v1949 = vadd.f32 0.0, %v1948
  %v1950 = vpop.f32.mrb[0].mxu0
  %1951 = vdwg.mxu0
  %v1952 = vadd.f32 %v1507, %v1810
  %v1953 = vadd.f32 %v1510, %v1813
  %v1954 = vadd.f32 %v1515, %v1818
  %v1955 = vadd.f32 %v1518, %v1821
  %v1956 = vadd.f32 %v1523, %v1826
  %v1957 = vadd.f32 %v1526, %v1829
  %v1958 = vadd.f32 %v1531, %v1834
  %v1959 = vadd.f32 %v1534, %v1837
  %v1960 = vadd.f32 %v1539, %v1842
  %v1961 = vadd.f32 %v1542, %v1845
  %v1962 = vadd.f32 %v1547, %v1850
  %v1963 = vadd.f32 %v1550, %v1853
  %v1964 = vadd.f32 %v1555, %v1858
  %v1965 = vadd.f32 %v1558, %v1861
  %v1966 = vadd.f32 %v1563, %v1866
  %v1967 = vadd.f32 %v1566, %v1869
  %v1968 = vadd.f32 %v1571, %v1874
  %v1969 = vadd.f32 %v1574, %v1877
  %v1970 = vadd.f32 %v1579, %v1882
  %v1971 = vadd.f32 %v1582, %v1885
  %v1972 = vadd.f32 %v1587, %v1890
  %v1973 = vadd.f32 %v1590, %v1893
  %v1974 = vadd.f32 %v1595, %v1898
  %v1975 = vadd.f32 %v1598, %v1901
  %v1976 = vadd.f32 %v1603, %v1906
  %v1977 = vadd.f32 %v1606, %v1909
  %v1978 = vadd.f32 %v1611, %v1914
  %v1979 = vadd.f32 %v1614, %v1917
  %v1980 = vadd.f32 %v1619, %v1922
  %v1981 = vadd.f32 %v1622, %v1925
  %v1982 = vadd.f32 %v1627, %v1930
  %v1983 = vadd.f32 %v1630, %v1933
  %v1984 = vadd.f32 %v1635, %v1938
  %v1985 = vadd.f32 %v1638, %v1941
  %v1986 = vadd.f32 %v1643, %v1946
  %v1987 = vadd.f32 %v1646, %v1949
  %v1988 = vld [vmem:[%s1019] sm:$0xff]
  %v1989 = vld [vmem:[%s1019 + $0x8] sm:$0xff]
  %v1990 = vld [vmem:[%s1019 + $0x10] sm:$0xff]
  %v1991 = vld [vmem:[%s1019 + $0x18] sm:$0xff]
  %v1992 = vld [vmem:[%s1019 + $0x20] sm:$0xff]
  %v1993 = vld [vmem:[%s1019 + $0x28] sm:$0xff]
  %v1994 = vld [vmem:[%s1019 + $0x38] sm:$0xff]
  %v1995 = vld [vmem:[%s1019 + $0x40] sm:$0xff]
  %v1996 = vld [vmem:[%s1019 + $0x48] sm:$0xff]
  %v1997 = vld [vmem:[%s1019 + $0x50] sm:$0xff]
  %v1998 = vld [vmem:[%s1019 + $0x58] sm:$0xff]
  %v1999 = vld [vmem:[%s1019 + $0x60] sm:$0xff]
  %v2000 = vld [vmem:[%s1019 + $0x70] sm:$0xff]
  %v2001 = vld [vmem:[%s1019 + $0x78] sm:$0xff]
  %v2002 = vld [vmem:[%s1019 + $0x80] sm:$0xff]
  %v2003 = vld [vmem:[%s1019 + $0x88] sm:$0xff]
  %v2004 = vld [vmem:[%s1019 + $0x90] sm:$0xff]
  %v2005 = vld [vmem:[%s1019 + $0x98] sm:$0xff]
  %v2006 = vld [vmem:[%s1019 + $0xa8] sm:$0xff]
  %v2007 = vld [vmem:[%s1019 + $0xb0] sm:$0xff]
  %v2008 = vld [vmem:[%s1019 + $0xb8] sm:$0xff]
  %v2009 = vld [vmem:[%s1019 + $0xc0] sm:$0xff]
  %v2010 = vld [vmem:[%s1019 + $0xc8] sm:$0xff]
  %v2011 = vld [vmem:[%s1019 + $0xd0] sm:$0xff]
  %v2012 = vld [vmem:[%s1019 + $0xe0] sm:$0xff]
  %v2013 = vld [vmem:[%s1019 + $0xe8] sm:$0xff]
  %v2014 = vld [vmem:[%s1019 + $0xf0] sm:$0xff]
  %v2015 = vld [vmem:[%s1019 + $0xf8] sm:$0xff]
  %v2016 = vld [vmem:[%s1019 + $0x100] sm:$0xff]
  %v2017 = vld [vmem:[%s1019 + $0x108] sm:$0xff]
  %v2018 = vld [vmem:[%s1019 + $0x118] sm:$0xff]
  %v2019 = vld [vmem:[%s1019 + $0x120] sm:$0xff]
  %v2020 = vld [vmem:[%s1019 + $0x128] sm:$0xff]
  %v2021 = vld [vmem:[%s1019 + $0x130] sm:$0xff]
  %v2022 = vld [vmem:[%s1019 + $0x138] sm:$0xff]
  %v2023 = vld [vmem:[%s1019 + $0x140] sm:$0xff]
  %v2024 = vpack.c.bf16 %v1989, %v1988
  %v2025 = vpack.c.bf16 %v1991, %v1990
  %v2026 = vpack.c.bf16 %v1993, %v1992
  %v2027 = vpack.c.bf16 %v1995, %v1994
  %v2028 = vpack.c.bf16 %v1997, %v1996
  %v2029 = vpack.c.bf16 %v1999, %v1998
  %v2030 = vpack.c.bf16 %v2001, %v2000
  %v2031 = vpack.c.bf16 %v2003, %v2002
  %v2032 = vpack.c.bf16 %v2005, %v2004
  %v2033 = vpack.c.bf16 %v2007, %v2006
  %v2034 = vpack.c.bf16 %v2009, %v2008
  %v2035 = vpack.c.bf16 %v2011, %v2010
  %v2036 = vpack.c.bf16 %v2013, %v2012
  %v2037 = vpack.c.bf16 %v2015, %v2014
  %v2038 = vpack.c.bf16 %v2017, %v2016
  %v2039 = vpack.c.bf16 %v2019, %v2018
  %v2040 = vpack.c.bf16 %v2021, %v2020
  %v2041 = vpack.c.bf16 %v2023, %v2022
  %s2042 = scalar_lea.vmem %s3, 48
  %v2043 = vld [vmem:[%s2042] sm:$0xf]
  %v2044 = vld [vmem:[%s2042 + $0x4] sm:$0xf]
  %v2045 = vld [vmem:[%s2042 + $0x8] sm:$0xf]
  %v2046 = vld [vmem:[%s2042 + $0xc] sm:$0xf]
  %v2051 = vunpack.c.l.b16 %v2043
  %v2052 = vunpack.c.l.b16 %v2044
  %v2053 = vunpack.c.l.b16 %v2045
  %v2054 = vunpack.c.l.b16 %v2046
  %v2055 = vpack.c.b16 %v2052, %v2051
  %v2056 = vpack.c.b16 %v2054, %v2053
  %v2060 = vsel %vm969, %v2024, 0
  %v2063 = vsel %vm969, %v2025, 0
  %v2066 = vsel %vm969, %v2026, 0
  %v2069 = vsel %vm969, %v2027, 0
  %v2072 = vsel %vm969, %v2028, 0
  %v2075 = vsel %vm969, %v2029, 0
  %v2078 = vsel %vm969, %v2030, 0
  %v2081 = vsel %vm969, %v2031, 0
  %v2084 = vsel %vm969, %v2032, 0
  %v2087 = vsel %vm969, %v2033, 0
  %v2090 = vsel %vm969, %v2034, 0
  %v2093 = vsel %vm969, %v2035, 0
  %v2096 = vsel %vm969, %v2036, 0
  %v2099 = vsel %vm969, %v2037, 0
  %v2102 = vsel %vm969, %v2038, 0
  %v2105 = vsel %vm969, %v2039, 0
  %v2108 = vsel %vm969, %v2040, 0
  %v2111 = vsel %vm969, %v2041, 0
  %2113 = vmatprep.subr.bf16.mxu0 0
  %2114 = vmatpush1.bf16.msra.mxu0 %v2055
  %2115 = vmatprep.subr.bf16.mxu0 0
  %2116 = vmatpush1.bf16.msra.mxu0 %v2056
  %2117 = vmatprep.subr.bf16.mxu0 0
  %2118 = vmatpush1.bf16.msra.mxu0 0
  %2119 = vmatprep.subr.bf16.mxu0 0
  %2120 = vmatpush1.bf16.msra.mxu0 0
  %2121 = vmatprep.subr.bf16.mxu0 0
  %2122 = vmatpush1.bf16.msra.mxu0 0
  %2123 = vmatprep.subr.bf16.mxu0 0
  %2124 = vmatpush1.bf16.msra.mxu0 0
  %2125 = vmatprep.subr.bf16.mxu0 0
  %2126 = vmatpush1.bf16.msra.mxu0 0
  %2127 = vmatprep.subr.bf16.mxu0 0
  %2128 = vmatpush1.bf16.msra.mxu0 0
  %2129 = vmatprep.subr.bf16.mxu0 0
  %2130 = vmatpush1.bf16.msra.mxu0 0
  %2131 = vmatprep.subr.bf16.mxu0 0
  %2132 = vmatpush1.bf16.msra.mxu0 0
  %2133 = vmatprep.subr.bf16.mxu0 0
  %2134 = vmatpush1.bf16.msra.mxu0 0
  %2135 = vmatprep.subr.bf16.mxu0 0
  %2136 = vmatpush1.bf16.msra.mxu0 0
  %2137 = vmatprep.subr.bf16.mxu0 0
  %2138 = vmatpush1.bf16.msra.mxu0 0
  %2139 = vmatprep.subr.bf16.mxu0 0
  %2140 = vmatpush1.bf16.msra.mxu0 0
  %2141 = vmatprep.subr.bf16.mxu0 0
  %2142 = vmatpush1.bf16.msra.mxu0 0
  %2143 = vmatprep.subr.bf16.mxu0 0
  %2144 = vmatpush1.bf16.msra.mxu0 0
  %2145 = vmatprep.mubr.bf16.mxu0 0
  %2146 = vmatmul.mubr.bf16.gmra.mrb[0].mxu0 %v2060
  %v2147 = vpop.f32.mrb[0].mxu0
  %v2148 = vadd.f32 0.0, %v2147
  %v2149 = vpop.f32.mrb[0].mxu0
  %v2150 = vpop.f32.mrb[0].mxu0
  %v2151 = vadd.f32 0.0, %v2150
  %v2152 = vpop.f32.mrb[0].mxu0
  %2153 = vmatprep.mubr.bf16.mxu0 0
  %2154 = vmatmul.mubr.bf16.gmra.mrb[0].mxu0 %v2063
  %v2155 = vpop.f32.mrb[0].mxu0
  %v2156 = vadd.f32 0.0, %v2155
  %v2157 = vpop.f32.mrb[0].mxu0
  %v2158 = vpop.f32.mrb[0].mxu0
  %v2159 = vadd.f32 0.0, %v2158
  %v2160 = vpop.f32.mrb[0].mxu0
  %2161 = vmatprep.mubr.bf16.mxu0 0
  %2162 = vmatmul.mubr.bf16.gmra.mrb[0].mxu0 %v2066
  %v2163 = vpop.f32.mrb[0].mxu0
  %v2164 = vadd.f32 0.0, %v2163
  %v2165 = vpop.f32.mrb[0].mxu0
  %v2166 = vpop.f32.mrb[0].mxu0
  %v2167 = vadd.f32 0.0, %v2166
  %v2168 = vpop.f32.mrb[0].mxu0
  %2169 = vmatprep.mubr.bf16.mxu0 0
  %2170 = vmatmul.mubr.bf16.gmra.mrb[0].mxu0 %v2069
  %v2171 = vpop.f32.mrb[0].mxu0
  %v2172 = vadd.f32 0.0, %v2171
  %v2173 = vpop.f32.mrb[0].mxu0
  %v2174 = vpop.f32.mrb[0].mxu0
  %v2175 = vadd.f32 0.0, %v2174
  %v2176 = vpop.f32.mrb[0].mxu0
  %2177 = vmatprep.mubr.bf16.mxu0 0
  %2178 = vmatmul.mubr.bf16.gmra.mrb[0].mxu0 %v2072
  %v2179 = vpop.f32.mrb[0].mxu0
  %v2180 = vadd.f32 0.0, %v2179
  %v2181 = vpop.f32.mrb[0].mxu0
  %v2182 = vpop.f32.mrb[0].mxu0
  %v2183 = vadd.f32 0.0, %v2182
  %v2184 = vpop.f32.mrb[0].mxu0
  %2185 = vmatprep.mubr.bf16.mxu0 0
  %2186 = vmatmul.mubr.bf16.gmra.mrb[0].mxu0 %v2075
  %v2187 = vpop.f32.mrb[0].mxu0
  %v2188 = vadd.f32 0.0, %v2187
  %v2189 = vpop.f32.mrb[0].mxu0
  %v2190 = vpop.f32.mrb[0].mxu0
  %v2191 = vadd.f32 0.0, %v2190
  %v2192 = vpop.f32.mrb[0].mxu0
  %2193 = vmatprep.mubr.bf16.mxu0 0
  %2194 = vmatmul.mubr.bf16.gmra.mrb[0].mxu0 %v2078
  %v2195 = vpop.f32.mrb[0].mxu0
  %v2196 = vadd.f32 0.0, %v2195
  %v2197 = vpop.f32.mrb[0].mxu0
  %v2198 = vpop.f32.mrb[0].mxu0
  %v2199 = vadd.f32 0.0, %v2198
  %v2200 = vpop.f32.mrb[0].mxu0
  %2201 = vmatprep.mubr.bf16.mxu0 0
  %2202 = vmatmul.mubr.bf16.gmra.mrb[0].mxu0 %v2081
  %v2203 = vpop.f32.mrb[0].mxu0
  %v2204 = vadd.f32 0.0, %v2203
  %v2205 = vpop.f32.mrb[0].mxu0
  %v2206 = vpop.f32.mrb[0].mxu0
  %v2207 = vadd.f32 0.0, %v2206
  %v2208 = vpop.f32.mrb[0].mxu0
  %2209 = vmatprep.mubr.bf16.mxu0 0
  %2210 = vmatmul.mubr.bf16.gmra.mrb[0].mxu0 %v2084
  %v2211 = vpop.f32.mrb[0].mxu0
  %v2212 = vadd.f32 0.0, %v2211
  %v2213 = vpop.f32.mrb[0].mxu0
  %v2214 = vpop.f32.mrb[0].mxu0
  %v2215 = vadd.f32 0.0, %v2214
  %v2216 = vpop.f32.mrb[0].mxu0
  %2217 = vmatprep.mubr.bf16.mxu0 0
  %2218 = vmatmul.mubr.bf16.gmra.mrb[0].mxu0 %v2087
  %v2219 = vpop.f32.mrb[0].mxu0
  %v2220 = vadd.f32 0.0, %v2219
  %v2221 = vpop.f32.mrb[0].mxu0
  %v2222 = vpop.f32.mrb[0].mxu0
  %v2223 = vadd.f32 0.0, %v2222
  %v2224 = vpop.f32.mrb[0].mxu0
  %2225 = vmatprep.mubr.bf16.mxu0 0
  %2226 = vmatmul.mubr.bf16.gmra.mrb[0].mxu0 %v2090
  %v2227 = vpop.f32.mrb[0].mxu0
  %v2228 = vadd.f32 0.0, %v2227
  %v2229 = vpop.f32.mrb[0].mxu0
  %v2230 = vpop.f32.mrb[0].mxu0
  %v2231 = vadd.f32 0.0, %v2230
  %v2232 = vpop.f32.mrb[0].mxu0
  %2233 = vmatprep.mubr.bf16.mxu0 0
  %2234 = vmatmul.mubr.bf16.gmra.mrb[0].mxu0 %v2093
  %v2235 = vpop.f32.mrb[0].mxu0
  %v2236 = vadd.f32 0.0, %v2235
  %v2237 = vpop.f32.mrb[0].mxu0
  %v2238 = vpop.f32.mrb[0].mxu0
  %v2239 = vadd.f32 0.0, %v2238
  %v2240 = vpop.f32.mrb[0].mxu0
  %2241 = vmatprep.mubr.bf16.mxu0 0
  %2242 = vmatmul.mubr.bf16.gmra.mrb[0].mxu0 %v2096
  %v2243 = vpop.f32.mrb[0].mxu0
  %v2244 = vadd.f32 0.0, %v2243
  %v2245 = vpop.f32.mrb[0].mxu0
  %v2246 = vpop.f32.mrb[0].mxu0
  %v2247 = vadd.f32 0.0, %v2246
  %v2248 = vpop.f32.mrb[0].mxu0
  %2249 = vmatprep.mubr.bf16.mxu0 0
  %2250 = vmatmul.mubr.bf16.gmra.mrb[0].mxu0 %v2099
  %v2251 = vpop.f32.mrb[0].mxu0
  %v2252 = vadd.f32 0.0, %v2251
  %v2253 = vpop.f32.mrb[0].mxu0
  %v2254 = vpop.f32.mrb[0].mxu0
  %v2255 = vadd.f32 0.0, %v2254
  %v2256 = vpop.f32.mrb[0].mxu0
  %2257 = vmatprep.mubr.bf16.mxu0 0
  %2258 = vmatmul.mubr.bf16.gmra.mrb[0].mxu0 %v2102
  %v2259 = vpop.f32.mrb[0].mxu0
  %v2260 = vadd.f32 0.0, %v2259
  %v2261 = vpop.f32.mrb[0].mxu0
  %v2262 = vpop.f32.mrb[0].mxu0
  %v2263 = vadd.f32 0.0, %v2262
  %v2264 = vpop.f32.mrb[0].mxu0
  %2265 = vmatprep.mubr.bf16.mxu0 0
  %2266 = vmatmul.mubr.bf16.gmra.mrb[0].mxu0 %v2105
  %v2267 = vpop.f32.mrb[0].mxu0
  %v2268 = vadd.f32 0.0, %v2267
  %v2269 = vpop.f32.mrb[0].mxu0
  %v2270 = vpop.f32.mrb[0].mxu0
  %v2271 = vadd.f32 0.0, %v2270
  %v2272 = vpop.f32.mrb[0].mxu0
  %2273 = vmatprep.mubr.bf16.mxu0 0
  %2274 = vmatmul.mubr.bf16.gmra.mrb[0].mxu0 %v2108
  %v2275 = vpop.f32.mrb[0].mxu0
  %v2276 = vadd.f32 0.0, %v2275
  %v2277 = vpop.f32.mrb[0].mxu0
  %v2278 = vpop.f32.mrb[0].mxu0
  %v2279 = vadd.f32 0.0, %v2278
  %v2280 = vpop.f32.mrb[0].mxu0
  %2281 = vmatprep.mubr.bf16.mxu0 0
  %2282 = vmatmul.mubr.bf16.gmra.mrb[0].mxu0 %v2111
  %v2283 = vpop.f32.mrb[0].mxu0
  %v2284 = vadd.f32 0.0, %v2283
  %v2285 = vpop.f32.mrb[0].mxu0
  %v2286 = vpop.f32.mrb[0].mxu0
  %v2287 = vadd.f32 0.0, %v2286
  %v2288 = vpop.f32.mrb[0].mxu0
  %2289 = vdwg.mxu0
  %v2290 = vadd.f32 %v1952, %v2148
  %v2291 = vadd.f32 %v1953, %v2151
  %v2292 = vadd.f32 %v1954, %v2156
  %v2293 = vadd.f32 %v1955, %v2159
  %v2294 = vadd.f32 %v1956, %v2164
  %v2295 = vadd.f32 %v1957, %v2167
  %v2296 = vadd.f32 %v1958, %v2172
  %v2297 = vadd.f32 %v1959, %v2175
  %v2298 = vadd.f32 %v1960, %v2180
  %v2299 = vadd.f32 %v1961, %v2183
  %v2300 = vadd.f32 %v1962, %v2188
  %v2301 = vadd.f32 %v1963, %v2191
  %v2302 = vadd.f32 %v1964, %v2196
  %v2303 = vadd.f32 %v1965, %v2199
  %v2304 = vadd.f32 %v1966, %v2204
  %v2305 = vadd.f32 %v1967, %v2207
  %v2306 = vadd.f32 %v1968, %v2212
  %v2307 = vadd.f32 %v1969, %v2215
  %v2308 = vadd.f32 %v1970, %v2220
  %v2309 = vadd.f32 %v1971, %v2223
  %v2310 = vadd.f32 %v1972, %v2228
  %v2311 = vadd.f32 %v1973, %v2231
  %v2312 = vadd.f32 %v1974, %v2236
  %v2313 = vadd.f32 %v1975, %v2239
  %v2314 = vadd.f32 %v1976, %v2244
  %v2315 = vadd.f32 %v1977, %v2247
  %v2316 = vadd.f32 %v1978, %v2252
  %v2317 = vadd.f32 %v1979, %v2255
  %v2318 = vadd.f32 %v1980, %v2260
  %v2319 = vadd.f32 %v1981, %v2263
  %v2320 = vadd.f32 %v1982, %v2268
  %v2321 = vadd.f32 %v1983, %v2271
  %v2322 = vadd.f32 %v1984, %v2276
  %v2323 = vadd.f32 %v1985, %v2279
  %v2324 = vadd.f32 %v1986, %v2284
  %v2325 = vadd.f32 %v1987, %v2287
  %v2326 = vld [vmem:[%s4] sm:$0x1]
  %v2328 = vlaneseq
  %v2329 = vshrl.u32 %v2328, 7
  %v2330 = vsub.s32 0, %v2329
  %v2331 = vrot.slane %v2326, %v2330
  %v2333 = vadd.f32 %v2290, %v2331
  %v2334 = vadd.f32 %v2291, %v2331
  %v2335 = vadd.f32 %v2292, %v2331
  %v2336 = vadd.f32 %v2293, %v2331
  %v2337 = vadd.f32 %v2294, %v2331
  %v2338 = vadd.f32 %v2295, %v2331
  %v2339 = vadd.f32 %v2296, %v2331
  %v2340 = vadd.f32 %v2297, %v2331
  %v2341 = vadd.f32 %v2298, %v2331
  %v2342 = vadd.f32 %v2299, %v2331
  %v2343 = vadd.f32 %v2300, %v2331
  %v2344 = vadd.f32 %v2301, %v2331
  %v2345 = vadd.f32 %v2302, %v2331
  %v2346 = vadd.f32 %v2303, %v2331
  %v2347 = vadd.f32 %v2304, %v2331
  %v2348 = vadd.f32 %v2305, %v2331
  %v2349 = vadd.f32 %v2306, %v2331
  %v2350 = vadd.f32 %v2307, %v2331
  %v2351 = vadd.f32 %v2308, %v2331
  %v2352 = vadd.f32 %v2309, %v2331
  %v2353 = vadd.f32 %v2310, %v2331
  %v2354 = vadd.f32 %v2311, %v2331
  %v2355 = vadd.f32 %v2312, %v2331
  %v2356 = vadd.f32 %v2313, %v2331
  %v2357 = vadd.f32 %v2314, %v2331
  %v2358 = vadd.f32 %v2315, %v2331
  %v2359 = vadd.f32 %v2316, %v2331
  %v2360 = vadd.f32 %v2317, %v2331
  %v2361 = vadd.f32 %v2318, %v2331
  %v2362 = vadd.f32 %v2319, %v2331
  %v2363 = vadd.f32 %v2320, %v2331
  %v2364 = vadd.f32 %v2321, %v2331
  %v2365 = vadd.f32 %v2322, %v2331
  %v2366 = vadd.f32 %v2323, %v2331
  %v2367 = vadd.f32 %v2324, %v2331
  %v2368 = vadd.f32 %v2325, %v2331
  %v2369 = vmax.f32 %v2333, 0.0
  %v2370 = vmax.f32 %v2334, 0.0
  %v2371 = vmax.f32 %v2335, 0.0
  %v2372 = vmax.f32 %v2336, 0.0
  %v2373 = vmax.f32 %v2337, 0.0
  %v2374 = vmax.f32 %v2338, 0.0
  %v2375 = vmax.f32 %v2339, 0.0
  %v2376 = vmax.f32 %v2340, 0.0
  %v2377 = vmax.f32 %v2341, 0.0
  %v2378 = vmax.f32 %v2342, 0.0
  %v2379 = vmax.f32 %v2343, 0.0
  %v2380 = vmax.f32 %v2344, 0.0
  %v2381 = vmax.f32 %v2345, 0.0
  %v2382 = vmax.f32 %v2346, 0.0
  %v2383 = vmax.f32 %v2347, 0.0
  %v2384 = vmax.f32 %v2348, 0.0
  %v2385 = vmax.f32 %v2349, 0.0
  %v2386 = vmax.f32 %v2350, 0.0
  %v2387 = vmax.f32 %v2351, 0.0
  %v2388 = vmax.f32 %v2352, 0.0
  %v2389 = vmax.f32 %v2353, 0.0
  %v2390 = vmax.f32 %v2354, 0.0
  %v2391 = vmax.f32 %v2355, 0.0
  %v2392 = vmax.f32 %v2356, 0.0
  %v2393 = vmax.f32 %v2357, 0.0
  %v2394 = vmax.f32 %v2358, 0.0
  %v2395 = vmax.f32 %v2359, 0.0
  %v2396 = vmax.f32 %v2360, 0.0
  %v2397 = vmax.f32 %v2361, 0.0
  %v2398 = vmax.f32 %v2362, 0.0
  %v2399 = vmax.f32 %v2363, 0.0
  %v2400 = vmax.f32 %v2364, 0.0
  %v2401 = vmax.f32 %v2365, 0.0
  %v2402 = vmax.f32 %v2366, 0.0
  %v2403 = vmax.f32 %v2367, 0.0
  %v2404 = vmax.f32 %v2368, 0.0
  %vm2405 = vcmask 523264
  %2406 = vst.msk [vmem:[#allocation4] sm:$0xff] %vm2405, 0.0
  %2407 = vst.msk [vmem:[#allocation4 + $0x8] sm:$0xff] %vm2405, 0.0
  %2408 = vst.msk [vmem:[#allocation4 + $0x10] sm:$0xff] %vm2405, 0.0
  %2409 = vst.msk [vmem:[#allocation4 + $0x18] sm:$0xff] %vm2405, 0.0
  %2410 = vst.msk [vmem:[#allocation4 + $0x20] sm:$0xff] %vm2405, 0.0
  %2411 = vst.msk [vmem:[#allocation4 + $0x28] sm:$0xff] %vm2405, 0.0
  %2412 = vst.msk [vmem:[#allocation4 + $0x30] sm:$0xff] %vm2405, 0.0
  %2413 = vst.msk [vmem:[#allocation4 + $0x38] sm:$0xff] %vm2405, 0.0
  %2414 = vst.msk [vmem:[#allocation4 + $0x40] sm:$0xff] %vm2405, 0.0
  %2415 = vst.msk [vmem:[#allocation4 + $0x48] sm:$0xff] %vm2405, 0.0
  %2416 = vst.msk [vmem:[#allocation4 + $0x50] sm:$0xff] %vm2405, 0.0
  %2417 = vst.msk [vmem:[#allocation4 + $0x58] sm:$0xff] %vm2405, 0.0
  %2418 = vst.msk [vmem:[#allocation4 + $0x60] sm:$0xff] %vm2405, 0.0
  %2419 = vst.msk [vmem:[#allocation4 + $0x68] sm:$0xff] %vm2405, 0.0
  %2420 = vst.msk [vmem:[#allocation4 + $0x70] sm:$0xff] %vm2405, 0.0
  %2421 = vst.msk [vmem:[#allocation4 + $0x78] sm:$0xff] %vm2405, 0.0
  %2422 = vst.msk [vmem:[#allocation4 + $0x80] sm:$0xff] %vm2405, 0.0
  %2423 = vst.msk [vmem:[#allocation4 + $0x88] sm:$0xff] %vm2405, 0.0
  %2424 = vst.msk [vmem:[#allocation4 + $0x90] sm:$0xff] %vm2405, 0.0
  %2425 = vst.msk [vmem:[#allocation4 + $0x98] sm:$0xff] %vm2405, 0.0
  %2426 = vst.msk [vmem:[#allocation4 + $0xa0] sm:$0xff] %vm2405, 0.0
  %2427 = vst.msk [vmem:[#allocation4 + $0xa8] sm:$0xff] %vm2405, 0.0
  %2428 = vst.msk [vmem:[#allocation4 + $0xb0] sm:$0xff] %vm2405, 0.0
  %2429 = vst.msk [vmem:[#allocation4 + $0xb8] sm:$0xff] %vm2405, 0.0
  %2430 = vst.msk [vmem:[#allocation4 + $0xc0] sm:$0xff] %vm2405, 0.0
  %2431 = vst.msk [vmem:[#allocation4 + $0xc8] sm:$0xff] %vm2405, 0.0
  %2432 = vst.msk [vmem:[#allocation4 + $0xd0] sm:$0xff] %vm2405, 0.0
  %2433 = vst.msk [vmem:[#allocation4 + $0xd8] sm:$0xff] %vm2405, 0.0
  %2434 = vst.msk [vmem:[#allocation4 + $0xe0] sm:$0xff] %vm2405, 0.0
  %2435 = vst.msk [vmem:[#allocation4 + $0xe8] sm:$0xff] %vm2405, 0.0
  %2436 = vst.msk [vmem:[#allocation4 + $0xf0] sm:$0xff] %vm2405, 0.0
  %2437 = vst.msk [vmem:[#allocation4 + $0xf8] sm:$0xff] %vm2405, 0.0
  %2438 = vst.msk [vmem:[#allocation4 + $0x100] sm:$0xff] %vm2405, 0.0
  %2439 = vst.msk [vmem:[#allocation4 + $0x108] sm:$0xff] %vm2405, 0.0
  %2440 = vst.msk [vmem:[#allocation4 + $0x110] sm:$0xff] %vm2405, 0.0
  %2441 = vst.msk [vmem:[#allocation4 + $0x118] sm:$0xff] %vm2405, 0.0
  %2442 = vst.msk [vmem:[#allocation4 + $0x120] sm:$0xff] %vm2405, 0.0
  %2443 = vst.msk [vmem:[#allocation4 + $0x128] sm:$0xff] %vm2405, 0.0
  %2444 = vst.msk [vmem:[#allocation4 + $0x130] sm:$0xff] %vm2405, 0.0
  %2445 = vst.msk [vmem:[#allocation4 + $0x138] sm:$0xff] %vm2405, 0.0
  %2446 = vst.msk [vmem:[#allocation4 + $0x140] sm:$0xff] %vm2405, 0.0
  %2447 = vst.msk [vmem:[#allocation4 + $0x148] sm:$0xff] %vm2405, 0.0
  %2448 = vst.msk [vmem:[#allocation4 + $0x150] sm:$0xff] %vm2405, 0.0
  %2449 = vst.msk [vmem:[#allocation4 + $0x158] sm:$0xff] %vm2405, 0.0
  %2450 = vst.msk [vmem:[#allocation4 + $0x160] sm:$0xff] %vm2405, 0.0
  %2451 = vst.msk [vmem:[#allocation4 + $0x168] sm:$0xff] %vm2405, 0.0
  %2452 = vst.msk [vmem:[#allocation4 + $0x170] sm:$0xff] %vm2405, 0.0
  %2453 = vst.msk [vmem:[#allocation4 + $0x178] sm:$0xff] %vm2405, 0.0
  %2454 = vst.msk [vmem:[#allocation4 + $0x180] sm:$0xff] %vm2405, 0.0
  %2455 = vst.msk [vmem:[#allocation4 + $0x188] sm:$0xff] %vm2405, 0.0
  %2456 = vst.msk [vmem:[#allocation4 + $0x190] sm:$0xff] %vm2405, 0.0
  %2457 = vst.msk [vmem:[#allocation4 + $0x198] sm:$0xff] %vm2405, 0.0
  %2458 = vst.msk [vmem:[#allocation4 + $0x1a0] sm:$0xff] %vm2405, 0.0
  %2459 = vst.msk [vmem:[#allocation4 + $0x1a8] sm:$0xff] %vm2405, 0.0
  %2460 = vst.msk [vmem:[#allocation4 + $0x1b0] sm:$0xff] %vm2405, 0.0
  %2461 = vst.msk [vmem:[#allocation4 + $0x1b8] sm:$0xff] %vm2405, 0.0
  %2462 = vst.msk [vmem:[#allocation4 + $0x1c0] sm:$0xff] %vm2405, 0.0
  %2463 = vst.msk [vmem:[#allocation4 + $0x1c8] sm:$0xff] %vm2405, 0.0
  %2464 = vst.msk [vmem:[#allocation4 + $0x1d0] sm:$0xff] %vm2405, 0.0
  %2465 = vst.msk [vmem:[#allocation4 + $0x1d8] sm:$0xff] %vm2405, 0.0
  %2466 = vst.msk [vmem:[#allocation4 + $0x1e0] sm:$0xff] %vm2405, 0.0
  %2467 = vst.msk [vmem:[#allocation4 + $0x1e8] sm:$0xff] %vm2405, 0.0
  %2468 = vst.msk [vmem:[#allocation4 + $0x1f0] sm:$0xff] %vm2405, 0.0
  %2469 = vst.msk [vmem:[#allocation4 + $0x1f8] sm:$0xff] %vm2405, 0.0
  %s2470 = scalar_lea.vmem [#allocation4], 72
  %2471 = vst.msk [vmem:[%s2470] sm:$0xff] %vm2405, %v2369
  %2472 = vst.msk [vmem:[%s2470 + $0x8] sm:$0xff] %vm2405, %v2370
  %2473 = vst.msk [vmem:[%s2470 + $0x10] sm:$0xff] %vm2405, %v2371
  %2474 = vst.msk [vmem:[%s2470 + $0x18] sm:$0xff] %vm2405, %v2372
  %2475 = vst.msk [vmem:[%s2470 + $0x20] sm:$0xff] %vm2405, %v2373
  %2476 = vst.msk [vmem:[%s2470 + $0x28] sm:$0xff] %vm2405, %v2374
  %2477 = vst.msk [vmem:[%s2470 + $0x40] sm:$0xff] %vm2405, %v2375
  %2478 = vst.msk [vmem:[%s2470 + $0x48] sm:$0xff] %vm2405, %v2376
  %2479 = vst.msk [vmem:[%s2470 + $0x50] sm:$0xff] %vm2405, %v2377
  %2480 = vst.msk [vmem:[%s2470 + $0x58] sm:$0xff] %vm2405, %v2378
  %2481 = vst.msk [vmem:[%s2470 + $0x60] sm:$0xff] %vm2405, %v2379
  %2482 = vst.msk [vmem:[%s2470 + $0x68] sm:$0xff] %vm2405, %v2380
  %2483 = vst.msk [vmem:[%s2470 + $0x80] sm:$0xff] %vm2405, %v2381
  %2484 = vst.msk [vmem:[%s2470 + $0x88] sm:$0xff] %vm2405, %v2382
  %2485 = vst.msk [vmem:[%s2470 + $0x90] sm:$0xff] %vm2405, %v2383
  %2486 = vst.msk [vmem:[%s2470 + $0x98] sm:$0xff] %vm2405, %v2384
  %2487 = vst.msk [vmem:[%s2470 + $0xa0] sm:$0xff] %vm2405, %v2385
  %2488 = vst.msk [vmem:[%s2470 + $0xa8] sm:$0xff] %vm2405, %v2386
  %2489 = vst.msk [vmem:[%s2470 + $0xc0] sm:$0xff] %vm2405, %v2387
  %2490 = vst.msk [vmem:[%s2470 + $0xc8] sm:$0xff] %vm2405, %v2388
  %2491 = vst.msk [vmem:[%s2470 + $0xd0] sm:$0xff] %vm2405, %v2389
  %2492 = vst.msk [vmem:[%s2470 + $0xd8] sm:$0xff] %vm2405, %v2390
  %2493 = vst.msk [vmem:[%s2470 + $0xe0] sm:$0xff] %vm2405, %v2391
  %2494 = vst.msk [vmem:[%s2470 + $0xe8] sm:$0xff] %vm2405, %v2392
  %2495 = vst.msk [vmem:[%s2470 + $0x100] sm:$0xff] %vm2405, %v2393
  %2496 = vst.msk [vmem:[%s2470 + $0x108] sm:$0xff] %vm2405, %v2394
  %2497 = vst.msk [vmem:[%s2470 + $0x110] sm:$0xff] %vm2405, %v2395
  %2498 = vst.msk [vmem:[%s2470 + $0x118] sm:$0xff] %vm2405, %v2396
  %2499 = vst.msk [vmem:[%s2470 + $0x120] sm:$0xff] %vm2405, %v2397
  %2500 = vst.msk [vmem:[%s2470 + $0x128] sm:$0xff] %vm2405, %v2398
  %2501 = vst.msk [vmem:[%s2470 + $0x140] sm:$0xff] %vm2405, %v2399
  %2502 = vst.msk [vmem:[%s2470 + $0x148] sm:$0xff] %vm2405, %v2400
  %2503 = vst.msk [vmem:[%s2470 + $0x150] sm:$0xff] %vm2405, %v2401
  %2504 = vst.msk [vmem:[%s2470 + $0x158] sm:$0xff] %vm2405, %v2402
  %2505 = vst.msk [vmem:[%s2470 + $0x160] sm:$0xff] %vm2405, %v2403
  %2506 = vst.msk [vmem:[%s2470 + $0x168] sm:$0xff] %vm2405, %v2404
  %v2507 = vld [vmem:[#allocation4] sm:$0xff]
  %v2508 = vld [vmem:[#allocation4 + $0x8] sm:$0xff]
  %v2509 = vld [vmem:[#allocation4 + $0x10] sm:$0xff]
  %v2510 = vld [vmem:[#allocation4 + $0x18] sm:$0xff]
  %v2511 = vld [vmem:[#allocation4 + $0x20] sm:$0xff]
  %v2512 = vld [vmem:[#allocation4 + $0x28] sm:$0xff]
  %v2513 = vld [vmem:[#allocation4 + $0x30] sm:$0xff]
  %v2514 = vld [vmem:[#allocation4 + $0x40] sm:$0xff]
  %v2515 = vld [vmem:[#allocation4 + $0x48] sm:$0xff]
  %v2516 = vld [vmem:[#allocation4 + $0x50] sm:$0xff]
  %v2517 = vld [vmem:[#allocation4 + $0x58] sm:$0xff]
  %v2518 = vld [vmem:[#allocation4 + $0x60] sm:$0xff]
  %v2519 = vld [vmem:[#allocation4 + $0x68] sm:$0xff]
  %v2520 = vld [vmem:[#allocation4 + $0x70] sm:$0xff]
  %v2521 = vld [vmem:[#allocation4 + $0x80] sm:$0xff]
  %v2522 = vld [vmem:[#allocation4 + $0x88] sm:$0xff]
  %v2523 = vld [vmem:[#allocation4 + $0x90] sm:$0xff]
  %v2524 = vld [vmem:[#allocation4 + $0x98] sm:$0xff]
  %v2525 = vld [vmem:[#allocation4 + $0xa0] sm:$0xff]
  %v2526 = vld [vmem:[#allocation4 + $0xa8] sm:$0xff]
  %v2527 = vld [vmem:[#allocation4 + $0xb0] sm:$0xff]
  %v2528 = vld [vmem:[#allocation4 + $0xc0] sm:$0xff]
  %v2529 = vld [vmem:[#allocation4 + $0xc8] sm:$0xff]
  %v2530 = vld [vmem:[#allocation4 + $0xd0] sm:$0xff]
  %v2531 = vld [vmem:[#allocation4 + $0xd8] sm:$0xff]
  %v2532 = vld [vmem:[#allocation4 + $0xe0] sm:$0xff]
  %v2533 = vld [vmem:[#allocation4 + $0xe8] sm:$0xff]
  %v2534 = vld [vmem:[#allocation4 + $0xf0] sm:$0xff]
  %v2535 = vld [vmem:[#allocation4 + $0x100] sm:$0xff]
  %v2536 = vld [vmem:[#allocation4 + $0x108] sm:$0xff]
  %v2537 = vld [vmem:[#allocation4 + $0x110] sm:$0xff]
  %v2538 = vld [vmem:[#allocation4 + $0x118] sm:$0xff]
  %v2539 = vld [vmem:[#allocation4 + $0x120] sm:$0xff]
  %v2540 = vld [vmem:[#allocation4 + $0x128] sm:$0xff]
  %v2541 = vld [vmem:[#allocation4 + $0x130] sm:$0xff]
  %v2542 = vld [vmem:[#allocation4 + $0x140] sm:$0xff]
  %v2543 = vld [vmem:[#allocation4 + $0x148] sm:$0xff]
  %v2544 = vld [vmem:[#allocation4 + $0x150] sm:$0xff]
  %v2545 = vld [vmem:[#allocation4 + $0x158] sm:$0xff]
  %v2546 = vld [vmem:[#allocation4 + $0x160] sm:$0xff]
  %v2547 = vld [vmem:[#allocation4 + $0x168] sm:$0xff]
  %v2548 = vld [vmem:[#allocation4 + $0x170] sm:$0xff]
  %v2549 = vld [vmem:[#allocation4 + $0x180] sm:$0xff]
  %v2550 = vld [vmem:[#allocation4 + $0x188] sm:$0xff]
  %v2551 = vld [vmem:[#allocation4 + $0x190] sm:$0xff]
  %v2552 = vld [vmem:[#allocation4 + $0x198] sm:$0xff]
  %v2553 = vld [vmem:[#allocation4 + $0x1a0] sm:$0xff]
  %v2554 = vld [vmem:[#allocation4 + $0x1a8] sm:$0xff]
  %v2555 = vld [vmem:[#allocation4 + $0x1b0] sm:$0xff]
  %v2556 = vpack.c.bf16 %v2508, %v2507
  %v2557 = vpack.c.bf16 %v2510, %v2509
  %v2558 = vpack.c.bf16 %v2512, %v2511
  %v2559 = vpack.c.bf16 %v2514, %v2513
  %v2560 = vpack.c.bf16 %v2516, %v2515
  %v2561 = vpack.c.bf16 %v2518, %v2517
  %v2562 = vpack.c.bf16 %v2520, %v2519
  %v2563 = vpack.c.bf16 %v2522, %v2521
  %v2564 = vpack.c.bf16 %v2524, %v2523
  %v2565 = vpack.c.bf16 %v2526, %v2525
  %v2566 = vpack.c.bf16 %v2528, %v2527
  %v2567 = vpack.c.bf16 %v2530, %v2529
  %v2568 = vpack.c.bf16 %v2532, %v2531
  %v2569 = vpack.c.bf16 %v2534, %v2533
  %v2570 = vpack.c.bf16 %v2536, %v2535
  %v2571 = vpack.c.bf16 %v2538, %v2537
  %v2572 = vpack.c.bf16 %v2540, %v2539
  %v2573 = vpack.c.bf16 %v2542, %v2541
  %v2574 = vpack.c.bf16 %v2544, %v2543
  %v2575 = vpack.c.bf16 %v2546, %v2545
  %v2576 = vpack.c.bf16 %v2548, %v2547
  %v2577 = vpack.c.bf16 %v2550, %v2549
  %v2578 = vpack.c.bf16 %v2552, %v2551
  %v2579 = vpack.c.bf16 %v2554, %v2553
  %v2580 = vpack.c.bf16 %v2555, %v2555
  %v2581 = vld [vmem:[%s5] sm:$0xf]
  %v2582 = vld [vmem:[%s5 + $0x4] sm:$0xf]
  %v2583 = vld [vmem:[%s5 + $0x8] sm:$0xf]
  %v2584 = vld [vmem:[%s5 + $0xc] sm:$0xf]
  %v2585 = vld [vmem:[%s5 + $0x10] sm:$0xf]
  %v2586 = vld [vmem:[%s5 + $0x14] sm:$0xf]
  %v2587 = vld [vmem:[%s5 + $0x18] sm:$0xf]
  %v2588 = vld [vmem:[%s5 + $0x1c] sm:$0xf]
  %s2589 = scalar_lea.vmem [#allocation4], 8
  %v2590 = vld [vmem:[%s2589] sm:$0xff]
  %v2591 = vld [vmem:[%s2589 + $0x8] sm:$0xff]
  %v2592 = vld [vmem:[%s2589 + $0x10] sm:$0xff]
  %v2593 = vld [vmem:[%s2589 + $0x18] sm:$0xff]
  %v2594 = vld [vmem:[%s2589 + $0x20] sm:$0xff]
  %v2595 = vld [vmem:[%s2589 + $0x28] sm:$0xff]
  %v2596 = vld [vmem:[%s2589 + $0x30] sm:$0xff]
  %v2597 = vld [vmem:[%s2589 + $0x40] sm:$0xff]
  %v2598 = vld [vmem:[%s2589 + $0x48] sm:$0xff]
  %v2599 = vld [vmem:[%s2589 + $0x50] sm:$0xff]
  %v2600 = vld [vmem:[%s2589 + $0x58] sm:$0xff]
  %v2601 = vld [vmem:[%s2589 + $0x60] sm:$0xff]
  %v2602 = vld [vmem:[%s2589 + $0x68] sm:$0xff]
  %v2603 = vld [vmem:[%s2589 + $0x70] sm:$0xff]
  %v2604 = vld [vmem:[%s2589 + $0x80] sm:$0xff]
  %v2605 = vld [vmem:[%s2589 + $0x88] sm:$0xff]
  %v2606 = vld [vmem:[%s2589 + $0x90] sm:$0xff]
  %v2607 = vld [vmem:[%s2589 + $0x98] sm:$0xff]
  %v2608 = vld [vmem:[%s2589 + $0xa0] sm:$0xff]
  %v2609 = vld [vmem:[%s2589 + $0xa8] sm:$0xff]
  %v2610 = vld [vmem:[%s2589 + $0xb0] sm:$0xff]
  %v2611 = vld [vmem:[%s2589 + $0xc0] sm:$0xff]
  %v2612 = vld [vmem:[%s2589 + $0xc8] sm:$0xff]
  %v2613 = vld [vmem:[%s2589 + $0xd0] sm:$0xff]
  %v2614 = vld [vmem:[%s2589 + $0xd8] sm:$0xff]
  %v2615 = vld [vmem:[%s2589 + $0xe0] sm:$0xff]
  %v2616 = vld [vmem:[%s2589 + $0xe8] sm:$0xff]
  %v2617 = vld [vmem:[%s2589 + $0xf0] sm:$0xff]
  %v2618 = vld [vmem:[%s2589 + $0x100] sm:$0xff]
  %v2619 = vld [vmem:[%s2589 + $0x108] sm:$0xff]
  %v2620 = vld [vmem:[%s2589 + $0x110] sm:$0xff]
  %v2621 = vld [vmem:[%s2589 + $0x118] sm:$0xff]
  %v2622 = vld [vmem:[%s2589 + $0x120] sm:$0xff]
  %v2623 = vld [vmem:[%s2589 + $0x128] sm:$0xff]
  %v2624 = vld [vmem:[%s2589 + $0x130] sm:$0xff]
  %v2625 = vld [vmem:[%s2589 + $0x140] sm:$0xff]
  %v2626 = vld [vmem:[%s2589 + $0x148] sm:$0xff]
  %v2627 = vld [vmem:[%s2589 + $0x150] sm:$0xff]
  %v2628 = vld [vmem:[%s2589 + $0x158] sm:$0xff]
  %v2629 = vld [vmem:[%s2589 + $0x160] sm:$0xff]
  %v2630 = vld [vmem:[%s2589 + $0x168] sm:$0xff]
  %v2631 = vld [vmem:[%s2589 + $0x170] sm:$0xff]
  %v2632 = vld [vmem:[%s2589 + $0x180] sm:$0xff]
  %v2633 = vld [vmem:[%s2589 + $0x188] sm:$0xff]
  %v2634 = vld [vmem:[%s2589 + $0x190] sm:$0xff]
  %v2635 = vld [vmem:[%s2589 + $0x198] sm:$0xff]
  %v2636 = vld [vmem:[%s2589 + $0x1a0] sm:$0xff]
  %v2637 = vld [vmem:[%s2589 + $0x1a8] sm:$0xff]
  %v2638 = vld [vmem:[%s2589 + $0x1b0] sm:$0xff]
  %v2639 = vpack.c.bf16 %v2591, %v2590
  %v2640 = vpack.c.bf16 %v2593, %v2592
  %v2641 = vpack.c.bf16 %v2595, %v2594
  %v2642 = vpack.c.bf16 %v2597, %v2596
  %v2643 = vpack.c.bf16 %v2599, %v2598
  %v2644 = vpack.c.bf16 %v2601, %v2600
  %v2645 = vpack.c.bf16 %v2603, %v2602
  %v2646 = vpack.c.bf16 %v2605, %v2604
  %v2647 = vpack.c.bf16 %v2607, %v2606
  %v2648 = vpack.c.bf16 %v2609, %v2608
  %v2649 = vpack.c.bf16 %v2611, %v2610
  %v2650 = vpack.c.bf16 %v2613, %v2612
  %v2651 = vpack.c.bf16 %v2615, %v2614
  %v2652 = vpack.c.bf16 %v2617, %v2616
  %v2653 = vpack.c.bf16 %v2619, %v2618
  %v2654 = vpack.c.bf16 %v2621, %v2620
  %v2655 = vpack.c.bf16 %v2623, %v2622
  %v2656 = vpack.c.bf16 %v2625, %v2624
  %v2657 = vpack.c.bf16 %v2627, %v2626
  %v2658 = vpack.c.bf16 %v2629, %v2628
  %v2659 = vpack.c.bf16 %v2631, %v2630
  %v2660 = vpack.c.bf16 %v2633, %v2632
  %v2661 = vpack.c.bf16 %v2635, %v2634
  %v2662 = vpack.c.bf16 %v2637, %v2636
  %v2663 = vpack.c.bf16 %v2638, %v2638
  %s2664 = scalar_lea.vmem %s5, 32
  %v2665 = vld [vmem:[%s2664] sm:$0xf]
  %v2666 = vld [vmem:[%s2664 + $0x4] sm:$0xf]
  %v2667 = vld [vmem:[%s2664 + $0x8] sm:$0xf]
  %v2668 = vld [vmem:[%s2664 + $0xc] sm:$0xf]
  %v2669 = vld [vmem:[%s2664 + $0x10] sm:$0xf]
  %v2670 = vld [vmem:[%s2664 + $0x14] sm:$0xf]
  %v2671 = vld [vmem:[%s2664 + $0x18] sm:$0xf]
  %v2672 = vld [vmem:[%s2664 + $0x1c] sm:$0xf]
  %v2681 = vunpack.c.l.b16 %v2665
  %v2682 = vunpack.c.l.b16 %v2666
  %v2683 = vunpack.c.l.b16 %v2667
  %v2684 = vunpack.c.l.b16 %v2668
  %v2685 = vunpack.c.l.b16 %v2669
  %v2686 = vunpack.c.l.b16 %v2670
  %v2687 = vunpack.c.l.b16 %v2671
  %v2688 = vunpack.c.l.b16 %v2672
  %v2689 = vpack.c.b16 %v2682, %v2681
  %v2690 = vpack.c.b16 %v2684, %v2683
  %v2691 = vpack.c.b16 %v2686, %v2685
  %v2692 = vpack.c.b16 %v2688, %v2687
  %v2698 = vsel %vm2405, %v2639, 0
  %v2701 = vsel %vm2405, %v2640, 0
  %v2704 = vsel %vm2405, %v2641, 0
  %v2707 = vsel %vm2405, %v2642, 0
  %v2710 = vsel %vm2405, %v2643, 0
  %v2713 = vsel %vm2405, %v2644, 0
  %v2716 = vsel %vm2405, %v2645, 0
  %v2719 = vsel %vm2405, %v2646, 0
  %v2722 = vsel %vm2405, %v2647, 0
  %v2725 = vsel %vm2405, %v2648, 0
  %v2728 = vsel %vm2405, %v2649, 0
  %v2731 = vsel %vm2405, %v2650, 0
  %v2734 = vsel %vm2405, %v2651, 0
  %v2737 = vsel %vm2405, %v2652, 0
  %v2740 = vsel %vm2405, %v2653, 0
  %v2743 = vsel %vm2405, %v2654, 0
  %v2746 = vsel %vm2405, %v2655, 0
  %v2749 = vsel %vm2405, %v2656, 0
  %v2752 = vsel %vm2405, %v2657, 0
  %v2755 = vsel %vm2405, %v2658, 0
  %v2758 = vsel %vm2405, %v2659, 0
  %v2761 = vsel %vm2405, %v2660, 0
  %v2764 = vsel %vm2405, %v2661, 0
  %v2767 = vsel %vm2405, %v2662, 0
  %v2770 = vsel %vm2405, %v2663, 0
  %2772 = vmatprep.subr.bf16.mxu0 0
  %2773 = vmatpush1.bf16.msra.mxu0 %v2689
  %2774 = vmatprep.subr.bf16.mxu0 0
  %2775 = vmatpush1.bf16.msra.mxu0 %v2690
  %2776 = vmatprep.subr.bf16.mxu0 0
  %2777 = vmatpush1.bf16.msra.mxu0 %v2691
  %2778 = vmatprep.subr.bf16.mxu0 0
  %2779 = vmatpush1.bf16.msra.mxu0 %v2692
  %2780 = vmatprep.subr.bf16.mxu0 0
  %2781 = vmatpush1.bf16.msra.mxu0 0
  %2782 = vmatprep.subr.bf16.mxu0 0
  %2783 = vmatpush1.bf16.msra.mxu0 0
  %2784 = vmatprep.subr.bf16.mxu0 0
  %2785 = vmatpush1.bf16.msra.mxu0 0
  %2786 = vmatprep.subr.bf16.mxu0 0
  %2787 = vmatpush1.bf16.msra.mxu0 0
  %2788 = vmatprep.subr.bf16.mxu0 0
  %2789 = vmatpush1.bf16.msra.mxu0 0
  %2790 = vmatprep.subr.bf16.mxu0 0
  %2791 = vmatpush1.bf16.msra.mxu0 0
  %2792 = vmatprep.subr.bf16.mxu0 0
  %2793 = vmatpush1.bf16.msra.mxu0 0
  %2794 = vmatprep.subr.bf16.mxu0 0
  %2795 = vmatpush1.bf16.msra.mxu0 0
  %2796 = vmatprep.subr.bf16.mxu0 0
  %2797 = vmatpush1.bf16.msra.mxu0 0
  %2798 = vmatprep.subr.bf16.mxu0 0
  %2799 = vmatpush1.bf16.msra.mxu0 0
  %2800 = vmatprep.subr.bf16.mxu0 0
  %2801 = vmatpush1.bf16.msra.mxu0 0
  %2802 = vmatprep.subr.bf16.mxu0 0
  %2803 = vmatpush1.bf16.msra.mxu0 0
  %2804 = vmatprep.mubr.bf16.mxu0 0
  %2805 = vmatmul.mubr.bf16.gmra.mrb[0].mxu0 %v2698
  %v2806 = vpop.f32.mrb[0].mxu0
  %v2807 = vadd.f32 0.0, %v2806
  %v2808 = vpop.f32.mrb[0].mxu0
  %v2809 = vpop.f32.mrb[0].mxu0
  %v2810 = vadd.f32 0.0, %v2809
  %v2811 = vpop.f32.mrb[0].mxu0
  %2812 = vmatprep.mubr.bf16.mxu0 0
  %2813 = vmatmul.mubr.bf16.gmra.mrb[0].mxu0 %v2701
  %v2814 = vpop.f32.mrb[0].mxu0
  %v2815 = vadd.f32 0.0, %v2814
  %v2816 = vpop.f32.mrb[0].mxu0
  %v2817 = vpop.f32.mrb[0].mxu0
  %v2818 = vadd.f32 0.0, %v2817
  %v2819 = vpop.f32.mrb[0].mxu0
  %2820 = vmatprep.mubr.bf16.mxu0 0
  %2821 = vmatmul.mubr.bf16.gmra.mrb[0].mxu0 %v2704
  %v2822 = vpop.f32.mrb[0].mxu0
  %v2823 = vadd.f32 0.0, %v2822
  %v2824 = vpop.f32.mrb[0].mxu0
  %v2825 = vpop.f32.mrb[0].mxu0
  %v2826 = vadd.f32 0.0, %v2825
  %v2827 = vpop.f32.mrb[0].mxu0
  %2828 = vmatprep.mubr.bf16.mxu0 0
  %2829 = vmatmul.mubr.bf16.gmra.mrb[0].mxu0 %v2707
  %v2830 = vpop.f32.mrb[0].mxu0
  %v2831 = vadd.f32 0.0, %v2830
  %v2832 = vpop.f32.mrb[0].mxu0
  %v2833 = vpop.f32.mrb[0].mxu0
  %v2834 = vadd.f32 0.0, %v2833
  %v2835 = vpop.f32.mrb[0].mxu0
  %2836 = vmatprep.mubr.bf16.mxu0 0
  %2837 = vmatmul.mubr.bf16.gmra.mrb[0].mxu0 %v2710
  %v2838 = vpop.f32.mrb[0].mxu0
  %v2839 = vadd.f32 0.0, %v2838
  %v2840 = vpop.f32.mrb[0].mxu0
  %v2841 = vpop.f32.mrb[0].mxu0
  %v2842 = vadd.f32 0.0, %v2841
  %v2843 = vpop.f32.mrb[0].mxu0
  %2844 = vmatprep.mubr.bf16.mxu0 0
  %2845 = vmatmul.mubr.bf16.gmra.mrb[0].mxu0 %v2713
  %v2846 = vpop.f32.mrb[0].mxu0
  %v2847 = vadd.f32 0.0, %v2846
  %v2848 = vpop.f32.mrb[0].mxu0
  %v2849 = vpop.f32.mrb[0].mxu0
  %v2850 = vadd.f32 0.0, %v2849
  %v2851 = vpop.f32.mrb[0].mxu0
  %2852 = vmatprep.mubr.bf16.mxu0 0
  %2853 = vmatmul.mubr.bf16.gmra.mrb[0].mxu0 %v2716
  %v2854 = vpop.f32.mrb[0].mxu0
  %v2855 = vadd.f32 0.0, %v2854
  %v2856 = vpop.f32.mrb[0].mxu0
  %v2857 = vpop.f32.mrb[0].mxu0
  %v2858 = vadd.f32 0.0, %v2857
  %v2859 = vpop.f32.mrb[0].mxu0
  %2860 = vmatprep.mubr.bf16.mxu0 0
  %2861 = vmatmul.mubr.bf16.gmra.mrb[0].mxu0 %v2719
  %v2862 = vpop.f32.mrb[0].mxu0
  %v2863 = vadd.f32 0.0, %v2862
  %v2864 = vpop.f32.mrb[0].mxu0
  %v2865 = vpop.f32.mrb[0].mxu0
  %v2866 = vadd.f32 0.0, %v2865
  %v2867 = vpop.f32.mrb[0].mxu0
  %2868 = vmatprep.mubr.bf16.mxu0 0
  %2869 = vmatmul.mubr.bf16.gmra.mrb[0].mxu0 %v2722
  %v2870 = vpop.f32.mrb[0].mxu0
  %v2871 = vadd.f32 0.0, %v2870
  %v2872 = vpop.f32.mrb[0].mxu0
  %v2873 = vpop.f32.mrb[0].mxu0
  %v2874 = vadd.f32 0.0, %v2873
  %v2875 = vpop.f32.mrb[0].mxu0
  %2876 = vmatprep.mubr.bf16.mxu0 0
  %2877 = vmatmul.mubr.bf16.gmra.mrb[0].mxu0 %v2725
  %v2878 = vpop.f32.mrb[0].mxu0
  %v2879 = vadd.f32 0.0, %v2878
  %v2880 = vpop.f32.mrb[0].mxu0
  %v2881 = vpop.f32.mrb[0].mxu0
  %v2882 = vadd.f32 0.0, %v2881
  %v2883 = vpop.f32.mrb[0].mxu0
  %2884 = vmatprep.mubr.bf16.mxu0 0
  %2885 = vmatmul.mubr.bf16.gmra.mrb[0].mxu0 %v2728
  %v2886 = vpop.f32.mrb[0].mxu0
  %v2887 = vadd.f32 0.0, %v2886
  %v2888 = vpop.f32.mrb[0].mxu0
  %v2889 = vpop.f32.mrb[0].mxu0
  %v2890 = vadd.f32 0.0, %v2889
  %v2891 = vpop.f32.mrb[0].mxu0
  %2892 = vmatprep.mubr.bf16.mxu0 0
  %2893 = vmatmul.mubr.bf16.gmra.mrb[0].mxu0 %v2731
  %v2894 = vpop.f32.mrb[0].mxu0
  %v2895 = vadd.f32 0.0, %v2894
  %v2896 = vpop.f32.mrb[0].mxu0
  %v2897 = vpop.f32.mrb[0].mxu0
  %v2898 = vadd.f32 0.0, %v2897
  %v2899 = vpop.f32.mrb[0].mxu0
  %2900 = vmatprep.mubr.bf16.mxu0 0
  %2901 = vmatmul.mubr.bf16.gmra.mrb[0].mxu0 %v2734
  %v2902 = vpop.f32.mrb[0].mxu0
  %v2903 = vadd.f32 0.0, %v2902
  %v2904 = vpop.f32.mrb[0].mxu0
  %v2905 = vpop.f32.mrb[0].mxu0
  %v2906 = vadd.f32 0.0, %v2905
  %v2907 = vpop.f32.mrb[0].mxu0
  %2908 = vmatprep.mubr.bf16.mxu0 0
  %2909 = vmatmul.mubr.bf16.gmra.mrb[0].mxu0 %v2737
  %v2910 = vpop.f32.mrb[0].mxu0
  %v2911 = vadd.f32 0.0, %v2910
  %v2912 = vpop.f32.mrb[0].mxu0
  %v2913 = vpop.f32.mrb[0].mxu0
  %v2914 = vadd.f32 0.0, %v2913
  %v2915 = vpop.f32.mrb[0].mxu0
  %2916 = vmatprep.mubr.bf16.mxu0 0
  %2917 = vmatmul.mubr.bf16.gmra.mrb[0].mxu0 %v2740
  %v2918 = vpop.f32.mrb[0].mxu0
  %v2919 = vadd.f32 0.0, %v2918
  %v2920 = vpop.f32.mrb[0].mxu0
  %v2921 = vpop.f32.mrb[0].mxu0
  %v2922 = vadd.f32 0.0, %v2921
  %v2923 = vpop.f32.mrb[0].mxu0
  %2924 = vmatprep.mubr.bf16.mxu0 0
  %2925 = vmatmul.mubr.bf16.gmra.mrb[0].mxu0 %v2743
  %v2926 = vpop.f32.mrb[0].mxu0
  %v2927 = vadd.f32 0.0, %v2926
  %v2928 = vpop.f32.mrb[0].mxu0
  %v2929 = vpop.f32.mrb[0].mxu0
  %v2930 = vadd.f32 0.0, %v2929
  %v2931 = vpop.f32.mrb[0].mxu0
  %2932 = vmatprep.mubr.bf16.mxu0 0
  %2933 = vmatmul.mubr.bf16.gmra.mrb[0].mxu0 %v2746
  %v2934 = vpop.f32.mrb[0].mxu0
  %v2935 = vadd.f32 0.0, %v2934
  %v2936 = vpop.f32.mrb[0].mxu0
  %v2937 = vpop.f32.mrb[0].mxu0
  %v2938 = vadd.f32 0.0, %v2937
  %v2939 = vpop.f32.mrb[0].mxu0
  %2940 = vmatprep.mubr.bf16.mxu0 0
  %2941 = vmatmul.mubr.bf16.gmra.mrb[0].mxu0 %v2749
  %v2942 = vpop.f32.mrb[0].mxu0
  %v2943 = vadd.f32 0.0, %v2942
  %v2944 = vpop.f32.mrb[0].mxu0
  %v2945 = vpop.f32.mrb[0].mxu0
  %v2946 = vadd.f32 0.0, %v2945
  %v2947 = vpop.f32.mrb[0].mxu0
  %2948 = vmatprep.mubr.bf16.mxu0 0
  %2949 = vmatmul.mubr.bf16.gmra.mrb[0].mxu0 %v2752
  %v2950 = vpop.f32.mrb[0].mxu0
  %v2951 = vadd.f32 0.0, %v2950
  %v2952 = vpop.f32.mrb[0].mxu0
  %v2953 = vpop.f32.mrb[0].mxu0
  %v2954 = vadd.f32 0.0, %v2953
  %v2955 = vpop.f32.mrb[0].mxu0
  %2956 = vmatprep.mubr.bf16.mxu0 0
  %2957 = vmatmul.mubr.bf16.gmra.mrb[0].mxu0 %v2755
  %v2958 = vpop.f32.mrb[0].mxu0
  %v2959 = vadd.f32 0.0, %v2958
  %v2960 = vpop.f32.mrb[0].mxu0
  %v2961 = vpop.f32.mrb[0].mxu0
  %v2962 = vadd.f32 0.0, %v2961
  %v2963 = vpop.f32.mrb[0].mxu0
  %2964 = vmatprep.mubr.bf16.mxu0 0
  %2965 = vmatmul.mubr.bf16.gmra.mrb[0].mxu0 %v2758
  %v2966 = vpop.f32.mrb[0].mxu0
  %v2967 = vadd.f32 0.0, %v2966
  %v2968 = vpop.f32.mrb[0].mxu0
  %v2969 = vpop.f32.mrb[0].mxu0
  %v2970 = vadd.f32 0.0, %v2969
  %v2971 = vpop.f32.mrb[0].mxu0
  %2972 = vmatprep.mubr.bf16.mxu0 0
  %2973 = vmatmul.mubr.bf16.gmra.mrb[0].mxu0 %v2761
  %v2974 = vpop.f32.mrb[0].mxu0
  %v2975 = vadd.f32 0.0, %v2974
  %v2976 = vpop.f32.mrb[0].mxu0
  %v2977 = vpop.f32.mrb[0].mxu0
  %v2978 = vadd.f32 0.0, %v2977
  %v2979 = vpop.f32.mrb[0].mxu0
  %2980 = vmatprep.mubr.bf16.mxu0 0
  %2981 = vmatmul.mubr.bf16.gmra.mrb[0].mxu0 %v2764
  %v2982 = vpop.f32.mrb[0].mxu0
  %v2983 = vadd.f32 0.0, %v2982
  %v2984 = vpop.f32.mrb[0].mxu0
  %v2985 = vpop.f32.mrb[0].mxu0
  %v2986 = vadd.f32 0.0, %v2985
  %v2987 = vpop.f32.mrb[0].mxu0
  %2988 = vmatprep.mubr.bf16.mxu0 0
  %2989 = vmatmul.mubr.bf16.gmra.mrb[0].mxu0 %v2767
  %v2990 = vpop.f32.mrb[0].mxu0
  %v2991 = vadd.f32 0.0, %v2990
  %v2992 = vpop.f32.mrb[0].mxu0
  %v2993 = vpop.f32.mrb[0].mxu0
  %v2994 = vadd.f32 0.0, %v2993
  %v2995 = vpop.f32.mrb[0].mxu0
  %2996 = vmatprep.mubr.bf16.mxu0 0
  %2997 = vmatmul.mubr.bf16.gmra.mrb[0].mxu0 %v2770
  %v2998 = vpop.f32.mrb[0].mxu0
  %v2999 = vadd.f32 0.0, %v2998
  %v3000 = vpop.f32.mrb[0].mxu0
  %v3001 = vpop.f32.mrb[0].mxu0
  %v3002 = vpop.f32.mrb[0].mxu0
  %3003 = vdwg.mxu0
  %v3012 = vunpack.c.l.b16 %v2581
  %v3013 = vunpack.c.l.b16 %v2582
  %v3014 = vunpack.c.l.b16 %v2583
  %v3015 = vunpack.c.l.b16 %v2584
  %v3016 = vunpack.c.l.b16 %v2585
  %v3017 = vunpack.c.l.b16 %v2586
  %v3018 = vunpack.c.l.b16 %v2587
  %v3019 = vunpack.c.l.b16 %v2588
  %v3020 = vpack.c.b16 %v3013, %v3012
  %v3021 = vpack.c.b16 %v3015, %v3014
  %v3022 = vpack.c.b16 %v3017, %v3016
  %v3023 = vpack.c.b16 %v3019, %v3018
  %v3029 = vsel %vm2405, %v2556, 0
  %v3032 = vsel %vm2405, %v2557, 0
  %v3035 = vsel %vm2405, %v2558, 0
  %v3038 = vsel %vm2405, %v2559, 0
  %v3041 = vsel %vm2405, %v2560, 0
  %v3044 = vsel %vm2405, %v2561, 0
  %v3047 = vsel %vm2405, %v2562, 0
  %v3050 = vsel %vm2405, %v2563, 0
  %v3053 = vsel %vm2405, %v2564, 0
  %v3056 = vsel %vm2405, %v2565, 0
  %v3059 = vsel %vm2405, %v2566, 0
  %v3062 = vsel %vm2405, %v2567, 0
  %v3065 = vsel %vm2405, %v2568, 0
  %v3068 = vsel %vm2405, %v2569, 0
  %v3071 = vsel %vm2405, %v2570, 0
  %v3074 = vsel %vm2405, %v2571, 0
  %v3077 = vsel %vm2405, %v2572, 0
  %v3080 = vsel %vm2405, %v2573, 0
  %v3083 = vsel %vm2405, %v2574, 0
  %v3086 = vsel %vm2405, %v2575, 0
  %v3089 = vsel %vm2405, %v2576, 0
  %v3092 = vsel %vm2405, %v2577, 0
  %v3095 = vsel %vm2405, %v2578, 0
  %v3098 = vsel %vm2405, %v2579, 0
  %v3101 = vsel %vm2405, %v2580, 0
  %3103 = vmatprep.subr.bf16.mxu0 0
  %3104 = vmatpush1.bf16.msra.mxu0 %v3020
  %3105 = vmatprep.subr.bf16.mxu0 0
  %3106 = vmatpush1.bf16.msra.mxu0 %v3021
  %3107 = vmatprep.subr.bf16.mxu0 0
  %3108 = vmatpush1.bf16.msra.mxu0 %v3022
  %3109 = vmatprep.subr.bf16.mxu0 0
  %3110 = vmatpush1.bf16.msra.mxu0 %v3023
  %3111 = vmatprep.subr.bf16.mxu0 0
  %3112 = vmatpush1.bf16.msra.mxu0 0
  %3113 = vmatprep.subr.bf16.mxu0 0
  %3114 = vmatpush1.bf16.msra.mxu0 0
  %3115 = vmatprep.subr.bf16.mxu0 0
  %3116 = vmatpush1.bf16.msra.mxu0 0
  %3117 = vmatprep.subr.bf16.mxu0 0
  %3118 = vmatpush1.bf16.msra.mxu0 0
  %3119 = vmatprep.subr.bf16.mxu0 0
  %3120 = vmatpush1.bf16.msra.mxu0 0
  %3121 = vmatprep.subr.bf16.mxu0 0
  %3122 = vmatpush1.bf16.msra.mxu0 0
  %3123 = vmatprep.subr.bf16.mxu0 0
  %3124 = vmatpush1.bf16.msra.mxu0 0
  %3125 = vmatprep.subr.bf16.mxu0 0
  %3126 = vmatpush1.bf16.msra.mxu0 0
  %3127 = vmatprep.subr.bf16.mxu0 0
  %3128 = vmatpush1.bf16.msra.mxu0 0
  %3129 = vmatprep.subr.bf16.mxu0 0
  %3130 = vmatpush1.bf16.msra.mxu0 0
  %3131 = vmatprep.subr.bf16.mxu0 0
  %3132 = vmatpush1.bf16.msra.mxu0 0
  %3133 = vmatprep.subr.bf16.mxu0 0
  %3134 = vmatpush1.bf16.msra.mxu0 0
  %3135 = vmatprep.mubr.bf16.mxu0 0
  %3136 = vmatmul.mubr.bf16.gmra.mrb[0].mxu0 %v3029
  %v3137 = vpop.f32.mrb[0].mxu0
  %v3138 = vadd.f32 %v2807, %v3137
  %v3139 = vpop.f32.mrb[0].mxu0
  %v3140 = vpop.f32.mrb[0].mxu0
  %v3141 = vadd.f32 %v2810, %v3140
  %v3142 = vpop.f32.mrb[0].mxu0
  %3143 = vmatprep.mubr.bf16.mxu0 0
  %3144 = vmatmul.mubr.bf16.gmra.mrb[0].mxu0 %v3032
  %v3145 = vpop.f32.mrb[0].mxu0
  %v3146 = vadd.f32 %v2815, %v3145
  %v3147 = vpop.f32.mrb[0].mxu0
  %v3148 = vpop.f32.mrb[0].mxu0
  %v3149 = vadd.f32 %v2818, %v3148
  %v3150 = vpop.f32.mrb[0].mxu0
  %3151 = vmatprep.mubr.bf16.mxu0 0
  %3152 = vmatmul.mubr.bf16.gmra.mrb[0].mxu0 %v3035
  %v3153 = vpop.f32.mrb[0].mxu0
  %v3154 = vadd.f32 %v2823, %v3153
  %v3155 = vpop.f32.mrb[0].mxu0
  %v3156 = vpop.f32.mrb[0].mxu0
  %v3157 = vadd.f32 %v2826, %v3156
  %v3158 = vpop.f32.mrb[0].mxu0
  %3159 = vmatprep.mubr.bf16.mxu0 0
  %3160 = vmatmul.mubr.bf16.gmra.mrb[0].mxu0 %v3038
  %v3161 = vpop.f32.mrb[0].mxu0
  %v3162 = vadd.f32 %v2831, %v3161
  %v3163 = vpop.f32.mrb[0].mxu0
  %v3164 = vpop.f32.mrb[0].mxu0
  %v3165 = vadd.f32 %v2834, %v3164
  %v3166 = vpop.f32.mrb[0].mxu0
  %3167 = vmatprep.mubr.bf16.mxu0 0
  %3168 = vmatmul.mubr.bf16.gmra.mrb[0].mxu0 %v3041
  %v3169 = vpop.f32.mrb[0].mxu0
  %v3170 = vadd.f32 %v2839, %v3169
  %v3171 = vpop.f32.mrb[0].mxu0
  %v3172 = vpop.f32.mrb[0].mxu0
  %v3173 = vadd.f32 %v2842, %v3172
  %v3174 = vpop.f32.mrb[0].mxu0
  %3175 = vmatprep.mubr.bf16.mxu0 0
  %3176 = vmatmul.mubr.bf16.gmra.mrb[0].mxu0 %v3044
  %v3177 = vpop.f32.mrb[0].mxu0
  %v3178 = vadd.f32 %v2847, %v3177
  %v3179 = vpop.f32.mrb[0].mxu0
  %v3180 = vpop.f32.mrb[0].mxu0
  %v3181 = vadd.f32 %v2850, %v3180
  %v3182 = vpop.f32.mrb[0].mxu0
  %3183 = vmatprep.mubr.bf16.mxu0 0
  %3184 = vmatmul.mubr.bf16.gmra.mrb[0].mxu0 %v3047
  %v3185 = vpop.f32.mrb[0].mxu0
  %v3186 = vadd.f32 %v2855, %v3185
  %v3187 = vpop.f32.mrb[0].mxu0
  %v3188 = vpop.f32.mrb[0].mxu0
  %v3189 = vadd.f32 %v2858, %v3188
  %v3190 = vpop.f32.mrb[0].mxu0
  %3191 = vmatprep.mubr.bf16.mxu0 0
  %3192 = vmatmul.mubr.bf16.gmra.mrb[0].mxu0 %v3050
  %v3193 = vpop.f32.mrb[0].mxu0
  %v3194 = vadd.f32 %v2863, %v3193
  %v3195 = vpop.f32.mrb[0].mxu0
  %v3196 = vpop.f32.mrb[0].mxu0
  %v3197 = vadd.f32 %v2866, %v3196
  %v3198 = vpop.f32.mrb[0].mxu0
  %3199 = vmatprep.mubr.bf16.mxu0 0
  %3200 = vmatmul.mubr.bf16.gmra.mrb[0].mxu0 %v3053
  %v3201 = vpop.f32.mrb[0].mxu0
  %v3202 = vadd.f32 %v2871, %v3201
  %v3203 = vpop.f32.mrb[0].mxu0
  %v3204 = vpop.f32.mrb[0].mxu0
  %v3205 = vadd.f32 %v2874, %v3204
  %v3206 = vpop.f32.mrb[0].mxu0
  %3207 = vmatprep.mubr.bf16.mxu0 0
  %3208 = vmatmul.mubr.bf16.gmra.mrb[0].mxu0 %v3056
  %v3209 = vpop.f32.mrb[0].mxu0
  %v3210 = vadd.f32 %v2879, %v3209
  %v3211 = vpop.f32.mrb[0].mxu0
  %v3212 = vpop.f32.mrb[0].mxu0
  %v3213 = vadd.f32 %v2882, %v3212
  %v3214 = vpop.f32.mrb[0].mxu0
  %3215 = vmatprep.mubr.bf16.mxu0 0
  %3216 = vmatmul.mubr.bf16.gmra.mrb[0].mxu0 %v3059
  %v3217 = vpop.f32.mrb[0].mxu0
  %v3218 = vadd.f32 %v2887, %v3217
  %v3219 = vpop.f32.mrb[0].mxu0
  %v3220 = vpop.f32.mrb[0].mxu0
  %v3221 = vadd.f32 %v2890, %v3220
  %v3222 = vpop.f32.mrb[0].mxu0
  %3223 = vmatprep.mubr.bf16.mxu0 0
  %3224 = vmatmul.mubr.bf16.gmra.mrb[0].mxu0 %v3062
  %v3225 = vpop.f32.mrb[0].mxu0
  %v3226 = vadd.f32 %v2895, %v3225
  %v3227 = vpop.f32.mrb[0].mxu0
  %v3228 = vpop.f32.mrb[0].mxu0
  %v3229 = vadd.f32 %v2898, %v3228
  %v3230 = vpop.f32.mrb[0].mxu0
  %3231 = vmatprep.mubr.bf16.mxu0 0
  %3232 = vmatmul.mubr.bf16.gmra.mrb[0].mxu0 %v3065
  %v3233 = vpop.f32.mrb[0].mxu0
  %v3234 = vadd.f32 %v2903, %v3233
  %v3235 = vpop.f32.mrb[0].mxu0
  %v3236 = vpop.f32.mrb[0].mxu0
  %v3237 = vadd.f32 %v2906, %v3236
  %v3238 = vpop.f32.mrb[0].mxu0
  %3239 = vmatprep.mubr.bf16.mxu0 0
  %3240 = vmatmul.mubr.bf16.gmra.mrb[0].mxu0 %v3068
  %v3241 = vpop.f32.mrb[0].mxu0
  %v3242 = vadd.f32 %v2911, %v3241
  %v3243 = vpop.f32.mrb[0].mxu0
  %v3244 = vpop.f32.mrb[0].mxu0
  %v3245 = vadd.f32 %v2914, %v3244
  %v3246 = vpop.f32.mrb[0].mxu0
  %3247 = vmatprep.mubr.bf16.mxu0 0
  %3248 = vmatmul.mubr.bf16.gmra.mrb[0].mxu0 %v3071
  %v3249 = vpop.f32.mrb[0].mxu0
  %v3250 = vadd.f32 %v2919, %v3249
  %v3251 = vpop.f32.mrb[0].mxu0
  %v3252 = vpop.f32.mrb[0].mxu0
  %v3253 = vadd.f32 %v2922, %v3252
  %v3254 = vpop.f32.mrb[0].mxu0
  %3255 = vmatprep.mubr.bf16.mxu0 0
  %3256 = vmatmul.mubr.bf16.gmra.mrb[0].mxu0 %v3074
  %v3257 = vpop.f32.mrb[0].mxu0
  %v3258 = vadd.f32 %v2927, %v3257
  %v3259 = vpop.f32.mrb[0].mxu0
  %v3260 = vpop.f32.mrb[0].mxu0
  %v3261 = vadd.f32 %v2930, %v3260
  %v3262 = vpop.f32.mrb[0].mxu0
  %3263 = vmatprep.mubr.bf16.mxu0 0
  %3264 = vmatmul.mubr.bf16.gmra.mrb[0].mxu0 %v3077
  %v3265 = vpop.f32.mrb[0].mxu0
  %v3266 = vadd.f32 %v2935, %v3265
  %v3267 = vpop.f32.mrb[0].mxu0
  %v3268 = vpop.f32.mrb[0].mxu0
  %v3269 = vadd.f32 %v2938, %v3268
  %v3270 = vpop.f32.mrb[0].mxu0
  %3271 = vmatprep.mubr.bf16.mxu0 0
  %3272 = vmatmul.mubr.bf16.gmra.mrb[0].mxu0 %v3080
  %v3273 = vpop.f32.mrb[0].mxu0
  %v3274 = vadd.f32 %v2943, %v3273
  %v3275 = vpop.f32.mrb[0].mxu0
  %v3276 = vpop.f32.mrb[0].mxu0
  %v3277 = vadd.f32 %v2946, %v3276
  %v3278 = vpop.f32.mrb[0].mxu0
  %3279 = vmatprep.mubr.bf16.mxu0 0
  %3280 = vmatmul.mubr.bf16.gmra.mrb[0].mxu0 %v3083
  %v3281 = vpop.f32.mrb[0].mxu0
  %v3282 = vadd.f32 %v2951, %v3281
  %v3283 = vpop.f32.mrb[0].mxu0
  %v3284 = vpop.f32.mrb[0].mxu0
  %v3285 = vadd.f32 %v2954, %v3284
  %v3286 = vpop.f32.mrb[0].mxu0
  %3287 = vmatprep.mubr.bf16.mxu0 0
  %3288 = vmatmul.mubr.bf16.gmra.mrb[0].mxu0 %v3086
  %v3289 = vpop.f32.mrb[0].mxu0
  %v3290 = vadd.f32 %v2959, %v3289
  %v3291 = vpop.f32.mrb[0].mxu0
  %v3292 = vpop.f32.mrb[0].mxu0
  %v3293 = vadd.f32 %v2962, %v3292
  %v3294 = vpop.f32.mrb[0].mxu0
  %3295 = vmatprep.mubr.bf16.mxu0 0
  %3296 = vmatmul.mubr.bf16.gmra.mrb[0].mxu0 %v3089
  %v3297 = vpop.f32.mrb[0].mxu0
  %v3298 = vadd.f32 %v2967, %v3297
  %v3299 = vpop.f32.mrb[0].mxu0
  %v3300 = vpop.f32.mrb[0].mxu0
  %v3301 = vadd.f32 %v2970, %v3300
  %v3302 = vpop.f32.mrb[0].mxu0
  %3303 = vmatprep.mubr.bf16.mxu0 0
  %3304 = vmatmul.mubr.bf16.gmra.mrb[0].mxu0 %v3092
  %v3305 = vpop.f32.mrb[0].mxu0
  %v3306 = vadd.f32 %v2975, %v3305
  %v3307 = vpop.f32.mrb[0].mxu0
  %v3308 = vpop.f32.mrb[0].mxu0
  %v3309 = vadd.f32 %v2978, %v3308
  %v3310 = vpop.f32.mrb[0].mxu0
  %3311 = vmatprep.mubr.bf16.mxu0 0
  %3312 = vmatmul.mubr.bf16.gmra.mrb[0].mxu0 %v3095
  %v3313 = vpop.f32.mrb[0].mxu0
  %v3314 = vadd.f32 %v2983, %v3313
  %v3315 = vpop.f32.mrb[0].mxu0
  %v3316 = vpop.f32.mrb[0].mxu0
  %v3317 = vadd.f32 %v2986, %v3316
  %v3318 = vpop.f32.mrb[0].mxu0
  %3319 = vmatprep.mubr.bf16.mxu0 0
  %3320 = vmatmul.mubr.bf16.gmra.mrb[0].mxu0 %v3098
  %v3321 = vpop.f32.mrb[0].mxu0
  %v3322 = vadd.f32 %v2991, %v3321
  %v3323 = vpop.f32.mrb[0].mxu0
  %v3324 = vpop.f32.mrb[0].mxu0
  %v3325 = vadd.f32 %v2994, %v3324
  %v3326 = vpop.f32.mrb[0].mxu0
  %3327 = vmatprep.mubr.bf16.mxu0 0
  %3328 = vmatmul.mubr.bf16.gmra.mrb[0].mxu0 %v3101
  %v3329 = vpop.f32.mrb[0].mxu0
  %v3330 = vadd.f32 %v2999, %v3329
  %v3331 = vpop.f32.mrb[0].mxu0
  %v3332 = vpop.f32.mrb[0].mxu0
  %v3333 = vpop.f32.mrb[0].mxu0
  %3334 = vdwg.mxu0
  %s3335 = scalar_lea.vmem [#allocation4], 64
  %v3336 = vld [vmem:[%s3335] sm:$0xff]
  %v3337 = vld [vmem:[%s3335 + $0x8] sm:$0xff]
  %v3338 = vld [vmem:[%s3335 + $0x10] sm:$0xff]
  %v3339 = vld [vmem:[%s3335 + $0x18] sm:$0xff]
  %v3340 = vld [vmem:[%s3335 + $0x20] sm:$0xff]
  %v3341 = vld [vmem:[%s3335 + $0x28] sm:$0xff]
  %v3342 = vld [vmem:[%s3335 + $0x30] sm:$0xff]
  %v3343 = vld [vmem:[%s3335 + $0x40] sm:$0xff]
  %v3344 = vld [vmem:[%s3335 + $0x48] sm:$0xff]
  %v3345 = vld [vmem:[%s3335 + $0x50] sm:$0xff]
  %v3346 = vld [vmem:[%s3335 + $0x58] sm:$0xff]
  %v3347 = vld [vmem:[%s3335 + $0x60] sm:$0xff]
  %v3348 = vld [vmem:[%s3335 + $0x68] sm:$0xff]
  %v3349 = vld [vmem:[%s3335 + $0x70] sm:$0xff]
  %v3350 = vld [vmem:[%s3335 + $0x80] sm:$0xff]
  %v3351 = vld [vmem:[%s3335 + $0x88] sm:$0xff]
  %v3352 = vld [vmem:[%s3335 + $0x90] sm:$0xff]
  %v3353 = vld [vmem:[%s3335 + $0x98] sm:$0xff]
  %v3354 = vld [vmem:[%s3335 + $0xa0] sm:$0xff]
  %v3355 = vld [vmem:[%s3335 + $0xa8] sm:$0xff]
  %v3356 = vld [vmem:[%s3335 + $0xb0] sm:$0xff]
  %v3357 = vld [vmem:[%s3335 + $0xc0] sm:$0xff]
  %v3358 = vld [vmem:[%s3335 + $0xc8] sm:$0xff]
  %v3359 = vld [vmem:[%s3335 + $0xd0] sm:$0xff]
  %v3360 = vld [vmem:[%s3335 + $0xd8] sm:$0xff]
  %v3361 = vld [vmem:[%s3335 + $0xe0] sm:$0xff]
  %v3362 = vld [vmem:[%s3335 + $0xe8] sm:$0xff]
  %v3363 = vld [vmem:[%s3335 + $0xf0] sm:$0xff]
  %v3364 = vld [vmem:[%s3335 + $0x100] sm:$0xff]
  %v3365 = vld [vmem:[%s3335 + $0x108] sm:$0xff]
  %v3366 = vld [vmem:[%s3335 + $0x110] sm:$0xff]
  %v3367 = vld [vmem:[%s3335 + $0x118] sm:$0xff]
  %v3368 = vld [vmem:[%s3335 + $0x120] sm:$0xff]
  %v3369 = vld [vmem:[%s3335 + $0x128] sm:$0xff]
  %v3370 = vld [vmem:[%s3335 + $0x130] sm:$0xff]
  %v3371 = vld [vmem:[%s3335 + $0x140] sm:$0xff]
  %v3372 = vld [vmem:[%s3335 + $0x148] sm:$0xff]
  %v3373 = vld [vmem:[%s3335 + $0x150] sm:$0xff]
  %v3374 = vld [vmem:[%s3335 + $0x158] sm:$0xff]
  %v3375 = vld [vmem:[%s3335 + $0x160] sm:$0xff]
  %v3376 = vld [vmem:[%s3335 + $0x168] sm:$0xff]
  %v3377 = vld [vmem:[%s3335 + $0x170] sm:$0xff]
  %v3378 = vld [vmem:[%s3335 + $0x180] sm:$0xff]
  %v3379 = vld [vmem:[%s3335 + $0x188] sm:$0xff]
  %v3380 = vld [vmem:[%s3335 + $0x190] sm:$0xff]
  %v3381 = vld [vmem:[%s3335 + $0x198] sm:$0xff]
  %v3382 = vld [vmem:[%s3335 + $0x1a0] sm:$0xff]
  %v3383 = vld [vmem:[%s3335 + $0x1a8] sm:$0xff]
  %v3384 = vld [vmem:[%s3335 + $0x1b0] sm:$0xff]
  %v3385 = vpack.c.bf16 %v3337, %v3336
  %v3386 = vpack.c.bf16 %v3339, %v3338
  %v3387 = vpack.c.bf16 %v3341, %v3340
  %v3388 = vpack.c.bf16 %v3343, %v3342
  %v3389 = vpack.c.bf16 %v3345, %v3344
  %v3390 = vpack.c.bf16 %v3347, %v3346
  %v3391 = vpack.c.bf16 %v3349, %v3348
  %v3392 = vpack.c.bf16 %v3351, %v3350
  %v3393 = vpack.c.bf16 %v3353, %v3352
  %v3394 = vpack.c.bf16 %v3355, %v3354
  %v3395 = vpack.c.bf16 %v3357, %v3356
  %v3396 = vpack.c.bf16 %v3359, %v3358
  %v3397 = vpack.c.bf16 %v3361, %v3360
  %v3398 = vpack.c.bf16 %v3363, %v3362
  %v3399 = vpack.c.bf16 %v3365, %v3364
  %v3400 = vpack.c.bf16 %v3367, %v3366
  %v3401 = vpack.c.bf16 %v3369, %v3368
  %v3402 = vpack.c.bf16 %v3371, %v3370
  %v3403 = vpack.c.bf16 %v3373, %v3372
  %v3404 = vpack.c.bf16 %v3375, %v3374
  %v3405 = vpack.c.bf16 %v3377, %v3376
  %v3406 = vpack.c.bf16 %v3379, %v3378
  %v3407 = vpack.c.bf16 %v3381, %v3380
  %v3408 = vpack.c.bf16 %v3383, %v3382
  %v3409 = vpack.c.bf16 %v3384, %v3384
  %s3410 = scalar_lea.vmem %s5, 64
  %v3411 = vld [vmem:[%s3410] sm:$0xf]
  %v3412 = vld [vmem:[%s3410 + $0x4] sm:$0xf]
  %v3413 = vld [vmem:[%s3410 + $0x8] sm:$0xf]
  %v3414 = vld [vmem:[%s3410 + $0xc] sm:$0xf]
  %v3415 = vld [vmem:[%s3410 + $0x10] sm:$0xf]
  %v3416 = vld [vmem:[%s3410 + $0x14] sm:$0xf]
  %v3417 = vld [vmem:[%s3410 + $0x18] sm:$0xf]
  %v3418 = vld [vmem:[%s3410 + $0x1c] sm:$0xf]
  %v3427 = vunpack.c.l.b16 %v3411
  %v3428 = vunpack.c.l.b16 %v3412
  %v3429 = vunpack.c.l.b16 %v3413
  %v3430 = vunpack.c.l.b16 %v3414
  %v3431 = vunpack.c.l.b16 %v3415
  %v3432 = vunpack.c.l.b16 %v3416
  %v3433 = vunpack.c.l.b16 %v3417
  %v3434 = vunpack.c.l.b16 %v3418
  %v3435 = vpack.c.b16 %v3428, %v3427
  %v3436 = vpack.c.b16 %v3430, %v3429
  %v3437 = vpack.c.b16 %v3432, %v3431
  %v3438 = vpack.c.b16 %v3434, %v3433
  %v3444 = vsel %vm2405, %v3385, 0
  %v3447 = vsel %vm2405, %v3386, 0
  %v3450 = vsel %vm2405, %v3387, 0
  %v3453 = vsel %vm2405, %v3388, 0
  %v3456 = vsel %vm2405, %v3389, 0
  %v3459 = vsel %vm2405, %v3390, 0
  %v3462 = vsel %vm2405, %v3391, 0
  %v3465 = vsel %vm2405, %v3392, 0
  %v3468 = vsel %vm2405, %v3393, 0
  %v3471 = vsel %vm2405, %v3394, 0
  %v3474 = vsel %vm2405, %v3395, 0
  %v3477 = vsel %vm2405, %v3396, 0
  %v3480 = vsel %vm2405, %v3397, 0
  %v3483 = vsel %vm2405, %v3398, 0
  %v3486 = vsel %vm2405, %v3399, 0
  %v3489 = vsel %vm2405, %v3400, 0
  %v3492 = vsel %vm2405, %v3401, 0
  %v3495 = vsel %vm2405, %v3402, 0
  %v3498 = vsel %vm2405, %v3403, 0
  %v3501 = vsel %vm2405, %v3404, 0
  %v3504 = vsel %vm2405, %v3405, 0
  %v3507 = vsel %vm2405, %v3406, 0
  %v3510 = vsel %vm2405, %v3407, 0
  %v3513 = vsel %vm2405, %v3408, 0
  %v3516 = vsel %vm2405, %v3409, 0
  %3518 = vmatprep.subr.bf16.mxu0 0
  %3519 = vmatpush1.bf16.msra.mxu0 %v3435
  %3520 = vmatprep.subr.bf16.mxu0 0
  %3521 = vmatpush1.bf16.msra.mxu0 %v3436
  %3522 = vmatprep.subr.bf16.mxu0 0
  %3523 = vmatpush1.bf16.msra.mxu0 %v3437
  %3524 = vmatprep.subr.bf16.mxu0 0
  %3525 = vmatpush1.bf16.msra.mxu0 %v3438
  %3526 = vmatprep.subr.bf16.mxu0 0
  %3527 = vmatpush1.bf16.msra.mxu0 0
  %3528 = vmatprep.subr.bf16.mxu0 0
  %3529 = vmatpush1.bf16.msra.mxu0 0
  %3530 = vmatprep.subr.bf16.mxu0 0
  %3531 = vmatpush1.bf16.msra.mxu0 0
  %3532 = vmatprep.subr.bf16.mxu0 0
  %3533 = vmatpush1.bf16.msra.mxu0 0
  %3534 = vmatprep.subr.bf16.mxu0 0
  %3535 = vmatpush1.bf16.msra.mxu0 0
  %3536 = vmatprep.subr.bf16.mxu0 0
  %3537 = vmatpush1.bf16.msra.mxu0 0
  %3538 = vmatprep.subr.bf16.mxu0 0
  %3539 = vmatpush1.bf16.msra.mxu0 0
  %3540 = vmatprep.subr.bf16.mxu0 0
  %3541 = vmatpush1.bf16.msra.mxu0 0
  %3542 = vmatprep.subr.bf16.mxu0 0
  %3543 = vmatpush1.bf16.msra.mxu0 0
  %3544 = vmatprep.subr.bf16.mxu0 0
  %3545 = vmatpush1.bf16.msra.mxu0 0
  %3546 = vmatprep.subr.bf16.mxu0 0
  %3547 = vmatpush1.bf16.msra.mxu0 0
  %3548 = vmatprep.subr.bf16.mxu0 0
  %3549 = vmatpush1.bf16.msra.mxu0 0
  %3550 = vmatprep.mubr.bf16.mxu0 0
  %3551 = vmatmul.mubr.bf16.gmra.mrb[0].mxu0 %v3444
  %v3552 = vpop.f32.mrb[0].mxu0
  %v3553 = vadd.f32 0.0, %v3552
  %v3554 = vpop.f32.mrb[0].mxu0
  %v3555 = vpop.f32.mrb[0].mxu0
  %v3556 = vadd.f32 0.0, %v3555
  %v3557 = vpop.f32.mrb[0].mxu0
  %3558 = vmatprep.mubr.bf16.mxu0 0
  %3559 = vmatmul.mubr.bf16.gmra.mrb[0].mxu0 %v3447
  %v3560 = vpop.f32.mrb[0].mxu0
  %v3561 = vadd.f32 0.0, %v3560
  %v3562 = vpop.f32.mrb[0].mxu0
  %v3563 = vpop.f32.mrb[0].mxu0
  %v3564 = vadd.f32 0.0, %v3563
  %v3565 = vpop.f32.mrb[0].mxu0
  %3566 = vmatprep.mubr.bf16.mxu0 0
  %3567 = vmatmul.mubr.bf16.gmra.mrb[0].mxu0 %v3450
  %v3568 = vpop.f32.mrb[0].mxu0
  %v3569 = vadd.f32 0.0, %v3568
  %v3570 = vpop.f32.mrb[0].mxu0
  %v3571 = vpop.f32.mrb[0].mxu0
  %v3572 = vadd.f32 0.0, %v3571
  %v3573 = vpop.f32.mrb[0].mxu0
  %3574 = vmatprep.mubr.bf16.mxu0 0
  %3575 = vmatmul.mubr.bf16.gmra.mrb[0].mxu0 %v3453
  %v3576 = vpop.f32.mrb[0].mxu0
  %v3577 = vadd.f32 0.0, %v3576
  %v3578 = vpop.f32.mrb[0].mxu0
  %v3579 = vpop.f32.mrb[0].mxu0
  %v3580 = vadd.f32 0.0, %v3579
  %v3581 = vpop.f32.mrb[0].mxu0
  %3582 = vmatprep.mubr.bf16.mxu0 0
  %3583 = vmatmul.mubr.bf16.gmra.mrb[0].mxu0 %v3456
  %v3584 = vpop.f32.mrb[0].mxu0
  %v3585 = vadd.f32 0.0, %v3584
  %v3586 = vpop.f32.mrb[0].mxu0
  %v3587 = vpop.f32.mrb[0].mxu0
  %v3588 = vadd.f32 0.0, %v3587
  %v3589 = vpop.f32.mrb[0].mxu0
  %3590 = vmatprep.mubr.bf16.mxu0 0
  %3591 = vmatmul.mubr.bf16.gmra.mrb[0].mxu0 %v3459
  %v3592 = vpop.f32.mrb[0].mxu0
  %v3593 = vadd.f32 0.0, %v3592
  %v3594 = vpop.f32.mrb[0].mxu0
  %v3595 = vpop.f32.mrb[0].mxu0
  %v3596 = vadd.f32 0.0, %v3595
  %v3597 = vpop.f32.mrb[0].mxu0
  %3598 = vmatprep.mubr.bf16.mxu0 0
  %3599 = vmatmul.mubr.bf16.gmra.mrb[0].mxu0 %v3462
  %v3600 = vpop.f32.mrb[0].mxu0
  %v3601 = vadd.f32 0.0, %v3600
  %v3602 = vpop.f32.mrb[0].mxu0
  %v3603 = vpop.f32.mrb[0].mxu0
  %v3604 = vadd.f32 0.0, %v3603
  %v3605 = vpop.f32.mrb[0].mxu0
  %3606 = vmatprep.mubr.bf16.mxu0 0
  %3607 = vmatmul.mubr.bf16.gmra.mrb[0].mxu0 %v3465
  %v3608 = vpop.f32.mrb[0].mxu0
  %v3609 = vadd.f32 0.0, %v3608
  %v3610 = vpop.f32.mrb[0].mxu0
  %v3611 = vpop.f32.mrb[0].mxu0
  %v3612 = vadd.f32 0.0, %v3611
  %v3613 = vpop.f32.mrb[0].mxu0
  %3614 = vmatprep.mubr.bf16.mxu0 0
  %3615 = vmatmul.mubr.bf16.gmra.mrb[0].mxu0 %v3468
  %v3616 = vpop.f32.mrb[0].mxu0
  %v3617 = vadd.f32 0.0, %v3616
  %v3618 = vpop.f32.mrb[0].mxu0
  %v3619 = vpop.f32.mrb[0].mxu0
  %v3620 = vadd.f32 0.0, %v3619
  %v3621 = vpop.f32.mrb[0].mxu0
  %3622 = vmatprep.mubr.bf16.mxu0 0
  %3623 = vmatmul.mubr.bf16.gmra.mrb[0].mxu0 %v3471
  %v3624 = vpop.f32.mrb[0].mxu0
  %v3625 = vadd.f32 0.0, %v3624
  %v3626 = vpop.f32.mrb[0].mxu0
  %v3627 = vpop.f32.mrb[0].mxu0
  %v3628 = vadd.f32 0.0, %v3627
  %v3629 = vpop.f32.mrb[0].mxu0
  %3630 = vmatprep.mubr.bf16.mxu0 0
  %3631 = vmatmul.mubr.bf16.gmra.mrb[0].mxu0 %v3474
  %v3632 = vpop.f32.mrb[0].mxu0
  %v3633 = vadd.f32 0.0, %v3632
  %v3634 = vpop.f32.mrb[0].mxu0
  %v3635 = vpop.f32.mrb[0].mxu0
  %v3636 = vadd.f32 0.0, %v3635
  %v3637 = vpop.f32.mrb[0].mxu0
  %3638 = vmatprep.mubr.bf16.mxu0 0
  %3639 = vmatmul.mubr.bf16.gmra.mrb[0].mxu0 %v3477
  %v3640 = vpop.f32.mrb[0].mxu0
  %v3641 = vadd.f32 0.0, %v3640
  %v3642 = vpop.f32.mrb[0].mxu0
  %v3643 = vpop.f32.mrb[0].mxu0
  %v3644 = vadd.f32 0.0, %v3643
  %v3645 = vpop.f32.mrb[0].mxu0
  %3646 = vmatprep.mubr.bf16.mxu0 0
  %3647 = vmatmul.mubr.bf16.gmra.mrb[0].mxu0 %v3480
  %v3648 = vpop.f32.mrb[0].mxu0
  %v3649 = vadd.f32 0.0, %v3648
  %v3650 = vpop.f32.mrb[0].mxu0
  %v3651 = vpop.f32.mrb[0].mxu0
  %v3652 = vadd.f32 0.0, %v3651
  %v3653 = vpop.f32.mrb[0].mxu0
  %3654 = vmatprep.mubr.bf16.mxu0 0
  %3655 = vmatmul.mubr.bf16.gmra.mrb[0].mxu0 %v3483
  %v3656 = vpop.f32.mrb[0].mxu0
  %v3657 = vadd.f32 0.0, %v3656
  %v3658 = vpop.f32.mrb[0].mxu0
  %v3659 = vpop.f32.mrb[0].mxu0
  %v3660 = vadd.f32 0.0, %v3659
  %v3661 = vpop.f32.mrb[0].mxu0
  %3662 = vmatprep.mubr.bf16.mxu0 0
  %3663 = vmatmul.mubr.bf16.gmra.mrb[0].mxu0 %v3486
  %v3664 = vpop.f32.mrb[0].mxu0
  %v3665 = vadd.f32 0.0, %v3664
  %v3666 = vpop.f32.mrb[0].mxu0
  %v3667 = vpop.f32.mrb[0].mxu0
  %v3668 = vadd.f32 0.0, %v3667
  %v3669 = vpop.f32.mrb[0].mxu0
  %3670 = vmatprep.mubr.bf16.mxu0 0
  %3671 = vmatmul.mubr.bf16.gmra.mrb[0].mxu0 %v3489
  %v3672 = vpop.f32.mrb[0].mxu0
  %v3673 = vadd.f32 0.0, %v3672
  %v3674 = vpop.f32.mrb[0].mxu0
  %v3675 = vpop.f32.mrb[0].mxu0
  %v3676 = vadd.f32 0.0, %v3675
  %v3677 = vpop.f32.mrb[0].mxu0
  %3678 = vmatprep.mubr.bf16.mxu0 0
  %3679 = vmatmul.mubr.bf16.gmra.mrb[0].mxu0 %v3492
  %v3680 = vpop.f32.mrb[0].mxu0
  %v3681 = vadd.f32 0.0, %v3680
  %v3682 = vpop.f32.mrb[0].mxu0
  %v3683 = vpop.f32.mrb[0].mxu0
  %v3684 = vadd.f32 0.0, %v3683
  %v3685 = vpop.f32.mrb[0].mxu0
  %3686 = vmatprep.mubr.bf16.mxu0 0
  %3687 = vmatmul.mubr.bf16.gmra.mrb[0].mxu0 %v3495
  %v3688 = vpop.f32.mrb[0].mxu0
  %v3689 = vadd.f32 0.0, %v3688
  %v3690 = vpop.f32.mrb[0].mxu0
  %v3691 = vpop.f32.mrb[0].mxu0
  %v3692 = vadd.f32 0.0, %v3691
  %v3693 = vpop.f32.mrb[0].mxu0
  %3694 = vmatprep.mubr.bf16.mxu0 0
  %3695 = vmatmul.mubr.bf16.gmra.mrb[0].mxu0 %v3498
  %v3696 = vpop.f32.mrb[0].mxu0
  %v3697 = vadd.f32 0.0, %v3696
  %v3698 = vpop.f32.mrb[0].mxu0
  %v3699 = vpop.f32.mrb[0].mxu0
  %v3700 = vadd.f32 0.0, %v3699
  %v3701 = vpop.f32.mrb[0].mxu0
  %3702 = vmatprep.mubr.bf16.mxu0 0
  %3703 = vmatmul.mubr.bf16.gmra.mrb[0].mxu0 %v3501
  %v3704 = vpop.f32.mrb[0].mxu0
  %v3705 = vadd.f32 0.0, %v3704
  %v3706 = vpop.f32.mrb[0].mxu0
  %v3707 = vpop.f32.mrb[0].mxu0
  %v3708 = vadd.f32 0.0, %v3707
  %v3709 = vpop.f32.mrb[0].mxu0
  %3710 = vmatprep.mubr.bf16.mxu0 0
  %3711 = vmatmul.mubr.bf16.gmra.mrb[0].mxu0 %v3504
  %v3712 = vpop.f32.mrb[0].mxu0
  %v3713 = vadd.f32 0.0, %v3712
  %v3714 = vpop.f32.mrb[0].mxu0
  %v3715 = vpop.f32.mrb[0].mxu0
  %v3716 = vadd.f32 0.0, %v3715
  %v3717 = vpop.f32.mrb[0].mxu0
  %3718 = vmatprep.mubr.bf16.mxu0 0
  %3719 = vmatmul.mubr.bf16.gmra.mrb[0].mxu0 %v3507
  %v3720 = vpop.f32.mrb[0].mxu0
  %v3721 = vadd.f32 0.0, %v3720
  %v3722 = vpop.f32.mrb[0].mxu0
  %v3723 = vpop.f32.mrb[0].mxu0
  %v3724 = vadd.f32 0.0, %v3723
  %v3725 = vpop.f32.mrb[0].mxu0
  %3726 = vmatprep.mubr.bf16.mxu0 0
  %3727 = vmatmul.mubr.bf16.gmra.mrb[0].mxu0 %v3510
  %v3728 = vpop.f32.mrb[0].mxu0
  %v3729 = vadd.f32 0.0, %v3728
  %v3730 = vpop.f32.mrb[0].mxu0
  %v3731 = vpop.f32.mrb[0].mxu0
  %v3732 = vadd.f32 0.0, %v3731
  %v3733 = vpop.f32.mrb[0].mxu0
  %3734 = vmatprep.mubr.bf16.mxu0 0
  %3735 = vmatmul.mubr.bf16.gmra.mrb[0].mxu0 %v3513
  %v3736 = vpop.f32.mrb[0].mxu0
  %v3737 = vadd.f32 0.0, %v3736
  %v3738 = vpop.f32.mrb[0].mxu0
  %v3739 = vpop.f32.mrb[0].mxu0
  %v3740 = vadd.f32 0.0, %v3739
  %v3741 = vpop.f32.mrb[0].mxu0
  %3742 = vmatprep.mubr.bf16.mxu0 0
  %3743 = vmatmul.mubr.bf16.gmra.mrb[0].mxu0 %v3516
  %v3744 = vpop.f32.mrb[0].mxu0
  %v3745 = vadd.f32 0.0, %v3744
  %v3746 = vpop.f32.mrb[0].mxu0
  %v3747 = vpop.f32.mrb[0].mxu0
  %v3748 = vpop.f32.mrb[0].mxu0
  %3749 = vdwg.mxu0
  %v3750 = vadd.f32 %v3138, %v3553
  %v3751 = vadd.f32 %v3141, %v3556
  %v3752 = vadd.f32 %v3146, %v3561
  %v3753 = vadd.f32 %v3149, %v3564
  %v3754 = vadd.f32 %v3154, %v3569
  %v3755 = vadd.f32 %v3157, %v3572
  %v3756 = vadd.f32 %v3162, %v3577
  %v3757 = vadd.f32 %v3165, %v3580
  %v3758 = vadd.f32 %v3170, %v3585
  %v3759 = vadd.f32 %v3173, %v3588
  %v3760 = vadd.f32 %v3178, %v3593
  %v3761 = vadd.f32 %v3181, %v3596
  %v3762 = vadd.f32 %v3186, %v3601
  %v3763 = vadd.f32 %v3189, %v3604
  %v3764 = vadd.f32 %v3194, %v3609
  %v3765 = vadd.f32 %v3197, %v3612
  %v3766 = vadd.f32 %v3202, %v3617
  %v3767 = vadd.f32 %v3205, %v3620
  %v3768 = vadd.f32 %v3210, %v3625
  %v3769 = vadd.f32 %v3213, %v3628
  %v3770 = vadd.f32 %v3218, %v3633
  %v3771 = vadd.f32 %v3221, %v3636
  %v3772 = vadd.f32 %v3226, %v3641
  %v3773 = vadd.f32 %v3229, %v3644
  %v3774 = vadd.f32 %v3234, %v3649
  %v3775 = vadd.f32 %v3237, %v3652
  %v3776 = vadd.f32 %v3242, %v3657
  %v3777 = vadd.f32 %v3245, %v3660
  %v3778 = vadd.f32 %v3250, %v3665
  %v3779 = vadd.f32 %v3253, %v3668
  %v3780 = vadd.f32 %v3258, %v3673
  %v3781 = vadd.f32 %v3261, %v3676
  %v3782 = vadd.f32 %v3266, %v3681
  %v3783 = vadd.f32 %v3269, %v3684
  %v3784 = vadd.f32 %v3274, %v3689
  %v3785 = vadd.f32 %v3277, %v3692
  %v3786 = vadd.f32 %v3282, %v3697
  %v3787 = vadd.f32 %v3285, %v3700
  %v3788 = vadd.f32 %v3290, %v3705
  %v3789 = vadd.f32 %v3293, %v3708
  %v3790 = vadd.f32 %v3298, %v3713
  %v3791 = vadd.f32 %v3301, %v3716
  %v3792 = vadd.f32 %v3306, %v3721
  %v3793 = vadd.f32 %v3309, %v3724
  %v3794 = vadd.f32 %v3314, %v3729
  %v3795 = vadd.f32 %v3317, %v3732
  %v3796 = vadd.f32 %v3322, %v3737
  %v3797 = vadd.f32 %v3325, %v3740
  %v3798 = vadd.f32 %v3330, %v3745
  %v3799 = vld [vmem:[%s2470] sm:$0xff]
  %v3800 = vld [vmem:[%s2470 + $0x8] sm:$0xff]
  %v3801 = vld [vmem:[%s2470 + $0x10] sm:$0xff]
  %v3802 = vld [vmem:[%s2470 + $0x18] sm:$0xff]
  %v3803 = vld [vmem:[%s2470 + $0x20] sm:$0xff]
  %v3804 = vld [vmem:[%s2470 + $0x28] sm:$0xff]
  %v3805 = vld [vmem:[%s2470 + $0x30] sm:$0xff]
  %v3806 = vld [vmem:[%s2470 + $0x40] sm:$0xff]
  %v3807 = vld [vmem:[%s2470 + $0x48] sm:$0xff]
  %v3808 = vld [vmem:[%s2470 + $0x50] sm:$0xff]
  %v3809 = vld [vmem:[%s2470 + $0x58] sm:$0xff]
  %v3810 = vld [vmem:[%s2470 + $0x60] sm:$0xff]
  %v3811 = vld [vmem:[%s2470 + $0x68] sm:$0xff]
  %v3812 = vld [vmem:[%s2470 + $0x70] sm:$0xff]
  %v3813 = vld [vmem:[%s2470 + $0x80] sm:$0xff]
  %v3814 = vld [vmem:[%s2470 + $0x88] sm:$0xff]
  %v3815 = vld [vmem:[%s2470 + $0x90] sm:$0xff]
  %v3816 = vld [vmem:[%s2470 + $0x98] sm:$0xff]
  %v3817 = vld [vmem:[%s2470 + $0xa0] sm:$0xff]
  %v3818 = vld [vmem:[%s2470 + $0xa8] sm:$0xff]
  %v3819 = vld [vmem:[%s2470 + $0xb0] sm:$0xff]
  %v3820 = vld [vmem:[%s2470 + $0xc0] sm:$0xff]
  %v3821 = vld [vmem:[%s2470 + $0xc8] sm:$0xff]
  %v3822 = vld [vmem:[%s2470 + $0xd0] sm:$0xff]
  %v3823 = vld [vmem:[%s2470 + $0xd8] sm:$0xff]
  %v3824 = vld [vmem:[%s2470 + $0xe0] sm:$0xff]
  %v3825 = vld [vmem:[%s2470 + $0xe8] sm:$0xff]
  %v3826 = vld [vmem:[%s2470 + $0xf0] sm:$0xff]
  %v3827 = vld [vmem:[%s2470 + $0x100] sm:$0xff]
  %v3828 = vld [vmem:[%s2470 + $0x108] sm:$0xff]
  %v3829 = vld [vmem:[%s2470 + $0x110] sm:$0xff]
  %v3830 = vld [vmem:[%s2470 + $0x118] sm:$0xff]
  %v3831 = vld [vmem:[%s2470 + $0x120] sm:$0xff]
  %v3832 = vld [vmem:[%s2470 + $0x128] sm:$0xff]
  %v3833 = vld [vmem:[%s2470 + $0x130] sm:$0xff]
  %v3834 = vld [vmem:[%s2470 + $0x140] sm:$0xff]
  %v3835 = vld [vmem:[%s2470 + $0x148] sm:$0xff]
  %v3836 = vld [vmem:[%s2470 + $0x150] sm:$0xff]
  %v3837 = vld [vmem:[%s2470 + $0x158] sm:$0xff]
  %v3838 = vld [vmem:[%s2470 + $0x160] sm:$0xff]
  %v3839 = vld [vmem:[%s2470 + $0x168] sm:$0xff]
  %v3840 = vld [vmem:[%s2470 + $0x170] sm:$0xff]
  %v3841 = vld [vmem:[%s2470 + $0x180] sm:$0xff]
  %v3842 = vld [vmem:[%s2470 + $0x188] sm:$0xff]
  %v3843 = vld [vmem:[%s2470 + $0x190] sm:$0xff]
  %v3844 = vld [vmem:[%s2470 + $0x198] sm:$0xff]
  %v3845 = vld [vmem:[%s2470 + $0x1a0] sm:$0xff]
  %v3846 = vld [vmem:[%s2470 + $0x1a8] sm:$0xff]
  %v3847 = vld [vmem:[%s2470 + $0x1b0] sm:$0xff]
  %v3848 = vpack.c.bf16 %v3800, %v3799
  %v3849 = vpack.c.bf16 %v3802, %v3801
  %v3850 = vpack.c.bf16 %v3804, %v3803
  %v3851 = vpack.c.bf16 %v3806, %v3805
  %v3852 = vpack.c.bf16 %v3808, %v3807
  %v3853 = vpack.c.bf16 %v3810, %v3809
  %v3854 = vpack.c.bf16 %v3812, %v3811
  %v3855 = vpack.c.bf16 %v3814, %v3813
  %v3856 = vpack.c.bf16 %v3816, %v3815
  %v3857 = vpack.c.bf16 %v3818, %v3817
  %v3858 = vpack.c.bf16 %v3820, %v3819
  %v3859 = vpack.c.bf16 %v3822, %v3821
  %v3860 = vpack.c.bf16 %v3824, %v3823
  %v3861 = vpack.c.bf16 %v3826, %v3825
  %v3862 = vpack.c.bf16 %v3828, %v3827
  %v3863 = vpack.c.bf16 %v3830, %v3829
  %v3864 = vpack.c.bf16 %v3832, %v3831
  %v3865 = vpack.c.bf16 %v3834, %v3833
  %v3866 = vpack.c.bf16 %v3836, %v3835
  %v3867 = vpack.c.bf16 %v3838, %v3837
  %v3868 = vpack.c.bf16 %v3840, %v3839
  %v3869 = vpack.c.bf16 %v3842, %v3841
  %v3870 = vpack.c.bf16 %v3844, %v3843
  %v3871 = vpack.c.bf16 %v3846, %v3845
  %v3872 = vpack.c.bf16 %v3847, %v3847
  %s3873 = scalar_lea.vmem %s5, 96
  %v3874 = vld [vmem:[%s3873] sm:$0xf]
  %v3875 = vld [vmem:[%s3873 + $0x4] sm:$0xf]
  %v3876 = vld [vmem:[%s3873 + $0x8] sm:$0xf]
  %v3877 = vld [vmem:[%s3873 + $0xc] sm:$0xf]
  %v3878 = vld [vmem:[%s3873 + $0x10] sm:$0xf]
  %v3879 = vld [vmem:[%s3873 + $0x14] sm:$0xf]
  %v3880 = vld [vmem:[%s3873 + $0x18] sm:$0xf]
  %v3881 = vld [vmem:[%s3873 + $0x1c] sm:$0xf]
  %v3890 = vunpack.c.l.b16 %v3874
  %v3891 = vunpack.c.l.b16 %v3875
  %v3892 = vunpack.c.l.b16 %v3876
  %v3893 = vunpack.c.l.b16 %v3877
  %v3894 = vunpack.c.l.b16 %v3878
  %v3895 = vunpack.c.l.b16 %v3879
  %v3896 = vunpack.c.l.b16 %v3880
  %v3897 = vunpack.c.l.b16 %v3881
  %v3898 = vpack.c.b16 %v3891, %v3890
  %v3899 = vpack.c.b16 %v3893, %v3892
  %v3900 = vpack.c.b16 %v3895, %v3894
  %v3901 = vpack.c.b16 %v3897, %v3896
  %v3907 = vsel %vm2405, %v3848, 0
  %v3910 = vsel %vm2405, %v3849, 0
  %v3913 = vsel %vm2405, %v3850, 0
  %v3916 = vsel %vm2405, %v3851, 0
  %v3919 = vsel %vm2405, %v3852, 0
  %v3922 = vsel %vm2405, %v3853, 0
  %v3925 = vsel %vm2405, %v3854, 0
  %v3928 = vsel %vm2405, %v3855, 0
  %v3931 = vsel %vm2405, %v3856, 0
  %v3934 = vsel %vm2405, %v3857, 0
  %v3937 = vsel %vm2405, %v3858, 0
  %v3940 = vsel %vm2405, %v3859, 0
  %v3943 = vsel %vm2405, %v3860, 0
  %v3946 = vsel %vm2405, %v3861, 0
  %v3949 = vsel %vm2405, %v3862, 0
  %v3952 = vsel %vm2405, %v3863, 0
  %v3955 = vsel %vm2405, %v3864, 0
  %v3958 = vsel %vm2405, %v3865, 0
  %v3961 = vsel %vm2405, %v3866, 0
  %v3964 = vsel %vm2405, %v3867, 0
  %v3967 = vsel %vm2405, %v3868, 0
  %v3970 = vsel %vm2405, %v3869, 0
  %v3973 = vsel %vm2405, %v3870, 0
  %v3976 = vsel %vm2405, %v3871, 0
  %v3979 = vsel %vm2405, %v3872, 0
  %3981 = vmatprep.subr.bf16.mxu0 0
  %3982 = vmatpush1.bf16.msra.mxu0 %v3898
  %3983 = vmatprep.subr.bf16.mxu0 0
  %3984 = vmatpush1.bf16.msra.mxu0 %v3899
  %3985 = vmatprep.subr.bf16.mxu0 0
  %3986 = vmatpush1.bf16.msra.mxu0 %v3900
  %3987 = vmatprep.subr.bf16.mxu0 0
  %3988 = vmatpush1.bf16.msra.mxu0 %v3901
  %3989 = vmatprep.subr.bf16.mxu0 0
  %3990 = vmatpush1.bf16.msra.mxu0 0
  %3991 = vmatprep.subr.bf16.mxu0 0
  %3992 = vmatpush1.bf16.msra.mxu0 0
  %3993 = vmatprep.subr.bf16.mxu0 0
  %3994 = vmatpush1.bf16.msra.mxu0 0
  %3995 = vmatprep.subr.bf16.mxu0 0
  %3996 = vmatpush1.bf16.msra.mxu0 0
  %3997 = vmatprep.subr.bf16.mxu0 0
  %3998 = vmatpush1.bf16.msra.mxu0 0
  %3999 = vmatprep.subr.bf16.mxu0 0
  %4000 = vmatpush1.bf16.msra.mxu0 0
  %4001 = vmatprep.subr.bf16.mxu0 0
  %4002 = vmatpush1.bf16.msra.mxu0 0
  %4003 = vmatprep.subr.bf16.mxu0 0
  %4004 = vmatpush1.bf16.msra.mxu0 0
  %4005 = vmatprep.subr.bf16.mxu0 0
  %4006 = vmatpush1.bf16.msra.mxu0 0
  %4007 = vmatprep.subr.bf16.mxu0 0
  %4008 = vmatpush1.bf16.msra.mxu0 0
  %4009 = vmatprep.subr.bf16.mxu0 0
  %4010 = vmatpush1.bf16.msra.mxu0 0
  %4011 = vmatprep.subr.bf16.mxu0 0
  %4012 = vmatpush1.bf16.msra.mxu0 0
  %4013 = vmatprep.mubr.bf16.mxu0 0
  %4014 = vmatmul.mubr.bf16.gmra.mrb[0].mxu0 %v3907
  %v4015 = vpop.f32.mrb[0].mxu0
  %v4016 = vadd.f32 0.0, %v4015
  %v4017 = vpop.f32.mrb[0].mxu0
  %v4018 = vpop.f32.mrb[0].mxu0
  %v4019 = vadd.f32 0.0, %v4018
  %v4020 = vpop.f32.mrb[0].mxu0
  %4021 = vmatprep.mubr.bf16.mxu0 0
  %4022 = vmatmul.mubr.bf16.gmra.mrb[0].mxu0 %v3910
  %v4023 = vpop.f32.mrb[0].mxu0
  %v4024 = vadd.f32 0.0, %v4023
  %v4025 = vpop.f32.mrb[0].mxu0
  %v4026 = vpop.f32.mrb[0].mxu0
  %v4027 = vadd.f32 0.0, %v4026
  %v4028 = vpop.f32.mrb[0].mxu0
  %4029 = vmatprep.mubr.bf16.mxu0 0
  %4030 = vmatmul.mubr.bf16.gmra.mrb[0].mxu0 %v3913
  %v4031 = vpop.f32.mrb[0].mxu0
  %v4032 = vadd.f32 0.0, %v4031
  %v4033 = vpop.f32.mrb[0].mxu0
  %v4034 = vpop.f32.mrb[0].mxu0
  %v4035 = vadd.f32 0.0, %v4034
  %v4036 = vpop.f32.mrb[0].mxu0
  %4037 = vmatprep.mubr.bf16.mxu0 0
  %4038 = vmatmul.mubr.bf16.gmra.mrb[0].mxu0 %v3916
  %v4039 = vpop.f32.mrb[0].mxu0
  %v4040 = vadd.f32 0.0, %v4039
  %v4041 = vpop.f32.mrb[0].mxu0
  %v4042 = vpop.f32.mrb[0].mxu0
  %v4043 = vadd.f32 0.0, %v4042
  %v4044 = vpop.f32.mrb[0].mxu0
  %4045 = vmatprep.mubr.bf16.mxu0 0
  %4046 = vmatmul.mubr.bf16.gmra.mrb[0].mxu0 %v3919
  %v4047 = vpop.f32.mrb[0].mxu0
  %v4048 = vadd.f32 0.0, %v4047
  %v4049 = vpop.f32.mrb[0].mxu0
  %v4050 = vpop.f32.mrb[0].mxu0
  %v4051 = vadd.f32 0.0, %v4050
  %v4052 = vpop.f32.mrb[0].mxu0
  %4053 = vmatprep.mubr.bf16.mxu0 0
  %4054 = vmatmul.mubr.bf16.gmra.mrb[0].mxu0 %v3922
  %v4055 = vpop.f32.mrb[0].mxu0
  %v4056 = vadd.f32 0.0, %v4055
  %v4057 = vpop.f32.mrb[0].mxu0
  %v4058 = vpop.f32.mrb[0].mxu0
  %v4059 = vadd.f32 0.0, %v4058
  %v4060 = vpop.f32.mrb[0].mxu0
  %4061 = vmatprep.mubr.bf16.mxu0 0
  %4062 = vmatmul.mubr.bf16.gmra.mrb[0].mxu0 %v3925
  %v4063 = vpop.f32.mrb[0].mxu0
  %v4064 = vadd.f32 0.0, %v4063
  %v4065 = vpop.f32.mrb[0].mxu0
  %v4066 = vpop.f32.mrb[0].mxu0
  %v4067 = vadd.f32 0.0, %v4066
  %v4068 = vpop.f32.mrb[0].mxu0
  %4069 = vmatprep.mubr.bf16.mxu0 0
  %4070 = vmatmul.mubr.bf16.gmra.mrb[0].mxu0 %v3928
  %v4071 = vpop.f32.mrb[0].mxu0
  %v4072 = vadd.f32 0.0, %v4071
  %v4073 = vpop.f32.mrb[0].mxu0
  %v4074 = vpop.f32.mrb[0].mxu0
  %v4075 = vadd.f32 0.0, %v4074
  %v4076 = vpop.f32.mrb[0].mxu0
  %4077 = vmatprep.mubr.bf16.mxu0 0
  %4078 = vmatmul.mubr.bf16.gmra.mrb[0].mxu0 %v3931
  %v4079 = vpop.f32.mrb[0].mxu0
  %v4080 = vadd.f32 0.0, %v4079
  %v4081 = vpop.f32.mrb[0].mxu0
  %v4082 = vpop.f32.mrb[0].mxu0
  %v4083 = vadd.f32 0.0, %v4082
  %v4084 = vpop.f32.mrb[0].mxu0
  %4085 = vmatprep.mubr.bf16.mxu0 0
  %4086 = vmatmul.mubr.bf16.gmra.mrb[0].mxu0 %v3934
  %v4087 = vpop.f32.mrb[0].mxu0
  %v4088 = vadd.f32 0.0, %v4087
  %v4089 = vpop.f32.mrb[0].mxu0
  %v4090 = vpop.f32.mrb[0].mxu0
  %v4091 = vadd.f32 0.0, %v4090
  %v4092 = vpop.f32.mrb[0].mxu0
  %4093 = vmatprep.mubr.bf16.mxu0 0
  %4094 = vmatmul.mubr.bf16.gmra.mrb[0].mxu0 %v3937
  %v4095 = vpop.f32.mrb[0].mxu0
  %v4096 = vadd.f32 0.0, %v4095
  %v4097 = vpop.f32.mrb[0].mxu0
  %v4098 = vpop.f32.mrb[0].mxu0
  %v4099 = vadd.f32 0.0, %v4098
  %v4100 = vpop.f32.mrb[0].mxu0
  %4101 = vmatprep.mubr.bf16.mxu0 0
  %4102 = vmatmul.mubr.bf16.gmra.mrb[0].mxu0 %v3940
  %v4103 = vpop.f32.mrb[0].mxu0
  %v4104 = vadd.f32 0.0, %v4103
  %v4105 = vpop.f32.mrb[0].mxu0
  %v4106 = vpop.f32.mrb[0].mxu0
  %v4107 = vadd.f32 0.0, %v4106
  %v4108 = vpop.f32.mrb[0].mxu0
  %4109 = vmatprep.mubr.bf16.mxu0 0
  %4110 = vmatmul.mubr.bf16.gmra.mrb[0].mxu0 %v3943
  %v4111 = vpop.f32.mrb[0].mxu0
  %v4112 = vadd.f32 0.0, %v4111
  %v4113 = vpop.f32.mrb[0].mxu0
  %v4114 = vpop.f32.mrb[0].mxu0
  %v4115 = vadd.f32 0.0, %v4114
  %v4116 = vpop.f32.mrb[0].mxu0
  %4117 = vmatprep.mubr.bf16.mxu0 0
  %4118 = vmatmul.mubr.bf16.gmra.mrb[0].mxu0 %v3946
  %v4119 = vpop.f32.mrb[0].mxu0
  %v4120 = vadd.f32 0.0, %v4119
  %v4121 = vpop.f32.mrb[0].mxu0
  %v4122 = vpop.f32.mrb[0].mxu0
  %v4123 = vadd.f32 0.0, %v4122
  %v4124 = vpop.f32.mrb[0].mxu0
  %4125 = vmatprep.mubr.bf16.mxu0 0
  %4126 = vmatmul.mubr.bf16.gmra.mrb[0].mxu0 %v3949
  %v4127 = vpop.f32.mrb[0].mxu0
  %v4128 = vadd.f32 0.0, %v4127
  %v4129 = vpop.f32.mrb[0].mxu0
  %v4130 = vpop.f32.mrb[0].mxu0
  %v4131 = vadd.f32 0.0, %v4130
  %v4132 = vpop.f32.mrb[0].mxu0
  %4133 = vmatprep.mubr.bf16.mxu0 0
  %4134 = vmatmul.mubr.bf16.gmra.mrb[0].mxu0 %v3952
  %v4135 = vpop.f32.mrb[0].mxu0
  %v4136 = vadd.f32 0.0, %v4135
  %v4137 = vpop.f32.mrb[0].mxu0
  %v4138 = vpop.f32.mrb[0].mxu0
  %v4139 = vadd.f32 0.0, %v4138
  %v4140 = vpop.f32.mrb[0].mxu0
  %4141 = vmatprep.mubr.bf16.mxu0 0
  %4142 = vmatmul.mubr.bf16.gmra.mrb[0].mxu0 %v3955
  %v4143 = vpop.f32.mrb[0].mxu0
  %v4144 = vadd.f32 0.0, %v4143
  %v4145 = vpop.f32.mrb[0].mxu0
  %v4146 = vpop.f32.mrb[0].mxu0
  %v4147 = vadd.f32 0.0, %v4146
  %v4148 = vpop.f32.mrb[0].mxu0
  %4149 = vmatprep.mubr.bf16.mxu0 0
  %4150 = vmatmul.mubr.bf16.gmra.mrb[0].mxu0 %v3958
  %v4151 = vpop.f32.mrb[0].mxu0
  %v4152 = vadd.f32 0.0, %v4151
  %v4153 = vpop.f32.mrb[0].mxu0
  %v4154 = vpop.f32.mrb[0].mxu0
  %v4155 = vadd.f32 0.0, %v4154
  %v4156 = vpop.f32.mrb[0].mxu0
  %4157 = vmatprep.mubr.bf16.mxu0 0
  %4158 = vmatmul.mubr.bf16.gmra.mrb[0].mxu0 %v3961
  %v4159 = vpop.f32.mrb[0].mxu0
  %v4160 = vadd.f32 0.0, %v4159
  %v4161 = vpop.f32.mrb[0].mxu0
  %v4162 = vpop.f32.mrb[0].mxu0
  %v4163 = vadd.f32 0.0, %v4162
  %v4164 = vpop.f32.mrb[0].mxu0
  %4165 = vmatprep.mubr.bf16.mxu0 0
  %4166 = vmatmul.mubr.bf16.gmra.mrb[0].mxu0 %v3964
  %v4167 = vpop.f32.mrb[0].mxu0
  %v4168 = vadd.f32 0.0, %v4167
  %v4169 = vpop.f32.mrb[0].mxu0
  %v4170 = vpop.f32.mrb[0].mxu0
  %v4171 = vadd.f32 0.0, %v4170
  %v4172 = vpop.f32.mrb[0].mxu0
  %4173 = vmatprep.mubr.bf16.mxu0 0
  %4174 = vmatmul.mubr.bf16.gmra.mrb[0].mxu0 %v3967
  %v4175 = vpop.f32.mrb[0].mxu0
  %v4176 = vadd.f32 0.0, %v4175
  %v4177 = vpop.f32.mrb[0].mxu0
  %v4178 = vpop.f32.mrb[0].mxu0
  %v4179 = vadd.f32 0.0, %v4178
  %v4180 = vpop.f32.mrb[0].mxu0
  %4181 = vmatprep.mubr.bf16.mxu0 0
  %4182 = vmatmul.mubr.bf16.gmra.mrb[0].mxu0 %v3970
  %v4183 = vpop.f32.mrb[0].mxu0
  %v4184 = vadd.f32 0.0, %v4183
  %v4185 = vpop.f32.mrb[0].mxu0
  %v4186 = vpop.f32.mrb[0].mxu0
  %v4187 = vadd.f32 0.0, %v4186
  %v4188 = vpop.f32.mrb[0].mxu0
  %4189 = vmatprep.mubr.bf16.mxu0 0
  %4190 = vmatmul.mubr.bf16.gmra.mrb[0].mxu0 %v3973
  %v4191 = vpop.f32.mrb[0].mxu0
  %v4192 = vadd.f32 0.0, %v4191
  %v4193 = vpop.f32.mrb[0].mxu0
  %v4194 = vpop.f32.mrb[0].mxu0
  %v4195 = vadd.f32 0.0, %v4194
  %v4196 = vpop.f32.mrb[0].mxu0
  %4197 = vmatprep.mubr.bf16.mxu0 0
  %4198 = vmatmul.mubr.bf16.gmra.mrb[0].mxu0 %v3976
  %v4199 = vpop.f32.mrb[0].mxu0
  %v4200 = vadd.f32 0.0, %v4199
  %v4201 = vpop.f32.mrb[0].mxu0
  %v4202 = vpop.f32.mrb[0].mxu0
  %v4203 = vadd.f32 0.0, %v4202
  %v4204 = vpop.f32.mrb[0].mxu0
  %4205 = vmatprep.mubr.bf16.mxu0 0
  %4206 = vmatmul.mubr.bf16.gmra.mrb[0].mxu0 %v3979
  %v4207 = vpop.f32.mrb[0].mxu0
  %v4208 = vadd.f32 0.0, %v4207
  %v4209 = vpop.f32.mrb[0].mxu0
  %v4210 = vpop.f32.mrb[0].mxu0
  %v4211 = vpop.f32.mrb[0].mxu0
  %4212 = vdwg.mxu0
  %v4213 = vadd.f32 %v3750, %v4016
  %v4214 = vadd.f32 %v3751, %v4019
  %v4215 = vadd.f32 %v3752, %v4024
  %v4216 = vadd.f32 %v3753, %v4027
  %v4217 = vadd.f32 %v3754, %v4032
  %v4218 = vadd.f32 %v3755, %v4035
  %v4219 = vadd.f32 %v3756, %v4040
  %v4220 = vadd.f32 %v3757, %v4043
  %v4221 = vadd.f32 %v3758, %v4048
  %v4222 = vadd.f32 %v3759, %v4051
  %v4223 = vadd.f32 %v3760, %v4056
  %v4224 = vadd.f32 %v3761, %v4059
  %v4225 = vadd.f32 %v3762, %v4064
  %v4226 = vadd.f32 %v3763, %v4067
  %v4227 = vadd.f32 %v3764, %v4072
  %v4228 = vadd.f32 %v3765, %v4075
  %v4229 = vadd.f32 %v3766, %v4080
  %v4230 = vadd.f32 %v3767, %v4083
  %v4231 = vadd.f32 %v3768, %v4088
  %v4232 = vadd.f32 %v3769, %v4091
  %v4233 = vadd.f32 %v3770, %v4096
  %v4234 = vadd.f32 %v3771, %v4099
  %v4235 = vadd.f32 %v3772, %v4104
  %v4236 = vadd.f32 %v3773, %v4107
  %v4237 = vadd.f32 %v3774, %v4112
  %v4238 = vadd.f32 %v3775, %v4115
  %v4239 = vadd.f32 %v3776, %v4120
  %v4240 = vadd.f32 %v3777, %v4123
  %v4241 = vadd.f32 %v3778, %v4128
  %v4242 = vadd.f32 %v3779, %v4131
  %v4243 = vadd.f32 %v3780, %v4136
  %v4244 = vadd.f32 %v3781, %v4139
  %v4245 = vadd.f32 %v3782, %v4144
  %v4246 = vadd.f32 %v3783, %v4147
  %v4247 = vadd.f32 %v3784, %v4152
  %v4248 = vadd.f32 %v3785, %v4155
  %v4249 = vadd.f32 %v3786, %v4160
  %v4250 = vadd.f32 %v3787, %v4163
  %v4251 = vadd.f32 %v3788, %v4168
  %v4252 = vadd.f32 %v3789, %v4171
  %v4253 = vadd.f32 %v3790, %v4176
  %v4254 = vadd.f32 %v3791, %v4179
  %v4255 = vadd.f32 %v3792, %v4184
  %v4256 = vadd.f32 %v3793, %v4187
  %v4257 = vadd.f32 %v3794, %v4192
  %v4258 = vadd.f32 %v3795, %v4195
  %v4259 = vadd.f32 %v3796, %v4200
  %v4260 = vadd.f32 %v3797, %v4203
  %v4261 = vadd.f32 %v3798, %v4208
  %v4262 = vld [vmem:[%s6] sm:$0x1]
  %v4264 = vlaneseq
  %v4265 = vshrl.u32 %v4264, 7
  %v4266 = vsub.s32 0, %v4265
  %v4267 = vrot.slane %v4262, %v4266
  %v4269 = vadd.f32 %v4213, %v4267
  %v4270 = vadd.f32 %v4214, %v4267
  %v4271 = vadd.f32 %v4215, %v4267
  %v4272 = vadd.f32 %v4216, %v4267
  %v4273 = vadd.f32 %v4217, %v4267
  %v4274 = vadd.f32 %v4218, %v4267
  %v4275 = vadd.f32 %v4219, %v4267
  %v4276 = vadd.f32 %v4220, %v4267
  %v4277 = vadd.f32 %v4221, %v4267
  %v4278 = vadd.f32 %v4222, %v4267
  %v4279 = vadd.f32 %v4223, %v4267
  %v4280 = vadd.f32 %v4224, %v4267
  %v4281 = vadd.f32 %v4225, %v4267
  %v4282 = vadd.f32 %v4226, %v4267
  %v4283 = vadd.f32 %v4227, %v4267
  %v4284 = vadd.f32 %v4228, %v4267
  %v4285 = vadd.f32 %v4229, %v4267
  %v4286 = vadd.f32 %v4230, %v4267
  %v4287 = vadd.f32 %v4231, %v4267
  %v4288 = vadd.f32 %v4232, %v4267
  %v4289 = vadd.f32 %v4233, %v4267
  %v4290 = vadd.f32 %v4234, %v4267
  %v4291 = vadd.f32 %v4235, %v4267
  %v4292 = vadd.f32 %v4236, %v4267
  %v4293 = vadd.f32 %v4237, %v4267
  %v4294 = vadd.f32 %v4238, %v4267
  %v4295 = vadd.f32 %v4239, %v4267
  %v4296 = vadd.f32 %v4240, %v4267
  %v4297 = vadd.f32 %v4241, %v4267
  %v4298 = vadd.f32 %v4242, %v4267
  %v4299 = vadd.f32 %v4243, %v4267
  %v4300 = vadd.f32 %v4244, %v4267
  %v4301 = vadd.f32 %v4245, %v4267
  %v4302 = vadd.f32 %v4246, %v4267
  %v4303 = vadd.f32 %v4247, %v4267
  %v4304 = vadd.f32 %v4248, %v4267
  %v4305 = vadd.f32 %v4249, %v4267
  %v4306 = vadd.f32 %v4250, %v4267
  %v4307 = vadd.f32 %v4251, %v4267
  %v4308 = vadd.f32 %v4252, %v4267
  %v4309 = vadd.f32 %v4253, %v4267
  %v4310 = vadd.f32 %v4254, %v4267
  %v4311 = vadd.f32 %v4255, %v4267
  %v4312 = vadd.f32 %v4256, %v4267
  %v4313 = vadd.f32 %v4257, %v4267
  %v4314 = vadd.f32 %v4258, %v4267
  %v4315 = vadd.f32 %v4259, %v4267
  %v4316 = vadd.f32 %v4260, %v4267
  %v4317 = vadd.f32 %v4261, %v4267
  %v4318 = vmax.f32 %v4269, 0.0
  %v4319 = vmax.f32 %v4270, 0.0
  %v4320 = vmax.f32 %v4271, 0.0
  %v4321 = vmax.f32 %v4272, 0.0
  %v4322 = vmax.f32 %v4273, 0.0
  %v4323 = vmax.f32 %v4274, 0.0
  %v4324 = vmax.f32 %v4275, 0.0
  %v4325 = vmax.f32 %v4276, 0.0
  %v4326 = vmax.f32 %v4277, 0.0
  %v4327 = vmax.f32 %v4278, 0.0
  %v4328 = vmax.f32 %v4279, 0.0
  %v4329 = vmax.f32 %v4280, 0.0
  %v4330 = vmax.f32 %v4281, 0.0
  %v4331 = vmax.f32 %v4282, 0.0
  %v4332 = vmax.f32 %v4283, 0.0
  %v4333 = vmax.f32 %v4284, 0.0
  %v4334 = vmax.f32 %v4285, 0.0
  %v4335 = vmax.f32 %v4286, 0.0
  %v4336 = vmax.f32 %v4287, 0.0
  %v4337 = vmax.f32 %v4288, 0.0
  %v4338 = vmax.f32 %v4289, 0.0
  %v4339 = vmax.f32 %v4290, 0.0
  %v4340 = vmax.f32 %v4291, 0.0
  %v4341 = vmax.f32 %v4292, 0.0
  %v4342 = vmax.f32 %v4293, 0.0
  %v4343 = vmax.f32 %v4294, 0.0
  %v4344 = vmax.f32 %v4295, 0.0
  %v4345 = vmax.f32 %v4296, 0.0
  %v4346 = vmax.f32 %v4297, 0.0
  %v4347 = vmax.f32 %v4298, 0.0
  %v4348 = vmax.f32 %v4299, 0.0
  %v4349 = vmax.f32 %v4300, 0.0
  %v4350 = vmax.f32 %v4301, 0.0
  %v4351 = vmax.f32 %v4302, 0.0
  %v4352 = vmax.f32 %v4303, 0.0
  %v4353 = vmax.f32 %v4304, 0.0
  %v4354 = vmax.f32 %v4305, 0.0
  %v4355 = vmax.f32 %v4306, 0.0
  %v4356 = vmax.f32 %v4307, 0.0
  %v4357 = vmax.f32 %v4308, 0.0
  %v4358 = vmax.f32 %v4309, 0.0
  %v4359 = vmax.f32 %v4310, 0.0
  %v4360 = vmax.f32 %v4311, 0.0
  %v4361 = vmax.f32 %v4312, 0.0
  %v4362 = vmax.f32 %v4313, 0.0
  %v4363 = vmax.f32 %v4314, 0.0
  %v4364 = vmax.f32 %v4315, 0.0
  %v4365 = vmax.f32 %v4316, 0.0
  %v4366 = vmax.f32 %v4317, 0.0
  %4367 = vst [vmem:[#allocation5] sm:$0xff] %v4318
  %4368 = vst [vmem:[#allocation5 + $0x8] sm:$0xff] %v4319
  %4369 = vst [vmem:[#allocation5 + $0x10] sm:$0xff] %v4320
  %4370 = vst [vmem:[#allocation5 + $0x18] sm:$0xff] %v4321
  %4371 = vst [vmem:[#allocation5 + $0x20] sm:$0xff] %v4322
  %4372 = vst [vmem:[#allocation5 + $0x28] sm:$0xff] %v4323
  %4373 = vst [vmem:[#allocation5 + $0x30] sm:$0xff] %v4324
  %4374 = vst [vmem:[#allocation5 + $0x38] sm:$0xff] %v4325
  %4375 = vst [vmem:[#allocation5 + $0x40] sm:$0xff] %v4326
  %4376 = vst [vmem:[#allocation5 + $0x48] sm:$0xff] %v4327
  %4377 = vst [vmem:[#allocation5 + $0x50] sm:$0xff] %v4328
  %4378 = vst [vmem:[#allocation5 + $0x58] sm:$0xff] %v4329
  %4379 = vst [vmem:[#allocation5 + $0x60] sm:$0xff] %v4330
  %4380 = vst [vmem:[#allocation5 + $0x68] sm:$0xff] %v4331
  %4381 = vst [vmem:[#allocation5 + $0x70] sm:$0xff] %v4332
  %4382 = vst [vmem:[#allocation5 + $0x78] sm:$0xff] %v4333
  %4383 = vst [vmem:[#allocation5 + $0x80] sm:$0xff] %v4334
  %4384 = vst [vmem:[#allocation5 + $0x88] sm:$0xff] %v4335
  %4385 = vst [vmem:[#allocation5 + $0x90] sm:$0xff] %v4336
  %4386 = vst [vmem:[#allocation5 + $0x98] sm:$0xff] %v4337
  %4387 = vst [vmem:[#allocation5 + $0xa0] sm:$0xff] %v4338
  %4388 = vst [vmem:[#allocation5 + $0xa8] sm:$0xff] %v4339
  %4389 = vst [vmem:[#allocation5 + $0xb0] sm:$0xff] %v4340
  %4390 = vst [vmem:[#allocation5 + $0xb8] sm:$0xff] %v4341
  %4391 = vst [vmem:[#allocation5 + $0xc0] sm:$0xff] %v4342
  %4392 = vst [vmem:[#allocation5 + $0xc8] sm:$0xff] %v4343
  %4393 = vst [vmem:[#allocation5 + $0xd0] sm:$0xff] %v4344
  %4394 = vst [vmem:[#allocation5 + $0xd8] sm:$0xff] %v4345
  %4395 = vst [vmem:[#allocation5 + $0xe0] sm:$0xff] %v4346
  %4396 = vst [vmem:[#allocation5 + $0xe8] sm:$0xff] %v4347
  %4397 = vst [vmem:[#allocation5 + $0xf0] sm:$0xff] %v4348
  %4398 = vst [vmem:[#allocation5 + $0xf8] sm:$0xff] %v4349
  %4399 = vst [vmem:[#allocation5 + $0x100] sm:$0xff] %v4350
  %4400 = vst [vmem:[#allocation5 + $0x108] sm:$0xff] %v4351
  %4401 = vst [vmem:[#allocation5 + $0x110] sm:$0xff] %v4352
  %4402 = vst [vmem:[#allocation5 + $0x118] sm:$0xff] %v4353
  %4403 = vst [vmem:[#allocation5 + $0x120] sm:$0xff] %v4354
  %4404 = vst [vmem:[#allocation5 + $0x128] sm:$0xff] %v4355
  %4405 = vst [vmem:[#allocation5 + $0x130] sm:$0xff] %v4356
  %4406 = vst [vmem:[#allocation5 + $0x138] sm:$0xff] %v4357
  %4407 = vst [vmem:[#allocation5 + $0x140] sm:$0xff] %v4358
  %4408 = vst [vmem:[#allocation5 + $0x148] sm:$0xff] %v4359
  %4409 = vst [vmem:[#allocation5 + $0x150] sm:$0xff] %v4360
  %4410 = vst [vmem:[#allocation5 + $0x158] sm:$0xff] %v4361
  %4411 = vst [vmem:[#allocation5 + $0x160] sm:$0xff] %v4362
  %4412 = vst [vmem:[#allocation5 + $0x168] sm:$0xff] %v4363
  %4413 = vst [vmem:[#allocation5 + $0x170] sm:$0xff] %v4364
  %4414 = vst [vmem:[#allocation5 + $0x178] sm:$0xff] %v4365
  %4415 = vst [vmem:[#allocation5 + $0x180] sm:$0xff] %v4366
  %v4416 = vld [vmem:[#allocation5] sm:$0xff]
  %v4417 = vpack.c.bf16 %v4416, %v4416
  %v4418 = vld [vmem:[%s7] sm:$0xf]
  %v4419 = vld [vmem:[%s7 + $0x4] sm:$0xf]
  %v4420 = vld [vmem:[%s7 + $0x8] sm:$0xf]
  %v4421 = vld [vmem:[%s7 + $0xc] sm:$0xf]
  %v4422 = vld [vmem:[%s7 + $0x10] sm:$0xf]
  %v4423 = vld [vmem:[%s7 + $0x14] sm:$0xf]
  %v4424 = vld [vmem:[%s7 + $0x18] sm:$0xf]
  %v4425 = vld [vmem:[%s7 + $0x1c] sm:$0xf]
  %v4426 = vld [vmem:[%s7 + $0x20] sm:$0xf]
  %v4427 = vld [vmem:[%s7 + $0x24] sm:$0xf]
  %v4428 = vld [vmem:[%s7 + $0x28] sm:$0xf]
  %v4429 = vld [vmem:[%s7 + $0x2c] sm:$0xf]
  %v4430 = vld [vmem:[%s7 + $0x30] sm:$0xf]
  %v4431 = vld [vmem:[%s7 + $0x34] sm:$0xf]
  %v4432 = vld [vmem:[%s7 + $0x38] sm:$0xf]
  %v4433 = vld [vmem:[%s7 + $0x3c] sm:$0xf]
  %s4434 = scalar_lea.vmem [#allocation5], 8
  %v4435 = vld [vmem:[%s4434] sm:$0xff]
  %v4436 = vpack.c.bf16 %v4435, %v4435
  %s4437 = scalar_lea.vmem %s7, 64
  %v4438 = vld [vmem:[%s4437] sm:$0xf]
  %v4439 = vld [vmem:[%s4437 + $0x4] sm:$0xf]
  %v4440 = vld [vmem:[%s4437 + $0x8] sm:$0xf]
  %v4441 = vld [vmem:[%s4437 + $0xc] sm:$0xf]
  %v4442 = vld [vmem:[%s4437 + $0x10] sm:$0xf]
  %v4443 = vld [vmem:[%s4437 + $0x14] sm:$0xf]
  %v4444 = vld [vmem:[%s4437 + $0x18] sm:$0xf]
  %v4445 = vld [vmem:[%s4437 + $0x1c] sm:$0xf]
  %v4446 = vld [vmem:[%s4437 + $0x20] sm:$0xf]
  %v4447 = vld [vmem:[%s4437 + $0x24] sm:$0xf]
  %v4448 = vld [vmem:[%s4437 + $0x28] sm:$0xf]
  %v4449 = vld [vmem:[%s4437 + $0x2c] sm:$0xf]
  %v4450 = vld [vmem:[%s4437 + $0x30] sm:$0xf]
  %v4451 = vld [vmem:[%s4437 + $0x34] sm:$0xf]
  %v4452 = vld [vmem:[%s4437 + $0x38] sm:$0xf]
  %v4453 = vld [vmem:[%s4437 + $0x3c] sm:$0xf]
  %v4470 = vunpack.c.l.b16 %v4438
  %v4471 = vunpack.c.l.b16 %v4439
  %v4472 = vunpack.c.l.b16 %v4440
  %v4473 = vunpack.c.l.b16 %v4441
  %v4474 = vunpack.c.l.b16 %v4442
  %v4475 = vunpack.c.l.b16 %v4443
  %v4476 = vunpack.c.l.b16 %v4444
  %v4477 = vunpack.c.l.b16 %v4445
  %v4478 = vunpack.c.l.b16 %v4446
  %v4479 = vunpack.c.l.b16 %v4447
  %v4480 = vunpack.c.l.b16 %v4448
  %v4481 = vunpack.c.l.b16 %v4449
  %v4482 = vunpack.c.l.b16 %v4450
  %v4483 = vunpack.c.l.b16 %v4451
  %v4484 = vunpack.c.l.b16 %v4452
  %v4485 = vunpack.c.l.b16 %v4453
  %v4486 = vpack.c.b16 %v4471, %v4470
  %v4487 = vpack.c.b16 %v4473, %v4472
  %v4488 = vpack.c.b16 %v4475, %v4474
  %v4489 = vpack.c.b16 %v4477, %v4476
  %v4490 = vpack.c.b16 %v4479, %v4478
  %v4491 = vpack.c.b16 %v4481, %v4480
  %v4492 = vpack.c.b16 %v4483, %v4482
  %v4493 = vpack.c.b16 %v4485, %v4484
  %4502 = vmatprep.subr.bf16.mxu0 0
  %4503 = vmatpush1.bf16.msra.mxu0 %v4486
  %4504 = vmatprep.subr.bf16.mxu0 0
  %4505 = vmatpush1.bf16.msra.mxu0 %v4487
  %4506 = vmatprep.subr.bf16.mxu0 0
  %4507 = vmatpush1.bf16.msra.mxu0 %v4488
  %4508 = vmatprep.subr.bf16.mxu0 0
  %4509 = vmatpush1.bf16.msra.mxu0 %v4489
  %4510 = vmatprep.subr.bf16.mxu0 0
  %4511 = vmatpush1.bf16.msra.mxu0 %v4490
  %4512 = vmatprep.subr.bf16.mxu0 0
  %4513 = vmatpush1.bf16.msra.mxu0 %v4491
  %4514 = vmatprep.subr.bf16.mxu0 0
  %4515 = vmatpush1.bf16.msra.mxu0 %v4492
  %4516 = vmatprep.subr.bf16.mxu0 0
  %4517 = vmatpush1.bf16.msra.mxu0 %v4493
  %4518 = vmatprep.subr.bf16.mxu0 0
  %4519 = vmatpush1.bf16.msra.mxu0 0
  %4520 = vmatprep.subr.bf16.mxu0 0
  %4521 = vmatpush1.bf16.msra.mxu0 0
  %4522 = vmatprep.subr.bf16.mxu0 0
  %4523 = vmatpush1.bf16.msra.mxu0 0
  %4524 = vmatprep.subr.bf16.mxu0 0
  %4525 = vmatpush1.bf16.msra.mxu0 0
  %4526 = vmatprep.subr.bf16.mxu0 0
  %4527 = vmatpush1.bf16.msra.mxu0 0
  %4528 = vmatprep.subr.bf16.mxu0 0
  %4529 = vmatpush1.bf16.msra.mxu0 0
  %4530 = vmatprep.subr.bf16.mxu0 0
  %4531 = vmatpush1.bf16.msra.mxu0 0
  %4532 = vmatprep.subr.bf16.mxu0 0
  %4533 = vmatpush1.bf16.msra.mxu0 0
  %4534 = vmatprep.mubr.bf16.mxu0 0
  %4535 = vmatmul.mubr.bf16.gmra.mrb[0].mxu0 %v4436
  %v4536 = vpop.f32.mrb[0].mxu0
  %v4537 = vadd.f32 0.0, %v4536
  %v4538 = vpop.f32.mrb[0].mxu0
  %v4539 = vpop.f32.mrb[0].mxu0
  %v4540 = vpop.f32.mrb[0].mxu0
  %4541 = vdwg.mxu0
  %v4558 = vunpack.c.l.b16 %v4418
  %v4559 = vunpack.c.l.b16 %v4419
  %v4560 = vunpack.c.l.b16 %v4420
  %v4561 = vunpack.c.l.b16 %v4421
  %v4562 = vunpack.c.l.b16 %v4422
  %v4563 = vunpack.c.l.b16 %v4423
  %v4564 = vunpack.c.l.b16 %v4424
  %v4565 = vunpack.c.l.b16 %v4425
  %v4566 = vunpack.c.l.b16 %v4426
  %v4567 = vunpack.c.l.b16 %v4427
  %v4568 = vunpack.c.l.b16 %v4428
  %v4569 = vunpack.c.l.b16 %v4429
  %v4570 = vunpack.c.l.b16 %v4430
  %v4571 = vunpack.c.l.b16 %v4431
  %v4572 = vunpack.c.l.b16 %v4432
  %v4573 = vunpack.c.l.b16 %v4433
  %v4574 = vpack.c.b16 %v4559, %v4558
  %v4575 = vpack.c.b16 %v4561, %v4560
  %v4576 = vpack.c.b16 %v4563, %v4562
  %v4577 = vpack.c.b16 %v4565, %v4564
  %v4578 = vpack.c.b16 %v4567, %v4566
  %v4579 = vpack.c.b16 %v4569, %v4568
  %v4580 = vpack.c.b16 %v4571, %v4570
  %v4581 = vpack.c.b16 %v4573, %v4572
  %4590 = vmatprep.subr.bf16.mxu0 0
  %4591 = vmatpush1.bf16.msra.mxu0 %v4574
  %4592 = vmatprep.subr.bf16.mxu0 0
  %4593 = vmatpush1.bf16.msra.mxu0 %v4575
  %4594 = vmatprep.subr.bf16.mxu0 0
  %4595 = vmatpush1.bf16.msra.mxu0 %v4576
  %4596 = vmatprep.subr.bf16.mxu0 0
  %4597 = vmatpush1.bf16.msra.mxu0 %v4577
  %4598 = vmatprep.subr.bf16.mxu0 0
  %4599 = vmatpush1.bf16.msra.mxu0 %v4578
  %4600 = vmatprep.subr.bf16.mxu0 0
  %4601 = vmatpush1.bf16.msra.mxu0 %v4579
  %4602 = vmatprep.subr.bf16.mxu0 0
  %4603 = vmatpush1.bf16.msra.mxu0 %v4580
  %4604 = vmatprep.subr.bf16.mxu0 0
  %4605 = vmatpush1.bf16.msra.mxu0 %v4581
  %4606 = vmatprep.subr.bf16.mxu0 0
  %4607 = vmatpush1.bf16.msra.mxu0 0
  %4608 = vmatprep.subr.bf16.mxu0 0
  %4609 = vmatpush1.bf16.msra.mxu0 0
  %4610 = vmatprep.subr.bf16.mxu0 0
  %4611 = vmatpush1.bf16.msra.mxu0 0
  %4612 = vmatprep.subr.bf16.mxu0 0
  %4613 = vmatpush1.bf16.msra.mxu0 0
  %4614 = vmatprep.subr.bf16.mxu0 0
  %4615 = vmatpush1.bf16.msra.mxu0 0
  %4616 = vmatprep.subr.bf16.mxu0 0
  %4617 = vmatpush1.bf16.msra.mxu0 0
  %4618 = vmatprep.subr.bf16.mxu0 0
  %4619 = vmatpush1.bf16.msra.mxu0 0
  %4620 = vmatprep.subr.bf16.mxu0 0
  %4621 = vmatpush1.bf16.msra.mxu0 0
  %4622 = vmatprep.mubr.bf16.mxu0 0
  %4623 = vmatmul.mubr.bf16.gmra.mrb[0].mxu0 %v4417
  %v4624 = vpop.f32.mrb[0].mxu0
  %v4625 = vadd.f32 %v4537, %v4624
  %v4626 = vpop.f32.mrb[0].mxu0
  %v4627 = vpop.f32.mrb[0].mxu0
  %v4628 = vpop.f32.mrb[0].mxu0
  %4629 = vdwg.mxu0
  %s4630 = scalar_lea.vmem [#allocation5], 16
  %v4631 = vld [vmem:[%s4630] sm:$0xff]
  %v4632 = vpack.c.bf16 %v4631, %v4631
  %s4633 = scalar_lea.vmem %s7, 128
  %v4634 = vld [vmem:[%s4633] sm:$0xf]
  %v4635 = vld [vmem:[%s4633 + $0x4] sm:$0xf]
  %v4636 = vld [vmem:[%s4633 + $0x8] sm:$0xf]
  %v4637 = vld [vmem:[%s4633 + $0xc] sm:$0xf]
  %v4638 = vld [vmem:[%s4633 + $0x10] sm:$0xf]
  %v4639 = vld [vmem:[%s4633 + $0x14] sm:$0xf]
  %v4640 = vld [vmem:[%s4633 + $0x18] sm:$0xf]
  %v4641 = vld [vmem:[%s4633 + $0x1c] sm:$0xf]
  %v4642 = vld [vmem:[%s4633 + $0x20] sm:$0xf]
  %v4643 = vld [vmem:[%s4633 + $0x24] sm:$0xf]
  %v4644 = vld [vmem:[%s4633 + $0x28] sm:$0xf]
  %v4645 = vld [vmem:[%s4633 + $0x2c] sm:$0xf]
  %v4646 = vld [vmem:[%s4633 + $0x30] sm:$0xf]
  %v4647 = vld [vmem:[%s4633 + $0x34] sm:$0xf]
  %v4648 = vld [vmem:[%s4633 + $0x38] sm:$0xf]
  %v4649 = vld [vmem:[%s4633 + $0x3c] sm:$0xf]
  %v4666 = vunpack.c.l.b16 %v4634
  %v4667 = vunpack.c.l.b16 %v4635
  %v4668 = vunpack.c.l.b16 %v4636
  %v4669 = vunpack.c.l.b16 %v4637
  %v4670 = vunpack.c.l.b16 %v4638
  %v4671 = vunpack.c.l.b16 %v4639
  %v4672 = vunpack.c.l.b16 %v4640
  %v4673 = vunpack.c.l.b16 %v4641
  %v4674 = vunpack.c.l.b16 %v4642
  %v4675 = vunpack.c.l.b16 %v4643
  %v4676 = vunpack.c.l.b16 %v4644
  %v4677 = vunpack.c.l.b16 %v4645
  %v4678 = vunpack.c.l.b16 %v4646
  %v4679 = vunpack.c.l.b16 %v4647
  %v4680 = vunpack.c.l.b16 %v4648
  %v4681 = vunpack.c.l.b16 %v4649
  %v4682 = vpack.c.b16 %v4667, %v4666
  %v4683 = vpack.c.b16 %v4669, %v4668
  %v4684 = vpack.c.b16 %v4671, %v4670
  %v4685 = vpack.c.b16 %v4673, %v4672
  %v4686 = vpack.c.b16 %v4675, %v4674
  %v4687 = vpack.c.b16 %v4677, %v4676
  %v4688 = vpack.c.b16 %v4679, %v4678
  %v4689 = vpack.c.b16 %v4681, %v4680
  %4698 = vmatprep.subr.bf16.mxu0 0
  %4699 = vmatpush1.bf16.msra.mxu0 %v4682
  %4700 = vmatprep.subr.bf16.mxu0 0
  %4701 = vmatpush1.bf16.msra.mxu0 %v4683
  %4702 = vmatprep.subr.bf16.mxu0 0
  %4703 = vmatpush1.bf16.msra.mxu0 %v4684
  %4704 = vmatprep.subr.bf16.mxu0 0
  %4705 = vmatpush1.bf16.msra.mxu0 %v4685
  %4706 = vmatprep.subr.bf16.mxu0 0
  %4707 = vmatpush1.bf16.msra.mxu0 %v4686
  %4708 = vmatprep.subr.bf16.mxu0 0
  %4709 = vmatpush1.bf16.msra.mxu0 %v4687
  %4710 = vmatprep.subr.bf16.mxu0 0
  %4711 = vmatpush1.bf16.msra.mxu0 %v4688
  %4712 = vmatprep.subr.bf16.mxu0 0
  %4713 = vmatpush1.bf16.msra.mxu0 %v4689
  %4714 = vmatprep.subr.bf16.mxu0 0
  %4715 = vmatpush1.bf16.msra.mxu0 0
  %4716 = vmatprep.subr.bf16.mxu0 0
  %4717 = vmatpush1.bf16.msra.mxu0 0
  %4718 = vmatprep.subr.bf16.mxu0 0
  %4719 = vmatpush1.bf16.msra.mxu0 0
  %4720 = vmatprep.subr.bf16.mxu0 0
  %4721 = vmatpush1.bf16.msra.mxu0 0
  %4722 = vmatprep.subr.bf16.mxu0 0
  %4723 = vmatpush1.bf16.msra.mxu0 0
  %4724 = vmatprep.subr.bf16.mxu0 0
  %4725 = vmatpush1.bf16.msra.mxu0 0
  %4726 = vmatprep.subr.bf16.mxu0 0
  %4727 = vmatpush1.bf16.msra.mxu0 0
  %4728 = vmatprep.subr.bf16.mxu0 0
  %4729 = vmatpush1.bf16.msra.mxu0 0
  %4730 = vmatprep.mubr.bf16.mxu0 0
  %4731 = vmatmul.mubr.bf16.gmra.mrb[0].mxu0 %v4632
  %v4732 = vpop.f32.mrb[0].mxu0
  %v4733 = vadd.f32 0.0, %v4732
  %v4734 = vpop.f32.mrb[0].mxu0
  %v4735 = vpop.f32.mrb[0].mxu0
  %v4736 = vpop.f32.mrb[0].mxu0
  %4737 = vdwg.mxu0
  %v4738 = vadd.f32 %v4625, %v4733
  %s4739 = scalar_lea.vmem [#allocation5], 24
  %v4740 = vld [vmem:[%s4739] sm:$0xff]
  %v4741 = vpack.c.bf16 %v4740, %v4740
  %s4742 = scalar_lea.vmem %s7, 192
  %v4743 = vld [vmem:[%s4742] sm:$0xf]
  %v4744 = vld [vmem:[%s4742 + $0x4] sm:$0xf]
  %v4745 = vld [vmem:[%s4742 + $0x8] sm:$0xf]
  %v4746 = vld [vmem:[%s4742 + $0xc] sm:$0xf]
  %v4747 = vld [vmem:[%s4742 + $0x10] sm:$0xf]
  %v4748 = vld [vmem:[%s4742 + $0x14] sm:$0xf]
  %v4749 = vld [vmem:[%s4742 + $0x18] sm:$0xf]
  %v4750 = vld [vmem:[%s4742 + $0x1c] sm:$0xf]
  %v4751 = vld [vmem:[%s4742 + $0x20] sm:$0xf]
  %v4752 = vld [vmem:[%s4742 + $0x24] sm:$0xf]
  %v4753 = vld [vmem:[%s4742 + $0x28] sm:$0xf]
  %v4754 = vld [vmem:[%s4742 + $0x2c] sm:$0xf]
  %v4755 = vld [vmem:[%s4742 + $0x30] sm:$0xf]
  %v4756 = vld [vmem:[%s4742 + $0x34] sm:$0xf]
  %v4757 = vld [vmem:[%s4742 + $0x38] sm:$0xf]
  %v4758 = vld [vmem:[%s4742 + $0x3c] sm:$0xf]
  %v4775 = vunpack.c.l.b16 %v4743
  %v4776 = vunpack.c.l.b16 %v4744
  %v4777 = vunpack.c.l.b16 %v4745
  %v4778 = vunpack.c.l.b16 %v4746
  %v4779 = vunpack.c.l.b16 %v4747
  %v4780 = vunpack.c.l.b16 %v4748
  %v4781 = vunpack.c.l.b16 %v4749
  %v4782 = vunpack.c.l.b16 %v4750
  %v4783 = vunpack.c.l.b16 %v4751
  %v4784 = vunpack.c.l.b16 %v4752
  %v4785 = vunpack.c.l.b16 %v4753
  %v4786 = vunpack.c.l.b16 %v4754
  %v4787 = vunpack.c.l.b16 %v4755
  %v4788 = vunpack.c.l.b16 %v4756
  %v4789 = vunpack.c.l.b16 %v4757
  %v4790 = vunpack.c.l.b16 %v4758
  %v4791 = vpack.c.b16 %v4776, %v4775
  %v4792 = vpack.c.b16 %v4778, %v4777
  %v4793 = vpack.c.b16 %v4780, %v4779
  %v4794 = vpack.c.b16 %v4782, %v4781
  %v4795 = vpack.c.b16 %v4784, %v4783
  %v4796 = vpack.c.b16 %v4786, %v4785
  %v4797 = vpack.c.b16 %v4788, %v4787
  %v4798 = vpack.c.b16 %v4790, %v4789
  %4807 = vmatprep.subr.bf16.mxu0 0
  %4808 = vmatpush1.bf16.msra.mxu0 %v4791
  %4809 = vmatprep.subr.bf16.mxu0 0
  %4810 = vmatpush1.bf16.msra.mxu0 %v4792
  %4811 = vmatprep.subr.bf16.mxu0 0
  %4812 = vmatpush1.bf16.msra.mxu0 %v4793
  %4813 = vmatprep.subr.bf16.mxu0 0
  %4814 = vmatpush1.bf16.msra.mxu0 %v4794
  %4815 = vmatprep.subr.bf16.mxu0 0
  %4816 = vmatpush1.bf16.msra.mxu0 %v4795
  %4817 = vmatprep.subr.bf16.mxu0 0
  %4818 = vmatpush1.bf16.msra.mxu0 %v4796
  %4819 = vmatprep.subr.bf16.mxu0 0
  %4820 = vmatpush1.bf16.msra.mxu0 %v4797
  %4821 = vmatprep.subr.bf16.mxu0 0
  %4822 = vmatpush1.bf16.msra.mxu0 %v4798
  %4823 = vmatprep.subr.bf16.mxu0 0
  %4824 = vmatpush1.bf16.msra.mxu0 0
  %4825 = vmatprep.subr.bf16.mxu0 0
  %4826 = vmatpush1.bf16.msra.mxu0 0
  %4827 = vmatprep.subr.bf16.mxu0 0
  %4828 = vmatpush1.bf16.msra.mxu0 0
  %4829 = vmatprep.subr.bf16.mxu0 0
  %4830 = vmatpush1.bf16.msra.mxu0 0
  %4831 = vmatprep.subr.bf16.mxu0 0
  %4832 = vmatpush1.bf16.msra.mxu0 0
  %4833 = vmatprep.subr.bf16.mxu0 0
  %4834 = vmatpush1.bf16.msra.mxu0 0
  %4835 = vmatprep.subr.bf16.mxu0 0
  %4836 = vmatpush1.bf16.msra.mxu0 0
  %4837 = vmatprep.subr.bf16.mxu0 0
  %4838 = vmatpush1.bf16.msra.mxu0 0
  %4839 = vmatprep.mubr.bf16.mxu0 0
  %4840 = vmatmul.mubr.bf16.gmra.mrb[0].mxu0 %v4741
  %v4841 = vpop.f32.mrb[0].mxu0
  %v4842 = vadd.f32 0.0, %v4841
  %v4843 = vpop.f32.mrb[0].mxu0
  %v4844 = vpop.f32.mrb[0].mxu0
  %v4845 = vpop.f32.mrb[0].mxu0
  %4846 = vdwg.mxu0
  %v4847 = vadd.f32 %v4738, %v4842
  %s4848 = scalar_lea.vmem [#allocation5], 32
  %v4849 = vld [vmem:[%s4848] sm:$0xff]
  %v4850 = vpack.c.bf16 %v4849, %v4849
  %s4851 = scalar_lea.vmem %s7, 256
  %v4852 = vld [vmem:[%s4851] sm:$0xf]
  %v4853 = vld [vmem:[%s4851 + $0x4] sm:$0xf]
  %v4854 = vld [vmem:[%s4851 + $0x8] sm:$0xf]
  %v4855 = vld [vmem:[%s4851 + $0xc] sm:$0xf]
  %v4856 = vld [vmem:[%s4851 + $0x10] sm:$0xf]
  %v4857 = vld [vmem:[%s4851 + $0x14] sm:$0xf]
  %v4858 = vld [vmem:[%s4851 + $0x18] sm:$0xf]
  %v4859 = vld [vmem:[%s4851 + $0x1c] sm:$0xf]
  %v4860 = vld [vmem:[%s4851 + $0x20] sm:$0xf]
  %v4861 = vld [vmem:[%s4851 + $0x24] sm:$0xf]
  %v4862 = vld [vmem:[%s4851 + $0x28] sm:$0xf]
  %v4863 = vld [vmem:[%s4851 + $0x2c] sm:$0xf]
  %v4864 = vld [vmem:[%s4851 + $0x30] sm:$0xf]
  %v4865 = vld [vmem:[%s4851 + $0x34] sm:$0xf]
  %v4866 = vld [vmem:[%s4851 + $0x38] sm:$0xf]
  %v4867 = vld [vmem:[%s4851 + $0x3c] sm:$0xf]
  %v4884 = vunpack.c.l.b16 %v4852
  %v4885 = vunpack.c.l.b16 %v4853
  %v4886 = vunpack.c.l.b16 %v4854
  %v4887 = vunpack.c.l.b16 %v4855
  %v4888 = vunpack.c.l.b16 %v4856
  %v4889 = vunpack.c.l.b16 %v4857
  %v4890 = vunpack.c.l.b16 %v4858
  %v4891 = vunpack.c.l.b16 %v4859
  %v4892 = vunpack.c.l.b16 %v4860
  %v4893 = vunpack.c.l.b16 %v4861
  %v4894 = vunpack.c.l.b16 %v4862
  %v4895 = vunpack.c.l.b16 %v4863
  %v4896 = vunpack.c.l.b16 %v4864
  %v4897 = vunpack.c.l.b16 %v4865
  %v4898 = vunpack.c.l.b16 %v4866
  %v4899 = vunpack.c.l.b16 %v4867
  %v4900 = vpack.c.b16 %v4885, %v4884
  %v4901 = vpack.c.b16 %v4887, %v4886
  %v4902 = vpack.c.b16 %v4889, %v4888
  %v4903 = vpack.c.b16 %v4891, %v4890
  %v4904 = vpack.c.b16 %v4893, %v4892
  %v4905 = vpack.c.b16 %v4895, %v4894
  %v4906 = vpack.c.b16 %v4897, %v4896
  %v4907 = vpack.c.b16 %v4899, %v4898
  %4916 = vmatprep.subr.bf16.mxu0 0
  %4917 = vmatpush1.bf16.msra.mxu0 %v4900
  %4918 = vmatprep.subr.bf16.mxu0 0
  %4919 = vmatpush1.bf16.msra.mxu0 %v4901
  %4920 = vmatprep.subr.bf16.mxu0 0
  %4921 = vmatpush1.bf16.msra.mxu0 %v4902
  %4922 = vmatprep.subr.bf16.mxu0 0
  %4923 = vmatpush1.bf16.msra.mxu0 %v4903
  %4924 = vmatprep.subr.bf16.mxu0 0
  %4925 = vmatpush1.bf16.msra.mxu0 %v4904
  %4926 = vmatprep.subr.bf16.mxu0 0
  %4927 = vmatpush1.bf16.msra.mxu0 %v4905
  %4928 = vmatprep.subr.bf16.mxu0 0
  %4929 = vmatpush1.bf16.msra.mxu0 %v4906
  %4930 = vmatprep.subr.bf16.mxu0 0
  %4931 = vmatpush1.bf16.msra.mxu0 %v4907
  %4932 = vmatprep.subr.bf16.mxu0 0
  %4933 = vmatpush1.bf16.msra.mxu0 0
  %4934 = vmatprep.subr.bf16.mxu0 0
  %4935 = vmatpush1.bf16.msra.mxu0 0
  %4936 = vmatprep.subr.bf16.mxu0 0
  %4937 = vmatpush1.bf16.msra.mxu0 0
  %4938 = vmatprep.subr.bf16.mxu0 0
  %4939 = vmatpush1.bf16.msra.mxu0 0
  %4940 = vmatprep.subr.bf16.mxu0 0
  %4941 = vmatpush1.bf16.msra.mxu0 0
  %4942 = vmatprep.subr.bf16.mxu0 0
  %4943 = vmatpush1.bf16.msra.mxu0 0
  %4944 = vmatprep.subr.bf16.mxu0 0
  %4945 = vmatpush1.bf16.msra.mxu0 0
  %4946 = vmatprep.subr.bf16.mxu0 0
  %4947 = vmatpush1.bf16.msra.mxu0 0
  %4948 = vmatprep.mubr.bf16.mxu0 0
  %4949 = vmatmul.mubr.bf16.gmra.mrb[0].mxu0 %v4850
  %v4950 = vpop.f32.mrb[0].mxu0
  %v4951 = vadd.f32 0.0, %v4950
  %v4952 = vpop.f32.mrb[0].mxu0
  %v4953 = vpop.f32.mrb[0].mxu0
  %v4954 = vpop.f32.mrb[0].mxu0
  %4955 = vdwg.mxu0
  %v4956 = vadd.f32 %v4847, %v4951
  %s4957 = scalar_lea.vmem [#allocation5], 40
  %v4958 = vld [vmem:[%s4957] sm:$0xff]
  %v4959 = vpack.c.bf16 %v4958, %v4958
  %s4960 = scalar_lea.vmem %s7, 320
  %v4961 = vld [vmem:[%s4960] sm:$0xf]
  %v4962 = vld [vmem:[%s4960 + $0x4] sm:$0xf]
  %v4963 = vld [vmem:[%s4960 + $0x8] sm:$0xf]
  %v4964 = vld [vmem:[%s4960 + $0xc] sm:$0xf]
  %v4965 = vld [vmem:[%s4960 + $0x10] sm:$0xf]
  %v4966 = vld [vmem:[%s4960 + $0x14] sm:$0xf]
  %v4967 = vld [vmem:[%s4960 + $0x18] sm:$0xf]
  %v4968 = vld [vmem:[%s4960 + $0x1c] sm:$0xf]
  %v4969 = vld [vmem:[%s4960 + $0x20] sm:$0xf]
  %v4970 = vld [vmem:[%s4960 + $0x24] sm:$0xf]
  %v4971 = vld [vmem:[%s4960 + $0x28] sm:$0xf]
  %v4972 = vld [vmem:[%s4960 + $0x2c] sm:$0xf]
  %v4973 = vld [vmem:[%s4960 + $0x30] sm:$0xf]
  %v4974 = vld [vmem:[%s4960 + $0x34] sm:$0xf]
  %v4975 = vld [vmem:[%s4960 + $0x38] sm:$0xf]
  %v4976 = vld [vmem:[%s4960 + $0x3c] sm:$0xf]
  %v4993 = vunpack.c.l.b16 %v4961
  %v4994 = vunpack.c.l.b16 %v4962
  %v4995 = vunpack.c.l.b16 %v4963
  %v4996 = vunpack.c.l.b16 %v4964
  %v4997 = vunpack.c.l.b16 %v4965
  %v4998 = vunpack.c.l.b16 %v4966
  %v4999 = vunpack.c.l.b16 %v4967
  %v5000 = vunpack.c.l.b16 %v4968
  %v5001 = vunpack.c.l.b16 %v4969
  %v5002 = vunpack.c.l.b16 %v4970
  %v5003 = vunpack.c.l.b16 %v4971
  %v5004 = vunpack.c.l.b16 %v4972
  %v5005 = vunpack.c.l.b16 %v4973
  %v5006 = vunpack.c.l.b16 %v4974
  %v5007 = vunpack.c.l.b16 %v4975
  %v5008 = vunpack.c.l.b16 %v4976
  %v5009 = vpack.c.b16 %v4994, %v4993
  %v5010 = vpack.c.b16 %v4996, %v4995
  %v5011 = vpack.c.b16 %v4998, %v4997
  %v5012 = vpack.c.b16 %v5000, %v4999
  %v5013 = vpack.c.b16 %v5002, %v5001
  %v5014 = vpack.c.b16 %v5004, %v5003
  %v5015 = vpack.c.b16 %v5006, %v5005
  %v5016 = vpack.c.b16 %v5008, %v5007
  %5025 = vmatprep.subr.bf16.mxu0 0
  %5026 = vmatpush1.bf16.msra.mxu0 %v5009
  %5027 = vmatprep.subr.bf16.mxu0 0
  %5028 = vmatpush1.bf16.msra.mxu0 %v5010
  %5029 = vmatprep.subr.bf16.mxu0 0
  %5030 = vmatpush1.bf16.msra.mxu0 %v5011
  %5031 = vmatprep.subr.bf16.mxu0 0
  %5032 = vmatpush1.bf16.msra.mxu0 %v5012
  %5033 = vmatprep.subr.bf16.mxu0 0
  %5034 = vmatpush1.bf16.msra.mxu0 %v5013
  %5035 = vmatprep.subr.bf16.mxu0 0
  %5036 = vmatpush1.bf16.msra.mxu0 %v5014
  %5037 = vmatprep.subr.bf16.mxu0 0
  %5038 = vmatpush1.bf16.msra.mxu0 %v5015
  %5039 = vmatprep.subr.bf16.mxu0 0
  %5040 = vmatpush1.bf16.msra.mxu0 %v5016
  %5041 = vmatprep.subr.bf16.mxu0 0
  %5042 = vmatpush1.bf16.msra.mxu0 0
  %5043 = vmatprep.subr.bf16.mxu0 0
  %5044 = vmatpush1.bf16.msra.mxu0 0
  %5045 = vmatprep.subr.bf16.mxu0 0
  %5046 = vmatpush1.bf16.msra.mxu0 0
  %5047 = vmatprep.subr.bf16.mxu0 0
  %5048 = vmatpush1.bf16.msra.mxu0 0
  %5049 = vmatprep.subr.bf16.mxu0 0
  %5050 = vmatpush1.bf16.msra.mxu0 0
  %5051 = vmatprep.subr.bf16.mxu0 0
  %5052 = vmatpush1.bf16.msra.mxu0 0
  %5053 = vmatprep.subr.bf16.mxu0 0
  %5054 = vmatpush1.bf16.msra.mxu0 0
  %5055 = vmatprep.subr.bf16.mxu0 0
  %5056 = vmatpush1.bf16.msra.mxu0 0
  %5057 = vmatprep.mubr.bf16.mxu0 0
  %5058 = vmatmul.mubr.bf16.gmra.mrb[0].mxu0 %v4959
  %v5059 = vpop.f32.mrb[0].mxu0
  %v5060 = vadd.f32 0.0, %v5059
  %v5061 = vpop.f32.mrb[0].mxu0
  %v5062 = vpop.f32.mrb[0].mxu0
  %v5063 = vpop.f32.mrb[0].mxu0
  %5064 = vdwg.mxu0
  %v5065 = vadd.f32 %v4956, %v5060
  %s5066 = scalar_lea.vmem [#allocation5], 48
  %v5067 = vld [vmem:[%s5066] sm:$0xff]
  %v5068 = vpack.c.bf16 %v5067, %v5067
  %s5069 = scalar_lea.vmem %s7, 384
  %v5070 = vld [vmem:[%s5069] sm:$0xf]
  %v5071 = vld [vmem:[%s5069 + $0x4] sm:$0xf]
  %v5072 = vld [vmem:[%s5069 + $0x8] sm:$0xf]
  %v5073 = vld [vmem:[%s5069 + $0xc] sm:$0xf]
  %v5074 = vld [vmem:[%s5069 + $0x10] sm:$0xf]
  %v5075 = vld [vmem:[%s5069 + $0x14] sm:$0xf]
  %v5076 = vld [vmem:[%s5069 + $0x18] sm:$0xf]
  %v5077 = vld [vmem:[%s5069 + $0x1c] sm:$0xf]
  %v5078 = vld [vmem:[%s5069 + $0x20] sm:$0xf]
  %v5079 = vld [vmem:[%s5069 + $0x24] sm:$0xf]
  %v5080 = vld [vmem:[%s5069 + $0x28] sm:$0xf]
  %v5081 = vld [vmem:[%s5069 + $0x2c] sm:$0xf]
  %v5082 = vld [vmem:[%s5069 + $0x30] sm:$0xf]
  %v5083 = vld [vmem:[%s5069 + $0x34] sm:$0xf]
  %v5084 = vld [vmem:[%s5069 + $0x38] sm:$0xf]
  %v5085 = vld [vmem:[%s5069 + $0x3c] sm:$0xf]
  %v5102 = vunpack.c.l.b16 %v5070
  %v5103 = vunpack.c.l.b16 %v5071
  %v5104 = vunpack.c.l.b16 %v5072
  %v5105 = vunpack.c.l.b16 %v5073
  %v5106 = vunpack.c.l.b16 %v5074
  %v5107 = vunpack.c.l.b16 %v5075
  %v5108 = vunpack.c.l.b16 %v5076
  %v5109 = vunpack.c.l.b16 %v5077
  %v5110 = vunpack.c.l.b16 %v5078
  %v5111 = vunpack.c.l.b16 %v5079
  %v5112 = vunpack.c.l.b16 %v5080
  %v5113 = vunpack.c.l.b16 %v5081
  %v5114 = vunpack.c.l.b16 %v5082
  %v5115 = vunpack.c.l.b16 %v5083
  %v5116 = vunpack.c.l.b16 %v5084
  %v5117 = vunpack.c.l.b16 %v5085
  %v5118 = vpack.c.b16 %v5103, %v5102
  %v5119 = vpack.c.b16 %v5105, %v5104
  %v5120 = vpack.c.b16 %v5107, %v5106
  %v5121 = vpack.c.b16 %v5109, %v5108
  %v5122 = vpack.c.b16 %v5111, %v5110
  %v5123 = vpack.c.b16 %v5113, %v5112
  %v5124 = vpack.c.b16 %v5115, %v5114
  %v5125 = vpack.c.b16 %v5117, %v5116
  %5134 = vmatprep.subr.bf16.mxu0 0
  %5135 = vmatpush1.bf16.msra.mxu0 %v5118
  %5136 = vmatprep.subr.bf16.mxu0 0
  %5137 = vmatpush1.bf16.msra.mxu0 %v5119
  %5138 = vmatprep.subr.bf16.mxu0 0
  %5139 = vmatpush1.bf16.msra.mxu0 %v5120
  %5140 = vmatprep.subr.bf16.mxu0 0
  %5141 = vmatpush1.bf16.msra.mxu0 %v5121
  %5142 = vmatprep.subr.bf16.mxu0 0
  %5143 = vmatpush1.bf16.msra.mxu0 %v5122
  %5144 = vmatprep.subr.bf16.mxu0 0
  %5145 = vmatpush1.bf16.msra.mxu0 %v5123
  %5146 = vmatprep.subr.bf16.mxu0 0
  %5147 = vmatpush1.bf16.msra.mxu0 %v5124
  %5148 = vmatprep.subr.bf16.mxu0 0
  %5149 = vmatpush1.bf16.msra.mxu0 %v5125
  %5150 = vmatprep.subr.bf16.mxu0 0
  %5151 = vmatpush1.bf16.msra.mxu0 0
  %5152 = vmatprep.subr.bf16.mxu0 0
  %5153 = vmatpush1.bf16.msra.mxu0 0
  %5154 = vmatprep.subr.bf16.mxu0 0
  %5155 = vmatpush1.bf16.msra.mxu0 0
  %5156 = vmatprep.subr.bf16.mxu0 0
  %5157 = vmatpush1.bf16.msra.mxu0 0
  %5158 = vmatprep.subr.bf16.mxu0 0
  %5159 = vmatpush1.bf16.msra.mxu0 0
  %5160 = vmatprep.subr.bf16.mxu0 0
  %5161 = vmatpush1.bf16.msra.mxu0 0
  %5162 = vmatprep.subr.bf16.mxu0 0
  %5163 = vmatpush1.bf16.msra.mxu0 0
  %5164 = vmatprep.subr.bf16.mxu0 0
  %5165 = vmatpush1.bf16.msra.mxu0 0
  %5166 = vmatprep.mubr.bf16.mxu0 0
  %5167 = vmatmul.mubr.bf16.gmra.mrb[0].mxu0 %v5068
  %v5168 = vpop.f32.mrb[0].mxu0
  %v5169 = vadd.f32 0.0, %v5168
  %v5170 = vpop.f32.mrb[0].mxu0
  %v5171 = vpop.f32.mrb[0].mxu0
  %v5172 = vpop.f32.mrb[0].mxu0
  %5173 = vdwg.mxu0
  %v5174 = vadd.f32 %v5065, %v5169
  %s5175 = scalar_lea.vmem [#allocation5], 56
  %v5176 = vld [vmem:[%s5175] sm:$0xff]
  %v5177 = vpack.c.bf16 %v5176, %v5176
  %s5178 = scalar_lea.vmem %s7, 448
  %v5179 = vld [vmem:[%s5178] sm:$0xf]
  %v5180 = vld [vmem:[%s5178 + $0x4] sm:$0xf]
  %v5181 = vld [vmem:[%s5178 + $0x8] sm:$0xf]
  %v5182 = vld [vmem:[%s5178 + $0xc] sm:$0xf]
  %v5183 = vld [vmem:[%s5178 + $0x10] sm:$0xf]
  %v5184 = vld [vmem:[%s5178 + $0x14] sm:$0xf]
  %v5185 = vld [vmem:[%s5178 + $0x18] sm:$0xf]
  %v5186 = vld [vmem:[%s5178 + $0x1c] sm:$0xf]
  %v5187 = vld [vmem:[%s5178 + $0x20] sm:$0xf]
  %v5188 = vld [vmem:[%s5178 + $0x24] sm:$0xf]
  %v5189 = vld [vmem:[%s5178 + $0x28] sm:$0xf]
  %v5190 = vld [vmem:[%s5178 + $0x2c] sm:$0xf]
  %v5191 = vld [vmem:[%s5178 + $0x30] sm:$0xf]
  %v5192 = vld [vmem:[%s5178 + $0x34] sm:$0xf]
  %v5193 = vld [vmem:[%s5178 + $0x38] sm:$0xf]
  %v5194 = vld [vmem:[%s5178 + $0x3c] sm:$0xf]
  %v5211 = vunpack.c.l.b16 %v5179
  %v5212 = vunpack.c.l.b16 %v5180
  %v5213 = vunpack.c.l.b16 %v5181
  %v5214 = vunpack.c.l.b16 %v5182
  %v5215 = vunpack.c.l.b16 %v5183
  %v5216 = vunpack.c.l.b16 %v5184
  %v5217 = vunpack.c.l.b16 %v5185
  %v5218 = vunpack.c.l.b16 %v5186
  %v5219 = vunpack.c.l.b16 %v5187
  %v5220 = vunpack.c.l.b16 %v5188
  %v5221 = vunpack.c.l.b16 %v5189
  %v5222 = vunpack.c.l.b16 %v5190
  %v5223 = vunpack.c.l.b16 %v5191
  %v5224 = vunpack.c.l.b16 %v5192
  %v5225 = vunpack.c.l.b16 %v5193
  %v5226 = vunpack.c.l.b16 %v5194
  %v5227 = vpack.c.b16 %v5212, %v5211
  %v5228 = vpack.c.b16 %v5214, %v5213
  %v5229 = vpack.c.b16 %v5216, %v5215
  %v5230 = vpack.c.b16 %v5218, %v5217
  %v5231 = vpack.c.b16 %v5220, %v5219
  %v5232 = vpack.c.b16 %v5222, %v5221
  %v5233 = vpack.c.b16 %v5224, %v5223
  %v5234 = vpack.c.b16 %v5226, %v5225
  %5243 = vmatprep.subr.bf16.mxu0 0
  %5244 = vmatpush1.bf16.msra.mxu0 %v5227
  %5245 = vmatprep.subr.bf16.mxu0 0
  %5246 = vmatpush1.bf16.msra.mxu0 %v5228
  %5247 = vmatprep.subr.bf16.mxu0 0
  %5248 = vmatpush1.bf16.msra.mxu0 %v5229
  %5249 = vmatprep.subr.bf16.mxu0 0
  %5250 = vmatpush1.bf16.msra.mxu0 %v5230
  %5251 = vmatprep.subr.bf16.mxu0 0
  %5252 = vmatpush1.bf16.msra.mxu0 %v5231
  %5253 = vmatprep.subr.bf16.mxu0 0
  %5254 = vmatpush1.bf16.msra.mxu0 %v5232
  %5255 = vmatprep.subr.bf16.mxu0 0
  %5256 = vmatpush1.bf16.msra.mxu0 %v5233
  %5257 = vmatprep.subr.bf16.mxu0 0
  %5258 = vmatpush1.bf16.msra.mxu0 %v5234
  %5259 = vmatprep.subr.bf16.mxu0 0
  %5260 = vmatpush1.bf16.msra.mxu0 0
  %5261 = vmatprep.subr.bf16.mxu0 0
  %5262 = vmatpush1.bf16.msra.mxu0 0
  %5263 = vmatprep.subr.bf16.mxu0 0
  %5264 = vmatpush1.bf16.msra.mxu0 0
  %5265 = vmatprep.subr.bf16.mxu0 0
  %5266 = vmatpush1.bf16.msra.mxu0 0
  %5267 = vmatprep.subr.bf16.mxu0 0
  %5268 = vmatpush1.bf16.msra.mxu0 0
  %5269 = vmatprep.subr.bf16.mxu0 0
  %5270 = vmatpush1.bf16.msra.mxu0 0
  %5271 = vmatprep.subr.bf16.mxu0 0
  %5272 = vmatpush1.bf16.msra.mxu0 0
  %5273 = vmatprep.subr.bf16.mxu0 0
  %5274 = vmatpush1.bf16.msra.mxu0 0
  %5275 = vmatprep.mubr.bf16.mxu0 0
  %5276 = vmatmul.mubr.bf16.gmra.mrb[0].mxu0 %v5177
  %v5277 = vpop.f32.mrb[0].mxu0
  %v5278 = vadd.f32 0.0, %v5277
  %v5279 = vpop.f32.mrb[0].mxu0
  %v5280 = vpop.f32.mrb[0].mxu0
  %v5281 = vpop.f32.mrb[0].mxu0
  %5282 = vdwg.mxu0
  %v5283 = vadd.f32 %v5174, %v5278
  %s5284 = scalar_lea.vmem [#allocation5], 64
  %v5285 = vld [vmem:[%s5284] sm:$0xff]
  %v5286 = vpack.c.bf16 %v5285, %v5285
  %s5287 = scalar_lea.vmem %s7, 512
  %v5288 = vld [vmem:[%s5287] sm:$0xf]
  %v5289 = vld [vmem:[%s5287 + $0x4] sm:$0xf]
  %v5290 = vld [vmem:[%s5287 + $0x8] sm:$0xf]
  %v5291 = vld [vmem:[%s5287 + $0xc] sm:$0xf]
  %v5292 = vld [vmem:[%s5287 + $0x10] sm:$0xf]
  %v5293 = vld [vmem:[%s5287 + $0x14] sm:$0xf]
  %v5294 = vld [vmem:[%s5287 + $0x18] sm:$0xf]
  %v5295 = vld [vmem:[%s5287 + $0x1c] sm:$0xf]
  %v5296 = vld [vmem:[%s5287 + $0x20] sm:$0xf]
  %v5297 = vld [vmem:[%s5287 + $0x24] sm:$0xf]
  %v5298 = vld [vmem:[%s5287 + $0x28] sm:$0xf]
  %v5299 = vld [vmem:[%s5287 + $0x2c] sm:$0xf]
  %v5300 = vld [vmem:[%s5287 + $0x30] sm:$0xf]
  %v5301 = vld [vmem:[%s5287 + $0x34] sm:$0xf]
  %v5302 = vld [vmem:[%s5287 + $0x38] sm:$0xf]
  %v5303 = vld [vmem:[%s5287 + $0x3c] sm:$0xf]
  %v5320 = vunpack.c.l.b16 %v5288
  %v5321 = vunpack.c.l.b16 %v5289
  %v5322 = vunpack.c.l.b16 %v5290
  %v5323 = vunpack.c.l.b16 %v5291
  %v5324 = vunpack.c.l.b16 %v5292
  %v5325 = vunpack.c.l.b16 %v5293
  %v5326 = vunpack.c.l.b16 %v5294
  %v5327 = vunpack.c.l.b16 %v5295
  %v5328 = vunpack.c.l.b16 %v5296
  %v5329 = vunpack.c.l.b16 %v5297
  %v5330 = vunpack.c.l.b16 %v5298
  %v5331 = vunpack.c.l.b16 %v5299
  %v5332 = vunpack.c.l.b16 %v5300
  %v5333 = vunpack.c.l.b16 %v5301
  %v5334 = vunpack.c.l.b16 %v5302
  %v5335 = vunpack.c.l.b16 %v5303
  %v5336 = vpack.c.b16 %v5321, %v5320
  %v5337 = vpack.c.b16 %v5323, %v5322
  %v5338 = vpack.c.b16 %v5325, %v5324
  %v5339 = vpack.c.b16 %v5327, %v5326
  %v5340 = vpack.c.b16 %v5329, %v5328
  %v5341 = vpack.c.b16 %v5331, %v5330
  %v5342 = vpack.c.b16 %v5333, %v5332
  %v5343 = vpack.c.b16 %v5335, %v5334
  %5352 = vmatprep.subr.bf16.mxu0 0
  %5353 = vmatpush1.bf16.msra.mxu0 %v5336
  %5354 = vmatprep.subr.bf16.mxu0 0
  %5355 = vmatpush1.bf16.msra.mxu0 %v5337
  %5356 = vmatprep.subr.bf16.mxu0 0
  %5357 = vmatpush1.bf16.msra.mxu0 %v5338
  %5358 = vmatprep.subr.bf16.mxu0 0
  %5359 = vmatpush1.bf16.msra.mxu0 %v5339
  %5360 = vmatprep.subr.bf16.mxu0 0
  %5361 = vmatpush1.bf16.msra.mxu0 %v5340
  %5362 = vmatprep.subr.bf16.mxu0 0
  %5363 = vmatpush1.bf16.msra.mxu0 %v5341
  %5364 = vmatprep.subr.bf16.mxu0 0
  %5365 = vmatpush1.bf16.msra.mxu0 %v5342
  %5366 = vmatprep.subr.bf16.mxu0 0
  %5367 = vmatpush1.bf16.msra.mxu0 %v5343
  %5368 = vmatprep.subr.bf16.mxu0 0
  %5369 = vmatpush1.bf16.msra.mxu0 0
  %5370 = vmatprep.subr.bf16.mxu0 0
  %5371 = vmatpush1.bf16.msra.mxu0 0
  %5372 = vmatprep.subr.bf16.mxu0 0
  %5373 = vmatpush1.bf16.msra.mxu0 0
  %5374 = vmatprep.subr.bf16.mxu0 0
  %5375 = vmatpush1.bf16.msra.mxu0 0
  %5376 = vmatprep.subr.bf16.mxu0 0
  %5377 = vmatpush1.bf16.msra.mxu0 0
  %5378 = vmatprep.subr.bf16.mxu0 0
  %5379 = vmatpush1.bf16.msra.mxu0 0
  %5380 = vmatprep.subr.bf16.mxu0 0
  %5381 = vmatpush1.bf16.msra.mxu0 0
  %5382 = vmatprep.subr.bf16.mxu0 0
  %5383 = vmatpush1.bf16.msra.mxu0 0
  %5384 = vmatprep.mubr.bf16.mxu0 0
  %5385 = vmatmul.mubr.bf16.gmra.mrb[0].mxu0 %v5286
  %v5386 = vpop.f32.mrb[0].mxu0
  %v5387 = vadd.f32 0.0, %v5386
  %v5388 = vpop.f32.mrb[0].mxu0
  %v5389 = vpop.f32.mrb[0].mxu0
  %v5390 = vpop.f32.mrb[0].mxu0
  %5391 = vdwg.mxu0
  %v5392 = vadd.f32 %v5283, %v5387
  %s5393 = scalar_lea.vmem [#allocation5], 72
  %v5394 = vld [vmem:[%s5393] sm:$0xff]
  %v5395 = vpack.c.bf16 %v5394, %v5394
  %s5396 = scalar_lea.vmem %s7, 576
  %v5397 = vld [vmem:[%s5396] sm:$0xf]
  %v5398 = vld [vmem:[%s5396 + $0x4] sm:$0xf]
  %v5399 = vld [vmem:[%s5396 + $0x8] sm:$0xf]
  %v5400 = vld [vmem:[%s5396 + $0xc] sm:$0xf]
  %v5401 = vld [vmem:[%s5396 + $0x10] sm:$0xf]
  %v5402 = vld [vmem:[%s5396 + $0x14] sm:$0xf]
  %v5403 = vld [vmem:[%s5396 + $0x18] sm:$0xf]
  %v5404 = vld [vmem:[%s5396 + $0x1c] sm:$0xf]
  %v5405 = vld [vmem:[%s5396 + $0x20] sm:$0xf]
  %v5406 = vld [vmem:[%s5396 + $0x24] sm:$0xf]
  %v5407 = vld [vmem:[%s5396 + $0x28] sm:$0xf]
  %v5408 = vld [vmem:[%s5396 + $0x2c] sm:$0xf]
  %v5409 = vld [vmem:[%s5396 + $0x30] sm:$0xf]
  %v5410 = vld [vmem:[%s5396 + $0x34] sm:$0xf]
  %v5411 = vld [vmem:[%s5396 + $0x38] sm:$0xf]
  %v5412 = vld [vmem:[%s5396 + $0x3c] sm:$0xf]
  %v5429 = vunpack.c.l.b16 %v5397
  %v5430 = vunpack.c.l.b16 %v5398
  %v5431 = vunpack.c.l.b16 %v5399
  %v5432 = vunpack.c.l.b16 %v5400
  %v5433 = vunpack.c.l.b16 %v5401
  %v5434 = vunpack.c.l.b16 %v5402
  %v5435 = vunpack.c.l.b16 %v5403
  %v5436 = vunpack.c.l.b16 %v5404
  %v5437 = vunpack.c.l.b16 %v5405
  %v5438 = vunpack.c.l.b16 %v5406
  %v5439 = vunpack.c.l.b16 %v5407
  %v5440 = vunpack.c.l.b16 %v5408
  %v5441 = vunpack.c.l.b16 %v5409
  %v5442 = vunpack.c.l.b16 %v5410
  %v5443 = vunpack.c.l.b16 %v5411
  %v5444 = vunpack.c.l.b16 %v5412
  %v5445 = vpack.c.b16 %v5430, %v5429
  %v5446 = vpack.c.b16 %v5432, %v5431
  %v5447 = vpack.c.b16 %v5434, %v5433
  %v5448 = vpack.c.b16 %v5436, %v5435
  %v5449 = vpack.c.b16 %v5438, %v5437
  %v5450 = vpack.c.b16 %v5440, %v5439
  %v5451 = vpack.c.b16 %v5442, %v5441
  %v5452 = vpack.c.b16 %v5444, %v5443
  %5461 = vmatprep.subr.bf16.mxu0 0
  %5462 = vmatpush1.bf16.msra.mxu0 %v5445
  %5463 = vmatprep.subr.bf16.mxu0 0
  %5464 = vmatpush1.bf16.msra.mxu0 %v5446
  %5465 = vmatprep.subr.bf16.mxu0 0
  %5466 = vmatpush1.bf16.msra.mxu0 %v5447
  %5467 = vmatprep.subr.bf16.mxu0 0
  %5468 = vmatpush1.bf16.msra.mxu0 %v5448
  %5469 = vmatprep.subr.bf16.mxu0 0
  %5470 = vmatpush1.bf16.msra.mxu0 %v5449
  %5471 = vmatprep.subr.bf16.mxu0 0
  %5472 = vmatpush1.bf16.msra.mxu0 %v5450
  %5473 = vmatprep.subr.bf16.mxu0 0
  %5474 = vmatpush1.bf16.msra.mxu0 %v5451
  %5475 = vmatprep.subr.bf16.mxu0 0
  %5476 = vmatpush1.bf16.msra.mxu0 %v5452
  %5477 = vmatprep.subr.bf16.mxu0 0
  %5478 = vmatpush1.bf16.msra.mxu0 0
  %5479 = vmatprep.subr.bf16.mxu0 0
  %5480 = vmatpush1.bf16.msra.mxu0 0
  %5481 = vmatprep.subr.bf16.mxu0 0
  %5482 = vmatpush1.bf16.msra.mxu0 0
  %5483 = vmatprep.subr.bf16.mxu0 0
  %5484 = vmatpush1.bf16.msra.mxu0 0
  %5485 = vmatprep.subr.bf16.mxu0 0
  %5486 = vmatpush1.bf16.msra.mxu0 0
  %5487 = vmatprep.subr.bf16.mxu0 0
  %5488 = vmatpush1.bf16.msra.mxu0 0
  %5489 = vmatprep.subr.bf16.mxu0 0
  %5490 = vmatpush1.bf16.msra.mxu0 0
  %5491 = vmatprep.subr.bf16.mxu0 0
  %5492 = vmatpush1.bf16.msra.mxu0 0
  %5493 = vmatprep.mubr.bf16.mxu0 0
  %5494 = vmatmul.mubr.bf16.gmra.mrb[0].mxu0 %v5395
  %v5495 = vpop.f32.mrb[0].mxu0
  %v5496 = vadd.f32 0.0, %v5495
  %v5497 = vpop.f32.mrb[0].mxu0
  %v5498 = vpop.f32.mrb[0].mxu0
  %v5499 = vpop.f32.mrb[0].mxu0
  %5500 = vdwg.mxu0
  %v5501 = vadd.f32 %v5392, %v5496
  %s5502 = scalar_lea.vmem [#allocation5], 80
  %v5503 = vld [vmem:[%s5502] sm:$0xff]
  %v5504 = vpack.c.bf16 %v5503, %v5503
  %s5505 = scalar_lea.vmem %s7, 640
  %v5506 = vld [vmem:[%s5505] sm:$0xf]
  %v5507 = vld [vmem:[%s5505 + $0x4] sm:$0xf]
  %v5508 = vld [vmem:[%s5505 + $0x8] sm:$0xf]
  %v5509 = vld [vmem:[%s5505 + $0xc] sm:$0xf]
  %v5510 = vld [vmem:[%s5505 + $0x10] sm:$0xf]
  %v5511 = vld [vmem:[%s5505 + $0x14] sm:$0xf]
  %v5512 = vld [vmem:[%s5505 + $0x18] sm:$0xf]
  %v5513 = vld [vmem:[%s5505 + $0x1c] sm:$0xf]
  %v5514 = vld [vmem:[%s5505 + $0x20] sm:$0xf]
  %v5515 = vld [vmem:[%s5505 + $0x24] sm:$0xf]
  %v5516 = vld [vmem:[%s5505 + $0x28] sm:$0xf]
  %v5517 = vld [vmem:[%s5505 + $0x2c] sm:$0xf]
  %v5518 = vld [vmem:[%s5505 + $0x30] sm:$0xf]
  %v5519 = vld [vmem:[%s5505 + $0x34] sm:$0xf]
  %v5520 = vld [vmem:[%s5505 + $0x38] sm:$0xf]
  %v5521 = vld [vmem:[%s5505 + $0x3c] sm:$0xf]
  %v5538 = vunpack.c.l.b16 %v5506
  %v5539 = vunpack.c.l.b16 %v5507
  %v5540 = vunpack.c.l.b16 %v5508
  %v5541 = vunpack.c.l.b16 %v5509
  %v5542 = vunpack.c.l.b16 %v5510
  %v5543 = vunpack.c.l.b16 %v5511
  %v5544 = vunpack.c.l.b16 %v5512
  %v5545 = vunpack.c.l.b16 %v5513
  %v5546 = vunpack.c.l.b16 %v5514
  %v5547 = vunpack.c.l.b16 %v5515
  %v5548 = vunpack.c.l.b16 %v5516
  %v5549 = vunpack.c.l.b16 %v5517
  %v5550 = vunpack.c.l.b16 %v5518
  %v5551 = vunpack.c.l.b16 %v5519
  %v5552 = vunpack.c.l.b16 %v5520
  %v5553 = vunpack.c.l.b16 %v5521
  %v5554 = vpack.c.b16 %v5539, %v5538
  %v5555 = vpack.c.b16 %v5541, %v5540
  %v5556 = vpack.c.b16 %v5543, %v5542
  %v5557 = vpack.c.b16 %v5545, %v5544
  %v5558 = vpack.c.b16 %v5547, %v5546
  %v5559 = vpack.c.b16 %v5549, %v5548
  %v5560 = vpack.c.b16 %v5551, %v5550
  %v5561 = vpack.c.b16 %v5553, %v5552
  %5570 = vmatprep.subr.bf16.mxu0 0
  %5571 = vmatpush1.bf16.msra.mxu0 %v5554
  %5572 = vmatprep.subr.bf16.mxu0 0
  %5573 = vmatpush1.bf16.msra.mxu0 %v5555
  %5574 = vmatprep.subr.bf16.mxu0 0
  %5575 = vmatpush1.bf16.msra.mxu0 %v5556
  %5576 = vmatprep.subr.bf16.mxu0 0
  %5577 = vmatpush1.bf16.msra.mxu0 %v5557
  %5578 = vmatprep.subr.bf16.mxu0 0
  %5579 = vmatpush1.bf16.msra.mxu0 %v5558
  %5580 = vmatprep.subr.bf16.mxu0 0
  %5581 = vmatpush1.bf16.msra.mxu0 %v5559
  %5582 = vmatprep.subr.bf16.mxu0 0
  %5583 = vmatpush1.bf16.msra.mxu0 %v5560
  %5584 = vmatprep.subr.bf16.mxu0 0
  %5585 = vmatpush1.bf16.msra.mxu0 %v5561
  %5586 = vmatprep.subr.bf16.mxu0 0
  %5587 = vmatpush1.bf16.msra.mxu0 0
  %5588 = vmatprep.subr.bf16.mxu0 0
  %5589 = vmatpush1.bf16.msra.mxu0 0
  %5590 = vmatprep.subr.bf16.mxu0 0
  %5591 = vmatpush1.bf16.msra.mxu0 0
  %5592 = vmatprep.subr.bf16.mxu0 0
  %5593 = vmatpush1.bf16.msra.mxu0 0
  %5594 = vmatprep.subr.bf16.mxu0 0
  %5595 = vmatpush1.bf16.msra.mxu0 0
  %5596 = vmatprep.subr.bf16.mxu0 0
  %5597 = vmatpush1.bf16.msra.mxu0 0
  %5598 = vmatprep.subr.bf16.mxu0 0
  %5599 = vmatpush1.bf16.msra.mxu0 0
  %5600 = vmatprep.subr.bf16.mxu0 0
  %5601 = vmatpush1.bf16.msra.mxu0 0
  %5602 = vmatprep.mubr.bf16.mxu0 0
  %5603 = vmatmul.mubr.bf16.gmra.mrb[0].mxu0 %v5504
  %v5604 = vpop.f32.mrb[0].mxu0
  %v5605 = vadd.f32 0.0, %v5604
  %v5606 = vpop.f32.mrb[0].mxu0
  %v5607 = vpop.f32.mrb[0].mxu0
  %v5608 = vpop.f32.mrb[0].mxu0
  %5609 = vdwg.mxu0
  %v5610 = vadd.f32 %v5501, %v5605
  %s5611 = scalar_lea.vmem [#allocation5], 88
  %v5612 = vld [vmem:[%s5611] sm:$0xff]
  %v5613 = vpack.c.bf16 %v5612, %v5612
  %s5614 = scalar_lea.vmem %s7, 704
  %v5615 = vld [vmem:[%s5614] sm:$0xf]
  %v5616 = vld [vmem:[%s5614 + $0x4] sm:$0xf]
  %v5617 = vld [vmem:[%s5614 + $0x8] sm:$0xf]
  %v5618 = vld [vmem:[%s5614 + $0xc] sm:$0xf]
  %v5619 = vld [vmem:[%s5614 + $0x10] sm:$0xf]
  %v5620 = vld [vmem:[%s5614 + $0x14] sm:$0xf]
  %v5621 = vld [vmem:[%s5614 + $0x18] sm:$0xf]
  %v5622 = vld [vmem:[%s5614 + $0x1c] sm:$0xf]
  %v5623 = vld [vmem:[%s5614 + $0x20] sm:$0xf]
  %v5624 = vld [vmem:[%s5614 + $0x24] sm:$0xf]
  %v5625 = vld [vmem:[%s5614 + $0x28] sm:$0xf]
  %v5626 = vld [vmem:[%s5614 + $0x2c] sm:$0xf]
  %v5627 = vld [vmem:[%s5614 + $0x30] sm:$0xf]
  %v5628 = vld [vmem:[%s5614 + $0x34] sm:$0xf]
  %v5629 = vld [vmem:[%s5614 + $0x38] sm:$0xf]
  %v5630 = vld [vmem:[%s5614 + $0x3c] sm:$0xf]
  %v5647 = vunpack.c.l.b16 %v5615
  %v5648 = vunpack.c.l.b16 %v5616
  %v5649 = vunpack.c.l.b16 %v5617
  %v5650 = vunpack.c.l.b16 %v5618
  %v5651 = vunpack.c.l.b16 %v5619
  %v5652 = vunpack.c.l.b16 %v5620
  %v5653 = vunpack.c.l.b16 %v5621
  %v5654 = vunpack.c.l.b16 %v5622
  %v5655 = vunpack.c.l.b16 %v5623
  %v5656 = vunpack.c.l.b16 %v5624
  %v5657 = vunpack.c.l.b16 %v5625
  %v5658 = vunpack.c.l.b16 %v5626
  %v5659 = vunpack.c.l.b16 %v5627
  %v5660 = vunpack.c.l.b16 %v5628
  %v5661 = vunpack.c.l.b16 %v5629
  %v5662 = vunpack.c.l.b16 %v5630
  %v5663 = vpack.c.b16 %v5648, %v5647
  %v5664 = vpack.c.b16 %v5650, %v5649
  %v5665 = vpack.c.b16 %v5652, %v5651
  %v5666 = vpack.c.b16 %v5654, %v5653
  %v5667 = vpack.c.b16 %v5656, %v5655
  %v5668 = vpack.c.b16 %v5658, %v5657
  %v5669 = vpack.c.b16 %v5660, %v5659
  %v5670 = vpack.c.b16 %v5662, %v5661
  %5679 = vmatprep.subr.bf16.mxu0 0
  %5680 = vmatpush1.bf16.msra.mxu0 %v5663
  %5681 = vmatprep.subr.bf16.mxu0 0
  %5682 = vmatpush1.bf16.msra.mxu0 %v5664
  %5683 = vmatprep.subr.bf16.mxu0 0
  %5684 = vmatpush1.bf16.msra.mxu0 %v5665
  %5685 = vmatprep.subr.bf16.mxu0 0
  %5686 = vmatpush1.bf16.msra.mxu0 %v5666
  %5687 = vmatprep.subr.bf16.mxu0 0
  %5688 = vmatpush1.bf16.msra.mxu0 %v5667
  %5689 = vmatprep.subr.bf16.mxu0 0
  %5690 = vmatpush1.bf16.msra.mxu0 %v5668
  %5691 = vmatprep.subr.bf16.mxu0 0
  %5692 = vmatpush1.bf16.msra.mxu0 %v5669
  %5693 = vmatprep.subr.bf16.mxu0 0
  %5694 = vmatpush1.bf16.msra.mxu0 %v5670
  %5695 = vmatprep.subr.bf16.mxu0 0
  %5696 = vmatpush1.bf16.msra.mxu0 0
  %5697 = vmatprep.subr.bf16.mxu0 0
  %5698 = vmatpush1.bf16.msra.mxu0 0
  %5699 = vmatprep.subr.bf16.mxu0 0
  %5700 = vmatpush1.bf16.msra.mxu0 0
  %5701 = vmatprep.subr.bf16.mxu0 0
  %5702 = vmatpush1.bf16.msra.mxu0 0
  %5703 = vmatprep.subr.bf16.mxu0 0
  %5704 = vmatpush1.bf16.msra.mxu0 0
  %5705 = vmatprep.subr.bf16.mxu0 0
  %5706 = vmatpush1.bf16.msra.mxu0 0
  %5707 = vmatprep.subr.bf16.mxu0 0
  %5708 = vmatpush1.bf16.msra.mxu0 0
  %5709 = vmatprep.subr.bf16.mxu0 0
  %5710 = vmatpush1.bf16.msra.mxu0 0
  %5711 = vmatprep.mubr.bf16.mxu0 0
  %5712 = vmatmul.mubr.bf16.gmra.mrb[0].mxu0 %v5613
  %v5713 = vpop.f32.mrb[0].mxu0
  %v5714 = vadd.f32 0.0, %v5713
  %v5715 = vpop.f32.mrb[0].mxu0
  %v5716 = vpop.f32.mrb[0].mxu0
  %v5717 = vpop.f32.mrb[0].mxu0
  %5718 = vdwg.mxu0
  %v5719 = vadd.f32 %v5610, %v5714
  %s5720 = scalar_lea.vmem [#allocation5], 96
  %v5721 = vld [vmem:[%s5720] sm:$0xff]
  %v5722 = vpack.c.bf16 %v5721, %v5721
  %s5723 = scalar_lea.vmem %s7, 768
  %v5724 = vld [vmem:[%s5723] sm:$0xf]
  %v5725 = vld [vmem:[%s5723 + $0x4] sm:$0xf]
  %v5726 = vld [vmem:[%s5723 + $0x8] sm:$0xf]
  %v5727 = vld [vmem:[%s5723 + $0xc] sm:$0xf]
  %v5728 = vld [vmem:[%s5723 + $0x10] sm:$0xf]
  %v5729 = vld [vmem:[%s5723 + $0x14] sm:$0xf]
  %v5730 = vld [vmem:[%s5723 + $0x18] sm:$0xf]
  %v5731 = vld [vmem:[%s5723 + $0x1c] sm:$0xf]
  %v5732 = vld [vmem:[%s5723 + $0x20] sm:$0xf]
  %v5733 = vld [vmem:[%s5723 + $0x24] sm:$0xf]
  %v5734 = vld [vmem:[%s5723 + $0x28] sm:$0xf]
  %v5735 = vld [vmem:[%s5723 + $0x2c] sm:$0xf]
  %v5736 = vld [vmem:[%s5723 + $0x30] sm:$0xf]
  %v5737 = vld [vmem:[%s5723 + $0x34] sm:$0xf]
  %v5738 = vld [vmem:[%s5723 + $0x38] sm:$0xf]
  %v5739 = vld [vmem:[%s5723 + $0x3c] sm:$0xf]
  %v5756 = vunpack.c.l.b16 %v5724
  %v5757 = vunpack.c.l.b16 %v5725
  %v5758 = vunpack.c.l.b16 %v5726
  %v5759 = vunpack.c.l.b16 %v5727
  %v5760 = vunpack.c.l.b16 %v5728
  %v5761 = vunpack.c.l.b16 %v5729
  %v5762 = vunpack.c.l.b16 %v5730
  %v5763 = vunpack.c.l.b16 %v5731
  %v5764 = vunpack.c.l.b16 %v5732
  %v5765 = vunpack.c.l.b16 %v5733
  %v5766 = vunpack.c.l.b16 %v5734
  %v5767 = vunpack.c.l.b16 %v5735
  %v5768 = vunpack.c.l.b16 %v5736
  %v5769 = vunpack.c.l.b16 %v5737
  %v5770 = vunpack.c.l.b16 %v5738
  %v5771 = vunpack.c.l.b16 %v5739
  %v5772 = vpack.c.b16 %v5757, %v5756
  %v5773 = vpack.c.b16 %v5759, %v5758
  %v5774 = vpack.c.b16 %v5761, %v5760
  %v5775 = vpack.c.b16 %v5763, %v5762
  %v5776 = vpack.c.b16 %v5765, %v5764
  %v5777 = vpack.c.b16 %v5767, %v5766
  %v5778 = vpack.c.b16 %v5769, %v5768
  %v5779 = vpack.c.b16 %v5771, %v5770
  %5788 = vmatprep.subr.bf16.mxu0 0
  %5789 = vmatpush1.bf16.msra.mxu0 %v5772
  %5790 = vmatprep.subr.bf16.mxu0 0
  %5791 = vmatpush1.bf16.msra.mxu0 %v5773
  %5792 = vmatprep.subr.bf16.mxu0 0
  %5793 = vmatpush1.bf16.msra.mxu0 %v5774
  %5794 = vmatprep.subr.bf16.mxu0 0
  %5795 = vmatpush1.bf16.msra.mxu0 %v5775
  %5796 = vmatprep.subr.bf16.mxu0 0
  %5797 = vmatpush1.bf16.msra.mxu0 %v5776
  %5798 = vmatprep.subr.bf16.mxu0 0
  %5799 = vmatpush1.bf16.msra.mxu0 %v5777
  %5800 = vmatprep.subr.bf16.mxu0 0
  %5801 = vmatpush1.bf16.msra.mxu0 %v5778
  %5802 = vmatprep.subr.bf16.mxu0 0
  %5803 = vmatpush1.bf16.msra.mxu0 %v5779
  %5804 = vmatprep.subr.bf16.mxu0 0
  %5805 = vmatpush1.bf16.msra.mxu0 0
  %5806 = vmatprep.subr.bf16.mxu0 0
  %5807 = vmatpush1.bf16.msra.mxu0 0
  %5808 = vmatprep.subr.bf16.mxu0 0
  %5809 = vmatpush1.bf16.msra.mxu0 0
  %5810 = vmatprep.subr.bf16.mxu0 0
  %5811 = vmatpush1.bf16.msra.mxu0 0
  %5812 = vmatprep.subr.bf16.mxu0 0
  %5813 = vmatpush1.bf16.msra.mxu0 0
  %5814 = vmatprep.subr.bf16.mxu0 0
  %5815 = vmatpush1.bf16.msra.mxu0 0
  %5816 = vmatprep.subr.bf16.mxu0 0
  %5817 = vmatpush1.bf16.msra.mxu0 0
  %5818 = vmatprep.subr.bf16.mxu0 0
  %5819 = vmatpush1.bf16.msra.mxu0 0
  %5820 = vmatprep.mubr.bf16.mxu0 0
  %5821 = vmatmul.mubr.bf16.gmra.mrb[0].mxu0 %v5722
  %v5822 = vpop.f32.mrb[0].mxu0
  %v5823 = vadd.f32 0.0, %v5822
  %v5824 = vpop.f32.mrb[0].mxu0
  %v5825 = vpop.f32.mrb[0].mxu0
  %v5826 = vpop.f32.mrb[0].mxu0
  %5827 = vdwg.mxu0
  %v5828 = vadd.f32 %v5719, %v5823
  %s5829 = scalar_lea.vmem [#allocation5], 104
  %v5830 = vld [vmem:[%s5829] sm:$0xff]
  %v5831 = vpack.c.bf16 %v5830, %v5830
  %s5832 = scalar_lea.vmem %s7, 832
  %v5833 = vld [vmem:[%s5832] sm:$0xf]
  %v5834 = vld [vmem:[%s5832 + $0x4] sm:$0xf]
  %v5835 = vld [vmem:[%s5832 + $0x8] sm:$0xf]
  %v5836 = vld [vmem:[%s5832 + $0xc] sm:$0xf]
  %v5837 = vld [vmem:[%s5832 + $0x10] sm:$0xf]
  %v5838 = vld [vmem:[%s5832 + $0x14] sm:$0xf]
  %v5839 = vld [vmem:[%s5832 + $0x18] sm:$0xf]
  %v5840 = vld [vmem:[%s5832 + $0x1c] sm:$0xf]
  %v5841 = vld [vmem:[%s5832 + $0x20] sm:$0xf]
  %v5842 = vld [vmem:[%s5832 + $0x24] sm:$0xf]
  %v5843 = vld [vmem:[%s5832 + $0x28] sm:$0xf]
  %v5844 = vld [vmem:[%s5832 + $0x2c] sm:$0xf]
  %v5845 = vld [vmem:[%s5832 + $0x30] sm:$0xf]
  %v5846 = vld [vmem:[%s5832 + $0x34] sm:$0xf]
  %v5847 = vld [vmem:[%s5832 + $0x38] sm:$0xf]
  %v5848 = vld [vmem:[%s5832 + $0x3c] sm:$0xf]
  %v5865 = vunpack.c.l.b16 %v5833
  %v5866 = vunpack.c.l.b16 %v5834
  %v5867 = vunpack.c.l.b16 %v5835
  %v5868 = vunpack.c.l.b16 %v5836
  %v5869 = vunpack.c.l.b16 %v5837
  %v5870 = vunpack.c.l.b16 %v5838
  %v5871 = vunpack.c.l.b16 %v5839
  %v5872 = vunpack.c.l.b16 %v5840
  %v5873 = vunpack.c.l.b16 %v5841
  %v5874 = vunpack.c.l.b16 %v5842
  %v5875 = vunpack.c.l.b16 %v5843
  %v5876 = vunpack.c.l.b16 %v5844
  %v5877 = vunpack.c.l.b16 %v5845
  %v5878 = vunpack.c.l.b16 %v5846
  %v5879 = vunpack.c.l.b16 %v5847
  %v5880 = vunpack.c.l.b16 %v5848
  %v5881 = vpack.c.b16 %v5866, %v5865
  %v5882 = vpack.c.b16 %v5868, %v5867
  %v5883 = vpack.c.b16 %v5870, %v5869
  %v5884 = vpack.c.b16 %v5872, %v5871
  %v5885 = vpack.c.b16 %v5874, %v5873
  %v5886 = vpack.c.b16 %v5876, %v5875
  %v5887 = vpack.c.b16 %v5878, %v5877
  %v5888 = vpack.c.b16 %v5880, %v5879
  %5897 = vmatprep.subr.bf16.mxu0 0
  %5898 = vmatpush1.bf16.msra.mxu0 %v5881
  %5899 = vmatprep.subr.bf16.mxu0 0
  %5900 = vmatpush1.bf16.msra.mxu0 %v5882
  %5901 = vmatprep.subr.bf16.mxu0 0
  %5902 = vmatpush1.bf16.msra.mxu0 %v5883
  %5903 = vmatprep.subr.bf16.mxu0 0
  %5904 = vmatpush1.bf16.msra.mxu0 %v5884
  %5905 = vmatprep.subr.bf16.mxu0 0
  %5906 = vmatpush1.bf16.msra.mxu0 %v5885
  %5907 = vmatprep.subr.bf16.mxu0 0
  %5908 = vmatpush1.bf16.msra.mxu0 %v5886
  %5909 = vmatprep.subr.bf16.mxu0 0
  %5910 = vmatpush1.bf16.msra.mxu0 %v5887
  %5911 = vmatprep.subr.bf16.mxu0 0
  %5912 = vmatpush1.bf16.msra.mxu0 %v5888
  %5913 = vmatprep.subr.bf16.mxu0 0
  %5914 = vmatpush1.bf16.msra.mxu0 0
  %5915 = vmatprep.subr.bf16.mxu0 0
  %5916 = vmatpush1.bf16.msra.mxu0 0
  %5917 = vmatprep.subr.bf16.mxu0 0
  %5918 = vmatpush1.bf16.msra.mxu0 0
  %5919 = vmatprep.subr.bf16.mxu0 0
  %5920 = vmatpush1.bf16.msra.mxu0 0
  %5921 = vmatprep.subr.bf16.mxu0 0
  %5922 = vmatpush1.bf16.msra.mxu0 0
  %5923 = vmatprep.subr.bf16.mxu0 0
  %5924 = vmatpush1.bf16.msra.mxu0 0
  %5925 = vmatprep.subr.bf16.mxu0 0
  %5926 = vmatpush1.bf16.msra.mxu0 0
  %5927 = vmatprep.subr.bf16.mxu0 0
  %5928 = vmatpush1.bf16.msra.mxu0 0
  %5929 = vmatprep.mubr.bf16.mxu0 0
  %5930 = vmatmul.mubr.bf16.gmra.mrb[0].mxu0 %v5831
  %v5931 = vpop.f32.mrb[0].mxu0
  %v5932 = vadd.f32 0.0, %v5931
  %v5933 = vpop.f32.mrb[0].mxu0
  %v5934 = vpop.f32.mrb[0].mxu0
  %v5935 = vpop.f32.mrb[0].mxu0
  %5936 = vdwg.mxu0
  %v5937 = vadd.f32 %v5828, %v5932
  %s5938 = scalar_lea.vmem [#allocation5], 112
  %v5939 = vld [vmem:[%s5938] sm:$0xff]
  %v5940 = vpack.c.bf16 %v5939, %v5939
  %s5941 = scalar_lea.vmem %s7, 896
  %v5942 = vld [vmem:[%s5941] sm:$0xf]
  %v5943 = vld [vmem:[%s5941 + $0x4] sm:$0xf]
  %v5944 = vld [vmem:[%s5941 + $0x8] sm:$0xf]
  %v5945 = vld [vmem:[%s5941 + $0xc] sm:$0xf]
  %v5946 = vld [vmem:[%s5941 + $0x10] sm:$0xf]
  %v5947 = vld [vmem:[%s5941 + $0x14] sm:$0xf]
  %v5948 = vld [vmem:[%s5941 + $0x18] sm:$0xf]
  %v5949 = vld [vmem:[%s5941 + $0x1c] sm:$0xf]
  %v5950 = vld [vmem:[%s5941 + $0x20] sm:$0xf]
  %v5951 = vld [vmem:[%s5941 + $0x24] sm:$0xf]
  %v5952 = vld [vmem:[%s5941 + $0x28] sm:$0xf]
  %v5953 = vld [vmem:[%s5941 + $0x2c] sm:$0xf]
  %v5954 = vld [vmem:[%s5941 + $0x30] sm:$0xf]
  %v5955 = vld [vmem:[%s5941 + $0x34] sm:$0xf]
  %v5956 = vld [vmem:[%s5941 + $0x38] sm:$0xf]
  %v5957 = vld [vmem:[%s5941 + $0x3c] sm:$0xf]
  %v5974 = vunpack.c.l.b16 %v5942
  %v5975 = vunpack.c.l.b16 %v5943
  %v5976 = vunpack.c.l.b16 %v5944
  %v5977 = vunpack.c.l.b16 %v5945
  %v5978 = vunpack.c.l.b16 %v5946
  %v5979 = vunpack.c.l.b16 %v5947
  %v5980 = vunpack.c.l.b16 %v5948
  %v5981 = vunpack.c.l.b16 %v5949
  %v5982 = vunpack.c.l.b16 %v5950
  %v5983 = vunpack.c.l.b16 %v5951
  %v5984 = vunpack.c.l.b16 %v5952
  %v5985 = vunpack.c.l.b16 %v5953
  %v5986 = vunpack.c.l.b16 %v5954
  %v5987 = vunpack.c.l.b16 %v5955
  %v5988 = vunpack.c.l.b16 %v5956
  %v5989 = vunpack.c.l.b16 %v5957
  %v5990 = vpack.c.b16 %v5975, %v5974
  %v5991 = vpack.c.b16 %v5977, %v5976
  %v5992 = vpack.c.b16 %v5979, %v5978
  %v5993 = vpack.c.b16 %v5981, %v5980
  %v5994 = vpack.c.b16 %v5983, %v5982
  %v5995 = vpack.c.b16 %v5985, %v5984
  %v5996 = vpack.c.b16 %v5987, %v5986
  %v5997 = vpack.c.b16 %v5989, %v5988
  %6006 = vmatprep.subr.bf16.mxu0 0
  %6007 = vmatpush1.bf16.msra.mxu0 %v5990
  %6008 = vmatprep.subr.bf16.mxu0 0
  %6009 = vmatpush1.bf16.msra.mxu0 %v5991
  %6010 = vmatprep.subr.bf16.mxu0 0
  %6011 = vmatpush1.bf16.msra.mxu0 %v5992
  %6012 = vmatprep.subr.bf16.mxu0 0
  %6013 = vmatpush1.bf16.msra.mxu0 %v5993
  %6014 = vmatprep.subr.bf16.mxu0 0
  %6015 = vmatpush1.bf16.msra.mxu0 %v5994
  %6016 = vmatprep.subr.bf16.mxu0 0
  %6017 = vmatpush1.bf16.msra.mxu0 %v5995
  %6018 = vmatprep.subr.bf16.mxu0 0
  %6019 = vmatpush1.bf16.msra.mxu0 %v5996
  %6020 = vmatprep.subr.bf16.mxu0 0
  %6021 = vmatpush1.bf16.msra.mxu0 %v5997
  %6022 = vmatprep.subr.bf16.mxu0 0
  %6023 = vmatpush1.bf16.msra.mxu0 0
  %6024 = vmatprep.subr.bf16.mxu0 0
  %6025 = vmatpush1.bf16.msra.mxu0 0
  %6026 = vmatprep.subr.bf16.mxu0 0
  %6027 = vmatpush1.bf16.msra.mxu0 0
  %6028 = vmatprep.subr.bf16.mxu0 0
  %6029 = vmatpush1.bf16.msra.mxu0 0
  %6030 = vmatprep.subr.bf16.mxu0 0
  %6031 = vmatpush1.bf16.msra.mxu0 0
  %6032 = vmatprep.subr.bf16.mxu0 0
  %6033 = vmatpush1.bf16.msra.mxu0 0
  %6034 = vmatprep.subr.bf16.mxu0 0
  %6035 = vmatpush1.bf16.msra.mxu0 0
  %6036 = vmatprep.subr.bf16.mxu0 0
  %6037 = vmatpush1.bf16.msra.mxu0 0
  %6038 = vmatprep.mubr.bf16.mxu0 0
  %6039 = vmatmul.mubr.bf16.gmra.mrb[0].mxu0 %v5940
  %v6040 = vpop.f32.mrb[0].mxu0
  %v6041 = vadd.f32 0.0, %v6040
  %v6042 = vpop.f32.mrb[0].mxu0
  %v6043 = vpop.f32.mrb[0].mxu0
  %v6044 = vpop.f32.mrb[0].mxu0
  %6045 = vdwg.mxu0
  %v6046 = vadd.f32 %v5937, %v6041
  %s6047 = scalar_lea.vmem [#allocation5], 120
  %v6048 = vld [vmem:[%s6047] sm:$0xff]
  %v6049 = vpack.c.bf16 %v6048, %v6048
  %s6050 = scalar_lea.vmem %s7, 960
  %v6051 = vld [vmem:[%s6050] sm:$0xf]
  %v6052 = vld [vmem:[%s6050 + $0x4] sm:$0xf]
  %v6053 = vld [vmem:[%s6050 + $0x8] sm:$0xf]
  %v6054 = vld [vmem:[%s6050 + $0xc] sm:$0xf]
  %v6055 = vld [vmem:[%s6050 + $0x10] sm:$0xf]
  %v6056 = vld [vmem:[%s6050 + $0x14] sm:$0xf]
  %v6057 = vld [vmem:[%s6050 + $0x18] sm:$0xf]
  %v6058 = vld [vmem:[%s6050 + $0x1c] sm:$0xf]
  %v6059 = vld [vmem:[%s6050 + $0x20] sm:$0xf]
  %v6060 = vld [vmem:[%s6050 + $0x24] sm:$0xf]
  %v6061 = vld [vmem:[%s6050 + $0x28] sm:$0xf]
  %v6062 = vld [vmem:[%s6050 + $0x2c] sm:$0xf]
  %v6063 = vld [vmem:[%s6050 + $0x30] sm:$0xf]
  %v6064 = vld [vmem:[%s6050 + $0x34] sm:$0xf]
  %v6065 = vld [vmem:[%s6050 + $0x38] sm:$0xf]
  %v6066 = vld [vmem:[%s6050 + $0x3c] sm:$0xf]
  %v6083 = vunpack.c.l.b16 %v6051
  %v6084 = vunpack.c.l.b16 %v6052
  %v6085 = vunpack.c.l.b16 %v6053
  %v6086 = vunpack.c.l.b16 %v6054
  %v6087 = vunpack.c.l.b16 %v6055
  %v6088 = vunpack.c.l.b16 %v6056
  %v6089 = vunpack.c.l.b16 %v6057
  %v6090 = vunpack.c.l.b16 %v6058
  %v6091 = vunpack.c.l.b16 %v6059
  %v6092 = vunpack.c.l.b16 %v6060
  %v6093 = vunpack.c.l.b16 %v6061
  %v6094 = vunpack.c.l.b16 %v6062
  %v6095 = vunpack.c.l.b16 %v6063
  %v6096 = vunpack.c.l.b16 %v6064
  %v6097 = vunpack.c.l.b16 %v6065
  %v6098 = vunpack.c.l.b16 %v6066
  %v6099 = vpack.c.b16 %v6084, %v6083
  %v6100 = vpack.c.b16 %v6086, %v6085
  %v6101 = vpack.c.b16 %v6088, %v6087
  %v6102 = vpack.c.b16 %v6090, %v6089
  %v6103 = vpack.c.b16 %v6092, %v6091
  %v6104 = vpack.c.b16 %v6094, %v6093
  %v6105 = vpack.c.b16 %v6096, %v6095
  %v6106 = vpack.c.b16 %v6098, %v6097
  %6115 = vmatprep.subr.bf16.mxu0 0
  %6116 = vmatpush1.bf16.msra.mxu0 %v6099
  %6117 = vmatprep.subr.bf16.mxu0 0
  %6118 = vmatpush1.bf16.msra.mxu0 %v6100
  %6119 = vmatprep.subr.bf16.mxu0 0
  %6120 = vmatpush1.bf16.msra.mxu0 %v6101
  %6121 = vmatprep.subr.bf16.mxu0 0
  %6122 = vmatpush1.bf16.msra.mxu0 %v6102
  %6123 = vmatprep.subr.bf16.mxu0 0
  %6124 = vmatpush1.bf16.msra.mxu0 %v6103
  %6125 = vmatprep.subr.bf16.mxu0 0
  %6126 = vmatpush1.bf16.msra.mxu0 %v6104
  %6127 = vmatprep.subr.bf16.mxu0 0
  %6128 = vmatpush1.bf16.msra.mxu0 %v6105
  %6129 = vmatprep.subr.bf16.mxu0 0
  %6130 = vmatpush1.bf16.msra.mxu0 %v6106
  %6131 = vmatprep.subr.bf16.mxu0 0
  %6132 = vmatpush1.bf16.msra.mxu0 0
  %6133 = vmatprep.subr.bf16.mxu0 0
  %6134 = vmatpush1.bf16.msra.mxu0 0
  %6135 = vmatprep.subr.bf16.mxu0 0
  %6136 = vmatpush1.bf16.msra.mxu0 0
  %6137 = vmatprep.subr.bf16.mxu0 0
  %6138 = vmatpush1.bf16.msra.mxu0 0
  %6139 = vmatprep.subr.bf16.mxu0 0
  %6140 = vmatpush1.bf16.msra.mxu0 0
  %6141 = vmatprep.subr.bf16.mxu0 0
  %6142 = vmatpush1.bf16.msra.mxu0 0
  %6143 = vmatprep.subr.bf16.mxu0 0
  %6144 = vmatpush1.bf16.msra.mxu0 0
  %6145 = vmatprep.subr.bf16.mxu0 0
  %6146 = vmatpush1.bf16.msra.mxu0 0
  %6147 = vmatprep.mubr.bf16.mxu0 0
  %6148 = vmatmul.mubr.bf16.gmra.mrb[0].mxu0 %v6049
  %v6149 = vpop.f32.mrb[0].mxu0
  %v6150 = vadd.f32 0.0, %v6149
  %v6151 = vpop.f32.mrb[0].mxu0
  %v6152 = vpop.f32.mrb[0].mxu0
  %v6153 = vpop.f32.mrb[0].mxu0
  %6154 = vdwg.mxu0
  %v6155 = vadd.f32 %v6046, %v6150
  %s6156 = scalar_lea.vmem [#allocation5], 128
  %v6157 = vld [vmem:[%s6156] sm:$0xff]
  %v6158 = vpack.c.bf16 %v6157, %v6157
  %s6159 = scalar_lea.vmem %s7, 1024
  %v6160 = vld [vmem:[%s6159] sm:$0xf]
  %v6161 = vld [vmem:[%s6159 + $0x4] sm:$0xf]
  %v6162 = vld [vmem:[%s6159 + $0x8] sm:$0xf]
  %v6163 = vld [vmem:[%s6159 + $0xc] sm:$0xf]
  %v6164 = vld [vmem:[%s6159 + $0x10] sm:$0xf]
  %v6165 = vld [vmem:[%s6159 + $0x14] sm:$0xf]
  %v6166 = vld [vmem:[%s6159 + $0x18] sm:$0xf]
  %v6167 = vld [vmem:[%s6159 + $0x1c] sm:$0xf]
  %v6168 = vld [vmem:[%s6159 + $0x20] sm:$0xf]
  %v6169 = vld [vmem:[%s6159 + $0x24] sm:$0xf]
  %v6170 = vld [vmem:[%s6159 + $0x28] sm:$0xf]
  %v6171 = vld [vmem:[%s6159 + $0x2c] sm:$0xf]
  %v6172 = vld [vmem:[%s6159 + $0x30] sm:$0xf]
  %v6173 = vld [vmem:[%s6159 + $0x34] sm:$0xf]
  %v6174 = vld [vmem:[%s6159 + $0x38] sm:$0xf]
  %v6175 = vld [vmem:[%s6159 + $0x3c] sm:$0xf]
  %v6192 = vunpack.c.l.b16 %v6160
  %v6193 = vunpack.c.l.b16 %v6161
  %v6194 = vunpack.c.l.b16 %v6162
  %v6195 = vunpack.c.l.b16 %v6163
  %v6196 = vunpack.c.l.b16 %v6164
  %v6197 = vunpack.c.l.b16 %v6165
  %v6198 = vunpack.c.l.b16 %v6166
  %v6199 = vunpack.c.l.b16 %v6167
  %v6200 = vunpack.c.l.b16 %v6168
  %v6201 = vunpack.c.l.b16 %v6169
  %v6202 = vunpack.c.l.b16 %v6170
  %v6203 = vunpack.c.l.b16 %v6171
  %v6204 = vunpack.c.l.b16 %v6172
  %v6205 = vunpack.c.l.b16 %v6173
  %v6206 = vunpack.c.l.b16 %v6174
  %v6207 = vunpack.c.l.b16 %v6175
  %v6208 = vpack.c.b16 %v6193, %v6192
  %v6209 = vpack.c.b16 %v6195, %v6194
  %v6210 = vpack.c.b16 %v6197, %v6196
  %v6211 = vpack.c.b16 %v6199, %v6198
  %v6212 = vpack.c.b16 %v6201, %v6200
  %v6213 = vpack.c.b16 %v6203, %v6202
  %v6214 = vpack.c.b16 %v6205, %v6204
  %v6215 = vpack.c.b16 %v6207, %v6206
  %6224 = vmatprep.subr.bf16.mxu0 0
  %6225 = vmatpush1.bf16.msra.mxu0 %v6208
  %6226 = vmatprep.subr.bf16.mxu0 0
  %6227 = vmatpush1.bf16.msra.mxu0 %v6209
  %6228 = vmatprep.subr.bf16.mxu0 0
  %6229 = vmatpush1.bf16.msra.mxu0 %v6210
  %6230 = vmatprep.subr.bf16.mxu0 0
  %6231 = vmatpush1.bf16.msra.mxu0 %v6211
  %6232 = vmatprep.subr.bf16.mxu0 0
  %6233 = vmatpush1.bf16.msra.mxu0 %v6212
  %6234 = vmatprep.subr.bf16.mxu0 0
  %6235 = vmatpush1.bf16.msra.mxu0 %v6213
  %6236 = vmatprep.subr.bf16.mxu0 0
  %6237 = vmatpush1.bf16.msra.mxu0 %v6214
  %6238 = vmatprep.subr.bf16.mxu0 0
  %6239 = vmatpush1.bf16.msra.mxu0 %v6215
  %6240 = vmatprep.subr.bf16.mxu0 0
  %6241 = vmatpush1.bf16.msra.mxu0 0
  %6242 = vmatprep.subr.bf16.mxu0 0
  %6243 = vmatpush1.bf16.msra.mxu0 0
  %6244 = vmatprep.subr.bf16.mxu0 0
  %6245 = vmatpush1.bf16.msra.mxu0 0
  %6246 = vmatprep.subr.bf16.mxu0 0
  %6247 = vmatpush1.bf16.msra.mxu0 0
  %6248 = vmatprep.subr.bf16.mxu0 0
  %6249 = vmatpush1.bf16.msra.mxu0 0
  %6250 = vmatprep.subr.bf16.mxu0 0
  %6251 = vmatpush1.bf16.msra.mxu0 0
  %6252 = vmatprep.subr.bf16.mxu0 0
  %6253 = vmatpush1.bf16.msra.mxu0 0
  %6254 = vmatprep.subr.bf16.mxu0 0
  %6255 = vmatpush1.bf16.msra.mxu0 0
  %6256 = vmatprep.mubr.bf16.mxu0 0
  %6257 = vmatmul.mubr.bf16.gmra.mrb[0].mxu0 %v6158
  %v6258 = vpop.f32.mrb[0].mxu0
  %v6259 = vadd.f32 0.0, %v6258
  %v6260 = vpop.f32.mrb[0].mxu0
  %v6261 = vpop.f32.mrb[0].mxu0
  %v6262 = vpop.f32.mrb[0].mxu0
  %6263 = vdwg.mxu0
  %v6264 = vadd.f32 %v6155, %v6259
  %s6265 = scalar_lea.vmem [#allocation5], 136
  %v6266 = vld [vmem:[%s6265] sm:$0xff]
  %v6267 = vpack.c.bf16 %v6266, %v6266
  %s6268 = scalar_lea.vmem %s7, 1088
  %v6269 = vld [vmem:[%s6268] sm:$0xf]
  %v6270 = vld [vmem:[%s6268 + $0x4] sm:$0xf]
  %v6271 = vld [vmem:[%s6268 + $0x8] sm:$0xf]
  %v6272 = vld [vmem:[%s6268 + $0xc] sm:$0xf]
  %v6273 = vld [vmem:[%s6268 + $0x10] sm:$0xf]
  %v6274 = vld [vmem:[%s6268 + $0x14] sm:$0xf]
  %v6275 = vld [vmem:[%s6268 + $0x18] sm:$0xf]
  %v6276 = vld [vmem:[%s6268 + $0x1c] sm:$0xf]
  %v6277 = vld [vmem:[%s6268 + $0x20] sm:$0xf]
  %v6278 = vld [vmem:[%s6268 + $0x24] sm:$0xf]
  %v6279 = vld [vmem:[%s6268 + $0x28] sm:$0xf]
  %v6280 = vld [vmem:[%s6268 + $0x2c] sm:$0xf]
  %v6281 = vld [vmem:[%s6268 + $0x30] sm:$0xf]
  %v6282 = vld [vmem:[%s6268 + $0x34] sm:$0xf]
  %v6283 = vld [vmem:[%s6268 + $0x38] sm:$0xf]
  %v6284 = vld [vmem:[%s6268 + $0x3c] sm:$0xf]
  %v6301 = vunpack.c.l.b16 %v6269
  %v6302 = vunpack.c.l.b16 %v6270
  %v6303 = vunpack.c.l.b16 %v6271
  %v6304 = vunpack.c.l.b16 %v6272
  %v6305 = vunpack.c.l.b16 %v6273
  %v6306 = vunpack.c.l.b16 %v6274
  %v6307 = vunpack.c.l.b16 %v6275
  %v6308 = vunpack.c.l.b16 %v6276
  %v6309 = vunpack.c.l.b16 %v6277
  %v6310 = vunpack.c.l.b16 %v6278
  %v6311 = vunpack.c.l.b16 %v6279
  %v6312 = vunpack.c.l.b16 %v6280
  %v6313 = vunpack.c.l.b16 %v6281
  %v6314 = vunpack.c.l.b16 %v6282
  %v6315 = vunpack.c.l.b16 %v6283
  %v6316 = vunpack.c.l.b16 %v6284
  %v6317 = vpack.c.b16 %v6302, %v6301
  %v6318 = vpack.c.b16 %v6304, %v6303
  %v6319 = vpack.c.b16 %v6306, %v6305
  %v6320 = vpack.c.b16 %v6308, %v6307
  %v6321 = vpack.c.b16 %v6310, %v6309
  %v6322 = vpack.c.b16 %v6312, %v6311
  %v6323 = vpack.c.b16 %v6314, %v6313
  %v6324 = vpack.c.b16 %v6316, %v6315
  %6333 = vmatprep.subr.bf16.mxu0 0
  %6334 = vmatpush1.bf16.msra.mxu0 %v6317
  %6335 = vmatprep.subr.bf16.mxu0 0
  %6336 = vmatpush1.bf16.msra.mxu0 %v6318
  %6337 = vmatprep.subr.bf16.mxu0 0
  %6338 = vmatpush1.bf16.msra.mxu0 %v6319
  %6339 = vmatprep.subr.bf16.mxu0 0
  %6340 = vmatpush1.bf16.msra.mxu0 %v6320
  %6341 = vmatprep.subr.bf16.mxu0 0
  %6342 = vmatpush1.bf16.msra.mxu0 %v6321
  %6343 = vmatprep.subr.bf16.mxu0 0
  %6344 = vmatpush1.bf16.msra.mxu0 %v6322
  %6345 = vmatprep.subr.bf16.mxu0 0
  %6346 = vmatpush1.bf16.msra.mxu0 %v6323
  %6347 = vmatprep.subr.bf16.mxu0 0
  %6348 = vmatpush1.bf16.msra.mxu0 %v6324
  %6349 = vmatprep.subr.bf16.mxu0 0
  %6350 = vmatpush1.bf16.msra.mxu0 0
  %6351 = vmatprep.subr.bf16.mxu0 0
  %6352 = vmatpush1.bf16.msra.mxu0 0
  %6353 = vmatprep.subr.bf16.mxu0 0
  %6354 = vmatpush1.bf16.msra.mxu0 0
  %6355 = vmatprep.subr.bf16.mxu0 0
  %6356 = vmatpush1.bf16.msra.mxu0 0
  %6357 = vmatprep.subr.bf16.mxu0 0
  %6358 = vmatpush1.bf16.msra.mxu0 0
  %6359 = vmatprep.subr.bf16.mxu0 0
  %6360 = vmatpush1.bf16.msra.mxu0 0
  %6361 = vmatprep.subr.bf16.mxu0 0
  %6362 = vmatpush1.bf16.msra.mxu0 0
  %6363 = vmatprep.subr.bf16.mxu0 0
  %6364 = vmatpush1.bf16.msra.mxu0 0
  %6365 = vmatprep.mubr.bf16.mxu0 0
  %6366 = vmatmul.mubr.bf16.gmra.mrb[0].mxu0 %v6267
  %v6367 = vpop.f32.mrb[0].mxu0
  %v6368 = vadd.f32 0.0, %v6367
  %v6369 = vpop.f32.mrb[0].mxu0
  %v6370 = vpop.f32.mrb[0].mxu0
  %v6371 = vpop.f32.mrb[0].mxu0
  %6372 = vdwg.mxu0
  %v6373 = vadd.f32 %v6264, %v6368
  %s6374 = scalar_lea.vmem [#allocation5], 144
  %v6375 = vld [vmem:[%s6374] sm:$0xff]
  %v6376 = vpack.c.bf16 %v6375, %v6375
  %s6377 = scalar_lea.vmem %s7, 1152
  %v6378 = vld [vmem:[%s6377] sm:$0xf]
  %v6379 = vld [vmem:[%s6377 + $0x4] sm:$0xf]
  %v6380 = vld [vmem:[%s6377 + $0x8] sm:$0xf]
  %v6381 = vld [vmem:[%s6377 + $0xc] sm:$0xf]
  %v6382 = vld [vmem:[%s6377 + $0x10] sm:$0xf]
  %v6383 = vld [vmem:[%s6377 + $0x14] sm:$0xf]
  %v6384 = vld [vmem:[%s6377 + $0x18] sm:$0xf]
  %v6385 = vld [vmem:[%s6377 + $0x1c] sm:$0xf]
  %v6386 = vld [vmem:[%s6377 + $0x20] sm:$0xf]
  %v6387 = vld [vmem:[%s6377 + $0x24] sm:$0xf]
  %v6388 = vld [vmem:[%s6377 + $0x28] sm:$0xf]
  %v6389 = vld [vmem:[%s6377 + $0x2c] sm:$0xf]
  %v6390 = vld [vmem:[%s6377 + $0x30] sm:$0xf]
  %v6391 = vld [vmem:[%s6377 + $0x34] sm:$0xf]
  %v6392 = vld [vmem:[%s6377 + $0x38] sm:$0xf]
  %v6393 = vld [vmem:[%s6377 + $0x3c] sm:$0xf]
  %v6410 = vunpack.c.l.b16 %v6378
  %v6411 = vunpack.c.l.b16 %v6379
  %v6412 = vunpack.c.l.b16 %v6380
  %v6413 = vunpack.c.l.b16 %v6381
  %v6414 = vunpack.c.l.b16 %v6382
  %v6415 = vunpack.c.l.b16 %v6383
  %v6416 = vunpack.c.l.b16 %v6384
  %v6417 = vunpack.c.l.b16 %v6385
  %v6418 = vunpack.c.l.b16 %v6386
  %v6419 = vunpack.c.l.b16 %v6387
  %v6420 = vunpack.c.l.b16 %v6388
  %v6421 = vunpack.c.l.b16 %v6389
  %v6422 = vunpack.c.l.b16 %v6390
  %v6423 = vunpack.c.l.b16 %v6391
  %v6424 = vunpack.c.l.b16 %v6392
  %v6425 = vunpack.c.l.b16 %v6393
  %v6426 = vpack.c.b16 %v6411, %v6410
  %v6427 = vpack.c.b16 %v6413, %v6412
  %v6428 = vpack.c.b16 %v6415, %v6414
  %v6429 = vpack.c.b16 %v6417, %v6416
  %v6430 = vpack.c.b16 %v6419, %v6418
  %v6431 = vpack.c.b16 %v6421, %v6420
  %v6432 = vpack.c.b16 %v6423, %v6422
  %v6433 = vpack.c.b16 %v6425, %v6424
  %6442 = vmatprep.subr.bf16.mxu0 0
  %6443 = vmatpush1.bf16.msra.mxu0 %v6426
  %6444 = vmatprep.subr.bf16.mxu0 0
  %6445 = vmatpush1.bf16.msra.mxu0 %v6427
  %6446 = vmatprep.subr.bf16.mxu0 0
  %6447 = vmatpush1.bf16.msra.mxu0 %v6428
  %6448 = vmatprep.subr.bf16.mxu0 0
  %6449 = vmatpush1.bf16.msra.mxu0 %v6429
  %6450 = vmatprep.subr.bf16.mxu0 0
  %6451 = vmatpush1.bf16.msra.mxu0 %v6430
  %6452 = vmatprep.subr.bf16.mxu0 0
  %6453 = vmatpush1.bf16.msra.mxu0 %v6431
  %6454 = vmatprep.subr.bf16.mxu0 0
  %6455 = vmatpush1.bf16.msra.mxu0 %v6432
  %6456 = vmatprep.subr.bf16.mxu0 0
  %6457 = vmatpush1.bf16.msra.mxu0 %v6433
  %6458 = vmatprep.subr.bf16.mxu0 0
  %6459 = vmatpush1.bf16.msra.mxu0 0
  %6460 = vmatprep.subr.bf16.mxu0 0
  %6461 = vmatpush1.bf16.msra.mxu0 0
  %6462 = vmatprep.subr.bf16.mxu0 0
  %6463 = vmatpush1.bf16.msra.mxu0 0
  %6464 = vmatprep.subr.bf16.mxu0 0
  %6465 = vmatpush1.bf16.msra.mxu0 0
  %6466 = vmatprep.subr.bf16.mxu0 0
  %6467 = vmatpush1.bf16.msra.mxu0 0
  %6468 = vmatprep.subr.bf16.mxu0 0
  %6469 = vmatpush1.bf16.msra.mxu0 0
  %6470 = vmatprep.subr.bf16.mxu0 0
  %6471 = vmatpush1.bf16.msra.mxu0 0
  %6472 = vmatprep.subr.bf16.mxu0 0
  %6473 = vmatpush1.bf16.msra.mxu0 0
  %6474 = vmatprep.mubr.bf16.mxu0 0
  %6475 = vmatmul.mubr.bf16.gmra.mrb[0].mxu0 %v6376
  %v6476 = vpop.f32.mrb[0].mxu0
  %v6477 = vadd.f32 0.0, %v6476
  %v6478 = vpop.f32.mrb[0].mxu0
  %v6479 = vpop.f32.mrb[0].mxu0
  %v6480 = vpop.f32.mrb[0].mxu0
  %6481 = vdwg.mxu0
  %v6482 = vadd.f32 %v6373, %v6477
  %s6483 = scalar_lea.vmem [#allocation5], 152
  %v6484 = vld [vmem:[%s6483] sm:$0xff]
  %v6485 = vpack.c.bf16 %v6484, %v6484
  %s6486 = scalar_lea.vmem %s7, 1216
  %v6487 = vld [vmem:[%s6486] sm:$0xf]
  %v6488 = vld [vmem:[%s6486 + $0x4] sm:$0xf]
  %v6489 = vld [vmem:[%s6486 + $0x8] sm:$0xf]
  %v6490 = vld [vmem:[%s6486 + $0xc] sm:$0xf]
  %v6491 = vld [vmem:[%s6486 + $0x10] sm:$0xf]
  %v6492 = vld [vmem:[%s6486 + $0x14] sm:$0xf]
  %v6493 = vld [vmem:[%s6486 + $0x18] sm:$0xf]
  %v6494 = vld [vmem:[%s6486 + $0x1c] sm:$0xf]
  %v6495 = vld [vmem:[%s6486 + $0x20] sm:$0xf]
  %v6496 = vld [vmem:[%s6486 + $0x24] sm:$0xf]
  %v6497 = vld [vmem:[%s6486 + $0x28] sm:$0xf]
  %v6498 = vld [vmem:[%s6486 + $0x2c] sm:$0xf]
  %v6499 = vld [vmem:[%s6486 + $0x30] sm:$0xf]
  %v6500 = vld [vmem:[%s6486 + $0x34] sm:$0xf]
  %v6501 = vld [vmem:[%s6486 + $0x38] sm:$0xf]
  %v6502 = vld [vmem:[%s6486 + $0x3c] sm:$0xf]
  %v6519 = vunpack.c.l.b16 %v6487
  %v6520 = vunpack.c.l.b16 %v6488
  %v6521 = vunpack.c.l.b16 %v6489
  %v6522 = vunpack.c.l.b16 %v6490
  %v6523 = vunpack.c.l.b16 %v6491
  %v6524 = vunpack.c.l.b16 %v6492
  %v6525 = vunpack.c.l.b16 %v6493
  %v6526 = vunpack.c.l.b16 %v6494
  %v6527 = vunpack.c.l.b16 %v6495
  %v6528 = vunpack.c.l.b16 %v6496
  %v6529 = vunpack.c.l.b16 %v6497
  %v6530 = vunpack.c.l.b16 %v6498
  %v6531 = vunpack.c.l.b16 %v6499
  %v6532 = vunpack.c.l.b16 %v6500
  %v6533 = vunpack.c.l.b16 %v6501
  %v6534 = vunpack.c.l.b16 %v6502
  %v6535 = vpack.c.b16 %v6520, %v6519
  %v6536 = vpack.c.b16 %v6522, %v6521
  %v6537 = vpack.c.b16 %v6524, %v6523
  %v6538 = vpack.c.b16 %v6526, %v6525
  %v6539 = vpack.c.b16 %v6528, %v6527
  %v6540 = vpack.c.b16 %v6530, %v6529
  %v6541 = vpack.c.b16 %v6532, %v6531
  %v6542 = vpack.c.b16 %v6534, %v6533
  %6551 = vmatprep.subr.bf16.mxu0 0
  %6552 = vmatpush1.bf16.msra.mxu0 %v6535
  %6553 = vmatprep.subr.bf16.mxu0 0
  %6554 = vmatpush1.bf16.msra.mxu0 %v6536
  %6555 = vmatprep.subr.bf16.mxu0 0
  %6556 = vmatpush1.bf16.msra.mxu0 %v6537
  %6557 = vmatprep.subr.bf16.mxu0 0
  %6558 = vmatpush1.bf16.msra.mxu0 %v6538
  %6559 = vmatprep.subr.bf16.mxu0 0
  %6560 = vmatpush1.bf16.msra.mxu0 %v6539
  %6561 = vmatprep.subr.bf16.mxu0 0
  %6562 = vmatpush1.bf16.msra.mxu0 %v6540
  %6563 = vmatprep.subr.bf16.mxu0 0
  %6564 = vmatpush1.bf16.msra.mxu0 %v6541
  %6565 = vmatprep.subr.bf16.mxu0 0
  %6566 = vmatpush1.bf16.msra.mxu0 %v6542
  %6567 = vmatprep.subr.bf16.mxu0 0
  %6568 = vmatpush1.bf16.msra.mxu0 0
  %6569 = vmatprep.subr.bf16.mxu0 0
  %6570 = vmatpush1.bf16.msra.mxu0 0
  %6571 = vmatprep.subr.bf16.mxu0 0
  %6572 = vmatpush1.bf16.msra.mxu0 0
  %6573 = vmatprep.subr.bf16.mxu0 0
  %6574 = vmatpush1.bf16.msra.mxu0 0
  %6575 = vmatprep.subr.bf16.mxu0 0
  %6576 = vmatpush1.bf16.msra.mxu0 0
  %6577 = vmatprep.subr.bf16.mxu0 0
  %6578 = vmatpush1.bf16.msra.mxu0 0
  %6579 = vmatprep.subr.bf16.mxu0 0
  %6580 = vmatpush1.bf16.msra.mxu0 0
  %6581 = vmatprep.subr.bf16.mxu0 0
  %6582 = vmatpush1.bf16.msra.mxu0 0
  %6583 = vmatprep.mubr.bf16.mxu0 0
  %6584 = vmatmul.mubr.bf16.gmra.mrb[0].mxu0 %v6485
  %v6585 = vpop.f32.mrb[0].mxu0
  %v6586 = vadd.f32 0.0, %v6585
  %v6587 = vpop.f32.mrb[0].mxu0
  %v6588 = vpop.f32.mrb[0].mxu0
  %v6589 = vpop.f32.mrb[0].mxu0
  %6590 = vdwg.mxu0
  %v6591 = vadd.f32 %v6482, %v6586
  %s6592 = scalar_lea.vmem [#allocation5], 160
  %v6593 = vld [vmem:[%s6592] sm:$0xff]
  %v6594 = vpack.c.bf16 %v6593, %v6593
  %s6595 = scalar_lea.vmem %s7, 1280
  %v6596 = vld [vmem:[%s6595] sm:$0xf]
  %v6597 = vld [vmem:[%s6595 + $0x4] sm:$0xf]
  %v6598 = vld [vmem:[%s6595 + $0x8] sm:$0xf]
  %v6599 = vld [vmem:[%s6595 + $0xc] sm:$0xf]
  %v6600 = vld [vmem:[%s6595 + $0x10] sm:$0xf]
  %v6601 = vld [vmem:[%s6595 + $0x14] sm:$0xf]
  %v6602 = vld [vmem:[%s6595 + $0x18] sm:$0xf]
  %v6603 = vld [vmem:[%s6595 + $0x1c] sm:$0xf]
  %v6604 = vld [vmem:[%s6595 + $0x20] sm:$0xf]
  %v6605 = vld [vmem:[%s6595 + $0x24] sm:$0xf]
  %v6606 = vld [vmem:[%s6595 + $0x28] sm:$0xf]
  %v6607 = vld [vmem:[%s6595 + $0x2c] sm:$0xf]
  %v6608 = vld [vmem:[%s6595 + $0x30] sm:$0xf]
  %v6609 = vld [vmem:[%s6595 + $0x34] sm:$0xf]
  %v6610 = vld [vmem:[%s6595 + $0x38] sm:$0xf]
  %v6611 = vld [vmem:[%s6595 + $0x3c] sm:$0xf]
  %v6628 = vunpack.c.l.b16 %v6596
  %v6629 = vunpack.c.l.b16 %v6597
  %v6630 = vunpack.c.l.b16 %v6598
  %v6631 = vunpack.c.l.b16 %v6599
  %v6632 = vunpack.c.l.b16 %v6600
  %v6633 = vunpack.c.l.b16 %v6601
  %v6634 = vunpack.c.l.b16 %v6602
  %v6635 = vunpack.c.l.b16 %v6603
  %v6636 = vunpack.c.l.b16 %v6604
  %v6637 = vunpack.c.l.b16 %v6605
  %v6638 = vunpack.c.l.b16 %v6606
  %v6639 = vunpack.c.l.b16 %v6607
  %v6640 = vunpack.c.l.b16 %v6608
  %v6641 = vunpack.c.l.b16 %v6609
  %v6642 = vunpack.c.l.b16 %v6610
  %v6643 = vunpack.c.l.b16 %v6611
  %v6644 = vpack.c.b16 %v6629, %v6628
  %v6645 = vpack.c.b16 %v6631, %v6630
  %v6646 = vpack.c.b16 %v6633, %v6632
  %v6647 = vpack.c.b16 %v6635, %v6634
  %v6648 = vpack.c.b16 %v6637, %v6636
  %v6649 = vpack.c.b16 %v6639, %v6638
  %v6650 = vpack.c.b16 %v6641, %v6640
  %v6651 = vpack.c.b16 %v6643, %v6642
  %6660 = vmatprep.subr.bf16.mxu0 0
  %6661 = vmatpush1.bf16.msra.mxu0 %v6644
  %6662 = vmatprep.subr.bf16.mxu0 0
  %6663 = vmatpush1.bf16.msra.mxu0 %v6645
  %6664 = vmatprep.subr.bf16.mxu0 0
  %6665 = vmatpush1.bf16.msra.mxu0 %v6646
  %6666 = vmatprep.subr.bf16.mxu0 0
  %6667 = vmatpush1.bf16.msra.mxu0 %v6647
  %6668 = vmatprep.subr.bf16.mxu0 0
  %6669 = vmatpush1.bf16.msra.mxu0 %v6648
  %6670 = vmatprep.subr.bf16.mxu0 0
  %6671 = vmatpush1.bf16.msra.mxu0 %v6649
  %6672 = vmatprep.subr.bf16.mxu0 0
  %6673 = vmatpush1.bf16.msra.mxu0 %v6650
  %6674 = vmatprep.subr.bf16.mxu0 0
  %6675 = vmatpush1.bf16.msra.mxu0 %v6651
  %6676 = vmatprep.subr.bf16.mxu0 0
  %6677 = vmatpush1.bf16.msra.mxu0 0
  %6678 = vmatprep.subr.bf16.mxu0 0
  %6679 = vmatpush1.bf16.msra.mxu0 0
  %6680 = vmatprep.subr.bf16.mxu0 0
  %6681 = vmatpush1.bf16.msra.mxu0 0
  %6682 = vmatprep.subr.bf16.mxu0 0
  %6683 = vmatpush1.bf16.msra.mxu0 0
  %6684 = vmatprep.subr.bf16.mxu0 0
  %6685 = vmatpush1.bf16.msra.mxu0 0
  %6686 = vmatprep.subr.bf16.mxu0 0
  %6687 = vmatpush1.bf16.msra.mxu0 0
  %6688 = vmatprep.subr.bf16.mxu0 0
  %6689 = vmatpush1.bf16.msra.mxu0 0
  %6690 = vmatprep.subr.bf16.mxu0 0
  %6691 = vmatpush1.bf16.msra.mxu0 0
  %6692 = vmatprep.mubr.bf16.mxu0 0
  %6693 = vmatmul.mubr.bf16.gmra.mrb[0].mxu0 %v6594
  %v6694 = vpop.f32.mrb[0].mxu0
  %v6695 = vadd.f32 0.0, %v6694
  %v6696 = vpop.f32.mrb[0].mxu0
  %v6697 = vpop.f32.mrb[0].mxu0
  %v6698 = vpop.f32.mrb[0].mxu0
  %6699 = vdwg.mxu0
  %v6700 = vadd.f32 %v6591, %v6695
  %s6701 = scalar_lea.vmem [#allocation5], 168
  %v6702 = vld [vmem:[%s6701] sm:$0xff]
  %v6703 = vpack.c.bf16 %v6702, %v6702
  %s6704 = scalar_lea.vmem %s7, 1344
  %v6705 = vld [vmem:[%s6704] sm:$0xf]
  %v6706 = vld [vmem:[%s6704 + $0x4] sm:$0xf]
  %v6707 = vld [vmem:[%s6704 + $0x8] sm:$0xf]
  %v6708 = vld [vmem:[%s6704 + $0xc] sm:$0xf]
  %v6709 = vld [vmem:[%s6704 + $0x10] sm:$0xf]
  %v6710 = vld [vmem:[%s6704 + $0x14] sm:$0xf]
  %v6711 = vld [vmem:[%s6704 + $0x18] sm:$0xf]
  %v6712 = vld [vmem:[%s6704 + $0x1c] sm:$0xf]
  %v6713 = vld [vmem:[%s6704 + $0x20] sm:$0xf]
  %v6714 = vld [vmem:[%s6704 + $0x24] sm:$0xf]
  %v6715 = vld [vmem:[%s6704 + $0x28] sm:$0xf]
  %v6716 = vld [vmem:[%s6704 + $0x2c] sm:$0xf]
  %v6717 = vld [vmem:[%s6704 + $0x30] sm:$0xf]
  %v6718 = vld [vmem:[%s6704 + $0x34] sm:$0xf]
  %v6719 = vld [vmem:[%s6704 + $0x38] sm:$0xf]
  %v6720 = vld [vmem:[%s6704 + $0x3c] sm:$0xf]
  %v6737 = vunpack.c.l.b16 %v6705
  %v6738 = vunpack.c.l.b16 %v6706
  %v6739 = vunpack.c.l.b16 %v6707
  %v6740 = vunpack.c.l.b16 %v6708
  %v6741 = vunpack.c.l.b16 %v6709
  %v6742 = vunpack.c.l.b16 %v6710
  %v6743 = vunpack.c.l.b16 %v6711
  %v6744 = vunpack.c.l.b16 %v6712
  %v6745 = vunpack.c.l.b16 %v6713
  %v6746 = vunpack.c.l.b16 %v6714
  %v6747 = vunpack.c.l.b16 %v6715
  %v6748 = vunpack.c.l.b16 %v6716
  %v6749 = vunpack.c.l.b16 %v6717
  %v6750 = vunpack.c.l.b16 %v6718
  %v6751 = vunpack.c.l.b16 %v6719
  %v6752 = vunpack.c.l.b16 %v6720
  %v6753 = vpack.c.b16 %v6738, %v6737
  %v6754 = vpack.c.b16 %v6740, %v6739
  %v6755 = vpack.c.b16 %v6742, %v6741
  %v6756 = vpack.c.b16 %v6744, %v6743
  %v6757 = vpack.c.b16 %v6746, %v6745
  %v6758 = vpack.c.b16 %v6748, %v6747
  %v6759 = vpack.c.b16 %v6750, %v6749
  %v6760 = vpack.c.b16 %v6752, %v6751
  %6769 = vmatprep.subr.bf16.mxu0 0
  %6770 = vmatpush1.bf16.msra.mxu0 %v6753
  %6771 = vmatprep.subr.bf16.mxu0 0
  %6772 = vmatpush1.bf16.msra.mxu0 %v6754
  %6773 = vmatprep.subr.bf16.mxu0 0
  %6774 = vmatpush1.bf16.msra.mxu0 %v6755
  %6775 = vmatprep.subr.bf16.mxu0 0
  %6776 = vmatpush1.bf16.msra.mxu0 %v6756
  %6777 = vmatprep.subr.bf16.mxu0 0
  %6778 = vmatpush1.bf16.msra.mxu0 %v6757
  %6779 = vmatprep.subr.bf16.mxu0 0
  %6780 = vmatpush1.bf16.msra.mxu0 %v6758
  %6781 = vmatprep.subr.bf16.mxu0 0
  %6782 = vmatpush1.bf16.msra.mxu0 %v6759
  %6783 = vmatprep.subr.bf16.mxu0 0
  %6784 = vmatpush1.bf16.msra.mxu0 %v6760
  %6785 = vmatprep.subr.bf16.mxu0 0
  %6786 = vmatpush1.bf16.msra.mxu0 0
  %6787 = vmatprep.subr.bf16.mxu0 0
  %6788 = vmatpush1.bf16.msra.mxu0 0
  %6789 = vmatprep.subr.bf16.mxu0 0
  %6790 = vmatpush1.bf16.msra.mxu0 0
  %6791 = vmatprep.subr.bf16.mxu0 0
  %6792 = vmatpush1.bf16.msra.mxu0 0
  %6793 = vmatprep.subr.bf16.mxu0 0
  %6794 = vmatpush1.bf16.msra.mxu0 0
  %6795 = vmatprep.subr.bf16.mxu0 0
  %6796 = vmatpush1.bf16.msra.mxu0 0
  %6797 = vmatprep.subr.bf16.mxu0 0
  %6798 = vmatpush1.bf16.msra.mxu0 0
  %6799 = vmatprep.subr.bf16.mxu0 0
  %6800 = vmatpush1.bf16.msra.mxu0 0
  %6801 = vmatprep.mubr.bf16.mxu0 0
  %6802 = vmatmul.mubr.bf16.gmra.mrb[0].mxu0 %v6703
  %v6803 = vpop.f32.mrb[0].mxu0
  %v6804 = vadd.f32 0.0, %v6803
  %v6805 = vpop.f32.mrb[0].mxu0
  %v6806 = vpop.f32.mrb[0].mxu0
  %v6807 = vpop.f32.mrb[0].mxu0
  %6808 = vdwg.mxu0
  %v6809 = vadd.f32 %v6700, %v6804
  %s6810 = scalar_lea.vmem [#allocation5], 176
  %v6811 = vld [vmem:[%s6810] sm:$0xff]
  %v6812 = vpack.c.bf16 %v6811, %v6811
  %s6813 = scalar_lea.vmem %s7, 1408
  %v6814 = vld [vmem:[%s6813] sm:$0xf]
  %v6815 = vld [vmem:[%s6813 + $0x4] sm:$0xf]
  %v6816 = vld [vmem:[%s6813 + $0x8] sm:$0xf]
  %v6817 = vld [vmem:[%s6813 + $0xc] sm:$0xf]
  %v6818 = vld [vmem:[%s6813 + $0x10] sm:$0xf]
  %v6819 = vld [vmem:[%s6813 + $0x14] sm:$0xf]
  %v6820 = vld [vmem:[%s6813 + $0x18] sm:$0xf]
  %v6821 = vld [vmem:[%s6813 + $0x1c] sm:$0xf]
  %v6822 = vld [vmem:[%s6813 + $0x20] sm:$0xf]
  %v6823 = vld [vmem:[%s6813 + $0x24] sm:$0xf]
  %v6824 = vld [vmem:[%s6813 + $0x28] sm:$0xf]
  %v6825 = vld [vmem:[%s6813 + $0x2c] sm:$0xf]
  %v6826 = vld [vmem:[%s6813 + $0x30] sm:$0xf]
  %v6827 = vld [vmem:[%s6813 + $0x34] sm:$0xf]
  %v6828 = vld [vmem:[%s6813 + $0x38] sm:$0xf]
  %v6829 = vld [vmem:[%s6813 + $0x3c] sm:$0xf]
  %v6846 = vunpack.c.l.b16 %v6814
  %v6847 = vunpack.c.l.b16 %v6815
  %v6848 = vunpack.c.l.b16 %v6816
  %v6849 = vunpack.c.l.b16 %v6817
  %v6850 = vunpack.c.l.b16 %v6818
  %v6851 = vunpack.c.l.b16 %v6819
  %v6852 = vunpack.c.l.b16 %v6820
  %v6853 = vunpack.c.l.b16 %v6821
  %v6854 = vunpack.c.l.b16 %v6822
  %v6855 = vunpack.c.l.b16 %v6823
  %v6856 = vunpack.c.l.b16 %v6824
  %v6857 = vunpack.c.l.b16 %v6825
  %v6858 = vunpack.c.l.b16 %v6826
  %v6859 = vunpack.c.l.b16 %v6827
  %v6860 = vunpack.c.l.b16 %v6828
  %v6861 = vunpack.c.l.b16 %v6829
  %v6862 = vpack.c.b16 %v6847, %v6846
  %v6863 = vpack.c.b16 %v6849, %v6848
  %v6864 = vpack.c.b16 %v6851, %v6850
  %v6865 = vpack.c.b16 %v6853, %v6852
  %v6866 = vpack.c.b16 %v6855, %v6854
  %v6867 = vpack.c.b16 %v6857, %v6856
  %v6868 = vpack.c.b16 %v6859, %v6858
  %v6869 = vpack.c.b16 %v6861, %v6860
  %6878 = vmatprep.subr.bf16.mxu0 0
  %6879 = vmatpush1.bf16.msra.mxu0 %v6862
  %6880 = vmatprep.subr.bf16.mxu0 0
  %6881 = vmatpush1.bf16.msra.mxu0 %v6863
  %6882 = vmatprep.subr.bf16.mxu0 0
  %6883 = vmatpush1.bf16.msra.mxu0 %v6864
  %6884 = vmatprep.subr.bf16.mxu0 0
  %6885 = vmatpush1.bf16.msra.mxu0 %v6865
  %6886 = vmatprep.subr.bf16.mxu0 0
  %6887 = vmatpush1.bf16.msra.mxu0 %v6866
  %6888 = vmatprep.subr.bf16.mxu0 0
  %6889 = vmatpush1.bf16.msra.mxu0 %v6867
  %6890 = vmatprep.subr.bf16.mxu0 0
  %6891 = vmatpush1.bf16.msra.mxu0 %v6868
  %6892 = vmatprep.subr.bf16.mxu0 0
  %6893 = vmatpush1.bf16.msra.mxu0 %v6869
  %6894 = vmatprep.subr.bf16.mxu0 0
  %6895 = vmatpush1.bf16.msra.mxu0 0
  %6896 = vmatprep.subr.bf16.mxu0 0
  %6897 = vmatpush1.bf16.msra.mxu0 0
  %6898 = vmatprep.subr.bf16.mxu0 0
  %6899 = vmatpush1.bf16.msra.mxu0 0
  %6900 = vmatprep.subr.bf16.mxu0 0
  %6901 = vmatpush1.bf16.msra.mxu0 0
  %6902 = vmatprep.subr.bf16.mxu0 0
  %6903 = vmatpush1.bf16.msra.mxu0 0
  %6904 = vmatprep.subr.bf16.mxu0 0
  %6905 = vmatpush1.bf16.msra.mxu0 0
  %6906 = vmatprep.subr.bf16.mxu0 0
  %6907 = vmatpush1.bf16.msra.mxu0 0
  %6908 = vmatprep.subr.bf16.mxu0 0
  %6909 = vmatpush1.bf16.msra.mxu0 0
  %6910 = vmatprep.mubr.bf16.mxu0 0
  %6911 = vmatmul.mubr.bf16.gmra.mrb[0].mxu0 %v6812
  %v6912 = vpop.f32.mrb[0].mxu0
  %v6913 = vadd.f32 0.0, %v6912
  %v6914 = vpop.f32.mrb[0].mxu0
  %v6915 = vpop.f32.mrb[0].mxu0
  %v6916 = vpop.f32.mrb[0].mxu0
  %6917 = vdwg.mxu0
  %v6918 = vadd.f32 %v6809, %v6913
  %s6919 = scalar_lea.vmem [#allocation5], 184
  %v6920 = vld [vmem:[%s6919] sm:$0xff]
  %v6921 = vpack.c.bf16 %v6920, %v6920
  %s6922 = scalar_lea.vmem %s7, 1472
  %v6923 = vld [vmem:[%s6922] sm:$0xf]
  %v6924 = vld [vmem:[%s6922 + $0x4] sm:$0xf]
  %v6925 = vld [vmem:[%s6922 + $0x8] sm:$0xf]
  %v6926 = vld [vmem:[%s6922 + $0xc] sm:$0xf]
  %v6927 = vld [vmem:[%s6922 + $0x10] sm:$0xf]
  %v6928 = vld [vmem:[%s6922 + $0x14] sm:$0xf]
  %v6929 = vld [vmem:[%s6922 + $0x18] sm:$0xf]
  %v6930 = vld [vmem:[%s6922 + $0x1c] sm:$0xf]
  %v6931 = vld [vmem:[%s6922 + $0x20] sm:$0xf]
  %v6932 = vld [vmem:[%s6922 + $0x24] sm:$0xf]
  %v6933 = vld [vmem:[%s6922 + $0x28] sm:$0xf]
  %v6934 = vld [vmem:[%s6922 + $0x2c] sm:$0xf]
  %v6935 = vld [vmem:[%s6922 + $0x30] sm:$0xf]
  %v6936 = vld [vmem:[%s6922 + $0x34] sm:$0xf]
  %v6937 = vld [vmem:[%s6922 + $0x38] sm:$0xf]
  %v6938 = vld [vmem:[%s6922 + $0x3c] sm:$0xf]
  %v6955 = vunpack.c.l.b16 %v6923
  %v6956 = vunpack.c.l.b16 %v6924
  %v6957 = vunpack.c.l.b16 %v6925
  %v6958 = vunpack.c.l.b16 %v6926
  %v6959 = vunpack.c.l.b16 %v6927
  %v6960 = vunpack.c.l.b16 %v6928
  %v6961 = vunpack.c.l.b16 %v6929
  %v6962 = vunpack.c.l.b16 %v6930
  %v6963 = vunpack.c.l.b16 %v6931
  %v6964 = vunpack.c.l.b16 %v6932
  %v6965 = vunpack.c.l.b16 %v6933
  %v6966 = vunpack.c.l.b16 %v6934
  %v6967 = vunpack.c.l.b16 %v6935
  %v6968 = vunpack.c.l.b16 %v6936
  %v6969 = vunpack.c.l.b16 %v6937
  %v6970 = vunpack.c.l.b16 %v6938
  %v6971 = vpack.c.b16 %v6956, %v6955
  %v6972 = vpack.c.b16 %v6958, %v6957
  %v6973 = vpack.c.b16 %v6960, %v6959
  %v6974 = vpack.c.b16 %v6962, %v6961
  %v6975 = vpack.c.b16 %v6964, %v6963
  %v6976 = vpack.c.b16 %v6966, %v6965
  %v6977 = vpack.c.b16 %v6968, %v6967
  %v6978 = vpack.c.b16 %v6970, %v6969
  %6987 = vmatprep.subr.bf16.mxu0 0
  %6988 = vmatpush1.bf16.msra.mxu0 %v6971
  %6989 = vmatprep.subr.bf16.mxu0 0
  %6990 = vmatpush1.bf16.msra.mxu0 %v6972
  %6991 = vmatprep.subr.bf16.mxu0 0
  %6992 = vmatpush1.bf16.msra.mxu0 %v6973
  %6993 = vmatprep.subr.bf16.mxu0 0
  %6994 = vmatpush1.bf16.msra.mxu0 %v6974
  %6995 = vmatprep.subr.bf16.mxu0 0
  %6996 = vmatpush1.bf16.msra.mxu0 %v6975
  %6997 = vmatprep.subr.bf16.mxu0 0
  %6998 = vmatpush1.bf16.msra.mxu0 %v6976
  %6999 = vmatprep.subr.bf16.mxu0 0
  %7000 = vmatpush1.bf16.msra.mxu0 %v6977
  %7001 = vmatprep.subr.bf16.mxu0 0
  %7002 = vmatpush1.bf16.msra.mxu0 %v6978
  %7003 = vmatprep.subr.bf16.mxu0 0
  %7004 = vmatpush1.bf16.msra.mxu0 0
  %7005 = vmatprep.subr.bf16.mxu0 0
  %7006 = vmatpush1.bf16.msra.mxu0 0
  %7007 = vmatprep.subr.bf16.mxu0 0
  %7008 = vmatpush1.bf16.msra.mxu0 0
  %7009 = vmatprep.subr.bf16.mxu0 0
  %7010 = vmatpush1.bf16.msra.mxu0 0
  %7011 = vmatprep.subr.bf16.mxu0 0
  %7012 = vmatpush1.bf16.msra.mxu0 0
  %7013 = vmatprep.subr.bf16.mxu0 0
  %7014 = vmatpush1.bf16.msra.mxu0 0
  %7015 = vmatprep.subr.bf16.mxu0 0
  %7016 = vmatpush1.bf16.msra.mxu0 0
  %7017 = vmatprep.subr.bf16.mxu0 0
  %7018 = vmatpush1.bf16.msra.mxu0 0
  %7019 = vmatprep.mubr.bf16.mxu0 0
  %7020 = vmatmul.mubr.bf16.gmra.mrb[0].mxu0 %v6921
  %v7021 = vpop.f32.mrb[0].mxu0
  %v7022 = vadd.f32 0.0, %v7021
  %v7023 = vpop.f32.mrb[0].mxu0
  %v7024 = vpop.f32.mrb[0].mxu0
  %v7025 = vpop.f32.mrb[0].mxu0
  %7026 = vdwg.mxu0
  %v7027 = vadd.f32 %v6918, %v7022
  %s7028 = scalar_lea.vmem [#allocation5], 192
  %v7029 = vld [vmem:[%s7028] sm:$0xff]
  %v7030 = vpack.c.bf16 %v7029, %v7029
  %s7031 = scalar_lea.vmem %s7, 1536
  %v7032 = vld [vmem:[%s7031] sm:$0xf]
  %v7033 = vld [vmem:[%s7031 + $0x4] sm:$0xf]
  %v7034 = vld [vmem:[%s7031 + $0x8] sm:$0xf]
  %v7035 = vld [vmem:[%s7031 + $0xc] sm:$0xf]
  %v7036 = vld [vmem:[%s7031 + $0x10] sm:$0xf]
  %v7037 = vld [vmem:[%s7031 + $0x14] sm:$0xf]
  %v7038 = vld [vmem:[%s7031 + $0x18] sm:$0xf]
  %v7039 = vld [vmem:[%s7031 + $0x1c] sm:$0xf]
  %v7040 = vld [vmem:[%s7031 + $0x20] sm:$0xf]
  %v7041 = vld [vmem:[%s7031 + $0x24] sm:$0xf]
  %v7042 = vld [vmem:[%s7031 + $0x28] sm:$0xf]
  %v7043 = vld [vmem:[%s7031 + $0x2c] sm:$0xf]
  %v7044 = vld [vmem:[%s7031 + $0x30] sm:$0xf]
  %v7045 = vld [vmem:[%s7031 + $0x34] sm:$0xf]
  %v7046 = vld [vmem:[%s7031 + $0x38] sm:$0xf]
  %v7047 = vld [vmem:[%s7031 + $0x3c] sm:$0xf]
  %v7064 = vunpack.c.l.b16 %v7032
  %v7065 = vunpack.c.l.b16 %v7033
  %v7066 = vunpack.c.l.b16 %v7034
  %v7067 = vunpack.c.l.b16 %v7035
  %v7068 = vunpack.c.l.b16 %v7036
  %v7069 = vunpack.c.l.b16 %v7037
  %v7070 = vunpack.c.l.b16 %v7038
  %v7071 = vunpack.c.l.b16 %v7039
  %v7072 = vunpack.c.l.b16 %v7040
  %v7073 = vunpack.c.l.b16 %v7041
  %v7074 = vunpack.c.l.b16 %v7042
  %v7075 = vunpack.c.l.b16 %v7043
  %v7076 = vunpack.c.l.b16 %v7044
  %v7077 = vunpack.c.l.b16 %v7045
  %v7078 = vunpack.c.l.b16 %v7046
  %v7079 = vunpack.c.l.b16 %v7047
  %v7080 = vpack.c.b16 %v7065, %v7064
  %v7081 = vpack.c.b16 %v7067, %v7066
  %v7082 = vpack.c.b16 %v7069, %v7068
  %v7083 = vpack.c.b16 %v7071, %v7070
  %v7084 = vpack.c.b16 %v7073, %v7072
  %v7085 = vpack.c.b16 %v7075, %v7074
  %v7086 = vpack.c.b16 %v7077, %v7076
  %v7087 = vpack.c.b16 %v7079, %v7078
  %7096 = vmatprep.subr.bf16.mxu0 0
  %7097 = vmatpush1.bf16.msra.mxu0 %v7080
  %7098 = vmatprep.subr.bf16.mxu0 0
  %7099 = vmatpush1.bf16.msra.mxu0 %v7081
  %7100 = vmatprep.subr.bf16.mxu0 0
  %7101 = vmatpush1.bf16.msra.mxu0 %v7082
  %7102 = vmatprep.subr.bf16.mxu0 0
  %7103 = vmatpush1.bf16.msra.mxu0 %v7083
  %7104 = vmatprep.subr.bf16.mxu0 0
  %7105 = vmatpush1.bf16.msra.mxu0 %v7084
  %7106 = vmatprep.subr.bf16.mxu0 0
  %7107 = vmatpush1.bf16.msra.mxu0 %v7085
  %7108 = vmatprep.subr.bf16.mxu0 0
  %7109 = vmatpush1.bf16.msra.mxu0 %v7086
  %7110 = vmatprep.subr.bf16.mxu0 0
  %7111 = vmatpush1.bf16.msra.mxu0 %v7087
  %7112 = vmatprep.subr.bf16.mxu0 0
  %7113 = vmatpush1.bf16.msra.mxu0 0
  %7114 = vmatprep.subr.bf16.mxu0 0
  %7115 = vmatpush1.bf16.msra.mxu0 0
  %7116 = vmatprep.subr.bf16.mxu0 0
  %7117 = vmatpush1.bf16.msra.mxu0 0
  %7118 = vmatprep.subr.bf16.mxu0 0
  %7119 = vmatpush1.bf16.msra.mxu0 0
  %7120 = vmatprep.subr.bf16.mxu0 0
  %7121 = vmatpush1.bf16.msra.mxu0 0
  %7122 = vmatprep.subr.bf16.mxu0 0
  %7123 = vmatpush1.bf16.msra.mxu0 0
  %7124 = vmatprep.subr.bf16.mxu0 0
  %7125 = vmatpush1.bf16.msra.mxu0 0
  %7126 = vmatprep.subr.bf16.mxu0 0
  %7127 = vmatpush1.bf16.msra.mxu0 0
  %7128 = vmatprep.mubr.bf16.mxu0 0
  %7129 = vmatmul.mubr.bf16.gmra.mrb[0].mxu0 %v7030
  %v7130 = vpop.f32.mrb[0].mxu0
  %v7131 = vadd.f32 0.0, %v7130
  %v7132 = vpop.f32.mrb[0].mxu0
  %v7133 = vpop.f32.mrb[0].mxu0
  %v7134 = vpop.f32.mrb[0].mxu0
  %7135 = vdwg.mxu0
  %v7136 = vadd.f32 %v7027, %v7131
  %s7137 = scalar_lea.vmem [#allocation5], 200
  %v7138 = vld [vmem:[%s7137] sm:$0xff]
  %v7139 = vpack.c.bf16 %v7138, %v7138
  %s7140 = scalar_lea.vmem %s7, 1600
  %v7141 = vld [vmem:[%s7140] sm:$0xf]
  %v7142 = vld [vmem:[%s7140 + $0x4] sm:$0xf]
  %v7143 = vld [vmem:[%s7140 + $0x8] sm:$0xf]
  %v7144 = vld [vmem:[%s7140 + $0xc] sm:$0xf]
  %v7145 = vld [vmem:[%s7140 + $0x10] sm:$0xf]
  %v7146 = vld [vmem:[%s7140 + $0x14] sm:$0xf]
  %v7147 = vld [vmem:[%s7140 + $0x18] sm:$0xf]
  %v7148 = vld [vmem:[%s7140 + $0x1c] sm:$0xf]
  %v7149 = vld [vmem:[%s7140 + $0x20] sm:$0xf]
  %v7150 = vld [vmem:[%s7140 + $0x24] sm:$0xf]
  %v7151 = vld [vmem:[%s7140 + $0x28] sm:$0xf]
  %v7152 = vld [vmem:[%s7140 + $0x2c] sm:$0xf]
  %v7153 = vld [vmem:[%s7140 + $0x30] sm:$0xf]
  %v7154 = vld [vmem:[%s7140 + $0x34] sm:$0xf]
  %v7155 = vld [vmem:[%s7140 + $0x38] sm:$0xf]
  %v7156 = vld [vmem:[%s7140 + $0x3c] sm:$0xf]
  %v7173 = vunpack.c.l.b16 %v7141
  %v7174 = vunpack.c.l.b16 %v7142
  %v7175 = vunpack.c.l.b16 %v7143
  %v7176 = vunpack.c.l.b16 %v7144
  %v7177 = vunpack.c.l.b16 %v7145
  %v7178 = vunpack.c.l.b16 %v7146
  %v7179 = vunpack.c.l.b16 %v7147
  %v7180 = vunpack.c.l.b16 %v7148
  %v7181 = vunpack.c.l.b16 %v7149
  %v7182 = vunpack.c.l.b16 %v7150
  %v7183 = vunpack.c.l.b16 %v7151
  %v7184 = vunpack.c.l.b16 %v7152
  %v7185 = vunpack.c.l.b16 %v7153
  %v7186 = vunpack.c.l.b16 %v7154
  %v7187 = vunpack.c.l.b16 %v7155
  %v7188 = vunpack.c.l.b16 %v7156
  %v7189 = vpack.c.b16 %v7174, %v7173
  %v7190 = vpack.c.b16 %v7176, %v7175
  %v7191 = vpack.c.b16 %v7178, %v7177
  %v7192 = vpack.c.b16 %v7180, %v7179
  %v7193 = vpack.c.b16 %v7182, %v7181
  %v7194 = vpack.c.b16 %v7184, %v7183
  %v7195 = vpack.c.b16 %v7186, %v7185
  %v7196 = vpack.c.b16 %v7188, %v7187
  %7205 = vmatprep.subr.bf16.mxu0 0
  %7206 = vmatpush1.bf16.msra.mxu0 %v7189
  %7207 = vmatprep.subr.bf16.mxu0 0
  %7208 = vmatpush1.bf16.msra.mxu0 %v7190
  %7209 = vmatprep.subr.bf16.mxu0 0
  %7210 = vmatpush1.bf16.msra.mxu0 %v7191
  %7211 = vmatprep.subr.bf16.mxu0 0
  %7212 = vmatpush1.bf16.msra.mxu0 %v7192
  %7213 = vmatprep.subr.bf16.mxu0 0
  %7214 = vmatpush1.bf16.msra.mxu0 %v7193
  %7215 = vmatprep.subr.bf16.mxu0 0
  %7216 = vmatpush1.bf16.msra.mxu0 %v7194
  %7217 = vmatprep.subr.bf16.mxu0 0
  %7218 = vmatpush1.bf16.msra.mxu0 %v7195
  %7219 = vmatprep.subr.bf16.mxu0 0
  %7220 = vmatpush1.bf16.msra.mxu0 %v7196
  %7221 = vmatprep.subr.bf16.mxu0 0
  %7222 = vmatpush1.bf16.msra.mxu0 0
  %7223 = vmatprep.subr.bf16.mxu0 0
  %7224 = vmatpush1.bf16.msra.mxu0 0
  %7225 = vmatprep.subr.bf16.mxu0 0
  %7226 = vmatpush1.bf16.msra.mxu0 0
  %7227 = vmatprep.subr.bf16.mxu0 0
  %7228 = vmatpush1.bf16.msra.mxu0 0
  %7229 = vmatprep.subr.bf16.mxu0 0
  %7230 = vmatpush1.bf16.msra.mxu0 0
  %7231 = vmatprep.subr.bf16.mxu0 0
  %7232 = vmatpush1.bf16.msra.mxu0 0
  %7233 = vmatprep.subr.bf16.mxu0 0
  %7234 = vmatpush1.bf16.msra.mxu0 0
  %7235 = vmatprep.subr.bf16.mxu0 0
  %7236 = vmatpush1.bf16.msra.mxu0 0
  %7237 = vmatprep.mubr.bf16.mxu0 0
  %7238 = vmatmul.mubr.bf16.gmra.mrb[0].mxu0 %v7139
  %v7239 = vpop.f32.mrb[0].mxu0
  %v7240 = vadd.f32 0.0, %v7239
  %v7241 = vpop.f32.mrb[0].mxu0
  %v7242 = vpop.f32.mrb[0].mxu0
  %v7243 = vpop.f32.mrb[0].mxu0
  %7244 = vdwg.mxu0
  %v7245 = vadd.f32 %v7136, %v7240
  %s7246 = scalar_lea.vmem [#allocation5], 208
  %v7247 = vld [vmem:[%s7246] sm:$0xff]
  %v7248 = vpack.c.bf16 %v7247, %v7247
  %s7249 = scalar_lea.vmem %s7, 1664
  %v7250 = vld [vmem:[%s7249] sm:$0xf]
  %v7251 = vld [vmem:[%s7249 + $0x4] sm:$0xf]
  %v7252 = vld [vmem:[%s7249 + $0x8] sm:$0xf]
  %v7253 = vld [vmem:[%s7249 + $0xc] sm:$0xf]
  %v7254 = vld [vmem:[%s7249 + $0x10] sm:$0xf]
  %v7255 = vld [vmem:[%s7249 + $0x14] sm:$0xf]
  %v7256 = vld [vmem:[%s7249 + $0x18] sm:$0xf]
  %v7257 = vld [vmem:[%s7249 + $0x1c] sm:$0xf]
  %v7258 = vld [vmem:[%s7249 + $0x20] sm:$0xf]
  %v7259 = vld [vmem:[%s7249 + $0x24] sm:$0xf]
  %v7260 = vld [vmem:[%s7249 + $0x28] sm:$0xf]
  %v7261 = vld [vmem:[%s7249 + $0x2c] sm:$0xf]
  %v7262 = vld [vmem:[%s7249 + $0x30] sm:$0xf]
  %v7263 = vld [vmem:[%s7249 + $0x34] sm:$0xf]
  %v7264 = vld [vmem:[%s7249 + $0x38] sm:$0xf]
  %v7265 = vld [vmem:[%s7249 + $0x3c] sm:$0xf]
  %v7282 = vunpack.c.l.b16 %v7250
  %v7283 = vunpack.c.l.b16 %v7251
  %v7284 = vunpack.c.l.b16 %v7252
  %v7285 = vunpack.c.l.b16 %v7253
  %v7286 = vunpack.c.l.b16 %v7254
  %v7287 = vunpack.c.l.b16 %v7255
  %v7288 = vunpack.c.l.b16 %v7256
  %v7289 = vunpack.c.l.b16 %v7257
  %v7290 = vunpack.c.l.b16 %v7258
  %v7291 = vunpack.c.l.b16 %v7259
  %v7292 = vunpack.c.l.b16 %v7260
  %v7293 = vunpack.c.l.b16 %v7261
  %v7294 = vunpack.c.l.b16 %v7262
  %v7295 = vunpack.c.l.b16 %v7263
  %v7296 = vunpack.c.l.b16 %v7264
  %v7297 = vunpack.c.l.b16 %v7265
  %v7298 = vpack.c.b16 %v7283, %v7282
  %v7299 = vpack.c.b16 %v7285, %v7284
  %v7300 = vpack.c.b16 %v7287, %v7286
  %v7301 = vpack.c.b16 %v7289, %v7288
  %v7302 = vpack.c.b16 %v7291, %v7290
  %v7303 = vpack.c.b16 %v7293, %v7292
  %v7304 = vpack.c.b16 %v7295, %v7294
  %v7305 = vpack.c.b16 %v7297, %v7296
  %7314 = vmatprep.subr.bf16.mxu0 0
  %7315 = vmatpush1.bf16.msra.mxu0 %v7298
  %7316 = vmatprep.subr.bf16.mxu0 0
  %7317 = vmatpush1.bf16.msra.mxu0 %v7299
  %7318 = vmatprep.subr.bf16.mxu0 0
  %7319 = vmatpush1.bf16.msra.mxu0 %v7300
  %7320 = vmatprep.subr.bf16.mxu0 0
  %7321 = vmatpush1.bf16.msra.mxu0 %v7301
  %7322 = vmatprep.subr.bf16.mxu0 0
  %7323 = vmatpush1.bf16.msra.mxu0 %v7302
  %7324 = vmatprep.subr.bf16.mxu0 0
  %7325 = vmatpush1.bf16.msra.mxu0 %v7303
  %7326 = vmatprep.subr.bf16.mxu0 0
  %7327 = vmatpush1.bf16.msra.mxu0 %v7304
  %7328 = vmatprep.subr.bf16.mxu0 0
  %7329 = vmatpush1.bf16.msra.mxu0 %v7305
  %7330 = vmatprep.subr.bf16.mxu0 0
  %7331 = vmatpush1.bf16.msra.mxu0 0
  %7332 = vmatprep.subr.bf16.mxu0 0
  %7333 = vmatpush1.bf16.msra.mxu0 0
  %7334 = vmatprep.subr.bf16.mxu0 0
  %7335 = vmatpush1.bf16.msra.mxu0 0
  %7336 = vmatprep.subr.bf16.mxu0 0
  %7337 = vmatpush1.bf16.msra.mxu0 0
  %7338 = vmatprep.subr.bf16.mxu0 0
  %7339 = vmatpush1.bf16.msra.mxu0 0
  %7340 = vmatprep.subr.bf16.mxu0 0
  %7341 = vmatpush1.bf16.msra.mxu0 0
  %7342 = vmatprep.subr.bf16.mxu0 0
  %7343 = vmatpush1.bf16.msra.mxu0 0
  %7344 = vmatprep.subr.bf16.mxu0 0
  %7345 = vmatpush1.bf16.msra.mxu0 0
  %7346 = vmatprep.mubr.bf16.mxu0 0
  %7347 = vmatmul.mubr.bf16.gmra.mrb[0].mxu0 %v7248
  %v7348 = vpop.f32.mrb[0].mxu0
  %v7349 = vadd.f32 0.0, %v7348
  %v7350 = vpop.f32.mrb[0].mxu0
  %v7351 = vpop.f32.mrb[0].mxu0
  %v7352 = vpop.f32.mrb[0].mxu0
  %7353 = vdwg.mxu0
  %v7354 = vadd.f32 %v7245, %v7349
  %s7355 = scalar_lea.vmem [#allocation5], 216
  %v7356 = vld [vmem:[%s7355] sm:$0xff]
  %v7357 = vpack.c.bf16 %v7356, %v7356
  %s7358 = scalar_lea.vmem %s7, 1728
  %v7359 = vld [vmem:[%s7358] sm:$0xf]
  %v7360 = vld [vmem:[%s7358 + $0x4] sm:$0xf]
  %v7361 = vld [vmem:[%s7358 + $0x8] sm:$0xf]
  %v7362 = vld [vmem:[%s7358 + $0xc] sm:$0xf]
  %v7363 = vld [vmem:[%s7358 + $0x10] sm:$0xf]
  %v7364 = vld [vmem:[%s7358 + $0x14] sm:$0xf]
  %v7365 = vld [vmem:[%s7358 + $0x18] sm:$0xf]
  %v7366 = vld [vmem:[%s7358 + $0x1c] sm:$0xf]
  %v7367 = vld [vmem:[%s7358 + $0x20] sm:$0xf]
  %v7368 = vld [vmem:[%s7358 + $0x24] sm:$0xf]
  %v7369 = vld [vmem:[%s7358 + $0x28] sm:$0xf]
  %v7370 = vld [vmem:[%s7358 + $0x2c] sm:$0xf]
  %v7371 = vld [vmem:[%s7358 + $0x30] sm:$0xf]
  %v7372 = vld [vmem:[%s7358 + $0x34] sm:$0xf]
  %v7373 = vld [vmem:[%s7358 + $0x38] sm:$0xf]
  %v7374 = vld [vmem:[%s7358 + $0x3c] sm:$0xf]
  %v7391 = vunpack.c.l.b16 %v7359
  %v7392 = vunpack.c.l.b16 %v7360
  %v7393 = vunpack.c.l.b16 %v7361
  %v7394 = vunpack.c.l.b16 %v7362
  %v7395 = vunpack.c.l.b16 %v7363
  %v7396 = vunpack.c.l.b16 %v7364
  %v7397 = vunpack.c.l.b16 %v7365
  %v7398 = vunpack.c.l.b16 %v7366
  %v7399 = vunpack.c.l.b16 %v7367
  %v7400 = vunpack.c.l.b16 %v7368
  %v7401 = vunpack.c.l.b16 %v7369
  %v7402 = vunpack.c.l.b16 %v7370
  %v7403 = vunpack.c.l.b16 %v7371
  %v7404 = vunpack.c.l.b16 %v7372
  %v7405 = vunpack.c.l.b16 %v7373
  %v7406 = vunpack.c.l.b16 %v7374
  %v7407 = vpack.c.b16 %v7392, %v7391
  %v7408 = vpack.c.b16 %v7394, %v7393
  %v7409 = vpack.c.b16 %v7396, %v7395
  %v7410 = vpack.c.b16 %v7398, %v7397
  %v7411 = vpack.c.b16 %v7400, %v7399
  %v7412 = vpack.c.b16 %v7402, %v7401
  %v7413 = vpack.c.b16 %v7404, %v7403
  %v7414 = vpack.c.b16 %v7406, %v7405
  %7423 = vmatprep.subr.bf16.mxu0 0
  %7424 = vmatpush1.bf16.msra.mxu0 %v7407
  %7425 = vmatprep.subr.bf16.mxu0 0
  %7426 = vmatpush1.bf16.msra.mxu0 %v7408
  %7427 = vmatprep.subr.bf16.mxu0 0
  %7428 = vmatpush1.bf16.msra.mxu0 %v7409
  %7429 = vmatprep.subr.bf16.mxu0 0
  %7430 = vmatpush1.bf16.msra.mxu0 %v7410
  %7431 = vmatprep.subr.bf16.mxu0 0
  %7432 = vmatpush1.bf16.msra.mxu0 %v7411
  %7433 = vmatprep.subr.bf16.mxu0 0
  %7434 = vmatpush1.bf16.msra.mxu0 %v7412
  %7435 = vmatprep.subr.bf16.mxu0 0
  %7436 = vmatpush1.bf16.msra.mxu0 %v7413
  %7437 = vmatprep.subr.bf16.mxu0 0
  %7438 = vmatpush1.bf16.msra.mxu0 %v7414
  %7439 = vmatprep.subr.bf16.mxu0 0
  %7440 = vmatpush1.bf16.msra.mxu0 0
  %7441 = vmatprep.subr.bf16.mxu0 0
  %7442 = vmatpush1.bf16.msra.mxu0 0
  %7443 = vmatprep.subr.bf16.mxu0 0
  %7444 = vmatpush1.bf16.msra.mxu0 0
  %7445 = vmatprep.subr.bf16.mxu0 0
  %7446 = vmatpush1.bf16.msra.mxu0 0
  %7447 = vmatprep.subr.bf16.mxu0 0
  %7448 = vmatpush1.bf16.msra.mxu0 0
  %7449 = vmatprep.subr.bf16.mxu0 0
  %7450 = vmatpush1.bf16.msra.mxu0 0
  %7451 = vmatprep.subr.bf16.mxu0 0
  %7452 = vmatpush1.bf16.msra.mxu0 0
  %7453 = vmatprep.subr.bf16.mxu0 0
  %7454 = vmatpush1.bf16.msra.mxu0 0
  %7455 = vmatprep.mubr.bf16.mxu0 0
  %7456 = vmatmul.mubr.bf16.gmra.mrb[0].mxu0 %v7357
  %v7457 = vpop.f32.mrb[0].mxu0
  %v7458 = vadd.f32 0.0, %v7457
  %v7459 = vpop.f32.mrb[0].mxu0
  %v7460 = vpop.f32.mrb[0].mxu0
  %v7461 = vpop.f32.mrb[0].mxu0
  %7462 = vdwg.mxu0
  %v7463 = vadd.f32 %v7354, %v7458
  %s7464 = scalar_lea.vmem [#allocation5], 224
  %v7465 = vld [vmem:[%s7464] sm:$0xff]
  %v7466 = vpack.c.bf16 %v7465, %v7465
  %s7467 = scalar_lea.vmem %s7, 1792
  %v7468 = vld [vmem:[%s7467] sm:$0xf]
  %v7469 = vld [vmem:[%s7467 + $0x4] sm:$0xf]
  %v7470 = vld [vmem:[%s7467 + $0x8] sm:$0xf]
  %v7471 = vld [vmem:[%s7467 + $0xc] sm:$0xf]
  %v7472 = vld [vmem:[%s7467 + $0x10] sm:$0xf]
  %v7473 = vld [vmem:[%s7467 + $0x14] sm:$0xf]
  %v7474 = vld [vmem:[%s7467 + $0x18] sm:$0xf]
  %v7475 = vld [vmem:[%s7467 + $0x1c] sm:$0xf]
  %v7476 = vld [vmem:[%s7467 + $0x20] sm:$0xf]
  %v7477 = vld [vmem:[%s7467 + $0x24] sm:$0xf]
  %v7478 = vld [vmem:[%s7467 + $0x28] sm:$0xf]
  %v7479 = vld [vmem:[%s7467 + $0x2c] sm:$0xf]
  %v7480 = vld [vmem:[%s7467 + $0x30] sm:$0xf]
  %v7481 = vld [vmem:[%s7467 + $0x34] sm:$0xf]
  %v7482 = vld [vmem:[%s7467 + $0x38] sm:$0xf]
  %v7483 = vld [vmem:[%s7467 + $0x3c] sm:$0xf]
  %v7500 = vunpack.c.l.b16 %v7468
  %v7501 = vunpack.c.l.b16 %v7469
  %v7502 = vunpack.c.l.b16 %v7470
  %v7503 = vunpack.c.l.b16 %v7471
  %v7504 = vunpack.c.l.b16 %v7472
  %v7505 = vunpack.c.l.b16 %v7473
  %v7506 = vunpack.c.l.b16 %v7474
  %v7507 = vunpack.c.l.b16 %v7475
  %v7508 = vunpack.c.l.b16 %v7476
  %v7509 = vunpack.c.l.b16 %v7477
  %v7510 = vunpack.c.l.b16 %v7478
  %v7511 = vunpack.c.l.b16 %v7479
  %v7512 = vunpack.c.l.b16 %v7480
  %v7513 = vunpack.c.l.b16 %v7481
  %v7514 = vunpack.c.l.b16 %v7482
  %v7515 = vunpack.c.l.b16 %v7483
  %v7516 = vpack.c.b16 %v7501, %v7500
  %v7517 = vpack.c.b16 %v7503, %v7502
  %v7518 = vpack.c.b16 %v7505, %v7504
  %v7519 = vpack.c.b16 %v7507, %v7506
  %v7520 = vpack.c.b16 %v7509, %v7508
  %v7521 = vpack.c.b16 %v7511, %v7510
  %v7522 = vpack.c.b16 %v7513, %v7512
  %v7523 = vpack.c.b16 %v7515, %v7514
  %7532 = vmatprep.subr.bf16.mxu0 0
  %7533 = vmatpush1.bf16.msra.mxu0 %v7516
  %7534 = vmatprep.subr.bf16.mxu0 0
  %7535 = vmatpush1.bf16.msra.mxu0 %v7517
  %7536 = vmatprep.subr.bf16.mxu0 0
  %7537 = vmatpush1.bf16.msra.mxu0 %v7518
  %7538 = vmatprep.subr.bf16.mxu0 0
  %7539 = vmatpush1.bf16.msra.mxu0 %v7519
  %7540 = vmatprep.subr.bf16.mxu0 0
  %7541 = vmatpush1.bf16.msra.mxu0 %v7520
  %7542 = vmatprep.subr.bf16.mxu0 0
  %7543 = vmatpush1.bf16.msra.mxu0 %v7521
  %7544 = vmatprep.subr.bf16.mxu0 0
  %7545 = vmatpush1.bf16.msra.mxu0 %v7522
  %7546 = vmatprep.subr.bf16.mxu0 0
  %7547 = vmatpush1.bf16.msra.mxu0 %v7523
  %7548 = vmatprep.subr.bf16.mxu0 0
  %7549 = vmatpush1.bf16.msra.mxu0 0
  %7550 = vmatprep.subr.bf16.mxu0 0
  %7551 = vmatpush1.bf16.msra.mxu0 0
  %7552 = vmatprep.subr.bf16.mxu0 0
  %7553 = vmatpush1.bf16.msra.mxu0 0
  %7554 = vmatprep.subr.bf16.mxu0 0
  %7555 = vmatpush1.bf16.msra.mxu0 0
  %7556 = vmatprep.subr.bf16.mxu0 0
  %7557 = vmatpush1.bf16.msra.mxu0 0
  %7558 = vmatprep.subr.bf16.mxu0 0
  %7559 = vmatpush1.bf16.msra.mxu0 0
  %7560 = vmatprep.subr.bf16.mxu0 0
  %7561 = vmatpush1.bf16.msra.mxu0 0
  %7562 = vmatprep.subr.bf16.mxu0 0
  %7563 = vmatpush1.bf16.msra.mxu0 0
  %7564 = vmatprep.mubr.bf16.mxu0 0
  %7565 = vmatmul.mubr.bf16.gmra.mrb[0].mxu0 %v7466
  %v7566 = vpop.f32.mrb[0].mxu0
  %v7567 = vadd.f32 0.0, %v7566
  %v7568 = vpop.f32.mrb[0].mxu0
  %v7569 = vpop.f32.mrb[0].mxu0
  %v7570 = vpop.f32.mrb[0].mxu0
  %7571 = vdwg.mxu0
  %v7572 = vadd.f32 %v7463, %v7567
  %s7573 = scalar_lea.vmem [#allocation5], 232
  %v7574 = vld [vmem:[%s7573] sm:$0xff]
  %v7575 = vpack.c.bf16 %v7574, %v7574
  %s7576 = scalar_lea.vmem %s7, 1856
  %v7577 = vld [vmem:[%s7576] sm:$0xf]
  %v7578 = vld [vmem:[%s7576 + $0x4] sm:$0xf]
  %v7579 = vld [vmem:[%s7576 + $0x8] sm:$0xf]
  %v7580 = vld [vmem:[%s7576 + $0xc] sm:$0xf]
  %v7581 = vld [vmem:[%s7576 + $0x10] sm:$0xf]
  %v7582 = vld [vmem:[%s7576 + $0x14] sm:$0xf]
  %v7583 = vld [vmem:[%s7576 + $0x18] sm:$0xf]
  %v7584 = vld [vmem:[%s7576 + $0x1c] sm:$0xf]
  %v7585 = vld [vmem:[%s7576 + $0x20] sm:$0xf]
  %v7586 = vld [vmem:[%s7576 + $0x24] sm:$0xf]
  %v7587 = vld [vmem:[%s7576 + $0x28] sm:$0xf]
  %v7588 = vld [vmem:[%s7576 + $0x2c] sm:$0xf]
  %v7589 = vld [vmem:[%s7576 + $0x30] sm:$0xf]
  %v7590 = vld [vmem:[%s7576 + $0x34] sm:$0xf]
  %v7591 = vld [vmem:[%s7576 + $0x38] sm:$0xf]
  %v7592 = vld [vmem:[%s7576 + $0x3c] sm:$0xf]
  %v7609 = vunpack.c.l.b16 %v7577
  %v7610 = vunpack.c.l.b16 %v7578
  %v7611 = vunpack.c.l.b16 %v7579
  %v7612 = vunpack.c.l.b16 %v7580
  %v7613 = vunpack.c.l.b16 %v7581
  %v7614 = vunpack.c.l.b16 %v7582
  %v7615 = vunpack.c.l.b16 %v7583
  %v7616 = vunpack.c.l.b16 %v7584
  %v7617 = vunpack.c.l.b16 %v7585
  %v7618 = vunpack.c.l.b16 %v7586
  %v7619 = vunpack.c.l.b16 %v7587
  %v7620 = vunpack.c.l.b16 %v7588
  %v7621 = vunpack.c.l.b16 %v7589
  %v7622 = vunpack.c.l.b16 %v7590
  %v7623 = vunpack.c.l.b16 %v7591
  %v7624 = vunpack.c.l.b16 %v7592
  %v7625 = vpack.c.b16 %v7610, %v7609
  %v7626 = vpack.c.b16 %v7612, %v7611
  %v7627 = vpack.c.b16 %v7614, %v7613
  %v7628 = vpack.c.b16 %v7616, %v7615
  %v7629 = vpack.c.b16 %v7618, %v7617
  %v7630 = vpack.c.b16 %v7620, %v7619
  %v7631 = vpack.c.b16 %v7622, %v7621
  %v7632 = vpack.c.b16 %v7624, %v7623
  %7641 = vmatprep.subr.bf16.mxu0 0
  %7642 = vmatpush1.bf16.msra.mxu0 %v7625
  %7643 = vmatprep.subr.bf16.mxu0 0
  %7644 = vmatpush1.bf16.msra.mxu0 %v7626
  %7645 = vmatprep.subr.bf16.mxu0 0
  %7646 = vmatpush1.bf16.msra.mxu0 %v7627
  %7647 = vmatprep.subr.bf16.mxu0 0
  %7648 = vmatpush1.bf16.msra.mxu0 %v7628
  %7649 = vmatprep.subr.bf16.mxu0 0
  %7650 = vmatpush1.bf16.msra.mxu0 %v7629
  %7651 = vmatprep.subr.bf16.mxu0 0
  %7652 = vmatpush1.bf16.msra.mxu0 %v7630
  %7653 = vmatprep.subr.bf16.mxu0 0
  %7654 = vmatpush1.bf16.msra.mxu0 %v7631
  %7655 = vmatprep.subr.bf16.mxu0 0
  %7656 = vmatpush1.bf16.msra.mxu0 %v7632
  %7657 = vmatprep.subr.bf16.mxu0 0
  %7658 = vmatpush1.bf16.msra.mxu0 0
  %7659 = vmatprep.subr.bf16.mxu0 0
  %7660 = vmatpush1.bf16.msra.mxu0 0
  %7661 = vmatprep.subr.bf16.mxu0 0
  %7662 = vmatpush1.bf16.msra.mxu0 0
  %7663 = vmatprep.subr.bf16.mxu0 0
  %7664 = vmatpush1.bf16.msra.mxu0 0
  %7665 = vmatprep.subr.bf16.mxu0 0
  %7666 = vmatpush1.bf16.msra.mxu0 0
  %7667 = vmatprep.subr.bf16.mxu0 0
  %7668 = vmatpush1.bf16.msra.mxu0 0
  %7669 = vmatprep.subr.bf16.mxu0 0
  %7670 = vmatpush1.bf16.msra.mxu0 0
  %7671 = vmatprep.subr.bf16.mxu0 0
  %7672 = vmatpush1.bf16.msra.mxu0 0
  %7673 = vmatprep.mubr.bf16.mxu0 0
  %7674 = vmatmul.mubr.bf16.gmra.mrb[0].mxu0 %v7575
  %v7675 = vpop.f32.mrb[0].mxu0
  %v7676 = vadd.f32 0.0, %v7675
  %v7677 = vpop.f32.mrb[0].mxu0
  %v7678 = vpop.f32.mrb[0].mxu0
  %v7679 = vpop.f32.mrb[0].mxu0
  %7680 = vdwg.mxu0
  %v7681 = vadd.f32 %v7572, %v7676
  %s7682 = scalar_lea.vmem [#allocation5], 240
  %v7683 = vld [vmem:[%s7682] sm:$0xff]
  %v7684 = vpack.c.bf16 %v7683, %v7683
  %s7685 = scalar_lea.vmem %s7, 1920
  %v7686 = vld [vmem:[%s7685] sm:$0xf]
  %v7687 = vld [vmem:[%s7685 + $0x4] sm:$0xf]
  %v7688 = vld [vmem:[%s7685 + $0x8] sm:$0xf]
  %v7689 = vld [vmem:[%s7685 + $0xc] sm:$0xf]
  %v7690 = vld [vmem:[%s7685 + $0x10] sm:$0xf]
  %v7691 = vld [vmem:[%s7685 + $0x14] sm:$0xf]
  %v7692 = vld [vmem:[%s7685 + $0x18] sm:$0xf]
  %v7693 = vld [vmem:[%s7685 + $0x1c] sm:$0xf]
  %v7694 = vld [vmem:[%s7685 + $0x20] sm:$0xf]
  %v7695 = vld [vmem:[%s7685 + $0x24] sm:$0xf]
  %v7696 = vld [vmem:[%s7685 + $0x28] sm:$0xf]
  %v7697 = vld [vmem:[%s7685 + $0x2c] sm:$0xf]
  %v7698 = vld [vmem:[%s7685 + $0x30] sm:$0xf]
  %v7699 = vld [vmem:[%s7685 + $0x34] sm:$0xf]
  %v7700 = vld [vmem:[%s7685 + $0x38] sm:$0xf]
  %v7701 = vld [vmem:[%s7685 + $0x3c] sm:$0xf]
  %v7718 = vunpack.c.l.b16 %v7686
  %v7719 = vunpack.c.l.b16 %v7687
  %v7720 = vunpack.c.l.b16 %v7688
  %v7721 = vunpack.c.l.b16 %v7689
  %v7722 = vunpack.c.l.b16 %v7690
  %v7723 = vunpack.c.l.b16 %v7691
  %v7724 = vunpack.c.l.b16 %v7692
  %v7725 = vunpack.c.l.b16 %v7693
  %v7726 = vunpack.c.l.b16 %v7694
  %v7727 = vunpack.c.l.b16 %v7695
  %v7728 = vunpack.c.l.b16 %v7696
  %v7729 = vunpack.c.l.b16 %v7697
  %v7730 = vunpack.c.l.b16 %v7698
  %v7731 = vunpack.c.l.b16 %v7699
  %v7732 = vunpack.c.l.b16 %v7700
  %v7733 = vunpack.c.l.b16 %v7701
  %v7734 = vpack.c.b16 %v7719, %v7718
  %v7735 = vpack.c.b16 %v7721, %v7720
  %v7736 = vpack.c.b16 %v7723, %v7722
  %v7737 = vpack.c.b16 %v7725, %v7724
  %v7738 = vpack.c.b16 %v7727, %v7726
  %v7739 = vpack.c.b16 %v7729, %v7728
  %v7740 = vpack.c.b16 %v7731, %v7730
  %v7741 = vpack.c.b16 %v7733, %v7732
  %7750 = vmatprep.subr.bf16.mxu0 0
  %7751 = vmatpush1.bf16.msra.mxu0 %v7734
  %7752 = vmatprep.subr.bf16.mxu0 0
  %7753 = vmatpush1.bf16.msra.mxu0 %v7735
  %7754 = vmatprep.subr.bf16.mxu0 0
  %7755 = vmatpush1.bf16.msra.mxu0 %v7736
  %7756 = vmatprep.subr.bf16.mxu0 0
  %7757 = vmatpush1.bf16.msra.mxu0 %v7737
  %7758 = vmatprep.subr.bf16.mxu0 0
  %7759 = vmatpush1.bf16.msra.mxu0 %v7738
  %7760 = vmatprep.subr.bf16.mxu0 0
  %7761 = vmatpush1.bf16.msra.mxu0 %v7739
  %7762 = vmatprep.subr.bf16.mxu0 0
  %7763 = vmatpush1.bf16.msra.mxu0 %v7740
  %7764 = vmatprep.subr.bf16.mxu0 0
  %7765 = vmatpush1.bf16.msra.mxu0 %v7741
  %7766 = vmatprep.subr.bf16.mxu0 0
  %7767 = vmatpush1.bf16.msra.mxu0 0
  %7768 = vmatprep.subr.bf16.mxu0 0
  %7769 = vmatpush1.bf16.msra.mxu0 0
  %7770 = vmatprep.subr.bf16.mxu0 0
  %7771 = vmatpush1.bf16.msra.mxu0 0
  %7772 = vmatprep.subr.bf16.mxu0 0
  %7773 = vmatpush1.bf16.msra.mxu0 0
  %7774 = vmatprep.subr.bf16.mxu0 0
  %7775 = vmatpush1.bf16.msra.mxu0 0
  %7776 = vmatprep.subr.bf16.mxu0 0
  %7777 = vmatpush1.bf16.msra.mxu0 0
  %7778 = vmatprep.subr.bf16.mxu0 0
  %7779 = vmatpush1.bf16.msra.mxu0 0
  %7780 = vmatprep.subr.bf16.mxu0 0
  %7781 = vmatpush1.bf16.msra.mxu0 0
  %7782 = vmatprep.mubr.bf16.mxu0 0
  %7783 = vmatmul.mubr.bf16.gmra.mrb[0].mxu0 %v7684
  %v7784 = vpop.f32.mrb[0].mxu0
  %v7785 = vadd.f32 0.0, %v7784
  %v7786 = vpop.f32.mrb[0].mxu0
  %v7787 = vpop.f32.mrb[0].mxu0
  %v7788 = vpop.f32.mrb[0].mxu0
  %7789 = vdwg.mxu0
  %v7790 = vadd.f32 %v7681, %v7785
  %s7791 = scalar_lea.vmem [#allocation5], 248
  %v7792 = vld [vmem:[%s7791] sm:$0xff]
  %v7793 = vpack.c.bf16 %v7792, %v7792
  %s7794 = scalar_lea.vmem %s7, 1984
  %v7795 = vld [vmem:[%s7794] sm:$0xf]
  %v7796 = vld [vmem:[%s7794 + $0x4] sm:$0xf]
  %v7797 = vld [vmem:[%s7794 + $0x8] sm:$0xf]
  %v7798 = vld [vmem:[%s7794 + $0xc] sm:$0xf]
  %v7799 = vld [vmem:[%s7794 + $0x10] sm:$0xf]
  %v7800 = vld [vmem:[%s7794 + $0x14] sm:$0xf]
  %v7801 = vld [vmem:[%s7794 + $0x18] sm:$0xf]
  %v7802 = vld [vmem:[%s7794 + $0x1c] sm:$0xf]
  %v7803 = vld [vmem:[%s7794 + $0x20] sm:$0xf]
  %v7804 = vld [vmem:[%s7794 + $0x24] sm:$0xf]
  %v7805 = vld [vmem:[%s7794 + $0x28] sm:$0xf]
  %v7806 = vld [vmem:[%s7794 + $0x2c] sm:$0xf]
  %v7807 = vld [vmem:[%s7794 + $0x30] sm:$0xf]
  %v7808 = vld [vmem:[%s7794 + $0x34] sm:$0xf]
  %v7809 = vld [vmem:[%s7794 + $0x38] sm:$0xf]
  %v7810 = vld [vmem:[%s7794 + $0x3c] sm:$0xf]
  %v7827 = vunpack.c.l.b16 %v7795
  %v7828 = vunpack.c.l.b16 %v7796
  %v7829 = vunpack.c.l.b16 %v7797
  %v7830 = vunpack.c.l.b16 %v7798
  %v7831 = vunpack.c.l.b16 %v7799
  %v7832 = vunpack.c.l.b16 %v7800
  %v7833 = vunpack.c.l.b16 %v7801
  %v7834 = vunpack.c.l.b16 %v7802
  %v7835 = vunpack.c.l.b16 %v7803
  %v7836 = vunpack.c.l.b16 %v7804
  %v7837 = vunpack.c.l.b16 %v7805
  %v7838 = vunpack.c.l.b16 %v7806
  %v7839 = vunpack.c.l.b16 %v7807
  %v7840 = vunpack.c.l.b16 %v7808
  %v7841 = vunpack.c.l.b16 %v7809
  %v7842 = vunpack.c.l.b16 %v7810
  %v7843 = vpack.c.b16 %v7828, %v7827
  %v7844 = vpack.c.b16 %v7830, %v7829
  %v7845 = vpack.c.b16 %v7832, %v7831
  %v7846 = vpack.c.b16 %v7834, %v7833
  %v7847 = vpack.c.b16 %v7836, %v7835
  %v7848 = vpack.c.b16 %v7838, %v7837
  %v7849 = vpack.c.b16 %v7840, %v7839
  %v7850 = vpack.c.b16 %v7842, %v7841
  %7859 = vmatprep.subr.bf16.mxu0 0
  %7860 = vmatpush1.bf16.msra.mxu0 %v7843
  %7861 = vmatprep.subr.bf16.mxu0 0
  %7862 = vmatpush1.bf16.msra.mxu0 %v7844
  %7863 = vmatprep.subr.bf16.mxu0 0
  %7864 = vmatpush1.bf16.msra.mxu0 %v7845
  %7865 = vmatprep.subr.bf16.mxu0 0
  %7866 = vmatpush1.bf16.msra.mxu0 %v7846
  %7867 = vmatprep.subr.bf16.mxu0 0
  %7868 = vmatpush1.bf16.msra.mxu0 %v7847
  %7869 = vmatprep.subr.bf16.mxu0 0
  %7870 = vmatpush1.bf16.msra.mxu0 %v7848
  %7871 = vmatprep.subr.bf16.mxu0 0
  %7872 = vmatpush1.bf16.msra.mxu0 %v7849
  %7873 = vmatprep.subr.bf16.mxu0 0
  %7874 = vmatpush1.bf16.msra.mxu0 %v7850
  %7875 = vmatprep.subr.bf16.mxu0 0
  %7876 = vmatpush1.bf16.msra.mxu0 0
  %7877 = vmatprep.subr.bf16.mxu0 0
  %7878 = vmatpush1.bf16.msra.mxu0 0
  %7879 = vmatprep.subr.bf16.mxu0 0
  %7880 = vmatpush1.bf16.msra.mxu0 0
  %7881 = vmatprep.subr.bf16.mxu0 0
  %7882 = vmatpush1.bf16.msra.mxu0 0
  %7883 = vmatprep.subr.bf16.mxu0 0
  %7884 = vmatpush1.bf16.msra.mxu0 0
  %7885 = vmatprep.subr.bf16.mxu0 0
  %7886 = vmatpush1.bf16.msra.mxu0 0
  %7887 = vmatprep.subr.bf16.mxu0 0
  %7888 = vmatpush1.bf16.msra.mxu0 0
  %7889 = vmatprep.subr.bf16.mxu0 0
  %7890 = vmatpush1.bf16.msra.mxu0 0
  %7891 = vmatprep.mubr.bf16.mxu0 0
  %7892 = vmatmul.mubr.bf16.gmra.mrb[0].mxu0 %v7793
  %v7893 = vpop.f32.mrb[0].mxu0
  %v7894 = vadd.f32 0.0, %v7893
  %v7895 = vpop.f32.mrb[0].mxu0
  %v7896 = vpop.f32.mrb[0].mxu0
  %v7897 = vpop.f32.mrb[0].mxu0
  %7898 = vdwg.mxu0
  %v7899 = vadd.f32 %v7790, %v7894
  %s7900 = scalar_lea.vmem [#allocation5], 256
  %v7901 = vld [vmem:[%s7900] sm:$0xff]
  %v7902 = vpack.c.bf16 %v7901, %v7901
  %s7903 = scalar_lea.vmem %s7, 2048
  %v7904 = vld [vmem:[%s7903] sm:$0xf]
  %v7905 = vld [vmem:[%s7903 + $0x4] sm:$0xf]
  %v7906 = vld [vmem:[%s7903 + $0x8] sm:$0xf]
  %v7907 = vld [vmem:[%s7903 + $0xc] sm:$0xf]
  %v7908 = vld [vmem:[%s7903 + $0x10] sm:$0xf]
  %v7909 = vld [vmem:[%s7903 + $0x14] sm:$0xf]
  %v7910 = vld [vmem:[%s7903 + $0x18] sm:$0xf]
  %v7911 = vld [vmem:[%s7903 + $0x1c] sm:$0xf]
  %v7912 = vld [vmem:[%s7903 + $0x20] sm:$0xf]
  %v7913 = vld [vmem:[%s7903 + $0x24] sm:$0xf]
  %v7914 = vld [vmem:[%s7903 + $0x28] sm:$0xf]
  %v7915 = vld [vmem:[%s7903 + $0x2c] sm:$0xf]
  %v7916 = vld [vmem:[%s7903 + $0x30] sm:$0xf]
  %v7917 = vld [vmem:[%s7903 + $0x34] sm:$0xf]
  %v7918 = vld [vmem:[%s7903 + $0x38] sm:$0xf]
  %v7919 = vld [vmem:[%s7903 + $0x3c] sm:$0xf]
  %v7936 = vunpack.c.l.b16 %v7904
  %v7937 = vunpack.c.l.b16 %v7905
  %v7938 = vunpack.c.l.b16 %v7906
  %v7939 = vunpack.c.l.b16 %v7907
  %v7940 = vunpack.c.l.b16 %v7908
  %v7941 = vunpack.c.l.b16 %v7909
  %v7942 = vunpack.c.l.b16 %v7910
  %v7943 = vunpack.c.l.b16 %v7911
  %v7944 = vunpack.c.l.b16 %v7912
  %v7945 = vunpack.c.l.b16 %v7913
  %v7946 = vunpack.c.l.b16 %v7914
  %v7947 = vunpack.c.l.b16 %v7915
  %v7948 = vunpack.c.l.b16 %v7916
  %v7949 = vunpack.c.l.b16 %v7917
  %v7950 = vunpack.c.l.b16 %v7918
  %v7951 = vunpack.c.l.b16 %v7919
  %v7952 = vpack.c.b16 %v7937, %v7936
  %v7953 = vpack.c.b16 %v7939, %v7938
  %v7954 = vpack.c.b16 %v7941, %v7940
  %v7955 = vpack.c.b16 %v7943, %v7942
  %v7956 = vpack.c.b16 %v7945, %v7944
  %v7957 = vpack.c.b16 %v7947, %v7946
  %v7958 = vpack.c.b16 %v7949, %v7948
  %v7959 = vpack.c.b16 %v7951, %v7950
  %7968 = vmatprep.subr.bf16.mxu0 0
  %7969 = vmatpush1.bf16.msra.mxu0 %v7952
  %7970 = vmatprep.subr.bf16.mxu0 0
  %7971 = vmatpush1.bf16.msra.mxu0 %v7953
  %7972 = vmatprep.subr.bf16.mxu0 0
  %7973 = vmatpush1.bf16.msra.mxu0 %v7954
  %7974 = vmatprep.subr.bf16.mxu0 0
  %7975 = vmatpush1.bf16.msra.mxu0 %v7955
  %7976 = vmatprep.subr.bf16.mxu0 0
  %7977 = vmatpush1.bf16.msra.mxu0 %v7956
  %7978 = vmatprep.subr.bf16.mxu0 0
  %7979 = vmatpush1.bf16.msra.mxu0 %v7957
  %7980 = vmatprep.subr.bf16.mxu0 0
  %7981 = vmatpush1.bf16.msra.mxu0 %v7958
  %7982 = vmatprep.subr.bf16.mxu0 0
  %7983 = vmatpush1.bf16.msra.mxu0 %v7959
  %7984 = vmatprep.subr.bf16.mxu0 0
  %7985 = vmatpush1.bf16.msra.mxu0 0
  %7986 = vmatprep.subr.bf16.mxu0 0
  %7987 = vmatpush1.bf16.msra.mxu0 0
  %7988 = vmatprep.subr.bf16.mxu0 0
  %7989 = vmatpush1.bf16.msra.mxu0 0
  %7990 = vmatprep.subr.bf16.mxu0 0
  %7991 = vmatpush1.bf16.msra.mxu0 0
  %7992 = vmatprep.subr.bf16.mxu0 0
  %7993 = vmatpush1.bf16.msra.mxu0 0
  %7994 = vmatprep.subr.bf16.mxu0 0
  %7995 = vmatpush1.bf16.msra.mxu0 0
  %7996 = vmatprep.subr.bf16.mxu0 0
  %7997 = vmatpush1.bf16.msra.mxu0 0
  %7998 = vmatprep.subr.bf16.mxu0 0
  %7999 = vmatpush1.bf16.msra.mxu0 0
  %8000 = vmatprep.mubr.bf16.mxu0 0
  %8001 = vmatmul.mubr.bf16.gmra.mrb[0].mxu0 %v7902
  %v8002 = vpop.f32.mrb[0].mxu0
  %v8003 = vadd.f32 0.0, %v8002
  %v8004 = vpop.f32.mrb[0].mxu0
  %v8005 = vpop.f32.mrb[0].mxu0
  %v8006 = vpop.f32.mrb[0].mxu0
  %8007 = vdwg.mxu0
  %v8008 = vadd.f32 %v7899, %v8003
  %s8009 = scalar_lea.vmem [#allocation5], 264
  %v8010 = vld [vmem:[%s8009] sm:$0xff]
  %v8011 = vpack.c.bf16 %v8010, %v8010
  %s8012 = scalar_lea.vmem %s7, 2112
  %v8013 = vld [vmem:[%s8012] sm:$0xf]
  %v8014 = vld [vmem:[%s8012 + $0x4] sm:$0xf]
  %v8015 = vld [vmem:[%s8012 + $0x8] sm:$0xf]
  %v8016 = vld [vmem:[%s8012 + $0xc] sm:$0xf]
  %v8017 = vld [vmem:[%s8012 + $0x10] sm:$0xf]
  %v8018 = vld [vmem:[%s8012 + $0x14] sm:$0xf]
  %v8019 = vld [vmem:[%s8012 + $0x18] sm:$0xf]
  %v8020 = vld [vmem:[%s8012 + $0x1c] sm:$0xf]
  %v8021 = vld [vmem:[%s8012 + $0x20] sm:$0xf]
  %v8022 = vld [vmem:[%s8012 + $0x24] sm:$0xf]
  %v8023 = vld [vmem:[%s8012 + $0x28] sm:$0xf]
  %v8024 = vld [vmem:[%s8012 + $0x2c] sm:$0xf]
  %v8025 = vld [vmem:[%s8012 + $0x30] sm:$0xf]
  %v8026 = vld [vmem:[%s8012 + $0x34] sm:$0xf]
  %v8027 = vld [vmem:[%s8012 + $0x38] sm:$0xf]
  %v8028 = vld [vmem:[%s8012 + $0x3c] sm:$0xf]
  %v8045 = vunpack.c.l.b16 %v8013
  %v8046 = vunpack.c.l.b16 %v8014
  %v8047 = vunpack.c.l.b16 %v8015
  %v8048 = vunpack.c.l.b16 %v8016
  %v8049 = vunpack.c.l.b16 %v8017
  %v8050 = vunpack.c.l.b16 %v8018
  %v8051 = vunpack.c.l.b16 %v8019
  %v8052 = vunpack.c.l.b16 %v8020
  %v8053 = vunpack.c.l.b16 %v8021
  %v8054 = vunpack.c.l.b16 %v8022
  %v8055 = vunpack.c.l.b16 %v8023
  %v8056 = vunpack.c.l.b16 %v8024
  %v8057 = vunpack.c.l.b16 %v8025
  %v8058 = vunpack.c.l.b16 %v8026
  %v8059 = vunpack.c.l.b16 %v8027
  %v8060 = vunpack.c.l.b16 %v8028
  %v8061 = vpack.c.b16 %v8046, %v8045
  %v8062 = vpack.c.b16 %v8048, %v8047
  %v8063 = vpack.c.b16 %v8050, %v8049
  %v8064 = vpack.c.b16 %v8052, %v8051
  %v8065 = vpack.c.b16 %v8054, %v8053
  %v8066 = vpack.c.b16 %v8056, %v8055
  %v8067 = vpack.c.b16 %v8058, %v8057
  %v8068 = vpack.c.b16 %v8060, %v8059
  %8077 = vmatprep.subr.bf16.mxu0 0
  %8078 = vmatpush1.bf16.msra.mxu0 %v8061
  %8079 = vmatprep.subr.bf16.mxu0 0
  %8080 = vmatpush1.bf16.msra.mxu0 %v8062
  %8081 = vmatprep.subr.bf16.mxu0 0
  %8082 = vmatpush1.bf16.msra.mxu0 %v8063
  %8083 = vmatprep.subr.bf16.mxu0 0
  %8084 = vmatpush1.bf16.msra.mxu0 %v8064
  %8085 = vmatprep.subr.bf16.mxu0 0
  %8086 = vmatpush1.bf16.msra.mxu0 %v8065
  %8087 = vmatprep.subr.bf16.mxu0 0
  %8088 = vmatpush1.bf16.msra.mxu0 %v8066
  %8089 = vmatprep.subr.bf16.mxu0 0
  %8090 = vmatpush1.bf16.msra.mxu0 %v8067
  %8091 = vmatprep.subr.bf16.mxu0 0
  %8092 = vmatpush1.bf16.msra.mxu0 %v8068
  %8093 = vmatprep.subr.bf16.mxu0 0
  %8094 = vmatpush1.bf16.msra.mxu0 0
  %8095 = vmatprep.subr.bf16.mxu0 0
  %8096 = vmatpush1.bf16.msra.mxu0 0
  %8097 = vmatprep.subr.bf16.mxu0 0
  %8098 = vmatpush1.bf16.msra.mxu0 0
  %8099 = vmatprep.subr.bf16.mxu0 0
  %8100 = vmatpush1.bf16.msra.mxu0 0
  %8101 = vmatprep.subr.bf16.mxu0 0
  %8102 = vmatpush1.bf16.msra.mxu0 0
  %8103 = vmatprep.subr.bf16.mxu0 0
  %8104 = vmatpush1.bf16.msra.mxu0 0
  %8105 = vmatprep.subr.bf16.mxu0 0
  %8106 = vmatpush1.bf16.msra.mxu0 0
  %8107 = vmatprep.subr.bf16.mxu0 0
  %8108 = vmatpush1.bf16.msra.mxu0 0
  %8109 = vmatprep.mubr.bf16.mxu0 0
  %8110 = vmatmul.mubr.bf16.gmra.mrb[0].mxu0 %v8011
  %v8111 = vpop.f32.mrb[0].mxu0
  %v8112 = vadd.f32 0.0, %v8111
  %v8113 = vpop.f32.mrb[0].mxu0
  %v8114 = vpop.f32.mrb[0].mxu0
  %v8115 = vpop.f32.mrb[0].mxu0
  %8116 = vdwg.mxu0
  %v8117 = vadd.f32 %v8008, %v8112
  %s8118 = scalar_lea.vmem [#allocation5], 272
  %v8119 = vld [vmem:[%s8118] sm:$0xff]
  %v8120 = vpack.c.bf16 %v8119, %v8119
  %s8121 = scalar_lea.vmem %s7, 2176
  %v8122 = vld [vmem:[%s8121] sm:$0xf]
  %v8123 = vld [vmem:[%s8121 + $0x4] sm:$0xf]
  %v8124 = vld [vmem:[%s8121 + $0x8] sm:$0xf]
  %v8125 = vld [vmem:[%s8121 + $0xc] sm:$0xf]
  %v8126 = vld [vmem:[%s8121 + $0x10] sm:$0xf]
  %v8127 = vld [vmem:[%s8121 + $0x14] sm:$0xf]
  %v8128 = vld [vmem:[%s8121 + $0x18] sm:$0xf]
  %v8129 = vld [vmem:[%s8121 + $0x1c] sm:$0xf]
  %v8130 = vld [vmem:[%s8121 + $0x20] sm:$0xf]
  %v8131 = vld [vmem:[%s8121 + $0x24] sm:$0xf]
  %v8132 = vld [vmem:[%s8121 + $0x28] sm:$0xf]
  %v8133 = vld [vmem:[%s8121 + $0x2c] sm:$0xf]
  %v8134 = vld [vmem:[%s8121 + $0x30] sm:$0xf]
  %v8135 = vld [vmem:[%s8121 + $0x34] sm:$0xf]
  %v8136 = vld [vmem:[%s8121 + $0x38] sm:$0xf]
  %v8137 = vld [vmem:[%s8121 + $0x3c] sm:$0xf]
  %v8154 = vunpack.c.l.b16 %v8122
  %v8155 = vunpack.c.l.b16 %v8123
  %v8156 = vunpack.c.l.b16 %v8124
  %v8157 = vunpack.c.l.b16 %v8125
  %v8158 = vunpack.c.l.b16 %v8126
  %v8159 = vunpack.c.l.b16 %v8127
  %v8160 = vunpack.c.l.b16 %v8128
  %v8161 = vunpack.c.l.b16 %v8129
  %v8162 = vunpack.c.l.b16 %v8130
  %v8163 = vunpack.c.l.b16 %v8131
  %v8164 = vunpack.c.l.b16 %v8132
  %v8165 = vunpack.c.l.b16 %v8133
  %v8166 = vunpack.c.l.b16 %v8134
  %v8167 = vunpack.c.l.b16 %v8135
  %v8168 = vunpack.c.l.b16 %v8136
  %v8169 = vunpack.c.l.b16 %v8137
  %v8170 = vpack.c.b16 %v8155, %v8154
  %v8171 = vpack.c.b16 %v8157, %v8156
  %v8172 = vpack.c.b16 %v8159, %v8158
  %v8173 = vpack.c.b16 %v8161, %v8160
  %v8174 = vpack.c.b16 %v8163, %v8162
  %v8175 = vpack.c.b16 %v8165, %v8164
  %v8176 = vpack.c.b16 %v8167, %v8166
  %v8177 = vpack.c.b16 %v8169, %v8168
  %8186 = vmatprep.subr.bf16.mxu0 0
  %8187 = vmatpush1.bf16.msra.mxu0 %v8170
  %8188 = vmatprep.subr.bf16.mxu0 0
  %8189 = vmatpush1.bf16.msra.mxu0 %v8171
  %8190 = vmatprep.subr.bf16.mxu0 0
  %8191 = vmatpush1.bf16.msra.mxu0 %v8172
  %8192 = vmatprep.subr.bf16.mxu0 0
  %8193 = vmatpush1.bf16.msra.mxu0 %v8173
  %8194 = vmatprep.subr.bf16.mxu0 0
  %8195 = vmatpush1.bf16.msra.mxu0 %v8174
  %8196 = vmatprep.subr.bf16.mxu0 0
  %8197 = vmatpush1.bf16.msra.mxu0 %v8175
  %8198 = vmatprep.subr.bf16.mxu0 0
  %8199 = vmatpush1.bf16.msra.mxu0 %v8176
  %8200 = vmatprep.subr.bf16.mxu0 0
  %8201 = vmatpush1.bf16.msra.mxu0 %v8177
  %8202 = vmatprep.subr.bf16.mxu0 0
  %8203 = vmatpush1.bf16.msra.mxu0 0
  %8204 = vmatprep.subr.bf16.mxu0 0
  %8205 = vmatpush1.bf16.msra.mxu0 0
  %8206 = vmatprep.subr.bf16.mxu0 0
  %8207 = vmatpush1.bf16.msra.mxu0 0
  %8208 = vmatprep.subr.bf16.mxu0 0
  %8209 = vmatpush1.bf16.msra.mxu0 0
  %8210 = vmatprep.subr.bf16.mxu0 0
  %8211 = vmatpush1.bf16.msra.mxu0 0
  %8212 = vmatprep.subr.bf16.mxu0 0
  %8213 = vmatpush1.bf16.msra.mxu0 0
  %8214 = vmatprep.subr.bf16.mxu0 0
  %8215 = vmatpush1.bf16.msra.mxu0 0
  %8216 = vmatprep.subr.bf16.mxu0 0
  %8217 = vmatpush1.bf16.msra.mxu0 0
  %8218 = vmatprep.mubr.bf16.mxu0 0
  %8219 = vmatmul.mubr.bf16.gmra.mrb[0].mxu0 %v8120
  %v8220 = vpop.f32.mrb[0].mxu0
  %v8221 = vadd.f32 0.0, %v8220
  %v8222 = vpop.f32.mrb[0].mxu0
  %v8223 = vpop.f32.mrb[0].mxu0
  %v8224 = vpop.f32.mrb[0].mxu0
  %8225 = vdwg.mxu0
  %v8226 = vadd.f32 %v8117, %v8221
  %s8227 = scalar_lea.vmem [#allocation5], 280
  %v8228 = vld [vmem:[%s8227] sm:$0xff]
  %v8229 = vpack.c.bf16 %v8228, %v8228
  %s8230 = scalar_lea.vmem %s7, 2240
  %v8231 = vld [vmem:[%s8230] sm:$0xf]
  %v8232 = vld [vmem:[%s8230 + $0x4] sm:$0xf]
  %v8233 = vld [vmem:[%s8230 + $0x8] sm:$0xf]
  %v8234 = vld [vmem:[%s8230 + $0xc] sm:$0xf]
  %v8235 = vld [vmem:[%s8230 + $0x10] sm:$0xf]
  %v8236 = vld [vmem:[%s8230 + $0x14] sm:$0xf]
  %v8237 = vld [vmem:[%s8230 + $0x18] sm:$0xf]
  %v8238 = vld [vmem:[%s8230 + $0x1c] sm:$0xf]
  %v8239 = vld [vmem:[%s8230 + $0x20] sm:$0xf]
  %v8240 = vld [vmem:[%s8230 + $0x24] sm:$0xf]
  %v8241 = vld [vmem:[%s8230 + $0x28] sm:$0xf]
  %v8242 = vld [vmem:[%s8230 + $0x2c] sm:$0xf]
  %v8243 = vld [vmem:[%s8230 + $0x30] sm:$0xf]
  %v8244 = vld [vmem:[%s8230 + $0x34] sm:$0xf]
  %v8245 = vld [vmem:[%s8230 + $0x38] sm:$0xf]
  %v8246 = vld [vmem:[%s8230 + $0x3c] sm:$0xf]
  %v8263 = vunpack.c.l.b16 %v8231
  %v8264 = vunpack.c.l.b16 %v8232
  %v8265 = vunpack.c.l.b16 %v8233
  %v8266 = vunpack.c.l.b16 %v8234
  %v8267 = vunpack.c.l.b16 %v8235
  %v8268 = vunpack.c.l.b16 %v8236
  %v8269 = vunpack.c.l.b16 %v8237
  %v8270 = vunpack.c.l.b16 %v8238
  %v8271 = vunpack.c.l.b16 %v8239
  %v8272 = vunpack.c.l.b16 %v8240
  %v8273 = vunpack.c.l.b16 %v8241
  %v8274 = vunpack.c.l.b16 %v8242
  %v8275 = vunpack.c.l.b16 %v8243
  %v8276 = vunpack.c.l.b16 %v8244
  %v8277 = vunpack.c.l.b16 %v8245
  %v8278 = vunpack.c.l.b16 %v8246
  %v8279 = vpack.c.b16 %v8264, %v8263
  %v8280 = vpack.c.b16 %v8266, %v8265
  %v8281 = vpack.c.b16 %v8268, %v8267
  %v8282 = vpack.c.b16 %v8270, %v8269
  %v8283 = vpack.c.b16 %v8272, %v8271
  %v8284 = vpack.c.b16 %v8274, %v8273
  %v8285 = vpack.c.b16 %v8276, %v8275
  %v8286 = vpack.c.b16 %v8278, %v8277
  %8295 = vmatprep.subr.bf16.mxu0 0
  %8296 = vmatpush1.bf16.msra.mxu0 %v8279
  %8297 = vmatprep.subr.bf16.mxu0 0
  %8298 = vmatpush1.bf16.msra.mxu0 %v8280
  %8299 = vmatprep.subr.bf16.mxu0 0
  %8300 = vmatpush1.bf16.msra.mxu0 %v8281
  %8301 = vmatprep.subr.bf16.mxu0 0
  %8302 = vmatpush1.bf16.msra.mxu0 %v8282
  %8303 = vmatprep.subr.bf16.mxu0 0
  %8304 = vmatpush1.bf16.msra.mxu0 %v8283
  %8305 = vmatprep.subr.bf16.mxu0 0
  %8306 = vmatpush1.bf16.msra.mxu0 %v8284
  %8307 = vmatprep.subr.bf16.mxu0 0
  %8308 = vmatpush1.bf16.msra.mxu0 %v8285
  %8309 = vmatprep.subr.bf16.mxu0 0
  %8310 = vmatpush1.bf16.msra.mxu0 %v8286
  %8311 = vmatprep.subr.bf16.mxu0 0
  %8312 = vmatpush1.bf16.msra.mxu0 0
  %8313 = vmatprep.subr.bf16.mxu0 0
  %8314 = vmatpush1.bf16.msra.mxu0 0
  %8315 = vmatprep.subr.bf16.mxu0 0
  %8316 = vmatpush1.bf16.msra.mxu0 0
  %8317 = vmatprep.subr.bf16.mxu0 0
  %8318 = vmatpush1.bf16.msra.mxu0 0
  %8319 = vmatprep.subr.bf16.mxu0 0
  %8320 = vmatpush1.bf16.msra.mxu0 0
  %8321 = vmatprep.subr.bf16.mxu0 0
  %8322 = vmatpush1.bf16.msra.mxu0 0
  %8323 = vmatprep.subr.bf16.mxu0 0
  %8324 = vmatpush1.bf16.msra.mxu0 0
  %8325 = vmatprep.subr.bf16.mxu0 0
  %8326 = vmatpush1.bf16.msra.mxu0 0
  %8327 = vmatprep.mubr.bf16.mxu0 0
  %8328 = vmatmul.mubr.bf16.gmra.mrb[0].mxu0 %v8229
  %v8329 = vpop.f32.mrb[0].mxu0
  %v8330 = vadd.f32 0.0, %v8329
  %v8331 = vpop.f32.mrb[0].mxu0
  %v8332 = vpop.f32.mrb[0].mxu0
  %v8333 = vpop.f32.mrb[0].mxu0
  %8334 = vdwg.mxu0
  %v8335 = vadd.f32 %v8226, %v8330
  %s8336 = scalar_lea.vmem [#allocation5], 288
  %v8337 = vld [vmem:[%s8336] sm:$0xff]
  %v8338 = vpack.c.bf16 %v8337, %v8337
  %s8339 = scalar_lea.vmem %s7, 2304
  %v8340 = vld [vmem:[%s8339] sm:$0xf]
  %v8341 = vld [vmem:[%s8339 + $0x4] sm:$0xf]
  %v8342 = vld [vmem:[%s8339 + $0x8] sm:$0xf]
  %v8343 = vld [vmem:[%s8339 + $0xc] sm:$0xf]
  %v8344 = vld [vmem:[%s8339 + $0x10] sm:$0xf]
  %v8345 = vld [vmem:[%s8339 + $0x14] sm:$0xf]
  %v8346 = vld [vmem:[%s8339 + $0x18] sm:$0xf]
  %v8347 = vld [vmem:[%s8339 + $0x1c] sm:$0xf]
  %v8348 = vld [vmem:[%s8339 + $0x20] sm:$0xf]
  %v8349 = vld [vmem:[%s8339 + $0x24] sm:$0xf]
  %v8350 = vld [vmem:[%s8339 + $0x28] sm:$0xf]
  %v8351 = vld [vmem:[%s8339 + $0x2c] sm:$0xf]
  %v8352 = vld [vmem:[%s8339 + $0x30] sm:$0xf]
  %v8353 = vld [vmem:[%s8339 + $0x34] sm:$0xf]
  %v8354 = vld [vmem:[%s8339 + $0x38] sm:$0xf]
  %v8355 = vld [vmem:[%s8339 + $0x3c] sm:$0xf]
  %v8372 = vunpack.c.l.b16 %v8340
  %v8373 = vunpack.c.l.b16 %v8341
  %v8374 = vunpack.c.l.b16 %v8342
  %v8375 = vunpack.c.l.b16 %v8343
  %v8376 = vunpack.c.l.b16 %v8344
  %v8377 = vunpack.c.l.b16 %v8345
  %v8378 = vunpack.c.l.b16 %v8346
  %v8379 = vunpack.c.l.b16 %v8347
  %v8380 = vunpack.c.l.b16 %v8348
  %v8381 = vunpack.c.l.b16 %v8349
  %v8382 = vunpack.c.l.b16 %v8350
  %v8383 = vunpack.c.l.b16 %v8351
  %v8384 = vunpack.c.l.b16 %v8352
  %v8385 = vunpack.c.l.b16 %v8353
  %v8386 = vunpack.c.l.b16 %v8354
  %v8387 = vunpack.c.l.b16 %v8355
  %v8388 = vpack.c.b16 %v8373, %v8372
  %v8389 = vpack.c.b16 %v8375, %v8374
  %v8390 = vpack.c.b16 %v8377, %v8376
  %v8391 = vpack.c.b16 %v8379, %v8378
  %v8392 = vpack.c.b16 %v8381, %v8380
  %v8393 = vpack.c.b16 %v8383, %v8382
  %v8394 = vpack.c.b16 %v8385, %v8384
  %v8395 = vpack.c.b16 %v8387, %v8386
  %8404 = vmatprep.subr.bf16.mxu0 0
  %8405 = vmatpush1.bf16.msra.mxu0 %v8388
  %8406 = vmatprep.subr.bf16.mxu0 0
  %8407 = vmatpush1.bf16.msra.mxu0 %v8389
  %8408 = vmatprep.subr.bf16.mxu0 0
  %8409 = vmatpush1.bf16.msra.mxu0 %v8390
  %8410 = vmatprep.subr.bf16.mxu0 0
  %8411 = vmatpush1.bf16.msra.mxu0 %v8391
  %8412 = vmatprep.subr.bf16.mxu0 0
  %8413 = vmatpush1.bf16.msra.mxu0 %v8392
  %8414 = vmatprep.subr.bf16.mxu0 0
  %8415 = vmatpush1.bf16.msra.mxu0 %v8393
  %8416 = vmatprep.subr.bf16.mxu0 0
  %8417 = vmatpush1.bf16.msra.mxu0 %v8394
  %8418 = vmatprep.subr.bf16.mxu0 0
  %8419 = vmatpush1.bf16.msra.mxu0 %v8395
  %8420 = vmatprep.subr.bf16.mxu0 0
  %8421 = vmatpush1.bf16.msra.mxu0 0
  %8422 = vmatprep.subr.bf16.mxu0 0
  %8423 = vmatpush1.bf16.msra.mxu0 0
  %8424 = vmatprep.subr.bf16.mxu0 0
  %8425 = vmatpush1.bf16.msra.mxu0 0
  %8426 = vmatprep.subr.bf16.mxu0 0
  %8427 = vmatpush1.bf16.msra.mxu0 0
  %8428 = vmatprep.subr.bf16.mxu0 0
  %8429 = vmatpush1.bf16.msra.mxu0 0
  %8430 = vmatprep.subr.bf16.mxu0 0
  %8431 = vmatpush1.bf16.msra.mxu0 0
  %8432 = vmatprep.subr.bf16.mxu0 0
  %8433 = vmatpush1.bf16.msra.mxu0 0
  %8434 = vmatprep.subr.bf16.mxu0 0
  %8435 = vmatpush1.bf16.msra.mxu0 0
  %8436 = vmatprep.mubr.bf16.mxu0 0
  %8437 = vmatmul.mubr.bf16.gmra.mrb[0].mxu0 %v8338
  %v8438 = vpop.f32.mrb[0].mxu0
  %v8439 = vadd.f32 0.0, %v8438
  %v8440 = vpop.f32.mrb[0].mxu0
  %v8441 = vpop.f32.mrb[0].mxu0
  %v8442 = vpop.f32.mrb[0].mxu0
  %8443 = vdwg.mxu0
  %v8444 = vadd.f32 %v8335, %v8439
  %s8445 = scalar_lea.vmem [#allocation5], 296
  %v8446 = vld [vmem:[%s8445] sm:$0xff]
  %v8447 = vpack.c.bf16 %v8446, %v8446
  %s8448 = scalar_lea.vmem %s7, 2368
  %v8449 = vld [vmem:[%s8448] sm:$0xf]
  %v8450 = vld [vmem:[%s8448 + $0x4] sm:$0xf]
  %v8451 = vld [vmem:[%s8448 + $0x8] sm:$0xf]
  %v8452 = vld [vmem:[%s8448 + $0xc] sm:$0xf]
  %v8453 = vld [vmem:[%s8448 + $0x10] sm:$0xf]
  %v8454 = vld [vmem:[%s8448 + $0x14] sm:$0xf]
  %v8455 = vld [vmem:[%s8448 + $0x18] sm:$0xf]
  %v8456 = vld [vmem:[%s8448 + $0x1c] sm:$0xf]
  %v8457 = vld [vmem:[%s8448 + $0x20] sm:$0xf]
  %v8458 = vld [vmem:[%s8448 + $0x24] sm:$0xf]
  %v8459 = vld [vmem:[%s8448 + $0x28] sm:$0xf]
  %v8460 = vld [vmem:[%s8448 + $0x2c] sm:$0xf]
  %v8461 = vld [vmem:[%s8448 + $0x30] sm:$0xf]
  %v8462 = vld [vmem:[%s8448 + $0x34] sm:$0xf]
  %v8463 = vld [vmem:[%s8448 + $0x38] sm:$0xf]
  %v8464 = vld [vmem:[%s8448 + $0x3c] sm:$0xf]
  %v8481 = vunpack.c.l.b16 %v8449
  %v8482 = vunpack.c.l.b16 %v8450
  %v8483 = vunpack.c.l.b16 %v8451
  %v8484 = vunpack.c.l.b16 %v8452
  %v8485 = vunpack.c.l.b16 %v8453
  %v8486 = vunpack.c.l.b16 %v8454
  %v8487 = vunpack.c.l.b16 %v8455
  %v8488 = vunpack.c.l.b16 %v8456
  %v8489 = vunpack.c.l.b16 %v8457
  %v8490 = vunpack.c.l.b16 %v8458
  %v8491 = vunpack.c.l.b16 %v8459
  %v8492 = vunpack.c.l.b16 %v8460
  %v8493 = vunpack.c.l.b16 %v8461
  %v8494 = vunpack.c.l.b16 %v8462
  %v8495 = vunpack.c.l.b16 %v8463
  %v8496 = vunpack.c.l.b16 %v8464
  %v8497 = vpack.c.b16 %v8482, %v8481
  %v8498 = vpack.c.b16 %v8484, %v8483
  %v8499 = vpack.c.b16 %v8486, %v8485
  %v8500 = vpack.c.b16 %v8488, %v8487
  %v8501 = vpack.c.b16 %v8490, %v8489
  %v8502 = vpack.c.b16 %v8492, %v8491
  %v8503 = vpack.c.b16 %v8494, %v8493
  %v8504 = vpack.c.b16 %v8496, %v8495
  %8513 = vmatprep.subr.bf16.mxu0 0
  %8514 = vmatpush1.bf16.msra.mxu0 %v8497
  %8515 = vmatprep.subr.bf16.mxu0 0
  %8516 = vmatpush1.bf16.msra.mxu0 %v8498
  %8517 = vmatprep.subr.bf16.mxu0 0
  %8518 = vmatpush1.bf16.msra.mxu0 %v8499
  %8519 = vmatprep.subr.bf16.mxu0 0
  %8520 = vmatpush1.bf16.msra.mxu0 %v8500
  %8521 = vmatprep.subr.bf16.mxu0 0
  %8522 = vmatpush1.bf16.msra.mxu0 %v8501
  %8523 = vmatprep.subr.bf16.mxu0 0
  %8524 = vmatpush1.bf16.msra.mxu0 %v8502
  %8525 = vmatprep.subr.bf16.mxu0 0
  %8526 = vmatpush1.bf16.msra.mxu0 %v8503
  %8527 = vmatprep.subr.bf16.mxu0 0
  %8528 = vmatpush1.bf16.msra.mxu0 %v8504
  %8529 = vmatprep.subr.bf16.mxu0 0
  %8530 = vmatpush1.bf16.msra.mxu0 0
  %8531 = vmatprep.subr.bf16.mxu0 0
  %8532 = vmatpush1.bf16.msra.mxu0 0
  %8533 = vmatprep.subr.bf16.mxu0 0
  %8534 = vmatpush1.bf16.msra.mxu0 0
  %8535 = vmatprep.subr.bf16.mxu0 0
  %8536 = vmatpush1.bf16.msra.mxu0 0
  %8537 = vmatprep.subr.bf16.mxu0 0
  %8538 = vmatpush1.bf16.msra.mxu0 0
  %8539 = vmatprep.subr.bf16.mxu0 0
  %8540 = vmatpush1.bf16.msra.mxu0 0
  %8541 = vmatprep.subr.bf16.mxu0 0
  %8542 = vmatpush1.bf16.msra.mxu0 0
  %8543 = vmatprep.subr.bf16.mxu0 0
  %8544 = vmatpush1.bf16.msra.mxu0 0
  %8545 = vmatprep.mubr.bf16.mxu0 0
  %8546 = vmatmul.mubr.bf16.gmra.mrb[0].mxu0 %v8447
  %v8547 = vpop.f32.mrb[0].mxu0
  %v8548 = vadd.f32 0.0, %v8547
  %v8549 = vpop.f32.mrb[0].mxu0
  %v8550 = vpop.f32.mrb[0].mxu0
  %v8551 = vpop.f32.mrb[0].mxu0
  %8552 = vdwg.mxu0
  %v8553 = vadd.f32 %v8444, %v8548
  %s8554 = scalar_lea.vmem [#allocation5], 304
  %v8555 = vld [vmem:[%s8554] sm:$0xff]
  %v8556 = vpack.c.bf16 %v8555, %v8555
  %s8557 = scalar_lea.vmem %s7, 2432
  %v8558 = vld [vmem:[%s8557] sm:$0xf]
  %v8559 = vld [vmem:[%s8557 + $0x4] sm:$0xf]
  %v8560 = vld [vmem:[%s8557 + $0x8] sm:$0xf]
  %v8561 = vld [vmem:[%s8557 + $0xc] sm:$0xf]
  %v8562 = vld [vmem:[%s8557 + $0x10] sm:$0xf]
  %v8563 = vld [vmem:[%s8557 + $0x14] sm:$0xf]
  %v8564 = vld [vmem:[%s8557 + $0x18] sm:$0xf]
  %v8565 = vld [vmem:[%s8557 + $0x1c] sm:$0xf]
  %v8566 = vld [vmem:[%s8557 + $0x20] sm:$0xf]
  %v8567 = vld [vmem:[%s8557 + $0x24] sm:$0xf]
  %v8568 = vld [vmem:[%s8557 + $0x28] sm:$0xf]
  %v8569 = vld [vmem:[%s8557 + $0x2c] sm:$0xf]
  %v8570 = vld [vmem:[%s8557 + $0x30] sm:$0xf]
  %v8571 = vld [vmem:[%s8557 + $0x34] sm:$0xf]
  %v8572 = vld [vmem:[%s8557 + $0x38] sm:$0xf]
  %v8573 = vld [vmem:[%s8557 + $0x3c] sm:$0xf]
  %v8590 = vunpack.c.l.b16 %v8558
  %v8591 = vunpack.c.l.b16 %v8559
  %v8592 = vunpack.c.l.b16 %v8560
  %v8593 = vunpack.c.l.b16 %v8561
  %v8594 = vunpack.c.l.b16 %v8562
  %v8595 = vunpack.c.l.b16 %v8563
  %v8596 = vunpack.c.l.b16 %v8564
  %v8597 = vunpack.c.l.b16 %v8565
  %v8598 = vunpack.c.l.b16 %v8566
  %v8599 = vunpack.c.l.b16 %v8567
  %v8600 = vunpack.c.l.b16 %v8568
  %v8601 = vunpack.c.l.b16 %v8569
  %v8602 = vunpack.c.l.b16 %v8570
  %v8603 = vunpack.c.l.b16 %v8571
  %v8604 = vunpack.c.l.b16 %v8572
  %v8605 = vunpack.c.l.b16 %v8573
  %v8606 = vpack.c.b16 %v8591, %v8590
  %v8607 = vpack.c.b16 %v8593, %v8592
  %v8608 = vpack.c.b16 %v8595, %v8594
  %v8609 = vpack.c.b16 %v8597, %v8596
  %v8610 = vpack.c.b16 %v8599, %v8598
  %v8611 = vpack.c.b16 %v8601, %v8600
  %v8612 = vpack.c.b16 %v8603, %v8602
  %v8613 = vpack.c.b16 %v8605, %v8604
  %8622 = vmatprep.subr.bf16.mxu0 0
  %8623 = vmatpush1.bf16.msra.mxu0 %v8606
  %8624 = vmatprep.subr.bf16.mxu0 0
  %8625 = vmatpush1.bf16.msra.mxu0 %v8607
  %8626 = vmatprep.subr.bf16.mxu0 0
  %8627 = vmatpush1.bf16.msra.mxu0 %v8608
  %8628 = vmatprep.subr.bf16.mxu0 0
  %8629 = vmatpush1.bf16.msra.mxu0 %v8609
  %8630 = vmatprep.subr.bf16.mxu0 0
  %8631 = vmatpush1.bf16.msra.mxu0 %v8610
  %8632 = vmatprep.subr.bf16.mxu0 0
  %8633 = vmatpush1.bf16.msra.mxu0 %v8611
  %8634 = vmatprep.subr.bf16.mxu0 0
  %8635 = vmatpush1.bf16.msra.mxu0 %v8612
  %8636 = vmatprep.subr.bf16.mxu0 0
  %8637 = vmatpush1.bf16.msra.mxu0 %v8613
  %8638 = vmatprep.subr.bf16.mxu0 0
  %8639 = vmatpush1.bf16.msra.mxu0 0
  %8640 = vmatprep.subr.bf16.mxu0 0
  %8641 = vmatpush1.bf16.msra.mxu0 0
  %8642 = vmatprep.subr.bf16.mxu0 0
  %8643 = vmatpush1.bf16.msra.mxu0 0
  %8644 = vmatprep.subr.bf16.mxu0 0
  %8645 = vmatpush1.bf16.msra.mxu0 0
  %8646 = vmatprep.subr.bf16.mxu0 0
  %8647 = vmatpush1.bf16.msra.mxu0 0
  %8648 = vmatprep.subr.bf16.mxu0 0
  %8649 = vmatpush1.bf16.msra.mxu0 0
  %8650 = vmatprep.subr.bf16.mxu0 0
  %8651 = vmatpush1.bf16.msra.mxu0 0
  %8652 = vmatprep.subr.bf16.mxu0 0
  %8653 = vmatpush1.bf16.msra.mxu0 0
  %8654 = vmatprep.mubr.bf16.mxu0 0
  %8655 = vmatmul.mubr.bf16.gmra.mrb[0].mxu0 %v8556
  %v8656 = vpop.f32.mrb[0].mxu0
  %v8657 = vadd.f32 0.0, %v8656
  %v8658 = vpop.f32.mrb[0].mxu0
  %v8659 = vpop.f32.mrb[0].mxu0
  %v8660 = vpop.f32.mrb[0].mxu0
  %8661 = vdwg.mxu0
  %v8662 = vadd.f32 %v8553, %v8657
  %s8663 = scalar_lea.vmem [#allocation5], 312
  %v8664 = vld [vmem:[%s8663] sm:$0xff]
  %v8665 = vpack.c.bf16 %v8664, %v8664
  %s8666 = scalar_lea.vmem %s7, 2496
  %v8667 = vld [vmem:[%s8666] sm:$0xf]
  %v8668 = vld [vmem:[%s8666 + $0x4] sm:$0xf]
  %v8669 = vld [vmem:[%s8666 + $0x8] sm:$0xf]
  %v8670 = vld [vmem:[%s8666 + $0xc] sm:$0xf]
  %v8671 = vld [vmem:[%s8666 + $0x10] sm:$0xf]
  %v8672 = vld [vmem:[%s8666 + $0x14] sm:$0xf]
  %v8673 = vld [vmem:[%s8666 + $0x18] sm:$0xf]
  %v8674 = vld [vmem:[%s8666 + $0x1c] sm:$0xf]
  %v8675 = vld [vmem:[%s8666 + $0x20] sm:$0xf]
  %v8676 = vld [vmem:[%s8666 + $0x24] sm:$0xf]
  %v8677 = vld [vmem:[%s8666 + $0x28] sm:$0xf]
  %v8678 = vld [vmem:[%s8666 + $0x2c] sm:$0xf]
  %v8679 = vld [vmem:[%s8666 + $0x30] sm:$0xf]
  %v8680 = vld [vmem:[%s8666 + $0x34] sm:$0xf]
  %v8681 = vld [vmem:[%s8666 + $0x38] sm:$0xf]
  %v8682 = vld [vmem:[%s8666 + $0x3c] sm:$0xf]
  %v8699 = vunpack.c.l.b16 %v8667
  %v8700 = vunpack.c.l.b16 %v8668
  %v8701 = vunpack.c.l.b16 %v8669
  %v8702 = vunpack.c.l.b16 %v8670
  %v8703 = vunpack.c.l.b16 %v8671
  %v8704 = vunpack.c.l.b16 %v8672
  %v8705 = vunpack.c.l.b16 %v8673
  %v8706 = vunpack.c.l.b16 %v8674
  %v8707 = vunpack.c.l.b16 %v8675
  %v8708 = vunpack.c.l.b16 %v8676
  %v8709 = vunpack.c.l.b16 %v8677
  %v8710 = vunpack.c.l.b16 %v8678
  %v8711 = vunpack.c.l.b16 %v8679
  %v8712 = vunpack.c.l.b16 %v8680
  %v8713 = vunpack.c.l.b16 %v8681
  %v8714 = vunpack.c.l.b16 %v8682
  %v8715 = vpack.c.b16 %v8700, %v8699
  %v8716 = vpack.c.b16 %v8702, %v8701
  %v8717 = vpack.c.b16 %v8704, %v8703
  %v8718 = vpack.c.b16 %v8706, %v8705
  %v8719 = vpack.c.b16 %v8708, %v8707
  %v8720 = vpack.c.b16 %v8710, %v8709
  %v8721 = vpack.c.b16 %v8712, %v8711
  %v8722 = vpack.c.b16 %v8714, %v8713
  %8731 = vmatprep.subr.bf16.mxu0 0
  %8732 = vmatpush1.bf16.msra.mxu0 %v8715
  %8733 = vmatprep.subr.bf16.mxu0 0
  %8734 = vmatpush1.bf16.msra.mxu0 %v8716
  %8735 = vmatprep.subr.bf16.mxu0 0
  %8736 = vmatpush1.bf16.msra.mxu0 %v8717
  %8737 = vmatprep.subr.bf16.mxu0 0
  %8738 = vmatpush1.bf16.msra.mxu0 %v8718
  %8739 = vmatprep.subr.bf16.mxu0 0
  %8740 = vmatpush1.bf16.msra.mxu0 %v8719
  %8741 = vmatprep.subr.bf16.mxu0 0
  %8742 = vmatpush1.bf16.msra.mxu0 %v8720
  %8743 = vmatprep.subr.bf16.mxu0 0
  %8744 = vmatpush1.bf16.msra.mxu0 %v8721
  %8745 = vmatprep.subr.bf16.mxu0 0
  %8746 = vmatpush1.bf16.msra.mxu0 %v8722
  %8747 = vmatprep.subr.bf16.mxu0 0
  %8748 = vmatpush1.bf16.msra.mxu0 0
  %8749 = vmatprep.subr.bf16.mxu0 0
  %8750 = vmatpush1.bf16.msra.mxu0 0
  %8751 = vmatprep.subr.bf16.mxu0 0
  %8752 = vmatpush1.bf16.msra.mxu0 0
  %8753 = vmatprep.subr.bf16.mxu0 0
  %8754 = vmatpush1.bf16.msra.mxu0 0
  %8755 = vmatprep.subr.bf16.mxu0 0
  %8756 = vmatpush1.bf16.msra.mxu0 0
  %8757 = vmatprep.subr.bf16.mxu0 0
  %8758 = vmatpush1.bf16.msra.mxu0 0
  %8759 = vmatprep.subr.bf16.mxu0 0
  %8760 = vmatpush1.bf16.msra.mxu0 0
  %8761 = vmatprep.subr.bf16.mxu0 0
  %8762 = vmatpush1.bf16.msra.mxu0 0
  %8763 = vmatprep.mubr.bf16.mxu0 0
  %8764 = vmatmul.mubr.bf16.gmra.mrb[0].mxu0 %v8665
  %v8765 = vpop.f32.mrb[0].mxu0
  %v8766 = vadd.f32 0.0, %v8765
  %v8767 = vpop.f32.mrb[0].mxu0
  %v8768 = vpop.f32.mrb[0].mxu0
  %v8769 = vpop.f32.mrb[0].mxu0
  %8770 = vdwg.mxu0
  %v8771 = vadd.f32 %v8662, %v8766
  %s8772 = scalar_lea.vmem [#allocation5], 320
  %v8773 = vld [vmem:[%s8772] sm:$0xff]
  %v8774 = vpack.c.bf16 %v8773, %v8773
  %s8775 = scalar_lea.vmem %s7, 2560
  %v8776 = vld [vmem:[%s8775] sm:$0xf]
  %v8777 = vld [vmem:[%s8775 + $0x4] sm:$0xf]
  %v8778 = vld [vmem:[%s8775 + $0x8] sm:$0xf]
  %v8779 = vld [vmem:[%s8775 + $0xc] sm:$0xf]
  %v8780 = vld [vmem:[%s8775 + $0x10] sm:$0xf]
  %v8781 = vld [vmem:[%s8775 + $0x14] sm:$0xf]
  %v8782 = vld [vmem:[%s8775 + $0x18] sm:$0xf]
  %v8783 = vld [vmem:[%s8775 + $0x1c] sm:$0xf]
  %v8784 = vld [vmem:[%s8775 + $0x20] sm:$0xf]
  %v8785 = vld [vmem:[%s8775 + $0x24] sm:$0xf]
  %v8786 = vld [vmem:[%s8775 + $0x28] sm:$0xf]
  %v8787 = vld [vmem:[%s8775 + $0x2c] sm:$0xf]
  %v8788 = vld [vmem:[%s8775 + $0x30] sm:$0xf]
  %v8789 = vld [vmem:[%s8775 + $0x34] sm:$0xf]
  %v8790 = vld [vmem:[%s8775 + $0x38] sm:$0xf]
  %v8791 = vld [vmem:[%s8775 + $0x3c] sm:$0xf]
  %v8808 = vunpack.c.l.b16 %v8776
  %v8809 = vunpack.c.l.b16 %v8777
  %v8810 = vunpack.c.l.b16 %v8778
  %v8811 = vunpack.c.l.b16 %v8779
  %v8812 = vunpack.c.l.b16 %v8780
  %v8813 = vunpack.c.l.b16 %v8781
  %v8814 = vunpack.c.l.b16 %v8782
  %v8815 = vunpack.c.l.b16 %v8783
  %v8816 = vunpack.c.l.b16 %v8784
  %v8817 = vunpack.c.l.b16 %v8785
  %v8818 = vunpack.c.l.b16 %v8786
  %v8819 = vunpack.c.l.b16 %v8787
  %v8820 = vunpack.c.l.b16 %v8788
  %v8821 = vunpack.c.l.b16 %v8789
  %v8822 = vunpack.c.l.b16 %v8790
  %v8823 = vunpack.c.l.b16 %v8791
  %v8824 = vpack.c.b16 %v8809, %v8808
  %v8825 = vpack.c.b16 %v8811, %v8810
  %v8826 = vpack.c.b16 %v8813, %v8812
  %v8827 = vpack.c.b16 %v8815, %v8814
  %v8828 = vpack.c.b16 %v8817, %v8816
  %v8829 = vpack.c.b16 %v8819, %v8818
  %v8830 = vpack.c.b16 %v8821, %v8820
  %v8831 = vpack.c.b16 %v8823, %v8822
  %8840 = vmatprep.subr.bf16.mxu0 0
  %8841 = vmatpush1.bf16.msra.mxu0 %v8824
  %8842 = vmatprep.subr.bf16.mxu0 0
  %8843 = vmatpush1.bf16.msra.mxu0 %v8825
  %8844 = vmatprep.subr.bf16.mxu0 0
  %8845 = vmatpush1.bf16.msra.mxu0 %v8826
  %8846 = vmatprep.subr.bf16.mxu0 0
  %8847 = vmatpush1.bf16.msra.mxu0 %v8827
  %8848 = vmatprep.subr.bf16.mxu0 0
  %8849 = vmatpush1.bf16.msra.mxu0 %v8828
  %8850 = vmatprep.subr.bf16.mxu0 0
  %8851 = vmatpush1.bf16.msra.mxu0 %v8829
  %8852 = vmatprep.subr.bf16.mxu0 0
  %8853 = vmatpush1.bf16.msra.mxu0 %v8830
  %8854 = vmatprep.subr.bf16.mxu0 0
  %8855 = vmatpush1.bf16.msra.mxu0 %v8831
  %8856 = vmatprep.subr.bf16.mxu0 0
  %8857 = vmatpush1.bf16.msra.mxu0 0
  %8858 = vmatprep.subr.bf16.mxu0 0
  %8859 = vmatpush1.bf16.msra.mxu0 0
  %8860 = vmatprep.subr.bf16.mxu0 0
  %8861 = vmatpush1.bf16.msra.mxu0 0
  %8862 = vmatprep.subr.bf16.mxu0 0
  %8863 = vmatpush1.bf16.msra.mxu0 0
  %8864 = vmatprep.subr.bf16.mxu0 0
  %8865 = vmatpush1.bf16.msra.mxu0 0
  %8866 = vmatprep.subr.bf16.mxu0 0
  %8867 = vmatpush1.bf16.msra.mxu0 0
  %8868 = vmatprep.subr.bf16.mxu0 0
  %8869 = vmatpush1.bf16.msra.mxu0 0
  %8870 = vmatprep.subr.bf16.mxu0 0
  %8871 = vmatpush1.bf16.msra.mxu0 0
  %8872 = vmatprep.mubr.bf16.mxu0 0
  %8873 = vmatmul.mubr.bf16.gmra.mrb[0].mxu0 %v8774
  %v8874 = vpop.f32.mrb[0].mxu0
  %v8875 = vadd.f32 0.0, %v8874
  %v8876 = vpop.f32.mrb[0].mxu0
  %v8877 = vpop.f32.mrb[0].mxu0
  %v8878 = vpop.f32.mrb[0].mxu0
  %8879 = vdwg.mxu0
  %v8880 = vadd.f32 %v8771, %v8875
  %s8881 = scalar_lea.vmem [#allocation5], 328
  %v8882 = vld [vmem:[%s8881] sm:$0xff]
  %v8883 = vpack.c.bf16 %v8882, %v8882
  %s8884 = scalar_lea.vmem %s7, 2624
  %v8885 = vld [vmem:[%s8884] sm:$0xf]
  %v8886 = vld [vmem:[%s8884 + $0x4] sm:$0xf]
  %v8887 = vld [vmem:[%s8884 + $0x8] sm:$0xf]
  %v8888 = vld [vmem:[%s8884 + $0xc] sm:$0xf]
  %v8889 = vld [vmem:[%s8884 + $0x10] sm:$0xf]
  %v8890 = vld [vmem:[%s8884 + $0x14] sm:$0xf]
  %v8891 = vld [vmem:[%s8884 + $0x18] sm:$0xf]
  %v8892 = vld [vmem:[%s8884 + $0x1c] sm:$0xf]
  %v8893 = vld [vmem:[%s8884 + $0x20] sm:$0xf]
  %v8894 = vld [vmem:[%s8884 + $0x24] sm:$0xf]
  %v8895 = vld [vmem:[%s8884 + $0x28] sm:$0xf]
  %v8896 = vld [vmem:[%s8884 + $0x2c] sm:$0xf]
  %v8897 = vld [vmem:[%s8884 + $0x30] sm:$0xf]
  %v8898 = vld [vmem:[%s8884 + $0x34] sm:$0xf]
  %v8899 = vld [vmem:[%s8884 + $0x38] sm:$0xf]
  %v8900 = vld [vmem:[%s8884 + $0x3c] sm:$0xf]
  %v8917 = vunpack.c.l.b16 %v8885
  %v8918 = vunpack.c.l.b16 %v8886
  %v8919 = vunpack.c.l.b16 %v8887
  %v8920 = vunpack.c.l.b16 %v8888
  %v8921 = vunpack.c.l.b16 %v8889
  %v8922 = vunpack.c.l.b16 %v8890
  %v8923 = vunpack.c.l.b16 %v8891
  %v8924 = vunpack.c.l.b16 %v8892
  %v8925 = vunpack.c.l.b16 %v8893
  %v8926 = vunpack.c.l.b16 %v8894
  %v8927 = vunpack.c.l.b16 %v8895
  %v8928 = vunpack.c.l.b16 %v8896
  %v8929 = vunpack.c.l.b16 %v8897
  %v8930 = vunpack.c.l.b16 %v8898
  %v8931 = vunpack.c.l.b16 %v8899
  %v8932 = vunpack.c.l.b16 %v8900
  %v8933 = vpack.c.b16 %v8918, %v8917
  %v8934 = vpack.c.b16 %v8920, %v8919
  %v8935 = vpack.c.b16 %v8922, %v8921
  %v8936 = vpack.c.b16 %v8924, %v8923
  %v8937 = vpack.c.b16 %v8926, %v8925
  %v8938 = vpack.c.b16 %v8928, %v8927
  %v8939 = vpack.c.b16 %v8930, %v8929
  %v8940 = vpack.c.b16 %v8932, %v8931
  %8949 = vmatprep.subr.bf16.mxu0 0
  %8950 = vmatpush1.bf16.msra.mxu0 %v8933
  %8951 = vmatprep.subr.bf16.mxu0 0
  %8952 = vmatpush1.bf16.msra.mxu0 %v8934
  %8953 = vmatprep.subr.bf16.mxu0 0
  %8954 = vmatpush1.bf16.msra.mxu0 %v8935
  %8955 = vmatprep.subr.bf16.mxu0 0
  %8956 = vmatpush1.bf16.msra.mxu0 %v8936
  %8957 = vmatprep.subr.bf16.mxu0 0
  %8958 = vmatpush1.bf16.msra.mxu0 %v8937
  %8959 = vmatprep.subr.bf16.mxu0 0
  %8960 = vmatpush1.bf16.msra.mxu0 %v8938
  %8961 = vmatprep.subr.bf16.mxu0 0
  %8962 = vmatpush1.bf16.msra.mxu0 %v8939
  %8963 = vmatprep.subr.bf16.mxu0 0
  %8964 = vmatpush1.bf16.msra.mxu0 %v8940
  %8965 = vmatprep.subr.bf16.mxu0 0
  %8966 = vmatpush1.bf16.msra.mxu0 0
  %8967 = vmatprep.subr.bf16.mxu0 0
  %8968 = vmatpush1.bf16.msra.mxu0 0
  %8969 = vmatprep.subr.bf16.mxu0 0
  %8970 = vmatpush1.bf16.msra.mxu0 0
  %8971 = vmatprep.subr.bf16.mxu0 0
  %8972 = vmatpush1.bf16.msra.mxu0 0
  %8973 = vmatprep.subr.bf16.mxu0 0
  %8974 = vmatpush1.bf16.msra.mxu0 0
  %8975 = vmatprep.subr.bf16.mxu0 0
  %8976 = vmatpush1.bf16.msra.mxu0 0
  %8977 = vmatprep.subr.bf16.mxu0 0
  %8978 = vmatpush1.bf16.msra.mxu0 0
  %8979 = vmatprep.subr.bf16.mxu0 0
  %8980 = vmatpush1.bf16.msra.mxu0 0
  %8981 = vmatprep.mubr.bf16.mxu0 0
  %8982 = vmatmul.mubr.bf16.gmra.mrb[0].mxu0 %v8883
  %v8983 = vpop.f32.mrb[0].mxu0
  %v8984 = vadd.f32 0.0, %v8983
  %v8985 = vpop.f32.mrb[0].mxu0
  %v8986 = vpop.f32.mrb[0].mxu0
  %v8987 = vpop.f32.mrb[0].mxu0
  %8988 = vdwg.mxu0
  %v8989 = vadd.f32 %v8880, %v8984
  %s8990 = scalar_lea.vmem [#allocation5], 336
  %v8991 = vld [vmem:[%s8990] sm:$0xff]
  %v8992 = vpack.c.bf16 %v8991, %v8991
  %s8993 = scalar_lea.vmem %s7, 2688
  %v8994 = vld [vmem:[%s8993] sm:$0xf]
  %v8995 = vld [vmem:[%s8993 + $0x4] sm:$0xf]
  %v8996 = vld [vmem:[%s8993 + $0x8] sm:$0xf]
  %v8997 = vld [vmem:[%s8993 + $0xc] sm:$0xf]
  %v8998 = vld [vmem:[%s8993 + $0x10] sm:$0xf]
  %v8999 = vld [vmem:[%s8993 + $0x14] sm:$0xf]
  %v9000 = vld [vmem:[%s8993 + $0x18] sm:$0xf]
  %v9001 = vld [vmem:[%s8993 + $0x1c] sm:$0xf]
  %v9002 = vld [vmem:[%s8993 + $0x20] sm:$0xf]
  %v9003 = vld [vmem:[%s8993 + $0x24] sm:$0xf]
  %v9004 = vld [vmem:[%s8993 + $0x28] sm:$0xf]
  %v9005 = vld [vmem:[%s8993 + $0x2c] sm:$0xf]
  %v9006 = vld [vmem:[%s8993 + $0x30] sm:$0xf]
  %v9007 = vld [vmem:[%s8993 + $0x34] sm:$0xf]
  %v9008 = vld [vmem:[%s8993 + $0x38] sm:$0xf]
  %v9009 = vld [vmem:[%s8993 + $0x3c] sm:$0xf]
  %v9026 = vunpack.c.l.b16 %v8994
  %v9027 = vunpack.c.l.b16 %v8995
  %v9028 = vunpack.c.l.b16 %v8996
  %v9029 = vunpack.c.l.b16 %v8997
  %v9030 = vunpack.c.l.b16 %v8998
  %v9031 = vunpack.c.l.b16 %v8999
  %v9032 = vunpack.c.l.b16 %v9000
  %v9033 = vunpack.c.l.b16 %v9001
  %v9034 = vunpack.c.l.b16 %v9002
  %v9035 = vunpack.c.l.b16 %v9003
  %v9036 = vunpack.c.l.b16 %v9004
  %v9037 = vunpack.c.l.b16 %v9005
  %v9038 = vunpack.c.l.b16 %v9006
  %v9039 = vunpack.c.l.b16 %v9007
  %v9040 = vunpack.c.l.b16 %v9008
  %v9041 = vunpack.c.l.b16 %v9009
  %v9042 = vpack.c.b16 %v9027, %v9026
  %v9043 = vpack.c.b16 %v9029, %v9028
  %v9044 = vpack.c.b16 %v9031, %v9030
  %v9045 = vpack.c.b16 %v9033, %v9032
  %v9046 = vpack.c.b16 %v9035, %v9034
  %v9047 = vpack.c.b16 %v9037, %v9036
  %v9048 = vpack.c.b16 %v9039, %v9038
  %v9049 = vpack.c.b16 %v9041, %v9040
  %9058 = vmatprep.subr.bf16.mxu0 0
  %9059 = vmatpush1.bf16.msra.mxu0 %v9042
  %9060 = vmatprep.subr.bf16.mxu0 0
  %9061 = vmatpush1.bf16.msra.mxu0 %v9043
  %9062 = vmatprep.subr.bf16.mxu0 0
  %9063 = vmatpush1.bf16.msra.mxu0 %v9044
  %9064 = vmatprep.subr.bf16.mxu0 0
  %9065 = vmatpush1.bf16.msra.mxu0 %v9045
  %9066 = vmatprep.subr.bf16.mxu0 0
  %9067 = vmatpush1.bf16.msra.mxu0 %v9046
  %9068 = vmatprep.subr.bf16.mxu0 0
  %9069 = vmatpush1.bf16.msra.mxu0 %v9047
  %9070 = vmatprep.subr.bf16.mxu0 0
  %9071 = vmatpush1.bf16.msra.mxu0 %v9048
  %9072 = vmatprep.subr.bf16.mxu0 0
  %9073 = vmatpush1.bf16.msra.mxu0 %v9049
  %9074 = vmatprep.subr.bf16.mxu0 0
  %9075 = vmatpush1.bf16.msra.mxu0 0
  %9076 = vmatprep.subr.bf16.mxu0 0
  %9077 = vmatpush1.bf16.msra.mxu0 0
  %9078 = vmatprep.subr.bf16.mxu0 0
  %9079 = vmatpush1.bf16.msra.mxu0 0
  %9080 = vmatprep.subr.bf16.mxu0 0
  %9081 = vmatpush1.bf16.msra.mxu0 0
  %9082 = vmatprep.subr.bf16.mxu0 0
  %9083 = vmatpush1.bf16.msra.mxu0 0
  %9084 = vmatprep.subr.bf16.mxu0 0
  %9085 = vmatpush1.bf16.msra.mxu0 0
  %9086 = vmatprep.subr.bf16.mxu0 0
  %9087 = vmatpush1.bf16.msra.mxu0 0
  %9088 = vmatprep.subr.bf16.mxu0 0
  %9089 = vmatpush1.bf16.msra.mxu0 0
  %9090 = vmatprep.mubr.bf16.mxu0 0
  %9091 = vmatmul.mubr.bf16.gmra.mrb[0].mxu0 %v8992
  %v9092 = vpop.f32.mrb[0].mxu0
  %v9093 = vadd.f32 0.0, %v9092
  %v9094 = vpop.f32.mrb[0].mxu0
  %v9095 = vpop.f32.mrb[0].mxu0
  %v9096 = vpop.f32.mrb[0].mxu0
  %9097 = vdwg.mxu0
  %v9098 = vadd.f32 %v8989, %v9093
  %s9099 = scalar_lea.vmem [#allocation5], 344
  %v9100 = vld [vmem:[%s9099] sm:$0xff]
  %v9101 = vpack.c.bf16 %v9100, %v9100
  %s9102 = scalar_lea.vmem %s7, 2752
  %v9103 = vld [vmem:[%s9102] sm:$0xf]
  %v9104 = vld [vmem:[%s9102 + $0x4] sm:$0xf]
  %v9105 = vld [vmem:[%s9102 + $0x8] sm:$0xf]
  %v9106 = vld [vmem:[%s9102 + $0xc] sm:$0xf]
  %v9107 = vld [vmem:[%s9102 + $0x10] sm:$0xf]
  %v9108 = vld [vmem:[%s9102 + $0x14] sm:$0xf]
  %v9109 = vld [vmem:[%s9102 + $0x18] sm:$0xf]
  %v9110 = vld [vmem:[%s9102 + $0x1c] sm:$0xf]
  %v9111 = vld [vmem:[%s9102 + $0x20] sm:$0xf]
  %v9112 = vld [vmem:[%s9102 + $0x24] sm:$0xf]
  %v9113 = vld [vmem:[%s9102 + $0x28] sm:$0xf]
  %v9114 = vld [vmem:[%s9102 + $0x2c] sm:$0xf]
  %v9115 = vld [vmem:[%s9102 + $0x30] sm:$0xf]
  %v9116 = vld [vmem:[%s9102 + $0x34] sm:$0xf]
  %v9117 = vld [vmem:[%s9102 + $0x38] sm:$0xf]
  %v9118 = vld [vmem:[%s9102 + $0x3c] sm:$0xf]
  %v9135 = vunpack.c.l.b16 %v9103
  %v9136 = vunpack.c.l.b16 %v9104
  %v9137 = vunpack.c.l.b16 %v9105
  %v9138 = vunpack.c.l.b16 %v9106
  %v9139 = vunpack.c.l.b16 %v9107
  %v9140 = vunpack.c.l.b16 %v9108
  %v9141 = vunpack.c.l.b16 %v9109
  %v9142 = vunpack.c.l.b16 %v9110
  %v9143 = vunpack.c.l.b16 %v9111
  %v9144 = vunpack.c.l.b16 %v9112
  %v9145 = vunpack.c.l.b16 %v9113
  %v9146 = vunpack.c.l.b16 %v9114
  %v9147 = vunpack.c.l.b16 %v9115
  %v9148 = vunpack.c.l.b16 %v9116
  %v9149 = vunpack.c.l.b16 %v9117
  %v9150 = vunpack.c.l.b16 %v9118
  %v9151 = vpack.c.b16 %v9136, %v9135
  %v9152 = vpack.c.b16 %v9138, %v9137
  %v9153 = vpack.c.b16 %v9140, %v9139
  %v9154 = vpack.c.b16 %v9142, %v9141
  %v9155 = vpack.c.b16 %v9144, %v9143
  %v9156 = vpack.c.b16 %v9146, %v9145
  %v9157 = vpack.c.b16 %v9148, %v9147
  %v9158 = vpack.c.b16 %v9150, %v9149
  %9167 = vmatprep.subr.bf16.mxu0 0
  %9168 = vmatpush1.bf16.msra.mxu0 %v9151
  %9169 = vmatprep.subr.bf16.mxu0 0
  %9170 = vmatpush1.bf16.msra.mxu0 %v9152
  %9171 = vmatprep.subr.bf16.mxu0 0
  %9172 = vmatpush1.bf16.msra.mxu0 %v9153
  %9173 = vmatprep.subr.bf16.mxu0 0
  %9174 = vmatpush1.bf16.msra.mxu0 %v9154
  %9175 = vmatprep.subr.bf16.mxu0 0
  %9176 = vmatpush1.bf16.msra.mxu0 %v9155
  %9177 = vmatprep.subr.bf16.mxu0 0
  %9178 = vmatpush1.bf16.msra.mxu0 %v9156
  %9179 = vmatprep.subr.bf16.mxu0 0
  %9180 = vmatpush1.bf16.msra.mxu0 %v9157
  %9181 = vmatprep.subr.bf16.mxu0 0
  %9182 = vmatpush1.bf16.msra.mxu0 %v9158
  %9183 = vmatprep.subr.bf16.mxu0 0
  %9184 = vmatpush1.bf16.msra.mxu0 0
  %9185 = vmatprep.subr.bf16.mxu0 0
  %9186 = vmatpush1.bf16.msra.mxu0 0
  %9187 = vmatprep.subr.bf16.mxu0 0
  %9188 = vmatpush1.bf16.msra.mxu0 0
  %9189 = vmatprep.subr.bf16.mxu0 0
  %9190 = vmatpush1.bf16.msra.mxu0 0
  %9191 = vmatprep.subr.bf16.mxu0 0
  %9192 = vmatpush1.bf16.msra.mxu0 0
  %9193 = vmatprep.subr.bf16.mxu0 0
  %9194 = vmatpush1.bf16.msra.mxu0 0
  %9195 = vmatprep.subr.bf16.mxu0 0
  %9196 = vmatpush1.bf16.msra.mxu0 0
  %9197 = vmatprep.subr.bf16.mxu0 0
  %9198 = vmatpush1.bf16.msra.mxu0 0
  %9199 = vmatprep.mubr.bf16.mxu0 0
  %9200 = vmatmul.mubr.bf16.gmra.mrb[0].mxu0 %v9101
  %v9201 = vpop.f32.mrb[0].mxu0
  %v9202 = vadd.f32 0.0, %v9201
  %v9203 = vpop.f32.mrb[0].mxu0
  %v9204 = vpop.f32.mrb[0].mxu0
  %v9205 = vpop.f32.mrb[0].mxu0
  %9206 = vdwg.mxu0
  %v9207 = vadd.f32 %v9098, %v9202
  %s9208 = scalar_lea.vmem [#allocation5], 352
  %v9209 = vld [vmem:[%s9208] sm:$0xff]
  %v9210 = vpack.c.bf16 %v9209, %v9209
  %s9211 = scalar_lea.vmem %s7, 2816
  %v9212 = vld [vmem:[%s9211] sm:$0xf]
  %v9213 = vld [vmem:[%s9211 + $0x4] sm:$0xf]
  %v9214 = vld [vmem:[%s9211 + $0x8] sm:$0xf]
  %v9215 = vld [vmem:[%s9211 + $0xc] sm:$0xf]
  %v9216 = vld [vmem:[%s9211 + $0x10] sm:$0xf]
  %v9217 = vld [vmem:[%s9211 + $0x14] sm:$0xf]
  %v9218 = vld [vmem:[%s9211 + $0x18] sm:$0xf]
  %v9219 = vld [vmem:[%s9211 + $0x1c] sm:$0xf]
  %v9220 = vld [vmem:[%s9211 + $0x20] sm:$0xf]
  %v9221 = vld [vmem:[%s9211 + $0x24] sm:$0xf]
  %v9222 = vld [vmem:[%s9211 + $0x28] sm:$0xf]
  %v9223 = vld [vmem:[%s9211 + $0x2c] sm:$0xf]
  %v9224 = vld [vmem:[%s9211 + $0x30] sm:$0xf]
  %v9225 = vld [vmem:[%s9211 + $0x34] sm:$0xf]
  %v9226 = vld [vmem:[%s9211 + $0x38] sm:$0xf]
  %v9227 = vld [vmem:[%s9211 + $0x3c] sm:$0xf]
  %v9244 = vunpack.c.l.b16 %v9212
  %v9245 = vunpack.c.l.b16 %v9213
  %v9246 = vunpack.c.l.b16 %v9214
  %v9247 = vunpack.c.l.b16 %v9215
  %v9248 = vunpack.c.l.b16 %v9216
  %v9249 = vunpack.c.l.b16 %v9217
  %v9250 = vunpack.c.l.b16 %v9218
  %v9251 = vunpack.c.l.b16 %v9219
  %v9252 = vunpack.c.l.b16 %v9220
  %v9253 = vunpack.c.l.b16 %v9221
  %v9254 = vunpack.c.l.b16 %v9222
  %v9255 = vunpack.c.l.b16 %v9223
  %v9256 = vunpack.c.l.b16 %v9224
  %v9257 = vunpack.c.l.b16 %v9225
  %v9258 = vunpack.c.l.b16 %v9226
  %v9259 = vunpack.c.l.b16 %v9227
  %v9260 = vpack.c.b16 %v9245, %v9244
  %v9261 = vpack.c.b16 %v9247, %v9246
  %v9262 = vpack.c.b16 %v9249, %v9248
  %v9263 = vpack.c.b16 %v9251, %v9250
  %v9264 = vpack.c.b16 %v9253, %v9252
  %v9265 = vpack.c.b16 %v9255, %v9254
  %v9266 = vpack.c.b16 %v9257, %v9256
  %v9267 = vpack.c.b16 %v9259, %v9258
  %9276 = vmatprep.subr.bf16.mxu0 0
  %9277 = vmatpush1.bf16.msra.mxu0 %v9260
  %9278 = vmatprep.subr.bf16.mxu0 0
  %9279 = vmatpush1.bf16.msra.mxu0 %v9261
  %9280 = vmatprep.subr.bf16.mxu0 0
  %9281 = vmatpush1.bf16.msra.mxu0 %v9262
  %9282 = vmatprep.subr.bf16.mxu0 0
  %9283 = vmatpush1.bf16.msra.mxu0 %v9263
  %9284 = vmatprep.subr.bf16.mxu0 0
  %9285 = vmatpush1.bf16.msra.mxu0 %v9264
  %9286 = vmatprep.subr.bf16.mxu0 0
  %9287 = vmatpush1.bf16.msra.mxu0 %v9265
  %9288 = vmatprep.subr.bf16.mxu0 0
  %9289 = vmatpush1.bf16.msra.mxu0 %v9266
  %9290 = vmatprep.subr.bf16.mxu0 0
  %9291 = vmatpush1.bf16.msra.mxu0 %v9267
  %9292 = vmatprep.subr.bf16.mxu0 0
  %9293 = vmatpush1.bf16.msra.mxu0 0
  %9294 = vmatprep.subr.bf16.mxu0 0
  %9295 = vmatpush1.bf16.msra.mxu0 0
  %9296 = vmatprep.subr.bf16.mxu0 0
  %9297 = vmatpush1.bf16.msra.mxu0 0
  %9298 = vmatprep.subr.bf16.mxu0 0
  %9299 = vmatpush1.bf16.msra.mxu0 0
  %9300 = vmatprep.subr.bf16.mxu0 0
  %9301 = vmatpush1.bf16.msra.mxu0 0
  %9302 = vmatprep.subr.bf16.mxu0 0
  %9303 = vmatpush1.bf16.msra.mxu0 0
  %9304 = vmatprep.subr.bf16.mxu0 0
  %9305 = vmatpush1.bf16.msra.mxu0 0
  %9306 = vmatprep.subr.bf16.mxu0 0
  %9307 = vmatpush1.bf16.msra.mxu0 0
  %9308 = vmatprep.mubr.bf16.mxu0 0
  %9309 = vmatmul.mubr.bf16.gmra.mrb[0].mxu0 %v9210
  %v9310 = vpop.f32.mrb[0].mxu0
  %v9311 = vadd.f32 0.0, %v9310
  %v9312 = vpop.f32.mrb[0].mxu0
  %v9313 = vpop.f32.mrb[0].mxu0
  %v9314 = vpop.f32.mrb[0].mxu0
  %9315 = vdwg.mxu0
  %v9316 = vadd.f32 %v9207, %v9311
  %s9317 = scalar_lea.vmem [#allocation5], 360
  %v9318 = vld [vmem:[%s9317] sm:$0xff]
  %v9319 = vpack.c.bf16 %v9318, %v9318
  %s9320 = scalar_lea.vmem %s7, 2880
  %v9321 = vld [vmem:[%s9320] sm:$0xf]
  %v9322 = vld [vmem:[%s9320 + $0x4] sm:$0xf]
  %v9323 = vld [vmem:[%s9320 + $0x8] sm:$0xf]
  %v9324 = vld [vmem:[%s9320 + $0xc] sm:$0xf]
  %v9325 = vld [vmem:[%s9320 + $0x10] sm:$0xf]
  %v9326 = vld [vmem:[%s9320 + $0x14] sm:$0xf]
  %v9327 = vld [vmem:[%s9320 + $0x18] sm:$0xf]
  %v9328 = vld [vmem:[%s9320 + $0x1c] sm:$0xf]
  %v9329 = vld [vmem:[%s9320 + $0x20] sm:$0xf]
  %v9330 = vld [vmem:[%s9320 + $0x24] sm:$0xf]
  %v9331 = vld [vmem:[%s9320 + $0x28] sm:$0xf]
  %v9332 = vld [vmem:[%s9320 + $0x2c] sm:$0xf]
  %v9333 = vld [vmem:[%s9320 + $0x30] sm:$0xf]
  %v9334 = vld [vmem:[%s9320 + $0x34] sm:$0xf]
  %v9335 = vld [vmem:[%s9320 + $0x38] sm:$0xf]
  %v9336 = vld [vmem:[%s9320 + $0x3c] sm:$0xf]
  %v9353 = vunpack.c.l.b16 %v9321
  %v9354 = vunpack.c.l.b16 %v9322
  %v9355 = vunpack.c.l.b16 %v9323
  %v9356 = vunpack.c.l.b16 %v9324
  %v9357 = vunpack.c.l.b16 %v9325
  %v9358 = vunpack.c.l.b16 %v9326
  %v9359 = vunpack.c.l.b16 %v9327
  %v9360 = vunpack.c.l.b16 %v9328
  %v9361 = vunpack.c.l.b16 %v9329
  %v9362 = vunpack.c.l.b16 %v9330
  %v9363 = vunpack.c.l.b16 %v9331
  %v9364 = vunpack.c.l.b16 %v9332
  %v9365 = vunpack.c.l.b16 %v9333
  %v9366 = vunpack.c.l.b16 %v9334
  %v9367 = vunpack.c.l.b16 %v9335
  %v9368 = vunpack.c.l.b16 %v9336
  %v9369 = vpack.c.b16 %v9354, %v9353
  %v9370 = vpack.c.b16 %v9356, %v9355
  %v9371 = vpack.c.b16 %v9358, %v9357
  %v9372 = vpack.c.b16 %v9360, %v9359
  %v9373 = vpack.c.b16 %v9362, %v9361
  %v9374 = vpack.c.b16 %v9364, %v9363
  %v9375 = vpack.c.b16 %v9366, %v9365
  %v9376 = vpack.c.b16 %v9368, %v9367
  %9385 = vmatprep.subr.bf16.mxu0 0
  %9386 = vmatpush1.bf16.msra.mxu0 %v9369
  %9387 = vmatprep.subr.bf16.mxu0 0
  %9388 = vmatpush1.bf16.msra.mxu0 %v9370
  %9389 = vmatprep.subr.bf16.mxu0 0
  %9390 = vmatpush1.bf16.msra.mxu0 %v9371
  %9391 = vmatprep.subr.bf16.mxu0 0
  %9392 = vmatpush1.bf16.msra.mxu0 %v9372
  %9393 = vmatprep.subr.bf16.mxu0 0
  %9394 = vmatpush1.bf16.msra.mxu0 %v9373
  %9395 = vmatprep.subr.bf16.mxu0 0
  %9396 = vmatpush1.bf16.msra.mxu0 %v9374
  %9397 = vmatprep.subr.bf16.mxu0 0
  %9398 = vmatpush1.bf16.msra.mxu0 %v9375
  %9399 = vmatprep.subr.bf16.mxu0 0
  %9400 = vmatpush1.bf16.msra.mxu0 %v9376
  %9401 = vmatprep.subr.bf16.mxu0 0
  %9402 = vmatpush1.bf16.msra.mxu0 0
  %9403 = vmatprep.subr.bf16.mxu0 0
  %9404 = vmatpush1.bf16.msra.mxu0 0
  %9405 = vmatprep.subr.bf16.mxu0 0
  %9406 = vmatpush1.bf16.msra.mxu0 0
  %9407 = vmatprep.subr.bf16.mxu0 0
  %9408 = vmatpush1.bf16.msra.mxu0 0
  %9409 = vmatprep.subr.bf16.mxu0 0
  %9410 = vmatpush1.bf16.msra.mxu0 0
  %9411 = vmatprep.subr.bf16.mxu0 0
  %9412 = vmatpush1.bf16.msra.mxu0 0
  %9413 = vmatprep.subr.bf16.mxu0 0
  %9414 = vmatpush1.bf16.msra.mxu0 0
  %9415 = vmatprep.subr.bf16.mxu0 0
  %9416 = vmatpush1.bf16.msra.mxu0 0
  %9417 = vmatprep.mubr.bf16.mxu0 0
  %9418 = vmatmul.mubr.bf16.gmra.mrb[0].mxu0 %v9319
  %v9419 = vpop.f32.mrb[0].mxu0
  %v9420 = vadd.f32 0.0, %v9419
  %v9421 = vpop.f32.mrb[0].mxu0
  %v9422 = vpop.f32.mrb[0].mxu0
  %v9423 = vpop.f32.mrb[0].mxu0
  %9424 = vdwg.mxu0
  %v9425 = vadd.f32 %v9316, %v9420
  %s9426 = scalar_lea.vmem [#allocation5], 368
  %v9427 = vld [vmem:[%s9426] sm:$0xff]
  %v9428 = vpack.c.bf16 %v9427, %v9427
  %s9429 = scalar_lea.vmem %s7, 2944
  %v9430 = vld [vmem:[%s9429] sm:$0xf]
  %v9431 = vld [vmem:[%s9429 + $0x4] sm:$0xf]
  %v9432 = vld [vmem:[%s9429 + $0x8] sm:$0xf]
  %v9433 = vld [vmem:[%s9429 + $0xc] sm:$0xf]
  %v9434 = vld [vmem:[%s9429 + $0x10] sm:$0xf]
  %v9435 = vld [vmem:[%s9429 + $0x14] sm:$0xf]
  %v9436 = vld [vmem:[%s9429 + $0x18] sm:$0xf]
  %v9437 = vld [vmem:[%s9429 + $0x1c] sm:$0xf]
  %v9438 = vld [vmem:[%s9429 + $0x20] sm:$0xf]
  %v9439 = vld [vmem:[%s9429 + $0x24] sm:$0xf]
  %v9440 = vld [vmem:[%s9429 + $0x28] sm:$0xf]
  %v9441 = vld [vmem:[%s9429 + $0x2c] sm:$0xf]
  %v9442 = vld [vmem:[%s9429 + $0x30] sm:$0xf]
  %v9443 = vld [vmem:[%s9429 + $0x34] sm:$0xf]
  %v9444 = vld [vmem:[%s9429 + $0x38] sm:$0xf]
  %v9445 = vld [vmem:[%s9429 + $0x3c] sm:$0xf]
  %v9462 = vunpack.c.l.b16 %v9430
  %v9463 = vunpack.c.l.b16 %v9431
  %v9464 = vunpack.c.l.b16 %v9432
  %v9465 = vunpack.c.l.b16 %v9433
  %v9466 = vunpack.c.l.b16 %v9434
  %v9467 = vunpack.c.l.b16 %v9435
  %v9468 = vunpack.c.l.b16 %v9436
  %v9469 = vunpack.c.l.b16 %v9437
  %v9470 = vunpack.c.l.b16 %v9438
  %v9471 = vunpack.c.l.b16 %v9439
  %v9472 = vunpack.c.l.b16 %v9440
  %v9473 = vunpack.c.l.b16 %v9441
  %v9474 = vunpack.c.l.b16 %v9442
  %v9475 = vunpack.c.l.b16 %v9443
  %v9476 = vunpack.c.l.b16 %v9444
  %v9477 = vunpack.c.l.b16 %v9445
  %v9478 = vpack.c.b16 %v9463, %v9462
  %v9479 = vpack.c.b16 %v9465, %v9464
  %v9480 = vpack.c.b16 %v9467, %v9466
  %v9481 = vpack.c.b16 %v9469, %v9468
  %v9482 = vpack.c.b16 %v9471, %v9470
  %v9483 = vpack.c.b16 %v9473, %v9472
  %v9484 = vpack.c.b16 %v9475, %v9474
  %v9485 = vpack.c.b16 %v9477, %v9476
  %9494 = vmatprep.subr.bf16.mxu0 0
  %9495 = vmatpush1.bf16.msra.mxu0 %v9478
  %9496 = vmatprep.subr.bf16.mxu0 0
  %9497 = vmatpush1.bf16.msra.mxu0 %v9479
  %9498 = vmatprep.subr.bf16.mxu0 0
  %9499 = vmatpush1.bf16.msra.mxu0 %v9480
  %9500 = vmatprep.subr.bf16.mxu0 0
  %9501 = vmatpush1.bf16.msra.mxu0 %v9481
  %9502 = vmatprep.subr.bf16.mxu0 0
  %9503 = vmatpush1.bf16.msra.mxu0 %v9482
  %9504 = vmatprep.subr.bf16.mxu0 0
  %9505 = vmatpush1.bf16.msra.mxu0 %v9483
  %9506 = vmatprep.subr.bf16.mxu0 0
  %9507 = vmatpush1.bf16.msra.mxu0 %v9484
  %9508 = vmatprep.subr.bf16.mxu0 0
  %9509 = vmatpush1.bf16.msra.mxu0 %v9485
  %9510 = vmatprep.subr.bf16.mxu0 0
  %9511 = vmatpush1.bf16.msra.mxu0 0
  %9512 = vmatprep.subr.bf16.mxu0 0
  %9513 = vmatpush1.bf16.msra.mxu0 0
  %9514 = vmatprep.subr.bf16.mxu0 0
  %9515 = vmatpush1.bf16.msra.mxu0 0
  %9516 = vmatprep.subr.bf16.mxu0 0
  %9517 = vmatpush1.bf16.msra.mxu0 0
  %9518 = vmatprep.subr.bf16.mxu0 0
  %9519 = vmatpush1.bf16.msra.mxu0 0
  %9520 = vmatprep.subr.bf16.mxu0 0
  %9521 = vmatpush1.bf16.msra.mxu0 0
  %9522 = vmatprep.subr.bf16.mxu0 0
  %9523 = vmatpush1.bf16.msra.mxu0 0
  %9524 = vmatprep.subr.bf16.mxu0 0
  %9525 = vmatpush1.bf16.msra.mxu0 0
  %9526 = vmatprep.mubr.bf16.mxu0 0
  %9527 = vmatmul.mubr.bf16.gmra.mrb[0].mxu0 %v9428
  %v9528 = vpop.f32.mrb[0].mxu0
  %v9529 = vadd.f32 0.0, %v9528
  %v9530 = vpop.f32.mrb[0].mxu0
  %v9531 = vpop.f32.mrb[0].mxu0
  %v9532 = vpop.f32.mrb[0].mxu0
  %9533 = vdwg.mxu0
  %v9534 = vadd.f32 %v9425, %v9529
  %s9535 = scalar_lea.vmem [#allocation5], 376
  %v9536 = vld [vmem:[%s9535] sm:$0xff]
  %v9537 = vpack.c.bf16 %v9536, %v9536
  %s9538 = scalar_lea.vmem %s7, 3008
  %v9539 = vld [vmem:[%s9538] sm:$0xf]
  %v9540 = vld [vmem:[%s9538 + $0x4] sm:$0xf]
  %v9541 = vld [vmem:[%s9538 + $0x8] sm:$0xf]
  %v9542 = vld [vmem:[%s9538 + $0xc] sm:$0xf]
  %v9543 = vld [vmem:[%s9538 + $0x10] sm:$0xf]
  %v9544 = vld [vmem:[%s9538 + $0x14] sm:$0xf]
  %v9545 = vld [vmem:[%s9538 + $0x18] sm:$0xf]
  %v9546 = vld [vmem:[%s9538 + $0x1c] sm:$0xf]
  %v9547 = vld [vmem:[%s9538 + $0x20] sm:$0xf]
  %v9548 = vld [vmem:[%s9538 + $0x24] sm:$0xf]
  %v9549 = vld [vmem:[%s9538 + $0x28] sm:$0xf]
  %v9550 = vld [vmem:[%s9538 + $0x2c] sm:$0xf]
  %v9551 = vld [vmem:[%s9538 + $0x30] sm:$0xf]
  %v9552 = vld [vmem:[%s9538 + $0x34] sm:$0xf]
  %v9553 = vld [vmem:[%s9538 + $0x38] sm:$0xf]
  %v9554 = vld [vmem:[%s9538 + $0x3c] sm:$0xf]
  %v9571 = vunpack.c.l.b16 %v9539
  %v9572 = vunpack.c.l.b16 %v9540
  %v9573 = vunpack.c.l.b16 %v9541
  %v9574 = vunpack.c.l.b16 %v9542
  %v9575 = vunpack.c.l.b16 %v9543
  %v9576 = vunpack.c.l.b16 %v9544
  %v9577 = vunpack.c.l.b16 %v9545
  %v9578 = vunpack.c.l.b16 %v9546
  %v9579 = vunpack.c.l.b16 %v9547
  %v9580 = vunpack.c.l.b16 %v9548
  %v9581 = vunpack.c.l.b16 %v9549
  %v9582 = vunpack.c.l.b16 %v9550
  %v9583 = vunpack.c.l.b16 %v9551
  %v9584 = vunpack.c.l.b16 %v9552
  %v9585 = vunpack.c.l.b16 %v9553
  %v9586 = vunpack.c.l.b16 %v9554
  %v9587 = vpack.c.b16 %v9572, %v9571
  %v9588 = vpack.c.b16 %v9574, %v9573
  %v9589 = vpack.c.b16 %v9576, %v9575
  %v9590 = vpack.c.b16 %v9578, %v9577
  %v9591 = vpack.c.b16 %v9580, %v9579
  %v9592 = vpack.c.b16 %v9582, %v9581
  %v9593 = vpack.c.b16 %v9584, %v9583
  %v9594 = vpack.c.b16 %v9586, %v9585
  %9603 = vmatprep.subr.bf16.mxu0 0
  %9604 = vmatpush1.bf16.msra.mxu0 %v9587
  %9605 = vmatprep.subr.bf16.mxu0 0
  %9606 = vmatpush1.bf16.msra.mxu0 %v9588
  %9607 = vmatprep.subr.bf16.mxu0 0
  %9608 = vmatpush1.bf16.msra.mxu0 %v9589
  %9609 = vmatprep.subr.bf16.mxu0 0
  %9610 = vmatpush1.bf16.msra.mxu0 %v9590
  %9611 = vmatprep.subr.bf16.mxu0 0
  %9612 = vmatpush1.bf16.msra.mxu0 %v9591
  %9613 = vmatprep.subr.bf16.mxu0 0
  %9614 = vmatpush1.bf16.msra.mxu0 %v9592
  %9615 = vmatprep.subr.bf16.mxu0 0
  %9616 = vmatpush1.bf16.msra.mxu0 %v9593
  %9617 = vmatprep.subr.bf16.mxu0 0
  %9618 = vmatpush1.bf16.msra.mxu0 %v9594
  %9619 = vmatprep.subr.bf16.mxu0 0
  %9620 = vmatpush1.bf16.msra.mxu0 0
  %9621 = vmatprep.subr.bf16.mxu0 0
  %9622 = vmatpush1.bf16.msra.mxu0 0
  %9623 = vmatprep.subr.bf16.mxu0 0
  %9624 = vmatpush1.bf16.msra.mxu0 0
  %9625 = vmatprep.subr.bf16.mxu0 0
  %9626 = vmatpush1.bf16.msra.mxu0 0
  %9627 = vmatprep.subr.bf16.mxu0 0
  %9628 = vmatpush1.bf16.msra.mxu0 0
  %9629 = vmatprep.subr.bf16.mxu0 0
  %9630 = vmatpush1.bf16.msra.mxu0 0
  %9631 = vmatprep.subr.bf16.mxu0 0
  %9632 = vmatpush1.bf16.msra.mxu0 0
  %9633 = vmatprep.subr.bf16.mxu0 0
  %9634 = vmatpush1.bf16.msra.mxu0 0
  %9635 = vmatprep.mubr.bf16.mxu0 0
  %9636 = vmatmul.mubr.bf16.gmra.mrb[0].mxu0 %v9537
  %v9637 = vpop.f32.mrb[0].mxu0
  %v9638 = vadd.f32 0.0, %v9637
  %v9639 = vpop.f32.mrb[0].mxu0
  %v9640 = vpop.f32.mrb[0].mxu0
  %v9641 = vpop.f32.mrb[0].mxu0
  %9642 = vdwg.mxu0
  %v9643 = vadd.f32 %v9534, %v9638
  %s9644 = scalar_lea.vmem [#allocation5], 384
  %v9645 = vld [vmem:[%s9644] sm:$0xff]
  %v9646 = vpack.c.bf16 %v9645, %v9645
  %s9647 = scalar_lea.vmem %s7, 3072
  %v9648 = vld [vmem:[%s9647] sm:$0xf]
  %v9649 = vld [vmem:[%s9647 + $0x4] sm:$0xf]
  %v9650 = vld [vmem:[%s9647 + $0x8] sm:$0xf]
  %v9651 = vld [vmem:[%s9647 + $0xc] sm:$0xf]
  %v9652 = vld [vmem:[%s9647 + $0x10] sm:$0xf]
  %v9653 = vld [vmem:[%s9647 + $0x14] sm:$0xf]
  %v9654 = vld [vmem:[%s9647 + $0x18] sm:$0xf]
  %v9655 = vld [vmem:[%s9647 + $0x1c] sm:$0xf]
  %v9656 = vld [vmem:[%s9647 + $0x20] sm:$0xf]
  %v9657 = vld [vmem:[%s9647 + $0x24] sm:$0xf]
  %v9658 = vld [vmem:[%s9647 + $0x28] sm:$0xf]
  %v9659 = vld [vmem:[%s9647 + $0x2c] sm:$0xf]
  %v9660 = vld [vmem:[%s9647 + $0x30] sm:$0xf]
  %v9661 = vld [vmem:[%s9647 + $0x34] sm:$0xf]
  %v9662 = vld [vmem:[%s9647 + $0x38] sm:$0xf]
  %v9663 = vld [vmem:[%s9647 + $0x3c] sm:$0xf]
  %v9680 = vunpack.c.l.b16 %v9648
  %v9681 = vunpack.c.l.b16 %v9649
  %v9682 = vunpack.c.l.b16 %v9650
  %v9683 = vunpack.c.l.b16 %v9651
  %v9684 = vunpack.c.l.b16 %v9652
  %v9685 = vunpack.c.l.b16 %v9653
  %v9686 = vunpack.c.l.b16 %v9654
  %v9687 = vunpack.c.l.b16 %v9655
  %v9688 = vunpack.c.l.b16 %v9656
  %v9689 = vunpack.c.l.b16 %v9657
  %v9690 = vunpack.c.l.b16 %v9658
  %v9691 = vunpack.c.l.b16 %v9659
  %v9692 = vunpack.c.l.b16 %v9660
  %v9693 = vunpack.c.l.b16 %v9661
  %v9694 = vunpack.c.l.b16 %v9662
  %v9695 = vunpack.c.l.b16 %v9663
  %v9696 = vpack.c.b16 %v9681, %v9680
  %v9697 = vpack.c.b16 %v9683, %v9682
  %v9698 = vpack.c.b16 %v9685, %v9684
  %v9699 = vpack.c.b16 %v9687, %v9686
  %v9700 = vpack.c.b16 %v9689, %v9688
  %v9701 = vpack.c.b16 %v9691, %v9690
  %v9702 = vpack.c.b16 %v9693, %v9692
  %v9703 = vpack.c.b16 %v9695, %v9694
  %9712 = vmatprep.subr.bf16.mxu0 0
  %9713 = vmatpush1.bf16.msra.mxu0 %v9696
  %9714 = vmatprep.subr.bf16.mxu0 0
  %9715 = vmatpush1.bf16.msra.mxu0 %v9697
  %9716 = vmatprep.subr.bf16.mxu0 0
  %9717 = vmatpush1.bf16.msra.mxu0 %v9698
  %9718 = vmatprep.subr.bf16.mxu0 0
  %9719 = vmatpush1.bf16.msra.mxu0 %v9699
  %9720 = vmatprep.subr.bf16.mxu0 0
  %9721 = vmatpush1.bf16.msra.mxu0 %v9700
  %9722 = vmatprep.subr.bf16.mxu0 0
  %9723 = vmatpush1.bf16.msra.mxu0 %v9701
  %9724 = vmatprep.subr.bf16.mxu0 0
  %9725 = vmatpush1.bf16.msra.mxu0 %v9702
  %9726 = vmatprep.subr.bf16.mxu0 0
  %9727 = vmatpush1.bf16.msra.mxu0 %v9703
  %9728 = vmatprep.subr.bf16.mxu0 0
  %9729 = vmatpush1.bf16.msra.mxu0 0
  %9730 = vmatprep.subr.bf16.mxu0 0
  %9731 = vmatpush1.bf16.msra.mxu0 0
  %9732 = vmatprep.subr.bf16.mxu0 0
  %9733 = vmatpush1.bf16.msra.mxu0 0
  %9734 = vmatprep.subr.bf16.mxu0 0
  %9735 = vmatpush1.bf16.msra.mxu0 0
  %9736 = vmatprep.subr.bf16.mxu0 0
  %9737 = vmatpush1.bf16.msra.mxu0 0
  %9738 = vmatprep.subr.bf16.mxu0 0
  %9739 = vmatpush1.bf16.msra.mxu0 0
  %9740 = vmatprep.subr.bf16.mxu0 0
  %9741 = vmatpush1.bf16.msra.mxu0 0
  %9742 = vmatprep.subr.bf16.mxu0 0
  %9743 = vmatpush1.bf16.msra.mxu0 0
  %9744 = vmatprep.mubr.bf16.mxu0 0
  %9745 = vmatmul.mubr.bf16.gmra.mrb[0].mxu0 %v9646
  %v9746 = vpop.f32.mrb[0].mxu0
  %v9747 = vadd.f32 0.0, %v9746
  %v9748 = vpop.f32.mrb[0].mxu0
  %v9749 = vpop.f32.mrb[0].mxu0
  %v9750 = vpop.f32.mrb[0].mxu0
  %9751 = vdwg.mxu0
  %v9752 = vadd.f32 %v9643, %v9747
  %v9753 = vld [vmem:[%s8] sm:$0x1]
  %v9755 = vlaneseq
  %v9756 = vshrl.u32 %v9755, 7
  %v9757 = vsub.s32 0, %v9756
  %v9758 = vrot.slane %v9753, %v9757
  %v9760 = vadd.f32 %v9752, %v9758
  %v9761 = vmax.f32 %v9760, 0.0
  %v9762 = vpack.c.bf16 %v9761, %v9761
  %v9763 = vld [vmem:[%s9] sm:$0xf]
  %v9764 = vld [vmem:[%s9 + $0x4] sm:$0xf]
  %v9765 = vld [vmem:[%s9 + $0x8] sm:$0xf]
  %v9766 = vld [vmem:[%s9 + $0xc] sm:$0xf]
  %v9767 = vld [vmem:[%s10] sm:$0x1]
  %v9769 = vlaneseq
  %v9770 = vshrl.u32 %v9769, 7
  %v9771 = vsub.s32 0, %v9770
  %v9772 = vrot.slane %v9767, %v9771
  %v9778 = vunpack.c.l.b16 %v9763
  %v9779 = vunpack.c.l.b16 %v9764
  %v9780 = vunpack.c.l.b16 %v9765
  %v9781 = vunpack.c.l.b16 %v9766
  %v9782 = vpack.c.b16 %v9779, %v9778
  %v9783 = vpack.c.b16 %v9781, %v9780
  %v9787 = vsel %vm969, %v9762, 0
  %9789 = vmatprep.subr.bf16.mxu0 0
  %9790 = vmatpush1.bf16.msra.mxu0 %v9782
  %9791 = vmatprep.subr.bf16.mxu0 0
  %9792 = vmatpush1.bf16.msra.mxu0 %v9783
  %9793 = vmatprep.subr.bf16.mxu0 0
  %9794 = vmatpush1.bf16.msra.mxu0 0
  %9795 = vmatprep.subr.bf16.mxu0 0
  %9796 = vmatpush1.bf16.msra.mxu0 0
  %9797 = vmatprep.subr.bf16.mxu0 0
  %9798 = vmatpush1.bf16.msra.mxu0 0
  %9799 = vmatprep.subr.bf16.mxu0 0
  %9800 = vmatpush1.bf16.msra.mxu0 0
  %9801 = vmatprep.subr.bf16.mxu0 0
  %9802 = vmatpush1.bf16.msra.mxu0 0
  %9803 = vmatprep.subr.bf16.mxu0 0
  %9804 = vmatpush1.bf16.msra.mxu0 0
  %9805 = vmatprep.subr.bf16.mxu0 0
  %9806 = vmatpush1.bf16.msra.mxu0 0
  %9807 = vmatprep.subr.bf16.mxu0 0
  %9808 = vmatpush1.bf16.msra.mxu0 0
  %9809 = vmatprep.subr.bf16.mxu0 0
  %9810 = vmatpush1.bf16.msra.mxu0 0
  %9811 = vmatprep.subr.bf16.mxu0 0
  %9812 = vmatpush1.bf16.msra.mxu0 0
  %9813 = vmatprep.subr.bf16.mxu0 0
  %9814 = vmatpush1.bf16.msra.mxu0 0
  %9815 = vmatprep.subr.bf16.mxu0 0
  %9816 = vmatpush1.bf16.msra.mxu0 0
  %9817 = vmatprep.subr.bf16.mxu0 0
  %9818 = vmatpush1.bf16.msra.mxu0 0
  %9819 = vmatprep.subr.bf16.mxu0 0
  %9820 = vmatpush1.bf16.msra.mxu0 0
  %9821 = vmatprep.mubr.bf16.mxu0 0
  %9822 = vmatmul.mubr.bf16.gmra.mrb[0].mxu0 %v9787
  %v9823 = vpop.f32.mrb[0].mxu0
  %v9824 = vadd.f32 %v9772, %v9823
  %v9825 = vpop.f32.mrb[0].mxu0
  %v9826 = vpop.f32.mrb[0].mxu0
  %v9827 = vpop.f32.mrb[0].mxu0
  %9828 = vdwg.mxu0
  %v9829 = vmax.f32 %v9824, 0.0
  %v9830 = vpack.c.bf16 %v9829, %v9829
  %v9831 = vld [vmem:[%s11] sm:$0xf]
  %v9832 = vld [vmem:[%s11 + $0x4] sm:$0xf]
  %v9833 = vld [vmem:[%s12] sm:$0x1]
  %v9835 = vlaneseq
  %v9836 = vshrl.u32 %v9835, 7
  %v9837 = vsub.s32 0, %v9836
  %v9838 = vrot.slane %v9833, %v9837
  %v9842 = vunpack.c.l.b16 %v9831
  %v9843 = vunpack.c.l.b16 %v9832
  %v9844 = vpack.c.b16 %v9843, %v9842
  %vm9846 = vcmask 130048
  %v9848 = vsel %vm9846, %v9830, 0
  %9850 = vmatprep.subr.bf16.mxu0 0
  %9851 = vmatpush1.bf16.msra.mxu0 %v9844
  %9852 = vmatprep.subr.bf16.mxu0 0
  %9853 = vmatpush1.bf16.msra.mxu0 0
  %9854 = vmatprep.subr.bf16.mxu0 0
  %9855 = vmatpush1.bf16.msra.mxu0 0
  %9856 = vmatprep.subr.bf16.mxu0 0
  %9857 = vmatpush1.bf16.msra.mxu0 0
  %9858 = vmatprep.subr.bf16.mxu0 0
  %9859 = vmatpush1.bf16.msra.mxu0 0
  %9860 = vmatprep.subr.bf16.mxu0 0
  %9861 = vmatpush1.bf16.msra.mxu0 0
  %9862 = vmatprep.subr.bf16.mxu0 0
  %9863 = vmatpush1.bf16.msra.mxu0 0
  %9864 = vmatprep.subr.bf16.mxu0 0
  %9865 = vmatpush1.bf16.msra.mxu0 0
  %9866 = vmatprep.subr.bf16.mxu0 0
  %9867 = vmatpush1.bf16.msra.mxu0 0
  %9868 = vmatprep.subr.bf16.mxu0 0
  %9869 = vmatpush1.bf16.msra.mxu0 0
  %9870 = vmatprep.subr.bf16.mxu0 0
  %9871 = vmatpush1.bf16.msra.mxu0 0
  %9872 = vmatprep.subr.bf16.mxu0 0
  %9873 = vmatpush1.bf16.msra.mxu0 0
  %9874 = vmatprep.subr.bf16.mxu0 0
  %9875 = vmatpush1.bf16.msra.mxu0 0
  %9876 = vmatprep.subr.bf16.mxu0 0
  %9877 = vmatpush1.bf16.msra.mxu0 0
  %9878 = vmatprep.subr.bf16.mxu0 0
  %9879 = vmatpush1.bf16.msra.mxu0 0
  %9880 = vmatprep.subr.bf16.mxu0 0
  %9881 = vmatpush1.bf16.msra.mxu0 0
  %9882 = vmatprep.mubr.bf16.mxu0 0
  %9883 = vmatmul.mubr.bf16.gmra.mrb[0].mxu0 %v9848
  %v9884 = vpop.f32.mrb[0].mxu0
  %v9885 = vadd.f32 %v9838, %v9884
  %v9886 = vpop.f32.mrb[0].mxu0
  %v9887 = vpop.f32.mrb[0].mxu0
  %v9888 = vpop.f32.mrb[0].mxu0
  %9889 = vdwg.mxu0
  %vm9890 = vcmask 31744
  %9891 = vst.msk [vmem:[%s13] sm:$0xff] %vm9890, %v9885
  // Predicated region
  $region54: #{_qnetwork_apply.1} parent=0 // pred_check
    _
  $region55: #{_qnetwork_apply.1} parent=0 // pred_check_branch
    %9893 = sbr.rel (0) target = $region57
  $region56: #{_qnetwork_apply.1} parent=0 // pred_region
    _
  $region57: #{_qnetwork_apply.1} parent=0 // pred_fallthru
    _
  // Predicated region
  $region58: #{_qnetwork_apply.1} parent=0 // pred_check
    _
  $region59: #{_qnetwork_apply.1} parent=0 // pred_check_branch
    %9895 = sbr.rel (0) target = $region61
  $region60: #{_qnetwork_apply.1} parent=0 // pred_region
    _
  $region61: #{_qnetwork_apply.1} parent=0 // pred_fallthru
    _

</llo_original>
